<compile_context>
chip_gen: v7x
topology: tpu7x:2x2x1
jax: 0.10.0
libtpu: 0.0.40
codegen_flags: <defaults>
</compile_context>

<pallas_src>
import functools

import jax
import jax.numpy as jnp
from jax.experimental import pallas as pl
from jax.experimental.pallas import tpu as pltpu


def _round_up(x, m):
    return (x + m - 1) // m * m


def _fused_matmul_kernel(a_ref, w_ref, b_ref, o_ref, acc_ref, *, apply_act):
    """O = epilogue(A @ W + bias); K-tiled accumulation in f32 scratch."""
    k = pl.program_id(2)

    @pl.when(k == 0)
    def _():
        acc_ref[...] = jnp.zeros_like(acc_ref)

    acc_ref[...] += jnp.dot(a_ref[...], w_ref[...],
                            preferred_element_type=jnp.float32)

    @pl.when(k == pl.num_programs(2) - 1)
    def _():
        acc = acc_ref[...] + b_ref[...]
        if apply_act:  # static Python bool (not traced)
            acc = jnp.maximum(acc, 0.2 * acc)  # LeakyReLU(0.2)
        o_ref[...] = acc.astype(o_ref.dtype)


def _pick_tiles(m, n, k):
    tm = min(512, _round_up(m, 8))
    if n % 256 == 0:
        tn = 256
    elif n % 128 == 0:
        tn = 128
    else:
        tn = n  # e.g. Cout=64 layer: full-N block (masked stores)
    if k % 512 == 0:
        tk = 512
    elif k % 256 == 0:
        tk = 256
    elif k % 128 == 0:
        tk = 128
    else:
        tk = k
    return tm, tn, tk


def fused_conv_matmul(a, w, bias, apply_act, out_dtype):
    """O[M, N] = epilogue(A[M, K] @ W[K, N] + bias) with LeakyReLU option."""
    m, k = a.shape
    _, n = w.shape
    tm, tn, tk = _pick_tiles(m, n, k)

    m_pad = _round_up(m, tm)
    if m_pad != m:
        a = jnp.pad(a, ((0, m_pad - m), (0, 0)))

    grid = (m_pad // tm, n // tn, k // tk)

    # Double-buffered VMEM footprint (bf16 operands, f32 bias/acc) + headroom.
    out_item = jnp.dtype(out_dtype).itemsize
    footprint = (2 * (tm * tk * 2 + tk * tn * 2 + tn * 4)
                 + 2 * tm * tn * out_item + tm * tn * 4)
    vmem_limit = max(2 * footprint + (2 << 20), 8 << 20)

    kernel = functools.partial(_fused_matmul_kernel, apply_act=apply_act)
    out = pl.pallas_call(
        kernel,
        out_shape=jax.ShapeDtypeStruct((m_pad, n), out_dtype),
        grid_spec=pltpu.PrefetchScalarGridSpec(
            num_scalar_prefetch=0,
            grid=grid,
            in_specs=[
                pl.BlockSpec((tm, tk), lambda i, j, kk: (i, kk)),
                pl.BlockSpec((tk, tn), lambda i, j, kk: (kk, j)),
                pl.BlockSpec((1, tn), lambda i, j, kk: (0, j)),
            ],
            out_specs=pl.BlockSpec((tm, tn), lambda i, j, kk: (i, j)),
            scratch_shapes=[pltpu.VMEM((tm, tn), jnp.float32)],
        ),
        compiler_params=pltpu.CompilerParams(
            dimension_semantics=("parallel", "parallel", "arbitrary"),
            vmem_limit_bytes=int(vmem_limit)),
    )(a.astype(jnp.bfloat16), w, bias)
    return out[:m] if m_pad != m else out


def _im2col_s2k4p1(x_nhwc):
    """Patches for Conv2d(kernel=4, stride=2, pad=1). Returns (N*Ho*Wo, 16*C)."""
    n, h, w, c = x_nhwc.shape
    ho, wo = h // 2, w // 2
    xp = jnp.pad(x_nhwc, ((0, 0), (1, 1), (1, 1), (0, 0)))
    cols = []
    for kh in range(4):
        for kw in range(4):
            cols.append(xp[:, kh:kh + 2 * ho:2, kw:kw + 2 * wo:2, :])
    patches = jnp.stack(cols, axis=3)            # (N, Ho, Wo, 16, C)
    return patches.reshape(n * ho * wo, 16 * c), (n, ho, wo)


def _conv_layer(x_nhwc, wm, bias, apply_act, out_dtype):
    """wm: (16*Cin_pad, Cout) bf16 with BN scale folded; bias: (1, Cout) f32."""
    cin_needed = wm.shape[0] // 16
    if x_nhwc.shape[-1] < cin_needed:  # layer-1 lane padding (Cin 3 -> 8)
        pad_c = cin_needed - x_nhwc.shape[-1]
        x_nhwc = jnp.pad(x_nhwc, ((0, 0), (0, 0), (0, 0), (0, pad_c)))
    a, (n, ho, wo) = _im2col_s2k4p1(x_nhwc)
    cout = wm.shape[1]
    out = fused_conv_matmul(a, wm, bias, apply_act, out_dtype)
    return out.reshape(n, ho, wo, cout)


def init_params(num_channels, key):
    """Deterministic synthetic weights for the 4 conv + 3 BN layers.

    Returns a list of (weight_matrix_bf16, bias_f32) — BN scale is folded into
    the weight matrix; activation flags are static (layers 0-2 only).
    """
    chans = [num_channels, 64, 128, 256, 512]
    eps = 1e-5
    keys = jax.random.split(key, 20)
    params = []
    for li in range(4):
        cin, cout = chans[li], chans[li + 1]
        k0, k1, k2, k3, k4 = keys[5 * li:5 * li + 5]
        w = 0.05 * jax.random.normal(k0, (cout, cin, 4, 4), jnp.float32)
        if li < 3:
            gamma = 1.0 + 0.1 * jax.random.normal(k1, (cout,), jnp.float32)
            beta = 0.1 * jax.random.normal(k2, (cout,), jnp.float32)
            run_mean = 0.1 * jax.random.normal(k3, (cout,), jnp.float32)
            run_var = 0.5 + jnp.abs(jax.random.normal(k4, (cout,), jnp.float32))
            scale = gamma / jnp.sqrt(run_var + eps)
            bias = beta - run_mean * scale
        else:  # last conv: no BN, no activation
            scale = jnp.ones((cout,), jnp.float32)
            bias = jnp.zeros((cout,), jnp.float32)
        # Pad Cin to a lane-friendly multiple of 8 (layer 1: 3 -> 8 => K = 128).
        cin_pad = _round_up(cin, 8)
        if cin_pad != cin:
            w = jnp.pad(w, ((0, 0), (0, cin_pad - cin), (0, 0), (0, 0)))
        # (Cout, Cin, kh, kw) -> (kh, kw, Cin, Cout) -> (16*Cin, Cout); matches
        # the (kh, kw, cin) ordering of the im2col K axis.  Fold BN scale.
        wm = jnp.transpose(w, (2, 3, 1, 0)).reshape(16 * cin_pad, cout)
        wm = (wm * scale[None, :]).astype(jnp.bfloat16)
        params.append((wm, bias.reshape(1, -1)))
    return params


def frame_map_forward(videos, params):
    """videos: (B, C, T, H, W) -> (T, B, 512, H//16, W//16)."""
    b, c, t, h, w = videos.shape
    # permute(0,2,1,3,4) then loop over frames & stack == fold T into batch
    # with T as the leading (stack) axis.
    frames = jnp.transpose(videos, (2, 0, 1, 3, 4)).reshape(t * b, c, h, w)
    x = jnp.transpose(frames, (0, 2, 3, 1)).astype(jnp.bfloat16)  # NCHW -> NHWC
    n_layers = len(params)
    for li, (wm, bias) in enumerate(params):
        last = li == n_layers - 1
        apply_act = not last               # static Python bool
        out_dtype = jnp.float32 if last else jnp.bfloat16
        x = _conv_layer(x, wm, bias, apply_act, out_dtype)
    ho, wo, cout = x.shape[1], x.shape[2], x.shape[3]
    x = jnp.transpose(x, (0, 3, 1, 2)).reshape(t, b, cout, ho, wo)
    return x


if __name__ == "__main__":
    key = jax.random.PRNGKey(0)
    k_param, k_data = jax.random.split(key)

    B, C, T, H, W = 2, 3, 4, 32, 32
    videos = jax.random.normal(k_data, (B, C, T, H, W), jnp.float32)
    params = init_params(C, k_param)

    out = jax.jit(frame_map_forward)(videos, params)
    out = jax.block_until_ready(out)

    assert out.shape == (T, B, 512, H // 16, W // 16), out.shape
    assert out.dtype == jnp.float32
    assert jnp.all(jnp.isfinite(out))
    print("KERNEL_OK")
</pallas_src>

<mosaic_0001>
module attributes {stable_mosaic.version = 11 : i64} {
  func.func @_fused_matmul_kernel(%arg0: i32, %arg1: i32, %arg2: i32, %arg3: memref<512x128xbf16, #tpu.memory_space<vmem>>, %arg4: memref<128x64xbf16, #tpu.memory_space<vmem>>, %arg5: memref<1x64xf32, #tpu.memory_space<vmem>>, %arg6: memref<512x64xbf16, #tpu.memory_space<vmem>>, %arg7: memref<512x64xf32, #tpu.memory_space<vmem>>) attributes {dimension_semantics = [#tpu.dimension_semantics<parallel>, #tpu.dimension_semantics<parallel>, #tpu.dimension_semantics<arbitrary>], iteration_bounds = array<i64: 4, 1, 1>, scalar_prefetch = 0 : i64, scratch_operands = 1 : i64, tpu.core_type = #tpu.core_type<tc>, window_params = [{transform_indices = @transform_0, window_bounds = array<i64: 512, 128>}, {transform_indices = @transform_1, window_bounds = array<i64: 128, 64>}, {transform_indices = @transform_2, window_bounds = array<i64: 1, 64>}, {transform_indices = @transform_3, window_bounds = array<i64: 512, 64>}]} {
    %c0_i32 = arith.constant 0 : i32
    %0 = arith.cmpi eq, %arg2, %c0_i32 : i32
    %1 = arith.extui %0 : i1 to i32
    %c0_i32_0 = arith.constant 0 : i32
    %2 = arith.cmpi ne, %1, %c0_i32_0 : i32
    scf.if %2 {
      %cst_10 = arith.constant 0.000000e+00 : f32
      %12 = vector.broadcast %cst_10 : f32 to vector<512x64xf32>
      %c0_11 = arith.constant 0 : index
      %c0_12 = arith.constant 0 : index
      %13 = vector.load %arg7[%c0_11, %c0_12] : memref<512x64xf32, #tpu.memory_space<vmem>>, vector<512x64xf32>
      tpu.vector_store %arg7[%c0_11, %c0_12], %12 {strides = array<i32>} : memref<512x64xf32, #tpu.memory_space<vmem>>, vector<512x64xf32>,
    } else {
    }
    %c0 = arith.constant 0 : index
    %c0_1 = arith.constant 0 : index
    %3 = vector.load %arg7[%c0, %c0_1] : memref<512x64xf32, #tpu.memory_space<vmem>>, vector<512x64xf32>
    %c0_2 = arith.constant 0 : index
    %c0_3 = arith.constant 0 : index
    %4 = vector.load %arg3[%c0_2, %c0_3] : memref<512x128xbf16, #tpu.memory_space<vmem>>, vector<512x128xbf16>
    %c0_4 = arith.constant 0 : index
    %c0_5 = arith.constant 0 : index
    %5 = vector.load %arg4[%c0_4, %c0_5] : memref<128x64xbf16, #tpu.memory_space<vmem>>, vector<128x64xbf16>
    %cst = arith.constant dense<0.000000e+00> : vector<512x64xf32>
    %6 = tpu.matmul %4, %5, %cst {dimension_numbers = #tpu.dot_dimension_numbers<[1], [0], [0], [1], [0, 0, 1, 1], [], []>} : vector<512x128xbf16>, vector<128x64xbf16>, vector<512x64xf32> -> vector<512x64xf32>
    %7 = arith.addf %3, %6 : vector<512x64xf32>
    %c0_6 = arith.constant 0 : index
    %c0_7 = arith.constant 0 : index
    %8 = vector.load %arg7[%c0_6, %c0_7] : memref<512x64xf32, #tpu.memory_space<vmem>>, vector<512x64xf32>
    tpu.vector_store %arg7[%c0_6, %c0_7], %7 {strides = array<i32>} : memref<512x64xf32, #tpu.memory_space<vmem>>, vector<512x64xf32>,
    %c0_i32_8 = arith.constant 0 : i32
    %9 = arith.cmpi eq, %arg2, %c0_i32_8 : i32
    %10 = arith.extui %9 : i1 to i32
    %c0_i32_9 = arith.constant 0 : i32
    %11 = arith.cmpi ne, %10, %c0_i32_9 : i32
    scf.if %11 {
      %c0_10 = arith.constant 0 : index
      %c0_11 = arith.constant 0 : index
      %12 = vector.load %arg7[%c0_10, %c0_11] : memref<512x64xf32, #tpu.memory_space<vmem>>, vector<512x64xf32>
      %c0_12 = arith.constant 0 : index
      %c0_13 = arith.constant 0 : index
      %13 = vector.load %arg5[%c0_12, %c0_13] : memref<1x64xf32, #tpu.memory_space<vmem>>, vector<1x64xf32>
      %14 = vector.broadcast %13 : vector<1x64xf32> to vector<512x64xf32>
      %15 = arith.addf %12, %14 : vector<512x64xf32>
      %cst_14 = arith.constant 2.000000e-01 : f32
      %16 = vector.broadcast %cst_14 : f32 to vector<512x64xf32>
      %17 = arith.mulf %16, %15 : vector<512x64xf32>
      %18 = arith.maximumf %15, %17 : vector<512x64xf32>
      %19 = arith.truncf %18 : vector<512x64xf32> to vector<512x64xbf16>
      %c0_15 = arith.constant 0 : index
      %c0_16 = arith.constant 0 : index
      %20 = vector.load %arg6[%c0_15, %c0_16] : memref<512x64xbf16, #tpu.memory_space<vmem>>, vector<512x64xbf16>
      tpu.vector_store %arg6[%c0_15, %c0_16], %19 {strides = array<i32>} : memref<512x64xbf16, #tpu.memory_space<vmem>>, vector<512x64xbf16>,
    } else {
    }
    return
  }
  func.func @transform_0(%arg0: i32, %arg1: i32, %arg2: i32) -> (i32, i32) {
    %c0_i32 = arith.constant 0 : i32
    return %arg0, %arg2 : i32, i32
  }
  func.func @transform_1(%arg0: i32, %arg1: i32, %arg2: i32) -> (i32, i32) {
    %c0_i32 = arith.constant 0 : i32
    return %arg2, %arg1 : i32, i32
  }
  func.func @transform_2(%arg0: i32, %arg1: i32, %arg2: i32) -> (i32, i32) {
    %c0_i32 = arith.constant 0 : i32
    %c0_i32_0 = arith.constant 0 : i32
    return %c0_i32, %arg1 : i32, i32
  }
  func.func @transform_3(%arg0: i32, %arg1: i32, %arg2: i32) -> (i32, i32) {
    %c0_i32 = arith.constant 0 : i32
    return %arg0, %arg1 : i32, i32
  }
}

module attributes {stable_mosaic.version = 11 : i64} {
  func.func @_fused_matmul_kernel(%arg0: i32, %arg1: i32, %arg2: i32, %arg3: memref<512x512xbf16, #tpu.memory_space<vmem>>, %arg4: memref<512x128xbf16, #tpu.memory_space<vmem>>, %arg5: memref<1x128xf32, #tpu.memory_space<vmem>>, %arg6: memref<512x128xbf16, #tpu.memory_space<vmem>>, %arg7: memref<512x128xf32, #tpu.memory_space<vmem>>) attributes {dimension_semantics = [#tpu.dimension_semantics<parallel>, #tpu.dimension_semantics<parallel>, #tpu.dimension_semantics<arbitrary>], iteration_bounds = array<i64: 1, 1, 2>, scalar_prefetch = 0 : i64, scratch_operands = 1 : i64, tpu.core_type = #tpu.core_type<tc>, window_params = [{transform_indices = @transform_0, window_bounds = array<i64: 512, 512>}, {transform_indices = @transform_1, window_bounds = array<i64: 512, 128>}, {transform_indices = @transform_2, window_bounds = array<i64: 1, 128>}, {transform_indices = @transform_3, window_bounds = array<i64: 512, 128>}]} {
    %c0_i32 = arith.constant 0 : i32
    %0 = arith.cmpi eq, %arg2, %c0_i32 : i32
    %1 = arith.extui %0 : i1 to i32
    %c0_i32_0 = arith.constant 0 : i32
    %2 = arith.cmpi ne, %1, %c0_i32_0 : i32
    scf.if %2 {
      %cst_9 = arith.constant 0.000000e+00 : f32
      %12 = vector.broadcast %cst_9 : f32 to vector<512x128xf32>
      %c0_10 = arith.constant 0 : index
      %c0_11 = arith.constant 0 : index
      %13 = vector.load %arg7[%c0_10, %c0_11] : memref<512x128xf32, #tpu.memory_space<vmem>>, vector<512x128xf32>
      tpu.vector_store %arg7[%c0_10, %c0_11], %12 {strides = array<i32>} : memref<512x128xf32, #tpu.memory_space<vmem>>, vector<512x128xf32>,
    } else {
    }
    %c0 = arith.constant 0 : index
    %c0_1 = arith.constant 0 : index
    %3 = vector.load %arg7[%c0, %c0_1] : memref<512x128xf32, #tpu.memory_space<vmem>>, vector<512x128xf32>
    %c0_2 = arith.constant 0 : index
    %c0_3 = arith.constant 0 : index
    %4 = vector.load %arg3[%c0_2, %c0_3] : memref<512x512xbf16, #tpu.memory_space<vmem>>, vector<512x512xbf16>
    %c0_4 = arith.constant 0 : index
    %c0_5 = arith.constant 0 : index
    %5 = vector.load %arg4[%c0_4, %c0_5] : memref<512x128xbf16, #tpu.memory_space<vmem>>, vector<512x128xbf16>
    %cst = arith.constant dense<0.000000e+00> : vector<512x128xf32>
    %6 = tpu.matmul %4, %5, %cst {dimension_numbers = #tpu.dot_dimension_numbers<[1], [0], [0], [1], [0, 0, 1, 1], [], []>} : vector<512x512xbf16>, vector<512x128xbf16>, vector<512x128xf32> -> vector<512x128xf32>
    %7 = arith.addf %3, %6 : vector<512x128xf32>
    %c0_6 = arith.constant 0 : index
    %c0_7 = arith.constant 0 : index
    %8 = vector.load %arg7[%c0_6, %c0_7] : memref<512x128xf32, #tpu.memory_space<vmem>>, vector<512x128xf32>
    tpu.vector_store %arg7[%c0_6, %c0_7], %7 {strides = array<i32>} : memref<512x128xf32, #tpu.memory_space<vmem>>, vector<512x128xf32>,
    %c1_i32 = arith.constant 1 : i32
    %9 = arith.cmpi eq, %arg2, %c1_i32 : i32
    %10 = arith.extui %9 : i1 to i32
    %c0_i32_8 = arith.constant 0 : i32
    %11 = arith.cmpi ne, %10, %c0_i32_8 : i32
    scf.if %11 {
      %c0_9 = arith.constant 0 : index
      %c0_10 = arith.constant 0 : index
      %12 = vector.load %arg7[%c0_9, %c0_10] : memref<512x128xf32, #tpu.memory_space<vmem>>, vector<512x128xf32>
      %c0_11 = arith.constant 0 : index
      %c0_12 = arith.constant 0 : index
      %13 = vector.load %arg5[%c0_11, %c0_12] : memref<1x128xf32, #tpu.memory_space<vmem>>, vector<1x128xf32>
      %14 = vector.broadcast %13 : vector<1x128xf32> to vector<512x128xf32>
      %15 = arith.addf %12, %14 : vector<512x128xf32>
      %cst_13 = arith.constant 2.000000e-01 : f32
      %16 = vector.broadcast %cst_13 : f32 to vector<512x128xf32>
      %17 = arith.mulf %16, %15 : vector<512x128xf32>
      %18 = arith.maximumf %15, %17 : vector<512x128xf32>
      %19 = arith.truncf %18 : vector<512x128xf32> to vector<512x128xbf16>
      %c0_14 = arith.constant 0 : index
      %c0_15 = arith.constant 0 : index
      %20 = vector.load %arg6[%c0_14, %c0_15] : memref<512x128xbf16, #tpu.memory_space<vmem>>, vector<512x128xbf16>
      tpu.vector_store %arg6[%c0_14, %c0_15], %19 {strides = array<i32>} : memref<512x128xbf16, #tpu.memory_space<vmem>>, vector<512x128xbf16>,
    } else {
    }
    return
  }
  func.func @transform_0(%arg0: i32, %arg1: i32, %arg2: i32) -> (i32, i32) {
    %c0_i32 = arith.constant 0 : i32
    return %arg0, %arg2 : i32, i32
  }
  func.func @transform_1(%arg0: i32, %arg1: i32, %arg2: i32) -> (i32, i32) {
    %c0_i32 = arith.constant 0 : i32
    return %arg2, %arg1 : i32, i32
  }
  func.func @transform_2(%arg0: i32, %arg1: i32, %arg2: i32) -> (i32, i32) {
    %c0_i32 = arith.constant 0 : i32
    %c0_i32_0 = arith.constant 0 : i32
    return %c0_i32, %arg1 : i32, i32
  }
  func.func @transform_3(%arg0: i32, %arg1: i32, %arg2: i32) -> (i32, i32) {
    %c0_i32 = arith.constant 0 : i32
    return %arg0, %arg1 : i32, i32
  }
}

module attributes {stable_mosaic.version = 11 : i64} {
  func.func @_fused_matmul_kernel(%arg0: i32, %arg1: i32, %arg2: i32, %arg3: memref<128x512xbf16, #tpu.memory_space<vmem>>, %arg4: memref<512x256xbf16, #tpu.memory_space<vmem>>, %arg5: memref<1x256xf32, #tpu.memory_space<vmem>>, %arg6: memref<128x256xbf16, #tpu.memory_space<vmem>>, %arg7: memref<128x256xf32, #tpu.memory_space<vmem>>) attributes {dimension_semantics = [#tpu.dimension_semantics<parallel>, #tpu.dimension_semantics<parallel>, #tpu.dimension_semantics<arbitrary>], iteration_bounds = array<i64: 1, 1, 4>, scalar_prefetch = 0 : i64, scratch_operands = 1 : i64, tpu.core_type = #tpu.core_type<tc>, window_params = [{transform_indices = @transform_0, window_bounds = array<i64: 128, 512>}, {transform_indices = @transform_1, window_bounds = array<i64: 512, 256>}, {transform_indices = @transform_2, window_bounds = array<i64: 1, 256>}, {transform_indices = @transform_3, window_bounds = array<i64: 128, 256>}]} {
    %c0_i32 = arith.constant 0 : i32
    %0 = arith.cmpi eq, %arg2, %c0_i32 : i32
    %1 = arith.extui %0 : i1 to i32
    %c0_i32_0 = arith.constant 0 : i32
    %2 = arith.cmpi ne, %1, %c0_i32_0 : i32
    scf.if %2 {
      %cst_9 = arith.constant 0.000000e+00 : f32
      %12 = vector.broadcast %cst_9 : f32 to vector<128x256xf32>
      %c0_10 = arith.constant 0 : index
      %c0_11 = arith.constant 0 : index
      %13 = vector.load %arg7[%c0_10, %c0_11] : memref<128x256xf32, #tpu.memory_space<vmem>>, vector<128x256xf32>
      tpu.vector_store %arg7[%c0_10, %c0_11], %12 {strides = array<i32>} : memref<128x256xf32, #tpu.memory_space<vmem>>, vector<128x256xf32>,
    } else {
    }
    %c0 = arith.constant 0 : index
    %c0_1 = arith.constant 0 : index
    %3 = vector.load %arg7[%c0, %c0_1] : memref<128x256xf32, #tpu.memory_space<vmem>>, vector<128x256xf32>
    %c0_2 = arith.constant 0 : index
    %c0_3 = arith.constant 0 : index
    %4 = vector.load %arg3[%c0_2, %c0_3] : memref<128x512xbf16, #tpu.memory_space<vmem>>, vector<128x512xbf16>
    %c0_4 = arith.constant 0 : index
    %c0_5 = arith.constant 0 : index
    %5 = vector.load %arg4[%c0_4, %c0_5] : memref<512x256xbf16, #tpu.memory_space<vmem>>, vector<512x256xbf16>
    %cst = arith.constant dense<0.000000e+00> : vector<128x256xf32>
    %6 = tpu.matmul %4, %5, %cst {dimension_numbers = #tpu.dot_dimension_numbers<[1], [0], [0], [1], [0, 0, 1, 1], [], []>} : vector<128x512xbf16>, vector<512x256xbf16>, vector<128x256xf32> -> vector<128x256xf32>
    %7 = arith.addf %3, %6 : vector<128x256xf32>
    %c0_6 = arith.constant 0 : index
    %c0_7 = arith.constant 0 : index
    %8 = vector.load %arg7[%c0_6, %c0_7] : memref<128x256xf32, #tpu.memory_space<vmem>>, vector<128x256xf32>
    tpu.vector_store %arg7[%c0_6, %c0_7], %7 {strides = array<i32>} : memref<128x256xf32, #tpu.memory_space<vmem>>, vector<128x256xf32>,
    %c3_i32 = arith.constant 3 : i32
    %9 = arith.cmpi eq, %arg2, %c3_i32 : i32
    %10 = arith.extui %9 : i1 to i32
    %c0_i32_8 = arith.constant 0 : i32
    %11 = arith.cmpi ne, %10, %c0_i32_8 : i32
    scf.if %11 {
      %c0_9 = arith.constant 0 : index
      %c0_10 = arith.constant 0 : index
      %12 = vector.load %arg7[%c0_9, %c0_10] : memref<128x256xf32, #tpu.memory_space<vmem>>, vector<128x256xf32>
      %c0_11 = arith.constant 0 : index
      %c0_12 = arith.constant 0 : index
      %13 = vector.load %arg5[%c0_11, %c0_12] : memref<1x256xf32, #tpu.memory_space<vmem>>, vector<1x256xf32>
      %14 = vector.broadcast %13 : vector<1x256xf32> to vector<128x256xf32>
      %15 = arith.addf %12, %14 : vector<128x256xf32>
      %cst_13 = arith.constant 2.000000e-01 : f32
      %16 = vector.broadcast %cst_13 : f32 to vector<128x256xf32>
      %17 = arith.mulf %16, %15 : vector<128x256xf32>
      %18 = arith.maximumf %15, %17 : vector<128x256xf32>
      %19 = arith.truncf %18 : vector<128x256xf32> to vector<128x256xbf16>
      %c0_14 = arith.constant 0 : index
      %c0_15 = arith.constant 0 : index
      %20 = vector.load %arg6[%c0_14, %c0_15] : memref<128x256xbf16, #tpu.memory_space<vmem>>, vector<128x256xbf16>
      tpu.vector_store %arg6[%c0_14, %c0_15], %19 {strides = array<i32>} : memref<128x256xbf16, #tpu.memory_space<vmem>>, vector<128x256xbf16>,
    } else {
    }
    return
  }
  func.func @transform_0(%arg0: i32, %arg1: i32, %arg2: i32) -> (i32, i32) {
    %c0_i32 = arith.constant 0 : i32
    return %arg0, %arg2 : i32, i32
  }
  func.func @transform_1(%arg0: i32, %arg1: i32, %arg2: i32) -> (i32, i32) {
    %c0_i32 = arith.constant 0 : i32
    return %arg2, %arg1 : i32, i32
  }
  func.func @transform_2(%arg0: i32, %arg1: i32, %arg2: i32) -> (i32, i32) {
    %c0_i32 = arith.constant 0 : i32
    %c0_i32_0 = arith.constant 0 : i32
    return %c0_i32, %arg1 : i32, i32
  }
  func.func @transform_3(%arg0: i32, %arg1: i32, %arg2: i32) -> (i32, i32) {
    %c0_i32 = arith.constant 0 : i32
    return %arg0, %arg1 : i32, i32
  }
}

module attributes {stable_mosaic.version = 11 : i64} {
  func.func @_fused_matmul_kernel(%arg0: i32, %arg1: i32, %arg2: i32, %arg3: memref<32x512xbf16, #tpu.memory_space<vmem>>, %arg4: memref<512x256xbf16, #tpu.memory_space<vmem>>, %arg5: memref<1x256xf32, #tpu.memory_space<vmem>>, %arg6: memref<32x256xf32, #tpu.memory_space<vmem>>, %arg7: memref<32x256xf32, #tpu.memory_space<vmem>>) attributes {dimension_semantics = [#tpu.dimension_semantics<parallel>, #tpu.dimension_semantics<parallel>, #tpu.dimension_semantics<arbitrary>], iteration_bounds = array<i64: 1, 2, 8>, scalar_prefetch = 0 : i64, scratch_operands = 1 : i64, tpu.core_type = #tpu.core_type<tc>, window_params = [{transform_indices = @transform_0, window_bounds = array<i64: 32, 512>}, {transform_indices = @transform_1, window_bounds = array<i64: 512, 256>}, {transform_indices = @transform_2, window_bounds = array<i64: 1, 256>}, {transform_indices = @transform_3, window_bounds = array<i64: 32, 256>}]} {
    %c0_i32 = arith.constant 0 : i32
    %0 = arith.cmpi eq, %arg2, %c0_i32 : i32
    %1 = arith.extui %0 : i1 to i32
    %c0_i32_0 = arith.constant 0 : i32
    %2 = arith.cmpi ne, %1, %c0_i32_0 : i32
    scf.if %2 {
      %cst_9 = arith.constant 0.000000e+00 : f32
      %12 = vector.broadcast %cst_9 : f32 to vector<32x256xf32>
      %c0_10 = arith.constant 0 : index
      %c0_11 = arith.constant 0 : index
      %13 = vector.load %arg7[%c0_10, %c0_11] : memref<32x256xf32, #tpu.memory_space<vmem>>, vector<32x256xf32>
      tpu.vector_store %arg7[%c0_10, %c0_11], %12 {strides = array<i32>} : memref<32x256xf32, #tpu.memory_space<vmem>>, vector<32x256xf32>,
    } else {
    }
    %c0 = arith.constant 0 : index
    %c0_1 = arith.constant 0 : index
    %3 = vector.load %arg7[%c0, %c0_1] : memref<32x256xf32, #tpu.memory_space<vmem>>, vector<32x256xf32>
    %c0_2 = arith.constant 0 : index
    %c0_3 = arith.constant 0 : index
    %4 = vector.load %arg3[%c0_2, %c0_3] : memref<32x512xbf16, #tpu.memory_space<vmem>>, vector<32x512xbf16>
    %c0_4 = arith.constant 0 : index
    %c0_5 = arith.constant 0 : index
    %5 = vector.load %arg4[%c0_4, %c0_5] : memref<512x256xbf16, #tpu.memory_space<vmem>>, vector<512x256xbf16>
    %cst = arith.constant dense<0.000000e+00> : vector<32x256xf32>
    %6 = tpu.matmul %4, %5, %cst {dimension_numbers = #tpu.dot_dimension_numbers<[1], [0], [0], [1], [0, 0, 1, 1], [], []>} : vector<32x512xbf16>, vector<512x256xbf16>, vector<32x256xf32> -> vector<32x256xf32>
    %7 = arith.addf %3, %6 : vector<32x256xf32>
    %c0_6 = arith.constant 0 : index
    %c0_7 = arith.constant 0 : index
    %8 = vector.load %arg7[%c0_6, %c0_7] : memref<32x256xf32, #tpu.memory_space<vmem>>, vector<32x256xf32>
    tpu.vector_store %arg7[%c0_6, %c0_7], %7 {strides = array<i32>} : memref<32x256xf32, #tpu.memory_space<vmem>>, vector<32x256xf32>,
    %c7_i32 = arith.constant 7 : i32
    %9 = arith.cmpi eq, %arg2, %c7_i32 : i32
    %10 = arith.extui %9 : i1 to i32
    %c0_i32_8 = arith.constant 0 : i32
    %11 = arith.cmpi ne, %10, %c0_i32_8 : i32
    scf.if %11 {
      %c0_9 = arith.constant 0 : index
      %c0_10 = arith.constant 0 : index
      %12 = vector.load %arg7[%c0_9, %c0_10] : memref<32x256xf32, #tpu.memory_space<vmem>>, vector<32x256xf32>
      %c0_11 = arith.constant 0 : index
      %c0_12 = arith.constant 0 : index
      %13 = vector.load %arg5[%c0_11, %c0_12] : memref<1x256xf32, #tpu.memory_space<vmem>>, vector<1x256xf32>
      %14 = vector.broadcast %13 : vector<1x256xf32> to vector<32x256xf32>
      %15 = arith.addf %12, %14 : vector<32x256xf32>
      %c0_13 = arith.constant 0 : index
      %c0_14 = arith.constant 0 : index
      %16 = vector.load %arg6[%c0_13, %c0_14] : memref<32x256xf32, #tpu.memory_space<vmem>>, vector<32x256xf32>
      tpu.vector_store %arg6[%c0_13, %c0_14], %15 {strides = array<i32>} : memref<32x256xf32, #tpu.memory_space<vmem>>, vector<32x256xf32>,
    } else {
    }
    return
  }
  func.func @transform_0(%arg0: i32, %arg1: i32, %arg2: i32) -> (i32, i32) {
    %c0_i32 = arith.constant 0 : i32
    return %arg0, %arg2 : i32, i32
  }
  func.func @transform_1(%arg0: i32, %arg1: i32, %arg2: i32) -> (i32, i32) {
    %c0_i32 = arith.constant 0 : i32
    return %arg2, %arg1 : i32, i32
  }
  func.func @transform_2(%arg0: i32, %arg1: i32, %arg2: i32) -> (i32, i32) {
    %c0_i32 = arith.constant 0 : i32
    %c0_i32_0 = arith.constant 0 : i32
    return %c0_i32, %arg1 : i32, i32
  }
  func.func @transform_3(%arg0: i32, %arg1: i32, %arg2: i32) -> (i32, i32) {
    %c0_i32 = arith.constant 0 : i32
    return %arg0, %arg1 : i32, i32
  }
}

</mosaic_0001>

<llo_original>
// kernel: frame_map_forward.4
$region0: #{frame_map_forward.4}
  #allocation0 [shape = 'u32[]', space=smem, size = 0x4, offset = 0x4, fixed_abs, tag = 'smem constant byte address 0x4 - core index']
  #allocation1 [shape = 'u32[144,128]{1,0:T(1,128)}', space=vmem, size = 0x12000, scoped, tag = 'internal scratch']
  #allocation2 [shape = 'f32[512,64]{1,0:T(8,128)}', space=vmem, size = 0x40000, scoped, tag = 'scratch operand']
  %s0 = inlined_call_operand.vmem [shape: bf16[2048,128], index: 0, kind: input, shape index: {}]
  %s1 = inlined_call_operand.vmem [shape: bf16[128,64], index: 1, kind: input, shape index: {}]
  %s2 = inlined_call_operand.vmem [shape: f32[1,64], index: 2, kind: input, shape index: {}]
  %s3 = inlined_call_operand.vmem [shape: bf16[2048,64], index: 3, kind: output, shape index: {}]
  %s4 = sld [smem:[#allocation0]]
  $region53: #{frame_map_forward.4} parent=0
    _
  %s6 = ssub.s32 1, %s4
  %s7 = scalar_select 0, %s6, %s4
  loop: start=0, step=1, limit=6
  $region2: #{frame_map_forward.4} parent=0 // loop_pre_header
    _
  $region3: #{frame_map_forward.4} parent=0 // loop_header
    %s9 = sphi 0, %s13
    %p10 = scmp.ge.s32.totalorder %s9, 6
    %s16 = sphi 0, %s35
    %s17 = sphi 0, %s31
    %s18 = sphi 0, %s27
    %s19 = sphi 0, %s16
    %s20 = sphi 0, %s17
    %s21 = sphi 0, %s18
    %s22 = sphi 0, %s19
    %s23 = sphi 0, %s20
    %s24 = sphi 0, %s21
    %s40 = sphi 0, %s42
    %s43 = sphi 0, %s40
    %s44 = sphi 0, %s43
    %s60 = sphi 0, %s44
    %s68 = sphi 0, %s70
    %s71 = sphi 0, %s68
    %s72 = sphi 0, %s71
    %s88 = sphi 0, %s72
    %s94 = sphi 0, %s96
    %s97 = sphi 0, %s94
    %s98 = sphi 0, %s97
    %s114 = sphi 0, %s98
    %s122 = sphi 0, %s124
    %s125 = sphi 0, %s122
    %s126 = sphi 0, %s125
    %s142 = sphi 0, %s126
  $region4: #{frame_map_forward.4} parent=0 // loop_header_branch
    %12 = sbr.rel (%p10) target = $region8
  $region5: #{frame_map_forward.4} parent=0 // loop_body
    %s14 = ssub.s32 %s9, 1
    %s15 = ssub.s32 %s9, 2
    %s25 = sadd.s32 1, %s18
    %p26 = scmp.ge.s32.totalorder %s25, 1
    %s27 = scalar_select %p26, 0, %s25
    %s28 = sadd.s32 1, %s17
    %s29 = scalar_select %p26, %s28, %s17
    %p30 = scmp.ge.s32.totalorder %s29, 1
    %s31 = scalar_select %p30, 0, %s29
    %s32 = sadd.s32 1, %s16
    %s33 = scalar_select %p30, %s32, %s16
    %p34 = scmp.ge.s32.totalorder %s33, 4
    %s35 = scalar_select %p34, 0, %s33
    %s36 = ssub.s32 %s16, %s35
    %s37 = ssub.s32 %s18, %s27
    %s38 = sor.u32 %s36, %s37
    %p39 = scmp.eq.s32.totalorder %s38, 0
    %s41 = sadd.s32 %s40, 1
    %s42 = scalar_select %p39, %s40, %s41
    %p45 = pneg %p39
    %p46 = scmp.eq.s32.totalorder %s9, 3
    %p47 = por %p45, %p46
    %p48 = scmp.ne.s32.totalorder %s40, %s43
    %p49 = scmp.eq.s32.totalorder %s9, 0
    %p50 = por %p48, %p49
    %p51 = scmp.ne.s32.totalorder %s40, %s43
    %p52 = scmp.eq.s32.totalorder %s14, 3
    %p53 = por %p51, %p52
    %p54 = scmp.ne.s32.totalorder %s43, %s44
    %p55 = scmp.eq.s32.totalorder %s14, 0
    %p56 = por %p54, %p55
    %p57 = scmp.ne.s32.totalorder %s43, %s44
    %p58 = scmp.eq.s32.totalorder %s15, 3
    %p59 = por %p57, %p58
    %p61 = scmp.ne.s32.totalorder %s44, %s60
    %p62 = scmp.eq.s32.totalorder %s15, 0
    %p63 = por %p61, %p62
    %s64 = ssub.s32 %s18, %s27
    %s65 = ssub.s32 %s17, %s31
    %s66 = sor.u32 %s64, %s65
    %p67 = scmp.eq.s32.totalorder %s66, 0
    %s69 = sadd.s32 %s68, 1
    %s70 = scalar_select %p67, %s68, %s69
    %p73 = pneg %p67
    %p74 = scmp.eq.s32.totalorder %s9, 3
    %p75 = por %p73, %p74
    %p76 = scmp.ne.s32.totalorder %s68, %s71
    %p77 = scmp.eq.s32.totalorder %s9, 0
    %p78 = por %p76, %p77
    %p79 = scmp.ne.s32.totalorder %s68, %s71
    %p80 = scmp.eq.s32.totalorder %s14, 3
    %p81 = por %p79, %p80
    %p82 = scmp.ne.s32.totalorder %s71, %s72
    %p83 = scmp.eq.s32.totalorder %s14, 0
    %p84 = por %p82, %p83
    %p85 = scmp.ne.s32.totalorder %s71, %s72
    %p86 = scmp.eq.s32.totalorder %s15, 3
    %p87 = por %p85, %p86
    %p89 = scmp.ne.s32.totalorder %s72, %s88
    %p90 = scmp.eq.s32.totalorder %s15, 0
    %p91 = por %p89, %p90
    %s92 = ssub.s32 %s17, %s31
    %p93 = scmp.eq.s32.totalorder %s92, 0
    %s95 = sadd.s32 %s94, 1
    %s96 = scalar_select %p93, %s94, %s95
    %p99 = pneg %p93
    %p100 = scmp.eq.s32.totalorder %s9, 3
    %p101 = por %p99, %p100
    %p102 = scmp.ne.s32.totalorder %s94, %s97
    %p103 = scmp.eq.s32.totalorder %s9, 0
    %p104 = por %p102, %p103
    %p105 = scmp.ne.s32.totalorder %s94, %s97
    %p106 = scmp.eq.s32.totalorder %s14, 3
    %p107 = por %p105, %p106
    %p108 = scmp.ne.s32.totalorder %s97, %s98
    %p109 = scmp.eq.s32.totalorder %s14, 0
    %p110 = por %p108, %p109
    %p111 = scmp.ne.s32.totalorder %s97, %s98
    %p112 = scmp.eq.s32.totalorder %s15, 3
    %p113 = por %p111, %p112
    %p115 = scmp.ne.s32.totalorder %s98, %s114
    %p116 = scmp.eq.s32.totalorder %s15, 0
    %p117 = por %p115, %p116
    %s118 = ssub.s32 %s16, %s35
    %s119 = ssub.s32 %s17, %s31
    %s120 = sor.u32 %s118, %s119
    %p121 = scmp.eq.s32.totalorder %s120, 0
    %s123 = sadd.s32 %s122, 1
    %s124 = scalar_select %p121, %s122, %s123
    %p127 = pneg %p121
    %p128 = scmp.eq.s32.totalorder %s9, 3
    %p129 = por %p127, %p128
    %p130 = scmp.ne.s32.totalorder %s122, %s125
    %p131 = scmp.eq.s32.totalorder %s9, 0
    %p132 = por %p130, %p131
    %p133 = scmp.ne.s32.totalorder %s122, %s125
    %p134 = scmp.eq.s32.totalorder %s14, 3
    %p135 = por %p133, %p134
    %p136 = scmp.ne.s32.totalorder %s125, %s126
    %p137 = scmp.eq.s32.totalorder %s14, 0
    %p138 = por %p136, %p137
    %p139 = scmp.ne.s32.totalorder %s125, %s126
    %p140 = scmp.eq.s32.totalorder %s15, 3
    %p141 = por %p139, %p140
    %p143 = scmp.ne.s32.totalorder %s126, %s142
    %p144 = scmp.eq.s32.totalorder %s15, 0
    %p145 = por %p143, %p144
    %p146 = scmp.le.s32.totalorder 1, %s9
    %p147 = scmp.lt.s32.totalorder %s9, 5
    %p148 = pnand %p146, %p147
    %p149 = pneg %p148
    // Predicated region
    $region9: #{frame_map_forward.4} parent=5 // pred_check
      _
    $region10: #{frame_map_forward.4} parent=5 // pred_check_branch
      %151 = sbr.rel (%p148) target = $region12
    $region11: #{frame_map_forward.4} parent=5 // pred_region
      %s152 = ssub.s32 %s9, 1
      // Predicated region
      $region13: #{frame_map_forward.4} parent=11 // pred_check
        %p153 = pneg %p84
      $region14: #{frame_map_forward.4} parent=11 // pred_check_branch
        %155 = sbr.rel (%p153) target = $region16
      $region15: #{frame_map_forward.4} parent=11 // pred_region
        %s156 = smul.u32 16, %s21
        %p157 = scmp.lt.s32.totalorder %s156, 15
        %s158 = scalar_select %p157, %s156, 15
        %p159 = scmp.lt.s32.totalorder %s20, 0
        %s160 = scalar_select %p159, %s20, 0
        %s161 = sadd.s32 %s160, %s158
        %s162 = smul.addr %s161, 4
        %s163 = scalar_lea.vmem %s1, %s162
        %s164 = smul.u32 16, %s21
      $region16: #{frame_map_forward.4} parent=11 // pred_fallthru
        _
      // Predicated region
      $region17: #{frame_map_forward.4} parent=11 // pred_check
        %p165 = pneg %p110
      $region18: #{frame_map_forward.4} parent=11 // pred_check_branch
        %167 = sbr.rel (%p165) target = $region20
      $region19: #{frame_map_forward.4} parent=11 // pred_region
        %p168 = scmp.lt.s32.totalorder %s20, 0
        %s169 = scalar_select %p168, %s20, 0
        %s170 = scalar_lea.vmem %s2, %s169
      $region20: #{frame_map_forward.4} parent=11 // pred_fallthru
        _
    $region12: #{frame_map_forward.4} parent=5 // pred_fallthru
      _
    %p171 = scmp.lt.s32.totalorder %s9, 4
    // Predicated region
    $region21: #{frame_map_forward.4} parent=5 // pred_check
      %p172 = pneg %p171
    $region22: #{frame_map_forward.4} parent=5 // pred_check_branch
      %174 = sbr.rel (%p172) target = $region24
    $region23: #{frame_map_forward.4} parent=5 // pred_region
      // Predicated region
      $region25: #{frame_map_forward.4} parent=23 // pred_check
        %p175 = pneg %p50
      $region26: #{frame_map_forward.4} parent=23 // pred_check_branch
        %177 = sbr.rel (%p175) target = $region28
      $region27: #{frame_map_forward.4} parent=23 // pred_region
        %s178 = smul.u32 64, %s16
        %p179 = scmp.lt.s32.totalorder %s178, 255
        %s180 = scalar_select %p179, %s178, 255
        %p181 = scmp.lt.s32.totalorder %s18, 0
        %s182 = scalar_select %p181, %s18, 0
        %s183 = sadd.s32 %s182, %s180
        %s184 = smul.addr %s183, 4
        %s185 = scalar_lea.vmem %s0, %s184
        %s186 = smul.u32 64, %s16
      $region28: #{frame_map_forward.4} parent=23 // pred_fallthru
        _
    $region24: #{frame_map_forward.4} parent=5 // pred_fallthru
      _
    %p187 = scmp.le.s32.totalorder 1, %s9
    %p188 = scmp.lt.s32.totalorder %s9, 5
    %p189 = pnand %p187, %p188
    %p190 = pneg %p189
    // Predicated region
    $region29: #{frame_map_forward.4} parent=5 // pred_check
      _
    $region30: #{frame_map_forward.4} parent=5 // pred_check_branch
      %192 = sbr.rel (%p189) target = $region32
    $region31: #{frame_map_forward.4} parent=5 // pred_region
      %s193 = ssub.s32 %s9, 1
      %s194 = smul.u32 64, %s19
      %p195 = scmp.lt.s32.totalorder %s194, 255
      %s196 = scalar_select %p195, %s194, 255
      %p197 = scmp.lt.s32.totalorder %s21, 0
      %s198 = scalar_select %p197, %s21, 0
      %s199 = sadd.s32 %s198, %s196
      %s200 = smul.addr %s199, 4
      %s201 = scalar_lea.vmem %s0, %s200
      %p202 = pneg %p56
      %p203 = pneg %p53
      %s204 = smul.u32 16, %s21
      %p205 = scmp.lt.s32.totalorder %s204, 15
      %s206 = scalar_select %p205, %s204, 15
      %p207 = scmp.lt.s32.totalorder %s20, 0
      %s208 = scalar_select %p207, %s20, 0
      %s209 = sadd.s32 %s208, %s206
      %s210 = smul.addr %s209, 4
      %s211 = scalar_lea.vmem %s1, %s210
      %p212 = pneg %p84
      %p213 = pneg %p81
      %p214 = scmp.lt.s32.totalorder %s20, 0
      %s215 = scalar_select %p214, %s20, 0
      %s216 = scalar_lea.vmem %s2, %s215
      %p217 = pneg %p110
      %p218 = pneg %p107
      %p219 = pneg %p138
      %p220 = pneg %p135
      %s221 = smul.u32 64, %s19
      %p222 = scmp.lt.s32.totalorder %s221, 255
      %s223 = scalar_select %p222, %s221, 255
      %p224 = scmp.lt.s32.totalorder %s20, 0
      %s225 = scalar_select %p224, %s20, 0
      %s226 = sadd.s32 %s225, %s223
      %s227 = smul.addr %s226, 4
      %s228 = scalar_lea.vmem %s3, %s227
      %s229 = smul.u32 64, %s19
      %p230 = scmp.lt.s32.totalorder %s229, 255
      %s231 = scalar_select %p230, %s229, 255
      %p232 = scmp.lt.s32.totalorder %s21, 0
      %s233 = scalar_select %p232, %s21, 0
      %s234 = sadd.s32 %s233, %s231
      %s235 = smul.addr %s234, 4
      %s236 = scalar_lea.vmem %s0, %s235
      %s237 = smul.u32 64, %s19
      %s238 = smul.u32 16, %s21
      %p239 = scmp.lt.s32.totalorder %s238, 15
      %s240 = scalar_select %p239, %s238, 15
      %p241 = scmp.lt.s32.totalorder %s20, 0
      %s242 = scalar_select %p241, %s20, 0
      %s243 = sadd.s32 %s242, %s240
      %s244 = smul.addr %s243, 4
      %s245 = scalar_lea.vmem %s1, %s244
      %s246 = smul.u32 16, %s21
      %p247 = scmp.lt.s32.totalorder %s20, 0
      %s248 = scalar_select %p247, %s20, 0
      %s249 = scalar_lea.vmem %s2, %s248
      %s250 = smul.u32 64, %s19
      %p251 = scmp.lt.s32.totalorder %s250, 255
      %s252 = scalar_select %p251, %s250, 255
      %p253 = scmp.lt.s32.totalorder %s20, 0
      %s254 = scalar_select %p253, %s20, 0
      %s255 = sadd.s32 %s254, %s252
      %s256 = smul.addr %s255, 4
      %s257 = scalar_lea.vmem %s3, %s256
      %s258 = smul.u32 64, %s19
      %p260 = scmp.eq.s32.totalorder %s21, 0
      // Predicated region
      $region33: #{frame_map_forward.4} parent=31 // pred_check
        %p261 = pneg %p260
      $region34: #{frame_map_forward.4} parent=31 // pred_check_branch
        %263 = sbr.rel (%p261) target = $region36
      $region35: #{frame_map_forward.4} parent=31 // pred_region
        %vm264 = vcmask 523264
        %265 = vst.msk [vmem:[#allocation2] sm:$0xff] %vm264, 0.0
        %266 = vst.msk [vmem:[#allocation2 + $0x8] sm:$0xff] %vm264, 0.0
        %267 = vst.msk [vmem:[#allocation2 + $0x10] sm:$0xff] %vm264, 0.0
        %268 = vst.msk [vmem:[#allocation2 + $0x18] sm:$0xff] %vm264, 0.0
        %269 = vst.msk [vmem:[#allocation2 + $0x20] sm:$0xff] %vm264, 0.0
        %270 = vst.msk [vmem:[#allocation2 + $0x28] sm:$0xff] %vm264, 0.0
        %271 = vst.msk [vmem:[#allocation2 + $0x30] sm:$0xff] %vm264, 0.0
        %272 = vst.msk [vmem:[#allocation2 + $0x38] sm:$0xff] %vm264, 0.0
        %273 = vst.msk [vmem:[#allocation2 + $0x40] sm:$0xff] %vm264, 0.0
        %274 = vst.msk [vmem:[#allocation2 + $0x48] sm:$0xff] %vm264, 0.0
        %275 = vst.msk [vmem:[#allocation2 + $0x50] sm:$0xff] %vm264, 0.0
        %276 = vst.msk [vmem:[#allocation2 + $0x58] sm:$0xff] %vm264, 0.0
        %277 = vst.msk [vmem:[#allocation2 + $0x60] sm:$0xff] %vm264, 0.0
        %278 = vst.msk [vmem:[#allocation2 + $0x68] sm:$0xff] %vm264, 0.0
        %279 = vst.msk [vmem:[#allocation2 + $0x70] sm:$0xff] %vm264, 0.0
        %280 = vst.msk [vmem:[#allocation2 + $0x78] sm:$0xff] %vm264, 0.0
        %281 = vst.msk [vmem:[#allocation2 + $0x80] sm:$0xff] %vm264, 0.0
        %282 = vst.msk [vmem:[#allocation2 + $0x88] sm:$0xff] %vm264, 0.0
        %283 = vst.msk [vmem:[#allocation2 + $0x90] sm:$0xff] %vm264, 0.0
        %284 = vst.msk [vmem:[#allocation2 + $0x98] sm:$0xff] %vm264, 0.0
        %285 = vst.msk [vmem:[#allocation2 + $0xa0] sm:$0xff] %vm264, 0.0
        %286 = vst.msk [vmem:[#allocation2 + $0xa8] sm:$0xff] %vm264, 0.0
        %287 = vst.msk [vmem:[#allocation2 + $0xb0] sm:$0xff] %vm264, 0.0
        %288 = vst.msk [vmem:[#allocation2 + $0xb8] sm:$0xff] %vm264, 0.0
        %289 = vst.msk [vmem:[#allocation2 + $0xc0] sm:$0xff] %vm264, 0.0
        %290 = vst.msk [vmem:[#allocation2 + $0xc8] sm:$0xff] %vm264, 0.0
        %291 = vst.msk [vmem:[#allocation2 + $0xd0] sm:$0xff] %vm264, 0.0
        %292 = vst.msk [vmem:[#allocation2 + $0xd8] sm:$0xff] %vm264, 0.0
        %293 = vst.msk [vmem:[#allocation2 + $0xe0] sm:$0xff] %vm264, 0.0
        %294 = vst.msk [vmem:[#allocation2 + $0xe8] sm:$0xff] %vm264, 0.0
        %295 = vst.msk [vmem:[#allocation2 + $0xf0] sm:$0xff] %vm264, 0.0
        %296 = vst.msk [vmem:[#allocation2 + $0xf8] sm:$0xff] %vm264, 0.0
        %297 = vst.msk [vmem:[#allocation2 + $0x100] sm:$0xff] %vm264, 0.0
        %298 = vst.msk [vmem:[#allocation2 + $0x108] sm:$0xff] %vm264, 0.0
        %299 = vst.msk [vmem:[#allocation2 + $0x110] sm:$0xff] %vm264, 0.0
        %300 = vst.msk [vmem:[#allocation2 + $0x118] sm:$0xff] %vm264, 0.0
        %301 = vst.msk [vmem:[#allocation2 + $0x120] sm:$0xff] %vm264, 0.0
        %302 = vst.msk [vmem:[#allocation2 + $0x128] sm:$0xff] %vm264, 0.0
        %303 = vst.msk [vmem:[#allocation2 + $0x130] sm:$0xff] %vm264, 0.0
        %304 = vst.msk [vmem:[#allocation2 + $0x138] sm:$0xff] %vm264, 0.0
        %305 = vst.msk [vmem:[#allocation2 + $0x140] sm:$0xff] %vm264, 0.0
        %306 = vst.msk [vmem:[#allocation2 + $0x148] sm:$0xff] %vm264, 0.0
        %307 = vst.msk [vmem:[#allocation2 + $0x150] sm:$0xff] %vm264, 0.0
        %308 = vst.msk [vmem:[#allocation2 + $0x158] sm:$0xff] %vm264, 0.0
        %309 = vst.msk [vmem:[#allocation2 + $0x160] sm:$0xff] %vm264, 0.0
        %310 = vst.msk [vmem:[#allocation2 + $0x168] sm:$0xff] %vm264, 0.0
        %311 = vst.msk [vmem:[#allocation2 + $0x170] sm:$0xff] %vm264, 0.0
        %312 = vst.msk [vmem:[#allocation2 + $0x178] sm:$0xff] %vm264, 0.0
        %313 = vst.msk [vmem:[#allocation2 + $0x180] sm:$0xff] %vm264, 0.0
        %314 = vst.msk [vmem:[#allocation2 + $0x188] sm:$0xff] %vm264, 0.0
        %315 = vst.msk [vmem:[#allocation2 + $0x190] sm:$0xff] %vm264, 0.0
        %316 = vst.msk [vmem:[#allocation2 + $0x198] sm:$0xff] %vm264, 0.0
        %317 = vst.msk [vmem:[#allocation2 + $0x1a0] sm:$0xff] %vm264, 0.0
        %318 = vst.msk [vmem:[#allocation2 + $0x1a8] sm:$0xff] %vm264, 0.0
        %319 = vst.msk [vmem:[#allocation2 + $0x1b0] sm:$0xff] %vm264, 0.0
        %320 = vst.msk [vmem:[#allocation2 + $0x1b8] sm:$0xff] %vm264, 0.0
        %321 = vst.msk [vmem:[#allocation2 + $0x1c0] sm:$0xff] %vm264, 0.0
        %322 = vst.msk [vmem:[#allocation2 + $0x1c8] sm:$0xff] %vm264, 0.0
        %323 = vst.msk [vmem:[#allocation2 + $0x1d0] sm:$0xff] %vm264, 0.0
        %324 = vst.msk [vmem:[#allocation2 + $0x1d8] sm:$0xff] %vm264, 0.0
        %325 = vst.msk [vmem:[#allocation2 + $0x1e0] sm:$0xff] %vm264, 0.0
        %326 = vst.msk [vmem:[#allocation2 + $0x1e8] sm:$0xff] %vm264, 0.0
        %327 = vst.msk [vmem:[#allocation2 + $0x1f0] sm:$0xff] %vm264, 0.0
        %328 = vst.msk [vmem:[#allocation2 + $0x1f8] sm:$0xff] %vm264, 0.0
      $region36: #{frame_map_forward.4} parent=31 // pred_fallthru
        _
      %v329 = vld [vmem:[#allocation2] sm:$0xff]
      %v330 = vld [vmem:[#allocation2 + $0x8] sm:$0xff]
      %v331 = vld [vmem:[#allocation2 + $0x10] sm:$0xff]
      %v332 = vld [vmem:[#allocation2 + $0x18] sm:$0xff]
      %v333 = vld [vmem:[#allocation2 + $0x20] sm:$0xff]
      %v334 = vld [vmem:[#allocation2 + $0x28] sm:$0xff]
      %v335 = vld [vmem:[#allocation2 + $0x30] sm:$0xff]
      %v336 = vld [vmem:[#allocation2 + $0x38] sm:$0xff]
      %v337 = vld [vmem:[#allocation2 + $0x40] sm:$0xff]
      %v338 = vld [vmem:[#allocation2 + $0x48] sm:$0xff]
      %v339 = vld [vmem:[#allocation2 + $0x50] sm:$0xff]
      %v340 = vld [vmem:[#allocation2 + $0x58] sm:$0xff]
      %v341 = vld [vmem:[#allocation2 + $0x60] sm:$0xff]
      %v342 = vld [vmem:[#allocation2 + $0x68] sm:$0xff]
      %v343 = vld [vmem:[#allocation2 + $0x70] sm:$0xff]
      %v344 = vld [vmem:[#allocation2 + $0x78] sm:$0xff]
      %v345 = vld [vmem:[#allocation2 + $0x80] sm:$0xff]
      %v346 = vld [vmem:[#allocation2 + $0x88] sm:$0xff]
      %v347 = vld [vmem:[#allocation2 + $0x90] sm:$0xff]
      %v348 = vld [vmem:[#allocation2 + $0x98] sm:$0xff]
      %v349 = vld [vmem:[#allocation2 + $0xa0] sm:$0xff]
      %v350 = vld [vmem:[#allocation2 + $0xa8] sm:$0xff]
      %v351 = vld [vmem:[#allocation2 + $0xb0] sm:$0xff]
      %v352 = vld [vmem:[#allocation2 + $0xb8] sm:$0xff]
      %v353 = vld [vmem:[#allocation2 + $0xc0] sm:$0xff]
      %v354 = vld [vmem:[#allocation2 + $0xc8] sm:$0xff]
      %v355 = vld [vmem:[#allocation2 + $0xd0] sm:$0xff]
      %v356 = vld [vmem:[#allocation2 + $0xd8] sm:$0xff]
      %v357 = vld [vmem:[#allocation2 + $0xe0] sm:$0xff]
      %v358 = vld [vmem:[#allocation2 + $0xe8] sm:$0xff]
      %v359 = vld [vmem:[#allocation2 + $0xf0] sm:$0xff]
      %v360 = vld [vmem:[#allocation2 + $0xf8] sm:$0xff]
      %v361 = vld [vmem:[#allocation2 + $0x100] sm:$0xff]
      %v362 = vld [vmem:[#allocation2 + $0x108] sm:$0xff]
      %v363 = vld [vmem:[#allocation2 + $0x110] sm:$0xff]
      %v364 = vld [vmem:[#allocation2 + $0x118] sm:$0xff]
      %v365 = vld [vmem:[#allocation2 + $0x120] sm:$0xff]
      %v366 = vld [vmem:[#allocation2 + $0x128] sm:$0xff]
      %v367 = vld [vmem:[#allocation2 + $0x130] sm:$0xff]
      %v368 = vld [vmem:[#allocation2 + $0x138] sm:$0xff]
      %v369 = vld [vmem:[#allocation2 + $0x140] sm:$0xff]
      %v370 = vld [vmem:[#allocation2 + $0x148] sm:$0xff]
      %v371 = vld [vmem:[#allocation2 + $0x150] sm:$0xff]
      %v372 = vld [vmem:[#allocation2 + $0x158] sm:$0xff]
      %v373 = vld [vmem:[#allocation2 + $0x160] sm:$0xff]
      %v374 = vld [vmem:[#allocation2 + $0x168] sm:$0xff]
      %v375 = vld [vmem:[#allocation2 + $0x170] sm:$0xff]
      %v376 = vld [vmem:[#allocation2 + $0x178] sm:$0xff]
      %v377 = vld [vmem:[#allocation2 + $0x180] sm:$0xff]
      %v378 = vld [vmem:[#allocation2 + $0x188] sm:$0xff]
      %v379 = vld [vmem:[#allocation2 + $0x190] sm:$0xff]
      %v380 = vld [vmem:[#allocation2 + $0x198] sm:$0xff]
      %v381 = vld [vmem:[#allocation2 + $0x1a0] sm:$0xff]
      %v382 = vld [vmem:[#allocation2 + $0x1a8] sm:$0xff]
      %v383 = vld [vmem:[#allocation2 + $0x1b0] sm:$0xff]
      %v384 = vld [vmem:[#allocation2 + $0x1b8] sm:$0xff]
      %v385 = vld [vmem:[#allocation2 + $0x1c0] sm:$0xff]
      %v386 = vld [vmem:[#allocation2 + $0x1c8] sm:$0xff]
      %v387 = vld [vmem:[#allocation2 + $0x1d0] sm:$0xff]
      %v388 = vld [vmem:[#allocation2 + $0x1d8] sm:$0xff]
      %v389 = vld [vmem:[#allocation2 + $0x1e0] sm:$0xff]
      %v390 = vld [vmem:[#allocation2 + $0x1e8] sm:$0xff]
      %v391 = vld [vmem:[#allocation2 + $0x1f0] sm:$0xff]
      %v392 = vld [vmem:[#allocation2 + $0x1f8] sm:$0xff]
      %v393 = vld [vmem:[%s236] sm:$0xf]
      %v394 = vld [vmem:[%s236 + $0x4] sm:$0xf]
      %v395 = vld [vmem:[%s236 + $0x8] sm:$0xf]
      %v396 = vld [vmem:[%s236 + $0xc] sm:$0xf]
      %v397 = vld [vmem:[%s236 + $0x10] sm:$0xf]
      %v398 = vld [vmem:[%s236 + $0x14] sm:$0xf]
      %v399 = vld [vmem:[%s236 + $0x18] sm:$0xf]
      %v400 = vld [vmem:[%s236 + $0x1c] sm:$0xf]
      %v401 = vld [vmem:[%s236 + $0x20] sm:$0xf]
      %v402 = vld [vmem:[%s236 + $0x24] sm:$0xf]
      %v403 = vld [vmem:[%s236 + $0x28] sm:$0xf]
      %v404 = vld [vmem:[%s236 + $0x2c] sm:$0xf]
      %v405 = vld [vmem:[%s236 + $0x30] sm:$0xf]
      %v406 = vld [vmem:[%s236 + $0x34] sm:$0xf]
      %v407 = vld [vmem:[%s236 + $0x38] sm:$0xf]
      %v408 = vld [vmem:[%s236 + $0x3c] sm:$0xf]
      %v409 = vld [vmem:[%s236 + $0x40] sm:$0xf]
      %v410 = vld [vmem:[%s236 + $0x44] sm:$0xf]
      %v411 = vld [vmem:[%s236 + $0x48] sm:$0xf]
      %v412 = vld [vmem:[%s236 + $0x4c] sm:$0xf]
      %v413 = vld [vmem:[%s236 + $0x50] sm:$0xf]
      %v414 = vld [vmem:[%s236 + $0x54] sm:$0xf]
      %v415 = vld [vmem:[%s236 + $0x58] sm:$0xf]
      %v416 = vld [vmem:[%s236 + $0x5c] sm:$0xf]
      %v417 = vld [vmem:[%s236 + $0x60] sm:$0xf]
      %v418 = vld [vmem:[%s236 + $0x64] sm:$0xf]
      %v419 = vld [vmem:[%s236 + $0x68] sm:$0xf]
      %v420 = vld [vmem:[%s236 + $0x6c] sm:$0xf]
      %v421 = vld [vmem:[%s236 + $0x70] sm:$0xf]
      %v422 = vld [vmem:[%s236 + $0x74] sm:$0xf]
      %v423 = vld [vmem:[%s236 + $0x78] sm:$0xf]
      %v424 = vld [vmem:[%s236 + $0x7c] sm:$0xf]
      %v425 = vld [vmem:[%s236 + $0x80] sm:$0xf]
      %v426 = vld [vmem:[%s236 + $0x84] sm:$0xf]
      %v427 = vld [vmem:[%s236 + $0x88] sm:$0xf]
      %v428 = vld [vmem:[%s236 + $0x8c] sm:$0xf]
      %v429 = vld [vmem:[%s236 + $0x90] sm:$0xf]
      %v430 = vld [vmem:[%s236 + $0x94] sm:$0xf]
      %v431 = vld [vmem:[%s236 + $0x98] sm:$0xf]
      %v432 = vld [vmem:[%s236 + $0x9c] sm:$0xf]
      %v433 = vld [vmem:[%s236 + $0xa0] sm:$0xf]
      %v434 = vld [vmem:[%s236 + $0xa4] sm:$0xf]
      %v435 = vld [vmem:[%s236 + $0xa8] sm:$0xf]
      %v436 = vld [vmem:[%s236 + $0xac] sm:$0xf]
      %v437 = vld [vmem:[%s236 + $0xb0] sm:$0xf]
      %v438 = vld [vmem:[%s236 + $0xb4] sm:$0xf]
      %v439 = vld [vmem:[%s236 + $0xb8] sm:$0xf]
      %v440 = vld [vmem:[%s236 + $0xbc] sm:$0xf]
      %v441 = vld [vmem:[%s236 + $0xc0] sm:$0xf]
      %v442 = vld [vmem:[%s236 + $0xc4] sm:$0xf]
      %v443 = vld [vmem:[%s236 + $0xc8] sm:$0xf]
      %v444 = vld [vmem:[%s236 + $0xcc] sm:$0xf]
      %v445 = vld [vmem:[%s236 + $0xd0] sm:$0xf]
      %v446 = vld [vmem:[%s236 + $0xd4] sm:$0xf]
      %v447 = vld [vmem:[%s236 + $0xd8] sm:$0xf]
      %v448 = vld [vmem:[%s236 + $0xdc] sm:$0xf]
      %v449 = vld [vmem:[%s236 + $0xe0] sm:$0xf]
      %v450 = vld [vmem:[%s236 + $0xe4] sm:$0xf]
      %v451 = vld [vmem:[%s236 + $0xe8] sm:$0xf]
      %v452 = vld [vmem:[%s236 + $0xec] sm:$0xf]
      %v453 = vld [vmem:[%s236 + $0xf0] sm:$0xf]
      %v454 = vld [vmem:[%s236 + $0xf4] sm:$0xf]
      %v455 = vld [vmem:[%s236 + $0xf8] sm:$0xf]
      %v456 = vld [vmem:[%s236 + $0xfc] sm:$0xf]
      %v457 = vld [vmem:[%s245] sm:$0xf]
      %v458 = vld [vmem:[%s245 + $0x4] sm:$0xf]
      %v459 = vld [vmem:[%s245 + $0x8] sm:$0xf]
      %v460 = vld [vmem:[%s245 + $0xc] sm:$0xf]
      %v461 = vld [vmem:[%s245 + $0x10] sm:$0xf]
      %v462 = vld [vmem:[%s245 + $0x14] sm:$0xf]
      %v463 = vld [vmem:[%s245 + $0x18] sm:$0xf]
      %v464 = vld [vmem:[%s245 + $0x1c] sm:$0xf]
      %v465 = vld [vmem:[%s245 + $0x20] sm:$0xf]
      %v466 = vld [vmem:[%s245 + $0x24] sm:$0xf]
      %v467 = vld [vmem:[%s245 + $0x28] sm:$0xf]
      %v468 = vld [vmem:[%s245 + $0x2c] sm:$0xf]
      %v469 = vld [vmem:[%s245 + $0x30] sm:$0xf]
      %v470 = vld [vmem:[%s245 + $0x34] sm:$0xf]
      %v471 = vld [vmem:[%s245 + $0x38] sm:$0xf]
      %v472 = vld [vmem:[%s245 + $0x3c] sm:$0xf]
      %v537 = vunpack.c.l.b16 %v393
      %v538 = vunpack.c.l.b16 %v394
      %v539 = vunpack.c.l.b16 %v395
      %v540 = vunpack.c.l.b16 %v396
      %v541 = vunpack.c.l.b16 %v397
      %v542 = vunpack.c.l.b16 %v398
      %v543 = vunpack.c.l.b16 %v399
      %v544 = vunpack.c.l.b16 %v400
      %v545 = vunpack.c.l.b16 %v401
      %v546 = vunpack.c.l.b16 %v402
      %v547 = vunpack.c.l.b16 %v403
      %v548 = vunpack.c.l.b16 %v404
      %v549 = vunpack.c.l.b16 %v405
      %v550 = vunpack.c.l.b16 %v406
      %v551 = vunpack.c.l.b16 %v407
      %v552 = vunpack.c.l.b16 %v408
      %v553 = vunpack.c.l.b16 %v409
      %v554 = vunpack.c.l.b16 %v410
      %v555 = vunpack.c.l.b16 %v411
      %v556 = vunpack.c.l.b16 %v412
      %v557 = vunpack.c.l.b16 %v413
      %v558 = vunpack.c.l.b16 %v414
      %v559 = vunpack.c.l.b16 %v415
      %v560 = vunpack.c.l.b16 %v416
      %v561 = vunpack.c.l.b16 %v417
      %v562 = vunpack.c.l.b16 %v418
      %v563 = vunpack.c.l.b16 %v419
      %v564 = vunpack.c.l.b16 %v420
      %v565 = vunpack.c.l.b16 %v421
      %v566 = vunpack.c.l.b16 %v422
      %v567 = vunpack.c.l.b16 %v423
      %v568 = vunpack.c.l.b16 %v424
      %v569 = vunpack.c.l.b16 %v425
      %v570 = vunpack.c.l.b16 %v426
      %v571 = vunpack.c.l.b16 %v427
      %v572 = vunpack.c.l.b16 %v428
      %v573 = vunpack.c.l.b16 %v429
      %v574 = vunpack.c.l.b16 %v430
      %v575 = vunpack.c.l.b16 %v431
      %v576 = vunpack.c.l.b16 %v432
      %v577 = vunpack.c.l.b16 %v433
      %v578 = vunpack.c.l.b16 %v434
      %v579 = vunpack.c.l.b16 %v435
      %v580 = vunpack.c.l.b16 %v436
      %v581 = vunpack.c.l.b16 %v437
      %v582 = vunpack.c.l.b16 %v438
      %v583 = vunpack.c.l.b16 %v439
      %v584 = vunpack.c.l.b16 %v440
      %v585 = vunpack.c.l.b16 %v441
      %v586 = vunpack.c.l.b16 %v442
      %v587 = vunpack.c.l.b16 %v443
      %v588 = vunpack.c.l.b16 %v444
      %v589 = vunpack.c.l.b16 %v445
      %v590 = vunpack.c.l.b16 %v446
      %v591 = vunpack.c.l.b16 %v447
      %v592 = vunpack.c.l.b16 %v448
      %v593 = vunpack.c.l.b16 %v449
      %v594 = vunpack.c.l.b16 %v450
      %v595 = vunpack.c.l.b16 %v451
      %v596 = vunpack.c.l.b16 %v452
      %v597 = vunpack.c.l.b16 %v453
      %v598 = vunpack.c.l.b16 %v454
      %v599 = vunpack.c.l.b16 %v455
      %v600 = vunpack.c.l.b16 %v456
      %v601 = vpack.c.b16 %v538, %v537
      %v602 = vpack.c.b16 %v540, %v539
      %v603 = vpack.c.b16 %v542, %v541
      %v604 = vpack.c.b16 %v544, %v543
      %v605 = vpack.c.b16 %v546, %v545
      %v606 = vpack.c.b16 %v548, %v547
      %v607 = vpack.c.b16 %v550, %v549
      %v608 = vpack.c.b16 %v552, %v551
      %v609 = vpack.c.b16 %v554, %v553
      %v610 = vpack.c.b16 %v556, %v555
      %v611 = vpack.c.b16 %v558, %v557
      %v612 = vpack.c.b16 %v560, %v559
      %v613 = vpack.c.b16 %v562, %v561
      %v614 = vpack.c.b16 %v564, %v563
      %v615 = vpack.c.b16 %v566, %v565
      %v616 = vpack.c.b16 %v568, %v567
      %v617 = vpack.c.b16 %v570, %v569
      %v618 = vpack.c.b16 %v572, %v571
      %v619 = vpack.c.b16 %v574, %v573
      %v620 = vpack.c.b16 %v576, %v575
      %v621 = vpack.c.b16 %v578, %v577
      %v622 = vpack.c.b16 %v580, %v579
      %v623 = vpack.c.b16 %v582, %v581
      %v624 = vpack.c.b16 %v584, %v583
      %v625 = vpack.c.b16 %v586, %v585
      %v626 = vpack.c.b16 %v588, %v587
      %v627 = vpack.c.b16 %v590, %v589
      %v628 = vpack.c.b16 %v592, %v591
      %v629 = vpack.c.b16 %v594, %v593
      %v630 = vpack.c.b16 %v596, %v595
      %v631 = vpack.c.b16 %v598, %v597
      %v632 = vpack.c.b16 %v600, %v599
      %v681 = vunpack.c.l.b16 %v457
      %v682 = vunpack.c.l.b16 %v458
      %v683 = vunpack.c.l.b16 %v459
      %v684 = vunpack.c.l.b16 %v460
      %v685 = vunpack.c.l.b16 %v461
      %v686 = vunpack.c.l.b16 %v462
      %v687 = vunpack.c.l.b16 %v463
      %v688 = vunpack.c.l.b16 %v464
      %v689 = vunpack.c.l.b16 %v465
      %v690 = vunpack.c.l.b16 %v466
      %v691 = vunpack.c.l.b16 %v467
      %v692 = vunpack.c.l.b16 %v468
      %v693 = vunpack.c.l.b16 %v469
      %v694 = vunpack.c.l.b16 %v470
      %v695 = vunpack.c.l.b16 %v471
      %v696 = vunpack.c.l.b16 %v472
      %v697 = vpack.c.b16 %v682, %v681
      %v698 = vpack.c.b16 %v684, %v683
      %v699 = vpack.c.b16 %v686, %v685
      %v700 = vpack.c.b16 %v688, %v687
      %v701 = vpack.c.b16 %v690, %v689
      %v702 = vpack.c.b16 %v692, %v691
      %v703 = vpack.c.b16 %v694, %v693
      %v704 = vpack.c.b16 %v696, %v695
      %713 = vmatprep.subr.bf16.mxu0 0
      %714 = vmatpush1.bf16.msra.mxu0 %v697
      %715 = vmatprep.subr.bf16.mxu0 0
      %716 = vmatpush1.bf16.msra.mxu0 %v698
      %717 = vmatprep.subr.bf16.mxu0 0
      %718 = vmatpush1.bf16.msra.mxu0 %v699
      %719 = vmatprep.subr.bf16.mxu0 0
      %720 = vmatpush1.bf16.msra.mxu0 %v700
      %721 = vmatprep.subr.bf16.mxu0 0
      %722 = vmatpush1.bf16.msra.mxu0 %v701
      %723 = vmatprep.subr.bf16.mxu0 0
      %724 = vmatpush1.bf16.msra.mxu0 %v702
      %725 = vmatprep.subr.bf16.mxu0 0
      %726 = vmatpush1.bf16.msra.mxu0 %v703
      %727 = vmatprep.subr.bf16.mxu0 0
      %728 = vmatpush1.bf16.msra.mxu0 %v704
      %729 = vmatprep.subr.bf16.mxu0 0
      %730 = vmatpush1.bf16.msra.mxu0 0
      %731 = vmatprep.subr.bf16.mxu0 0
      %732 = vmatpush1.bf16.msra.mxu0 0
      %733 = vmatprep.subr.bf16.mxu0 0
      %734 = vmatpush1.bf16.msra.mxu0 0
      %735 = vmatprep.subr.bf16.mxu0 0
      %736 = vmatpush1.bf16.msra.mxu0 0
      %737 = vmatprep.subr.bf16.mxu0 0
      %738 = vmatpush1.bf16.msra.mxu0 0
      %739 = vmatprep.subr.bf16.mxu0 0
      %740 = vmatpush1.bf16.msra.mxu0 0
      %741 = vmatprep.subr.bf16.mxu0 0
      %742 = vmatpush1.bf16.msra.mxu0 0
      %743 = vmatprep.subr.bf16.mxu0 0
      %744 = vmatpush1.bf16.msra.mxu0 0
      %745 = vmatprep.mubr.bf16.mxu0 0
      %746 = vmatmul.mubr.bf16.gmra.mrb[0].mxu0 %v601
      %v747 = vpop.f32.mrb[0].mxu0
      %v748 = vadd.f32 0.0, %v747
      %v749 = vpop.f32.mrb[0].mxu0
      %v750 = vpop.f32.mrb[0].mxu0
      %v751 = vadd.f32 0.0, %v750
      %v752 = vpop.f32.mrb[0].mxu0
      %753 = vmatprep.mubr.bf16.mxu0 0
      %754 = vmatmul.mubr.bf16.gmra.mrb[0].mxu0 %v602
      %v755 = vpop.f32.mrb[0].mxu0
      %v756 = vadd.f32 0.0, %v755
      %v757 = vpop.f32.mrb[0].mxu0
      %v758 = vpop.f32.mrb[0].mxu0
      %v759 = vadd.f32 0.0, %v758
      %v760 = vpop.f32.mrb[0].mxu0
      %761 = vmatprep.mubr.bf16.mxu0 0
      %762 = vmatmul.mubr.bf16.gmra.mrb[0].mxu0 %v603
      %v763 = vpop.f32.mrb[0].mxu0
      %v764 = vadd.f32 0.0, %v763
      %v765 = vpop.f32.mrb[0].mxu0
      %v766 = vpop.f32.mrb[0].mxu0
      %v767 = vadd.f32 0.0, %v766
      %v768 = vpop.f32.mrb[0].mxu0
      %769 = vmatprep.mubr.bf16.mxu0 0
      %770 = vmatmul.mubr.bf16.gmra.mrb[0].mxu0 %v604
      %v771 = vpop.f32.mrb[0].mxu0
      %v772 = vadd.f32 0.0, %v771
      %v773 = vpop.f32.mrb[0].mxu0
      %v774 = vpop.f32.mrb[0].mxu0
      %v775 = vadd.f32 0.0, %v774
      %v776 = vpop.f32.mrb[0].mxu0
      %777 = vmatprep.mubr.bf16.mxu0 0
      %778 = vmatmul.mubr.bf16.gmra.mrb[0].mxu0 %v605
      %v779 = vpop.f32.mrb[0].mxu0
      %v780 = vadd.f32 0.0, %v779
      %v781 = vpop.f32.mrb[0].mxu0
      %v782 = vpop.f32.mrb[0].mxu0
      %v783 = vadd.f32 0.0, %v782
      %v784 = vpop.f32.mrb[0].mxu0
      %785 = vmatprep.mubr.bf16.mxu0 0
      %786 = vmatmul.mubr.bf16.gmra.mrb[0].mxu0 %v606
      %v787 = vpop.f32.mrb[0].mxu0
      %v788 = vadd.f32 0.0, %v787
      %v789 = vpop.f32.mrb[0].mxu0
      %v790 = vpop.f32.mrb[0].mxu0
      %v791 = vadd.f32 0.0, %v790
      %v792 = vpop.f32.mrb[0].mxu0
      %793 = vmatprep.mubr.bf16.mxu0 0
      %794 = vmatmul.mubr.bf16.gmra.mrb[0].mxu0 %v607
      %v795 = vpop.f32.mrb[0].mxu0
      %v796 = vadd.f32 0.0, %v795
      %v797 = vpop.f32.mrb[0].mxu0
      %v798 = vpop.f32.mrb[0].mxu0
      %v799 = vadd.f32 0.0, %v798
      %v800 = vpop.f32.mrb[0].mxu0
      %801 = vmatprep.mubr.bf16.mxu0 0
      %802 = vmatmul.mubr.bf16.gmra.mrb[0].mxu0 %v608
      %v803 = vpop.f32.mrb[0].mxu0
      %v804 = vadd.f32 0.0, %v803
      %v805 = vpop.f32.mrb[0].mxu0
      %v806 = vpop.f32.mrb[0].mxu0
      %v807 = vadd.f32 0.0, %v806
      %v808 = vpop.f32.mrb[0].mxu0
      %809 = vmatprep.mubr.bf16.mxu0 0
      %810 = vmatmul.mubr.bf16.gmra.mrb[0].mxu0 %v609
      %v811 = vpop.f32.mrb[0].mxu0
      %v812 = vadd.f32 0.0, %v811
      %v813 = vpop.f32.mrb[0].mxu0
      %v814 = vpop.f32.mrb[0].mxu0
      %v815 = vadd.f32 0.0, %v814
      %v816 = vpop.f32.mrb[0].mxu0
      %817 = vmatprep.mubr.bf16.mxu0 0
      %818 = vmatmul.mubr.bf16.gmra.mrb[0].mxu0 %v610
      %v819 = vpop.f32.mrb[0].mxu0
      %v820 = vadd.f32 0.0, %v819
      %v821 = vpop.f32.mrb[0].mxu0
      %v822 = vpop.f32.mrb[0].mxu0
      %v823 = vadd.f32 0.0, %v822
      %v824 = vpop.f32.mrb[0].mxu0
      %825 = vmatprep.mubr.bf16.mxu0 0
      %826 = vmatmul.mubr.bf16.gmra.mrb[0].mxu0 %v611
      %v827 = vpop.f32.mrb[0].mxu0
      %v828 = vadd.f32 0.0, %v827
      %v829 = vpop.f32.mrb[0].mxu0
      %v830 = vpop.f32.mrb[0].mxu0
      %v831 = vadd.f32 0.0, %v830
      %v832 = vpop.f32.mrb[0].mxu0
      %833 = vmatprep.mubr.bf16.mxu0 0
      %834 = vmatmul.mubr.bf16.gmra.mrb[0].mxu0 %v612
      %v835 = vpop.f32.mrb[0].mxu0
      %v836 = vadd.f32 0.0, %v835
      %v837 = vpop.f32.mrb[0].mxu0
      %v838 = vpop.f32.mrb[0].mxu0
      %v839 = vadd.f32 0.0, %v838
      %v840 = vpop.f32.mrb[0].mxu0
      %841 = vmatprep.mubr.bf16.mxu0 0
      %842 = vmatmul.mubr.bf16.gmra.mrb[0].mxu0 %v613
      %v843 = vpop.f32.mrb[0].mxu0
      %v844 = vadd.f32 0.0, %v843
      %v845 = vpop.f32.mrb[0].mxu0
      %v846 = vpop.f32.mrb[0].mxu0
      %v847 = vadd.f32 0.0, %v846
      %v848 = vpop.f32.mrb[0].mxu0
      %849 = vmatprep.mubr.bf16.mxu0 0
      %850 = vmatmul.mubr.bf16.gmra.mrb[0].mxu0 %v614
      %v851 = vpop.f32.mrb[0].mxu0
      %v852 = vadd.f32 0.0, %v851
      %v853 = vpop.f32.mrb[0].mxu0
      %v854 = vpop.f32.mrb[0].mxu0
      %v855 = vadd.f32 0.0, %v854
      %v856 = vpop.f32.mrb[0].mxu0
      %857 = vmatprep.mubr.bf16.mxu0 0
      %858 = vmatmul.mubr.bf16.gmra.mrb[0].mxu0 %v615
      %v859 = vpop.f32.mrb[0].mxu0
      %v860 = vadd.f32 0.0, %v859
      %v861 = vpop.f32.mrb[0].mxu0
      %v862 = vpop.f32.mrb[0].mxu0
      %v863 = vadd.f32 0.0, %v862
      %v864 = vpop.f32.mrb[0].mxu0
      %865 = vmatprep.mubr.bf16.mxu0 0
      %866 = vmatmul.mubr.bf16.gmra.mrb[0].mxu0 %v616
      %v867 = vpop.f32.mrb[0].mxu0
      %v868 = vadd.f32 0.0, %v867
      %v869 = vpop.f32.mrb[0].mxu0
      %v870 = vpop.f32.mrb[0].mxu0
      %v871 = vadd.f32 0.0, %v870
      %v872 = vpop.f32.mrb[0].mxu0
      %873 = vmatprep.mubr.bf16.mxu0 0
      %874 = vmatmul.mubr.bf16.gmra.mrb[0].mxu0 %v617
      %v875 = vpop.f32.mrb[0].mxu0
      %v876 = vadd.f32 0.0, %v875
      %v877 = vpop.f32.mrb[0].mxu0
      %v878 = vpop.f32.mrb[0].mxu0
      %v879 = vadd.f32 0.0, %v878
      %v880 = vpop.f32.mrb[0].mxu0
      %881 = vmatprep.mubr.bf16.mxu0 0
      %882 = vmatmul.mubr.bf16.gmra.mrb[0].mxu0 %v618
      %v883 = vpop.f32.mrb[0].mxu0
      %v884 = vadd.f32 0.0, %v883
      %v885 = vpop.f32.mrb[0].mxu0
      %v886 = vpop.f32.mrb[0].mxu0
      %v887 = vadd.f32 0.0, %v886
      %v888 = vpop.f32.mrb[0].mxu0
      %889 = vmatprep.mubr.bf16.mxu0 0
      %890 = vmatmul.mubr.bf16.gmra.mrb[0].mxu0 %v619
      %v891 = vpop.f32.mrb[0].mxu0
      %v892 = vadd.f32 0.0, %v891
      %v893 = vpop.f32.mrb[0].mxu0
      %v894 = vpop.f32.mrb[0].mxu0
      %v895 = vadd.f32 0.0, %v894
      %v896 = vpop.f32.mrb[0].mxu0
      %897 = vmatprep.mubr.bf16.mxu0 0
      %898 = vmatmul.mubr.bf16.gmra.mrb[0].mxu0 %v620
      %v899 = vpop.f32.mrb[0].mxu0
      %v900 = vadd.f32 0.0, %v899
      %v901 = vpop.f32.mrb[0].mxu0
      %v902 = vpop.f32.mrb[0].mxu0
      %v903 = vadd.f32 0.0, %v902
      %v904 = vpop.f32.mrb[0].mxu0
      %905 = vmatprep.mubr.bf16.mxu0 0
      %906 = vmatmul.mubr.bf16.gmra.mrb[0].mxu0 %v621
      %v907 = vpop.f32.mrb[0].mxu0
      %v908 = vadd.f32 0.0, %v907
      %v909 = vpop.f32.mrb[0].mxu0
      %v910 = vpop.f32.mrb[0].mxu0
      %v911 = vadd.f32 0.0, %v910
      %v912 = vpop.f32.mrb[0].mxu0
      %913 = vmatprep.mubr.bf16.mxu0 0
      %914 = vmatmul.mubr.bf16.gmra.mrb[0].mxu0 %v622
      %v915 = vpop.f32.mrb[0].mxu0
      %v916 = vadd.f32 0.0, %v915
      %v917 = vpop.f32.mrb[0].mxu0
      %v918 = vpop.f32.mrb[0].mxu0
      %v919 = vadd.f32 0.0, %v918
      %v920 = vpop.f32.mrb[0].mxu0
      %921 = vmatprep.mubr.bf16.mxu0 0
      %922 = vmatmul.mubr.bf16.gmra.mrb[0].mxu0 %v623
      %v923 = vpop.f32.mrb[0].mxu0
      %v924 = vadd.f32 0.0, %v923
      %v925 = vpop.f32.mrb[0].mxu0
      %v926 = vpop.f32.mrb[0].mxu0
      %v927 = vadd.f32 0.0, %v926
      %v928 = vpop.f32.mrb[0].mxu0
      %929 = vmatprep.mubr.bf16.mxu0 0
      %930 = vmatmul.mubr.bf16.gmra.mrb[0].mxu0 %v624
      %v931 = vpop.f32.mrb[0].mxu0
      %v932 = vadd.f32 0.0, %v931
      %v933 = vpop.f32.mrb[0].mxu0
      %v934 = vpop.f32.mrb[0].mxu0
      %v935 = vadd.f32 0.0, %v934
      %v936 = vpop.f32.mrb[0].mxu0
      %937 = vmatprep.mubr.bf16.mxu0 0
      %938 = vmatmul.mubr.bf16.gmra.mrb[0].mxu0 %v625
      %v939 = vpop.f32.mrb[0].mxu0
      %v940 = vadd.f32 0.0, %v939
      %v941 = vpop.f32.mrb[0].mxu0
      %v942 = vpop.f32.mrb[0].mxu0
      %v943 = vadd.f32 0.0, %v942
      %v944 = vpop.f32.mrb[0].mxu0
      %945 = vmatprep.mubr.bf16.mxu0 0
      %946 = vmatmul.mubr.bf16.gmra.mrb[0].mxu0 %v626
      %v947 = vpop.f32.mrb[0].mxu0
      %v948 = vadd.f32 0.0, %v947
      %v949 = vpop.f32.mrb[0].mxu0
      %v950 = vpop.f32.mrb[0].mxu0
      %v951 = vadd.f32 0.0, %v950
      %v952 = vpop.f32.mrb[0].mxu0
      %953 = vmatprep.mubr.bf16.mxu0 0
      %954 = vmatmul.mubr.bf16.gmra.mrb[0].mxu0 %v627
      %v955 = vpop.f32.mrb[0].mxu0
      %v956 = vadd.f32 0.0, %v955
      %v957 = vpop.f32.mrb[0].mxu0
      %v958 = vpop.f32.mrb[0].mxu0
      %v959 = vadd.f32 0.0, %v958
      %v960 = vpop.f32.mrb[0].mxu0
      %961 = vmatprep.mubr.bf16.mxu0 0
      %962 = vmatmul.mubr.bf16.gmra.mrb[0].mxu0 %v628
      %v963 = vpop.f32.mrb[0].mxu0
      %v964 = vadd.f32 0.0, %v963
      %v965 = vpop.f32.mrb[0].mxu0
      %v966 = vpop.f32.mrb[0].mxu0
      %v967 = vadd.f32 0.0, %v966
      %v968 = vpop.f32.mrb[0].mxu0
      %969 = vmatprep.mubr.bf16.mxu0 0
      %970 = vmatmul.mubr.bf16.gmra.mrb[0].mxu0 %v629
      %v971 = vpop.f32.mrb[0].mxu0
      %v972 = vadd.f32 0.0, %v971
      %v973 = vpop.f32.mrb[0].mxu0
      %v974 = vpop.f32.mrb[0].mxu0
      %v975 = vadd.f32 0.0, %v974
      %v976 = vpop.f32.mrb[0].mxu0
      %977 = vmatprep.mubr.bf16.mxu0 0
      %978 = vmatmul.mubr.bf16.gmra.mrb[0].mxu0 %v630
      %v979 = vpop.f32.mrb[0].mxu0
      %v980 = vadd.f32 0.0, %v979
      %v981 = vpop.f32.mrb[0].mxu0
      %v982 = vpop.f32.mrb[0].mxu0
      %v983 = vadd.f32 0.0, %v982
      %v984 = vpop.f32.mrb[0].mxu0
      %985 = vmatprep.mubr.bf16.mxu0 0
      %986 = vmatmul.mubr.bf16.gmra.mrb[0].mxu0 %v631
      %v987 = vpop.f32.mrb[0].mxu0
      %v988 = vadd.f32 0.0, %v987
      %v989 = vpop.f32.mrb[0].mxu0
      %v990 = vpop.f32.mrb[0].mxu0
      %v991 = vadd.f32 0.0, %v990
      %v992 = vpop.f32.mrb[0].mxu0
      %993 = vmatprep.mubr.bf16.mxu0 0
      %994 = vmatmul.mubr.bf16.gmra.mrb[0].mxu0 %v632
      %v995 = vpop.f32.mrb[0].mxu0
      %v996 = vadd.f32 0.0, %v995
      %v997 = vpop.f32.mrb[0].mxu0
      %v998 = vpop.f32.mrb[0].mxu0
      %v999 = vadd.f32 0.0, %v998
      %v1000 = vpop.f32.mrb[0].mxu0
      %1001 = vdwg.mxu0
      %v1002 = vadd.f32 %v329, %v748
      %v1003 = vadd.f32 %v330, %v751
      %v1004 = vadd.f32 %v331, %v756
      %v1005 = vadd.f32 %v332, %v759
      %v1006 = vadd.f32 %v333, %v764
      %v1007 = vadd.f32 %v334, %v767
      %v1008 = vadd.f32 %v335, %v772
      %v1009 = vadd.f32 %v336, %v775
      %v1010 = vadd.f32 %v337, %v780
      %v1011 = vadd.f32 %v338, %v783
      %v1012 = vadd.f32 %v339, %v788
      %v1013 = vadd.f32 %v340, %v791
      %v1014 = vadd.f32 %v341, %v796
      %v1015 = vadd.f32 %v342, %v799
      %v1016 = vadd.f32 %v343, %v804
      %v1017 = vadd.f32 %v344, %v807
      %v1018 = vadd.f32 %v345, %v812
      %v1019 = vadd.f32 %v346, %v815
      %v1020 = vadd.f32 %v347, %v820
      %v1021 = vadd.f32 %v348, %v823
      %v1022 = vadd.f32 %v349, %v828
      %v1023 = vadd.f32 %v350, %v831
      %v1024 = vadd.f32 %v351, %v836
      %v1025 = vadd.f32 %v352, %v839
      %v1026 = vadd.f32 %v353, %v844
      %v1027 = vadd.f32 %v354, %v847
      %v1028 = vadd.f32 %v355, %v852
      %v1029 = vadd.f32 %v356, %v855
      %v1030 = vadd.f32 %v357, %v860
      %v1031 = vadd.f32 %v358, %v863
      %v1032 = vadd.f32 %v359, %v868
      %v1033 = vadd.f32 %v360, %v871
      %v1034 = vadd.f32 %v361, %v876
      %v1035 = vadd.f32 %v362, %v879
      %v1036 = vadd.f32 %v363, %v884
      %v1037 = vadd.f32 %v364, %v887
      %v1038 = vadd.f32 %v365, %v892
      %v1039 = vadd.f32 %v366, %v895
      %v1040 = vadd.f32 %v367, %v900
      %v1041 = vadd.f32 %v368, %v903
      %v1042 = vadd.f32 %v369, %v908
      %v1043 = vadd.f32 %v370, %v911
      %v1044 = vadd.f32 %v371, %v916
      %v1045 = vadd.f32 %v372, %v919
      %v1046 = vadd.f32 %v373, %v924
      %v1047 = vadd.f32 %v374, %v927
      %v1048 = vadd.f32 %v375, %v932
      %v1049 = vadd.f32 %v376, %v935
      %v1050 = vadd.f32 %v377, %v940
      %v1051 = vadd.f32 %v378, %v943
      %v1052 = vadd.f32 %v379, %v948
      %v1053 = vadd.f32 %v380, %v951
      %v1054 = vadd.f32 %v381, %v956
      %v1055 = vadd.f32 %v382, %v959
      %v1056 = vadd.f32 %v383, %v964
      %v1057 = vadd.f32 %v384, %v967
      %v1058 = vadd.f32 %v385, %v972
      %v1059 = vadd.f32 %v386, %v975
      %v1060 = vadd.f32 %v387, %v980
      %v1061 = vadd.f32 %v388, %v983
      %v1062 = vadd.f32 %v389, %v988
      %v1063 = vadd.f32 %v390, %v991
      %v1064 = vadd.f32 %v391, %v996
      %v1065 = vadd.f32 %v392, %v999
      %vm1066 = vcmask 523264
      %1067 = vst.msk [vmem:[#allocation2] sm:$0xff] %vm1066, %v1002
      %1068 = vst.msk [vmem:[#allocation2 + $0x8] sm:$0xff] %vm1066, %v1003
      %1069 = vst.msk [vmem:[#allocation2 + $0x10] sm:$0xff] %vm1066, %v1004
      %1070 = vst.msk [vmem:[#allocation2 + $0x18] sm:$0xff] %vm1066, %v1005
      %1071 = vst.msk [vmem:[#allocation2 + $0x20] sm:$0xff] %vm1066, %v1006
      %1072 = vst.msk [vmem:[#allocation2 + $0x28] sm:$0xff] %vm1066, %v1007
      %1073 = vst.msk [vmem:[#allocation2 + $0x30] sm:$0xff] %vm1066, %v1008
      %1074 = vst.msk [vmem:[#allocation2 + $0x38] sm:$0xff] %vm1066, %v1009
      %1075 = vst.msk [vmem:[#allocation2 + $0x40] sm:$0xff] %vm1066, %v1010
      %1076 = vst.msk [vmem:[#allocation2 + $0x48] sm:$0xff] %vm1066, %v1011
      %1077 = vst.msk [vmem:[#allocation2 + $0x50] sm:$0xff] %vm1066, %v1012
      %1078 = vst.msk [vmem:[#allocation2 + $0x58] sm:$0xff] %vm1066, %v1013
      %1079 = vst.msk [vmem:[#allocation2 + $0x60] sm:$0xff] %vm1066, %v1014
      %1080 = vst.msk [vmem:[#allocation2 + $0x68] sm:$0xff] %vm1066, %v1015
      %1081 = vst.msk [vmem:[#allocation2 + $0x70] sm:$0xff] %vm1066, %v1016
      %1082 = vst.msk [vmem:[#allocation2 + $0x78] sm:$0xff] %vm1066, %v1017
      %1083 = vst.msk [vmem:[#allocation2 + $0x80] sm:$0xff] %vm1066, %v1018
      %1084 = vst.msk [vmem:[#allocation2 + $0x88] sm:$0xff] %vm1066, %v1019
      %1085 = vst.msk [vmem:[#allocation2 + $0x90] sm:$0xff] %vm1066, %v1020
      %1086 = vst.msk [vmem:[#allocation2 + $0x98] sm:$0xff] %vm1066, %v1021
      %1087 = vst.msk [vmem:[#allocation2 + $0xa0] sm:$0xff] %vm1066, %v1022
      %1088 = vst.msk [vmem:[#allocation2 + $0xa8] sm:$0xff] %vm1066, %v1023
      %1089 = vst.msk [vmem:[#allocation2 + $0xb0] sm:$0xff] %vm1066, %v1024
      %1090 = vst.msk [vmem:[#allocation2 + $0xb8] sm:$0xff] %vm1066, %v1025
      %1091 = vst.msk [vmem:[#allocation2 + $0xc0] sm:$0xff] %vm1066, %v1026
      %1092 = vst.msk [vmem:[#allocation2 + $0xc8] sm:$0xff] %vm1066, %v1027
      %1093 = vst.msk [vmem:[#allocation2 + $0xd0] sm:$0xff] %vm1066, %v1028
      %1094 = vst.msk [vmem:[#allocation2 + $0xd8] sm:$0xff] %vm1066, %v1029
      %1095 = vst.msk [vmem:[#allocation2 + $0xe0] sm:$0xff] %vm1066, %v1030
      %1096 = vst.msk [vmem:[#allocation2 + $0xe8] sm:$0xff] %vm1066, %v1031
      %1097 = vst.msk [vmem:[#allocation2 + $0xf0] sm:$0xff] %vm1066, %v1032
      %1098 = vst.msk [vmem:[#allocation2 + $0xf8] sm:$0xff] %vm1066, %v1033
      %1099 = vst.msk [vmem:[#allocation2 + $0x100] sm:$0xff] %vm1066, %v1034
      %1100 = vst.msk [vmem:[#allocation2 + $0x108] sm:$0xff] %vm1066, %v1035
      %1101 = vst.msk [vmem:[#allocation2 + $0x110] sm:$0xff] %vm1066, %v1036
      %1102 = vst.msk [vmem:[#allocation2 + $0x118] sm:$0xff] %vm1066, %v1037
      %1103 = vst.msk [vmem:[#allocation2 + $0x120] sm:$0xff] %vm1066, %v1038
      %1104 = vst.msk [vmem:[#allocation2 + $0x128] sm:$0xff] %vm1066, %v1039
      %1105 = vst.msk [vmem:[#allocation2 + $0x130] sm:$0xff] %vm1066, %v1040
      %1106 = vst.msk [vmem:[#allocation2 + $0x138] sm:$0xff] %vm1066, %v1041
      %1107 = vst.msk [vmem:[#allocation2 + $0x140] sm:$0xff] %vm1066, %v1042
      %1108 = vst.msk [vmem:[#allocation2 + $0x148] sm:$0xff] %vm1066, %v1043
      %1109 = vst.msk [vmem:[#allocation2 + $0x150] sm:$0xff] %vm1066, %v1044
      %1110 = vst.msk [vmem:[#allocation2 + $0x158] sm:$0xff] %vm1066, %v1045
      %1111 = vst.msk [vmem:[#allocation2 + $0x160] sm:$0xff] %vm1066, %v1046
      %1112 = vst.msk [vmem:[#allocation2 + $0x168] sm:$0xff] %vm1066, %v1047
      %1113 = vst.msk [vmem:[#allocation2 + $0x170] sm:$0xff] %vm1066, %v1048
      %1114 = vst.msk [vmem:[#allocation2 + $0x178] sm:$0xff] %vm1066, %v1049
      %1115 = vst.msk [vmem:[#allocation2 + $0x180] sm:$0xff] %vm1066, %v1050
      %1116 = vst.msk [vmem:[#allocation2 + $0x188] sm:$0xff] %vm1066, %v1051
      %1117 = vst.msk [vmem:[#allocation2 + $0x190] sm:$0xff] %vm1066, %v1052
      %1118 = vst.msk [vmem:[#allocation2 + $0x198] sm:$0xff] %vm1066, %v1053
      %1119 = vst.msk [vmem:[#allocation2 + $0x1a0] sm:$0xff] %vm1066, %v1054
      %1120 = vst.msk [vmem:[#allocation2 + $0x1a8] sm:$0xff] %vm1066, %v1055
      %1121 = vst.msk [vmem:[#allocation2 + $0x1b0] sm:$0xff] %vm1066, %v1056
      %1122 = vst.msk [vmem:[#allocation2 + $0x1b8] sm:$0xff] %vm1066, %v1057
      %1123 = vst.msk [vmem:[#allocation2 + $0x1c0] sm:$0xff] %vm1066, %v1058
      %1124 = vst.msk [vmem:[#allocation2 + $0x1c8] sm:$0xff] %vm1066, %v1059
      %1125 = vst.msk [vmem:[#allocation2 + $0x1d0] sm:$0xff] %vm1066, %v1060
      %1126 = vst.msk [vmem:[#allocation2 + $0x1d8] sm:$0xff] %vm1066, %v1061
      %1127 = vst.msk [vmem:[#allocation2 + $0x1e0] sm:$0xff] %vm1066, %v1062
      %1128 = vst.msk [vmem:[#allocation2 + $0x1e8] sm:$0xff] %vm1066, %v1063
      %1129 = vst.msk [vmem:[#allocation2 + $0x1f0] sm:$0xff] %vm1066, %v1064
      %1130 = vst.msk [vmem:[#allocation2 + $0x1f8] sm:$0xff] %vm1066, %v1065
      // Predicated region
      $region37: #{frame_map_forward.4} parent=31 // pred_check
        %p1131 = pneg %p260
      $region38: #{frame_map_forward.4} parent=31 // pred_check_branch
        %1133 = sbr.rel (%p1131) target = $region40
      $region39: #{frame_map_forward.4} parent=31 // pred_region
        %v1134 = vld [vmem:[#allocation2] sm:$0xff]
        %v1135 = vld [vmem:[#allocation2 + $0x8] sm:$0xff]
        %v1136 = vld [vmem:[#allocation2 + $0x10] sm:$0xff]
        %v1137 = vld [vmem:[#allocation2 + $0x18] sm:$0xff]
        %v1138 = vld [vmem:[#allocation2 + $0x20] sm:$0xff]
        %v1139 = vld [vmem:[#allocation2 + $0x28] sm:$0xff]
        %v1140 = vld [vmem:[#allocation2 + $0x30] sm:$0xff]
        %v1141 = vld [vmem:[#allocation2 + $0x38] sm:$0xff]
        %v1142 = vld [vmem:[#allocation2 + $0x40] sm:$0xff]
        %v1143 = vld [vmem:[#allocation2 + $0x48] sm:$0xff]
        %v1144 = vld [vmem:[#allocation2 + $0x50] sm:$0xff]
        %v1145 = vld [vmem:[#allocation2 + $0x58] sm:$0xff]
        %v1146 = vld [vmem:[#allocation2 + $0x60] sm:$0xff]
        %v1147 = vld [vmem:[#allocation2 + $0x68] sm:$0xff]
        %v1148 = vld [vmem:[#allocation2 + $0x70] sm:$0xff]
        %v1149 = vld [vmem:[#allocation2 + $0x78] sm:$0xff]
        %v1150 = vld [vmem:[#allocation2 + $0x80] sm:$0xff]
        %v1151 = vld [vmem:[#allocation2 + $0x88] sm:$0xff]
        %v1152 = vld [vmem:[#allocation2 + $0x90] sm:$0xff]
        %v1153 = vld [vmem:[#allocation2 + $0x98] sm:$0xff]
        %v1154 = vld [vmem:[#allocation2 + $0xa0] sm:$0xff]
        %v1155 = vld [vmem:[#allocation2 + $0xa8] sm:$0xff]
        %v1156 = vld [vmem:[#allocation2 + $0xb0] sm:$0xff]
        %v1157 = vld [vmem:[#allocation2 + $0xb8] sm:$0xff]
        %v1158 = vld [vmem:[#allocation2 + $0xc0] sm:$0xff]
        %v1159 = vld [vmem:[#allocation2 + $0xc8] sm:$0xff]
        %v1160 = vld [vmem:[#allocation2 + $0xd0] sm:$0xff]
        %v1161 = vld [vmem:[#allocation2 + $0xd8] sm:$0xff]
        %v1162 = vld [vmem:[#allocation2 + $0xe0] sm:$0xff]
        %v1163 = vld [vmem:[#allocation2 + $0xe8] sm:$0xff]
        %v1164 = vld [vmem:[#allocation2 + $0xf0] sm:$0xff]
        %v1165 = vld [vmem:[#allocation2 + $0xf8] sm:$0xff]
        %v1166 = vld [vmem:[#allocation2 + $0x100] sm:$0xff]
        %v1167 = vld [vmem:[#allocation2 + $0x108] sm:$0xff]
        %v1168 = vld [vmem:[#allocation2 + $0x110] sm:$0xff]
        %v1169 = vld [vmem:[#allocation2 + $0x118] sm:$0xff]
        %v1170 = vld [vmem:[#allocation2 + $0x120] sm:$0xff]
        %v1171 = vld [vmem:[#allocation2 + $0x128] sm:$0xff]
        %v1172 = vld [vmem:[#allocation2 + $0x130] sm:$0xff]
        %v1173 = vld [vmem:[#allocation2 + $0x138] sm:$0xff]
        %v1174 = vld [vmem:[#allocation2 + $0x140] sm:$0xff]
        %v1175 = vld [vmem:[#allocation2 + $0x148] sm:$0xff]
        %v1176 = vld [vmem:[#allocation2 + $0x150] sm:$0xff]
        %v1177 = vld [vmem:[#allocation2 + $0x158] sm:$0xff]
        %v1178 = vld [vmem:[#allocation2 + $0x160] sm:$0xff]
        %v1179 = vld [vmem:[#allocation2 + $0x168] sm:$0xff]
        %v1180 = vld [vmem:[#allocation2 + $0x170] sm:$0xff]
        %v1181 = vld [vmem:[#allocation2 + $0x178] sm:$0xff]
        %v1182 = vld [vmem:[#allocation2 + $0x180] sm:$0xff]
        %v1183 = vld [vmem:[#allocation2 + $0x188] sm:$0xff]
        %v1184 = vld [vmem:[#allocation2 + $0x190] sm:$0xff]
        %v1185 = vld [vmem:[#allocation2 + $0x198] sm:$0xff]
        %v1186 = vld [vmem:[#allocation2 + $0x1a0] sm:$0xff]
        %v1187 = vld [vmem:[#allocation2 + $0x1a8] sm:$0xff]
        %v1188 = vld [vmem:[#allocation2 + $0x1b0] sm:$0xff]
        %v1189 = vld [vmem:[#allocation2 + $0x1b8] sm:$0xff]
        %v1190 = vld [vmem:[#allocation2 + $0x1c0] sm:$0xff]
        %v1191 = vld [vmem:[#allocation2 + $0x1c8] sm:$0xff]
        %v1192 = vld [vmem:[#allocation2 + $0x1d0] sm:$0xff]
        %v1193 = vld [vmem:[#allocation2 + $0x1d8] sm:$0xff]
        %v1194 = vld [vmem:[#allocation2 + $0x1e0] sm:$0xff]
        %v1195 = vld [vmem:[#allocation2 + $0x1e8] sm:$0xff]
        %v1196 = vld [vmem:[#allocation2 + $0x1f0] sm:$0xff]
        %v1197 = vld [vmem:[#allocation2 + $0x1f8] sm:$0xff]
        %v1198 = vld [vmem:[%s249] sm:$0x1]
        %v1200 = vlaneseq
        %v1201 = vshrl.u32 %v1200, 7
        %v1202 = vsub.s32 0, %v1201
        %v1203 = vrot.slane %v1198, %v1202
        %v1205 = vadd.f32 %v1134, %v1203
        %v1206 = vadd.f32 %v1135, %v1203
        %v1207 = vadd.f32 %v1136, %v1203
        %v1208 = vadd.f32 %v1137, %v1203
        %v1209 = vadd.f32 %v1138, %v1203
        %v1210 = vadd.f32 %v1139, %v1203
        %v1211 = vadd.f32 %v1140, %v1203
        %v1212 = vadd.f32 %v1141, %v1203
        %v1213 = vadd.f32 %v1142, %v1203
        %v1214 = vadd.f32 %v1143, %v1203
        %v1215 = vadd.f32 %v1144, %v1203
        %v1216 = vadd.f32 %v1145, %v1203
        %v1217 = vadd.f32 %v1146, %v1203
        %v1218 = vadd.f32 %v1147, %v1203
        %v1219 = vadd.f32 %v1148, %v1203
        %v1220 = vadd.f32 %v1149, %v1203
        %v1221 = vadd.f32 %v1150, %v1203
        %v1222 = vadd.f32 %v1151, %v1203
        %v1223 = vadd.f32 %v1152, %v1203
        %v1224 = vadd.f32 %v1153, %v1203
        %v1225 = vadd.f32 %v1154, %v1203
        %v1226 = vadd.f32 %v1155, %v1203
        %v1227 = vadd.f32 %v1156, %v1203
        %v1228 = vadd.f32 %v1157, %v1203
        %v1229 = vadd.f32 %v1158, %v1203
        %v1230 = vadd.f32 %v1159, %v1203
        %v1231 = vadd.f32 %v1160, %v1203
        %v1232 = vadd.f32 %v1161, %v1203
        %v1233 = vadd.f32 %v1162, %v1203
        %v1234 = vadd.f32 %v1163, %v1203
        %v1235 = vadd.f32 %v1164, %v1203
        %v1236 = vadd.f32 %v1165, %v1203
        %v1237 = vadd.f32 %v1166, %v1203
        %v1238 = vadd.f32 %v1167, %v1203
        %v1239 = vadd.f32 %v1168, %v1203
        %v1240 = vadd.f32 %v1169, %v1203
        %v1241 = vadd.f32 %v1170, %v1203
        %v1242 = vadd.f32 %v1171, %v1203
        %v1243 = vadd.f32 %v1172, %v1203
        %v1244 = vadd.f32 %v1173, %v1203
        %v1245 = vadd.f32 %v1174, %v1203
        %v1246 = vadd.f32 %v1175, %v1203
        %v1247 = vadd.f32 %v1176, %v1203
        %v1248 = vadd.f32 %v1177, %v1203
        %v1249 = vadd.f32 %v1178, %v1203
        %v1250 = vadd.f32 %v1179, %v1203
        %v1251 = vadd.f32 %v1180, %v1203
        %v1252 = vadd.f32 %v1181, %v1203
        %v1253 = vadd.f32 %v1182, %v1203
        %v1254 = vadd.f32 %v1183, %v1203
        %v1255 = vadd.f32 %v1184, %v1203
        %v1256 = vadd.f32 %v1185, %v1203
        %v1257 = vadd.f32 %v1186, %v1203
        %v1258 = vadd.f32 %v1187, %v1203
        %v1259 = vadd.f32 %v1188, %v1203
        %v1260 = vadd.f32 %v1189, %v1203
        %v1261 = vadd.f32 %v1190, %v1203
        %v1262 = vadd.f32 %v1191, %v1203
        %v1263 = vadd.f32 %v1192, %v1203
        %v1264 = vadd.f32 %v1193, %v1203
        %v1265 = vadd.f32 %v1194, %v1203
        %v1266 = vadd.f32 %v1195, %v1203
        %v1267 = vadd.f32 %v1196, %v1203
        %v1268 = vadd.f32 %v1197, %v1203
        %v1269 = vmul.f32 %v1205, 0.2
        %v1270 = vmul.f32 %v1206, 0.2
        %v1271 = vmul.f32 %v1207, 0.2
        %v1272 = vmul.f32 %v1208, 0.2
        %v1273 = vmul.f32 %v1209, 0.2
        %v1274 = vmul.f32 %v1210, 0.2
        %v1275 = vmul.f32 %v1211, 0.2
        %v1276 = vmul.f32 %v1212, 0.2
        %v1277 = vmul.f32 %v1213, 0.2
        %v1278 = vmul.f32 %v1214, 0.2
        %v1279 = vmul.f32 %v1215, 0.2
        %v1280 = vmul.f32 %v1216, 0.2
        %v1281 = vmul.f32 %v1217, 0.2
        %v1282 = vmul.f32 %v1218, 0.2
        %v1283 = vmul.f32 %v1219, 0.2
        %v1284 = vmul.f32 %v1220, 0.2
        %v1285 = vmul.f32 %v1221, 0.2
        %v1286 = vmul.f32 %v1222, 0.2
        %v1287 = vmul.f32 %v1223, 0.2
        %v1288 = vmul.f32 %v1224, 0.2
        %v1289 = vmul.f32 %v1225, 0.2
        %v1290 = vmul.f32 %v1226, 0.2
        %v1291 = vmul.f32 %v1227, 0.2
        %v1292 = vmul.f32 %v1228, 0.2
        %v1293 = vmul.f32 %v1229, 0.2
        %v1294 = vmul.f32 %v1230, 0.2
        %v1295 = vmul.f32 %v1231, 0.2
        %v1296 = vmul.f32 %v1232, 0.2
        %v1297 = vmul.f32 %v1233, 0.2
        %v1298 = vmul.f32 %v1234, 0.2
        %v1299 = vmul.f32 %v1235, 0.2
        %v1300 = vmul.f32 %v1236, 0.2
        %v1301 = vmul.f32 %v1237, 0.2
        %v1302 = vmul.f32 %v1238, 0.2
        %v1303 = vmul.f32 %v1239, 0.2
        %v1304 = vmul.f32 %v1240, 0.2
        %v1305 = vmul.f32 %v1241, 0.2
        %v1306 = vmul.f32 %v1242, 0.2
        %v1307 = vmul.f32 %v1243, 0.2
        %v1308 = vmul.f32 %v1244, 0.2
        %v1309 = vmul.f32 %v1245, 0.2
        %v1310 = vmul.f32 %v1246, 0.2
        %v1311 = vmul.f32 %v1247, 0.2
        %v1312 = vmul.f32 %v1248, 0.2
        %v1313 = vmul.f32 %v1249, 0.2
        %v1314 = vmul.f32 %v1250, 0.2
        %v1315 = vmul.f32 %v1251, 0.2
        %v1316 = vmul.f32 %v1252, 0.2
        %v1317 = vmul.f32 %v1253, 0.2
        %v1318 = vmul.f32 %v1254, 0.2
        %v1319 = vmul.f32 %v1255, 0.2
        %v1320 = vmul.f32 %v1256, 0.2
        %v1321 = vmul.f32 %v1257, 0.2
        %v1322 = vmul.f32 %v1258, 0.2
        %v1323 = vmul.f32 %v1259, 0.2
        %v1324 = vmul.f32 %v1260, 0.2
        %v1325 = vmul.f32 %v1261, 0.2
        %v1326 = vmul.f32 %v1262, 0.2
        %v1327 = vmul.f32 %v1263, 0.2
        %v1328 = vmul.f32 %v1264, 0.2
        %v1329 = vmul.f32 %v1265, 0.2
        %v1330 = vmul.f32 %v1266, 0.2
        %v1331 = vmul.f32 %v1267, 0.2
        %v1332 = vmul.f32 %v1268, 0.2
        %v1333 = vmax.f32 %v1205, %v1269
        %v1334 = vmax.f32 %v1206, %v1270
        %v1335 = vmax.f32 %v1207, %v1271
        %v1336 = vmax.f32 %v1208, %v1272
        %v1337 = vmax.f32 %v1209, %v1273
        %v1338 = vmax.f32 %v1210, %v1274
        %v1339 = vmax.f32 %v1211, %v1275
        %v1340 = vmax.f32 %v1212, %v1276
        %v1341 = vmax.f32 %v1213, %v1277
        %v1342 = vmax.f32 %v1214, %v1278
        %v1343 = vmax.f32 %v1215, %v1279
        %v1344 = vmax.f32 %v1216, %v1280
        %v1345 = vmax.f32 %v1217, %v1281
        %v1346 = vmax.f32 %v1218, %v1282
        %v1347 = vmax.f32 %v1219, %v1283
        %v1348 = vmax.f32 %v1220, %v1284
        %v1349 = vmax.f32 %v1221, %v1285
        %v1350 = vmax.f32 %v1222, %v1286
        %v1351 = vmax.f32 %v1223, %v1287
        %v1352 = vmax.f32 %v1224, %v1288
        %v1353 = vmax.f32 %v1225, %v1289
        %v1354 = vmax.f32 %v1226, %v1290
        %v1355 = vmax.f32 %v1227, %v1291
        %v1356 = vmax.f32 %v1228, %v1292
        %v1357 = vmax.f32 %v1229, %v1293
        %v1358 = vmax.f32 %v1230, %v1294
        %v1359 = vmax.f32 %v1231, %v1295
        %v1360 = vmax.f32 %v1232, %v1296
        %v1361 = vmax.f32 %v1233, %v1297
        %v1362 = vmax.f32 %v1234, %v1298
        %v1363 = vmax.f32 %v1235, %v1299
        %v1364 = vmax.f32 %v1236, %v1300
        %v1365 = vmax.f32 %v1237, %v1301
        %v1366 = vmax.f32 %v1238, %v1302
        %v1367 = vmax.f32 %v1239, %v1303
        %v1368 = vmax.f32 %v1240, %v1304
        %v1369 = vmax.f32 %v1241, %v1305
        %v1370 = vmax.f32 %v1242, %v1306
        %v1371 = vmax.f32 %v1243, %v1307
        %v1372 = vmax.f32 %v1244, %v1308
        %v1373 = vmax.f32 %v1245, %v1309
        %v1374 = vmax.f32 %v1246, %v1310
        %v1375 = vmax.f32 %v1247, %v1311
        %v1376 = vmax.f32 %v1248, %v1312
        %v1377 = vmax.f32 %v1249, %v1313
        %v1378 = vmax.f32 %v1250, %v1314
        %v1379 = vmax.f32 %v1251, %v1315
        %v1380 = vmax.f32 %v1252, %v1316
        %v1381 = vmax.f32 %v1253, %v1317
        %v1382 = vmax.f32 %v1254, %v1318
        %v1383 = vmax.f32 %v1255, %v1319
        %v1384 = vmax.f32 %v1256, %v1320
        %v1385 = vmax.f32 %v1257, %v1321
        %v1386 = vmax.f32 %v1258, %v1322
        %v1387 = vmax.f32 %v1259, %v1323
        %v1388 = vmax.f32 %v1260, %v1324
        %v1389 = vmax.f32 %v1261, %v1325
        %v1390 = vmax.f32 %v1262, %v1326
        %v1391 = vmax.f32 %v1263, %v1327
        %v1392 = vmax.f32 %v1264, %v1328
        %v1393 = vmax.f32 %v1265, %v1329
        %v1394 = vmax.f32 %v1266, %v1330
        %v1395 = vmax.f32 %v1267, %v1331
        %v1396 = vmax.f32 %v1268, %v1332
        %v1397 = vpack.c.bf16 %v1334, %v1333
        %v1398 = vpack.c.bf16 %v1336, %v1335
        %v1399 = vpack.c.bf16 %v1338, %v1337
        %v1400 = vpack.c.bf16 %v1340, %v1339
        %v1401 = vpack.c.bf16 %v1342, %v1341
        %v1402 = vpack.c.bf16 %v1344, %v1343
        %v1403 = vpack.c.bf16 %v1346, %v1345
        %v1404 = vpack.c.bf16 %v1348, %v1347
        %v1405 = vpack.c.bf16 %v1350, %v1349
        %v1406 = vpack.c.bf16 %v1352, %v1351
        %v1407 = vpack.c.bf16 %v1354, %v1353
        %v1408 = vpack.c.bf16 %v1356, %v1355
        %v1409 = vpack.c.bf16 %v1358, %v1357
        %v1410 = vpack.c.bf16 %v1360, %v1359
        %v1411 = vpack.c.bf16 %v1362, %v1361
        %v1412 = vpack.c.bf16 %v1364, %v1363
        %v1413 = vpack.c.bf16 %v1366, %v1365
        %v1414 = vpack.c.bf16 %v1368, %v1367
        %v1415 = vpack.c.bf16 %v1370, %v1369
        %v1416 = vpack.c.bf16 %v1372, %v1371
        %v1417 = vpack.c.bf16 %v1374, %v1373
        %v1418 = vpack.c.bf16 %v1376, %v1375
        %v1419 = vpack.c.bf16 %v1378, %v1377
        %v1420 = vpack.c.bf16 %v1380, %v1379
        %v1421 = vpack.c.bf16 %v1382, %v1381
        %v1422 = vpack.c.bf16 %v1384, %v1383
        %v1423 = vpack.c.bf16 %v1386, %v1385
        %v1424 = vpack.c.bf16 %v1388, %v1387
        %v1425 = vpack.c.bf16 %v1390, %v1389
        %v1426 = vpack.c.bf16 %v1392, %v1391
        %v1427 = vpack.c.bf16 %v1394, %v1393
        %v1428 = vpack.c.bf16 %v1396, %v1395
        %v1461 = vunpack.c.l.b16 %v1397
        %v1462 = vunpack.c.h.b16 %v1397
        %v1463 = vunpack.c.l.b16 %v1398
        %v1464 = vunpack.c.h.b16 %v1398
        %v1465 = vunpack.c.l.b16 %v1399
        %v1466 = vunpack.c.h.b16 %v1399
        %v1467 = vunpack.c.l.b16 %v1400
        %v1468 = vunpack.c.h.b16 %v1400
        %v1469 = vunpack.c.l.b16 %v1401
        %v1470 = vunpack.c.h.b16 %v1401
        %v1471 = vunpack.c.l.b16 %v1402
        %v1472 = vunpack.c.h.b16 %v1402
        %v1473 = vunpack.c.l.b16 %v1403
        %v1474 = vunpack.c.h.b16 %v1403
        %v1475 = vunpack.c.l.b16 %v1404
        %v1476 = vunpack.c.h.b16 %v1404
        %v1477 = vunpack.c.l.b16 %v1405
        %v1478 = vunpack.c.h.b16 %v1405
        %v1479 = vunpack.c.l.b16 %v1406
        %v1480 = vunpack.c.h.b16 %v1406
        %v1481 = vunpack.c.l.b16 %v1407
        %v1482 = vunpack.c.h.b16 %v1407
        %v1483 = vunpack.c.l.b16 %v1408
        %v1484 = vunpack.c.h.b16 %v1408
        %v1485 = vunpack.c.l.b16 %v1409
        %v1486 = vunpack.c.h.b16 %v1409
        %v1487 = vunpack.c.l.b16 %v1410
        %v1488 = vunpack.c.h.b16 %v1410
        %v1489 = vunpack.c.l.b16 %v1411
        %v1490 = vunpack.c.h.b16 %v1411
        %v1491 = vunpack.c.l.b16 %v1412
        %v1492 = vunpack.c.h.b16 %v1412
        %v1493 = vunpack.c.l.b16 %v1413
        %v1494 = vunpack.c.h.b16 %v1413
        %v1495 = vunpack.c.l.b16 %v1414
        %v1496 = vunpack.c.h.b16 %v1414
        %v1497 = vunpack.c.l.b16 %v1415
        %v1498 = vunpack.c.h.b16 %v1415
        %v1499 = vunpack.c.l.b16 %v1416
        %v1500 = vunpack.c.h.b16 %v1416
        %v1501 = vunpack.c.l.b16 %v1417
        %v1502 = vunpack.c.h.b16 %v1417
        %v1503 = vunpack.c.l.b16 %v1418
        %v1504 = vunpack.c.h.b16 %v1418
        %v1505 = vunpack.c.l.b16 %v1419
        %v1506 = vunpack.c.h.b16 %v1419
        %v1507 = vunpack.c.l.b16 %v1420
        %v1508 = vunpack.c.h.b16 %v1420
        %v1509 = vunpack.c.l.b16 %v1421
        %v1510 = vunpack.c.h.b16 %v1421
        %v1511 = vunpack.c.l.b16 %v1422
        %v1512 = vunpack.c.h.b16 %v1422
        %v1513 = vunpack.c.l.b16 %v1423
        %v1514 = vunpack.c.h.b16 %v1423
        %v1515 = vunpack.c.l.b16 %v1424
        %v1516 = vunpack.c.h.b16 %v1424
        %v1517 = vunpack.c.l.b16 %v1425
        %v1518 = vunpack.c.h.b16 %v1425
        %v1519 = vunpack.c.l.b16 %v1426
        %v1520 = vunpack.c.h.b16 %v1426
        %v1521 = vunpack.c.l.b16 %v1427
        %v1522 = vunpack.c.h.b16 %v1427
        %v1523 = vunpack.c.l.b16 %v1428
        %v1524 = vunpack.c.h.b16 %v1428
        %v1525 = vpack.c.b16 %v1461, %v1461
        %v1526 = vpack.c.b16 %v1462, %v1462
        %v1527 = vpack.c.b16 %v1463, %v1463
        %v1528 = vpack.c.b16 %v1464, %v1464
        %v1529 = vpack.c.b16 %v1465, %v1465
        %v1530 = vpack.c.b16 %v1466, %v1466
        %v1531 = vpack.c.b16 %v1467, %v1467
        %v1532 = vpack.c.b16 %v1468, %v1468
        %v1533 = vpack.c.b16 %v1469, %v1469
        %v1534 = vpack.c.b16 %v1470, %v1470
        %v1535 = vpack.c.b16 %v1471, %v1471
        %v1536 = vpack.c.b16 %v1472, %v1472
        %v1537 = vpack.c.b16 %v1473, %v1473
        %v1538 = vpack.c.b16 %v1474, %v1474
        %v1539 = vpack.c.b16 %v1475, %v1475
        %v1540 = vpack.c.b16 %v1476, %v1476
        %v1541 = vpack.c.b16 %v1477, %v1477
        %v1542 = vpack.c.b16 %v1478, %v1478
        %v1543 = vpack.c.b16 %v1479, %v1479
        %v1544 = vpack.c.b16 %v1480, %v1480
        %v1545 = vpack.c.b16 %v1481, %v1481
        %v1546 = vpack.c.b16 %v1482, %v1482
        %v1547 = vpack.c.b16 %v1483, %v1483
        %v1548 = vpack.c.b16 %v1484, %v1484
        %v1549 = vpack.c.b16 %v1485, %v1485
        %v1550 = vpack.c.b16 %v1486, %v1486
        %v1551 = vpack.c.b16 %v1487, %v1487
        %v1552 = vpack.c.b16 %v1488, %v1488
        %v1553 = vpack.c.b16 %v1489, %v1489
        %v1554 = vpack.c.b16 %v1490, %v1490
        %v1555 = vpack.c.b16 %v1491, %v1491
        %v1556 = vpack.c.b16 %v1492, %v1492
        %v1557 = vpack.c.b16 %v1493, %v1493
        %v1558 = vpack.c.b16 %v1494, %v1494
        %v1559 = vpack.c.b16 %v1495, %v1495
        %v1560 = vpack.c.b16 %v1496, %v1496
        %v1561 = vpack.c.b16 %v1497, %v1497
        %v1562 = vpack.c.b16 %v1498, %v1498
        %v1563 = vpack.c.b16 %v1499, %v1499
        %v1564 = vpack.c.b16 %v1500, %v1500
        %v1565 = vpack.c.b16 %v1501, %v1501
        %v1566 = vpack.c.b16 %v1502, %v1502
        %v1567 = vpack.c.b16 %v1503, %v1503
        %v1568 = vpack.c.b16 %v1504, %v1504
        %v1569 = vpack.c.b16 %v1505, %v1505
        %v1570 = vpack.c.b16 %v1506, %v1506
        %v1571 = vpack.c.b16 %v1507, %v1507
        %v1572 = vpack.c.b16 %v1508, %v1508
        %v1573 = vpack.c.b16 %v1509, %v1509
        %v1574 = vpack.c.b16 %v1510, %v1510
        %v1575 = vpack.c.b16 %v1511, %v1511
        %v1576 = vpack.c.b16 %v1512, %v1512
        %v1577 = vpack.c.b16 %v1513, %v1513
        %v1578 = vpack.c.b16 %v1514, %v1514
        %v1579 = vpack.c.b16 %v1515, %v1515
        %v1580 = vpack.c.b16 %v1516, %v1516
        %v1581 = vpack.c.b16 %v1517, %v1517
        %v1582 = vpack.c.b16 %v1518, %v1518
        %v1583 = vpack.c.b16 %v1519, %v1519
        %v1584 = vpack.c.b16 %v1520, %v1520
        %v1585 = vpack.c.b16 %v1521, %v1521
        %v1586 = vpack.c.b16 %v1522, %v1522
        %v1587 = vpack.c.b16 %v1523, %v1523
        %v1588 = vpack.c.b16 %v1524, %v1524
        %vm1653 = vcmask 519168
        %1654 = vst.msk [vmem:[%s257] sm:$0xf] %vm1653, %v1525
        %1655 = vst.msk [vmem:[%s257 + $0x4] sm:$0xf] %vm1653, %v1526
        %1656 = vst.msk [vmem:[%s257 + $0x8] sm:$0xf] %vm1653, %v1527
        %1657 = vst.msk [vmem:[%s257 + $0xc] sm:$0xf] %vm1653, %v1528
        %1658 = vst.msk [vmem:[%s257 + $0x10] sm:$0xf] %vm1653, %v1529
        %1659 = vst.msk [vmem:[%s257 + $0x14] sm:$0xf] %vm1653, %v1530
        %1660 = vst.msk [vmem:[%s257 + $0x18] sm:$0xf] %vm1653, %v1531
        %1661 = vst.msk [vmem:[%s257 + $0x1c] sm:$0xf] %vm1653, %v1532
        %1662 = vst.msk [vmem:[%s257 + $0x20] sm:$0xf] %vm1653, %v1533
        %1663 = vst.msk [vmem:[%s257 + $0x24] sm:$0xf] %vm1653, %v1534
        %1664 = vst.msk [vmem:[%s257 + $0x28] sm:$0xf] %vm1653, %v1535
        %1665 = vst.msk [vmem:[%s257 + $0x2c] sm:$0xf] %vm1653, %v1536
        %1666 = vst.msk [vmem:[%s257 + $0x30] sm:$0xf] %vm1653, %v1537
        %1667 = vst.msk [vmem:[%s257 + $0x34] sm:$0xf] %vm1653, %v1538
        %1668 = vst.msk [vmem:[%s257 + $0x38] sm:$0xf] %vm1653, %v1539
        %1669 = vst.msk [vmem:[%s257 + $0x3c] sm:$0xf] %vm1653, %v1540
        %1670 = vst.msk [vmem:[%s257 + $0x40] sm:$0xf] %vm1653, %v1541
        %1671 = vst.msk [vmem:[%s257 + $0x44] sm:$0xf] %vm1653, %v1542
        %1672 = vst.msk [vmem:[%s257 + $0x48] sm:$0xf] %vm1653, %v1543
        %1673 = vst.msk [vmem:[%s257 + $0x4c] sm:$0xf] %vm1653, %v1544
        %1674 = vst.msk [vmem:[%s257 + $0x50] sm:$0xf] %vm1653, %v1545
        %1675 = vst.msk [vmem:[%s257 + $0x54] sm:$0xf] %vm1653, %v1546
        %1676 = vst.msk [vmem:[%s257 + $0x58] sm:$0xf] %vm1653, %v1547
        %1677 = vst.msk [vmem:[%s257 + $0x5c] sm:$0xf] %vm1653, %v1548
        %1678 = vst.msk [vmem:[%s257 + $0x60] sm:$0xf] %vm1653, %v1549
        %1679 = vst.msk [vmem:[%s257 + $0x64] sm:$0xf] %vm1653, %v1550
        %1680 = vst.msk [vmem:[%s257 + $0x68] sm:$0xf] %vm1653, %v1551
        %1681 = vst.msk [vmem:[%s257 + $0x6c] sm:$0xf] %vm1653, %v1552
        %1682 = vst.msk [vmem:[%s257 + $0x70] sm:$0xf] %vm1653, %v1553
        %1683 = vst.msk [vmem:[%s257 + $0x74] sm:$0xf] %vm1653, %v1554
        %1684 = vst.msk [vmem:[%s257 + $0x78] sm:$0xf] %vm1653, %v1555
        %1685 = vst.msk [vmem:[%s257 + $0x7c] sm:$0xf] %vm1653, %v1556
        %1686 = vst.msk [vmem:[%s257 + $0x80] sm:$0xf] %vm1653, %v1557
        %1687 = vst.msk [vmem:[%s257 + $0x84] sm:$0xf] %vm1653, %v1558
        %1688 = vst.msk [vmem:[%s257 + $0x88] sm:$0xf] %vm1653, %v1559
        %1689 = vst.msk [vmem:[%s257 + $0x8c] sm:$0xf] %vm1653, %v1560
        %1690 = vst.msk [vmem:[%s257 + $0x90] sm:$0xf] %vm1653, %v1561
        %1691 = vst.msk [vmem:[%s257 + $0x94] sm:$0xf] %vm1653, %v1562
        %1692 = vst.msk [vmem:[%s257 + $0x98] sm:$0xf] %vm1653, %v1563
        %1693 = vst.msk [vmem:[%s257 + $0x9c] sm:$0xf] %vm1653, %v1564
        %1694 = vst.msk [vmem:[%s257 + $0xa0] sm:$0xf] %vm1653, %v1565
        %1695 = vst.msk [vmem:[%s257 + $0xa4] sm:$0xf] %vm1653, %v1566
        %1696 = vst.msk [vmem:[%s257 + $0xa8] sm:$0xf] %vm1653, %v1567
        %1697 = vst.msk [vmem:[%s257 + $0xac] sm:$0xf] %vm1653, %v1568
        %1698 = vst.msk [vmem:[%s257 + $0xb0] sm:$0xf] %vm1653, %v1569
        %1699 = vst.msk [vmem:[%s257 + $0xb4] sm:$0xf] %vm1653, %v1570
        %1700 = vst.msk [vmem:[%s257 + $0xb8] sm:$0xf] %vm1653, %v1571
        %1701 = vst.msk [vmem:[%s257 + $0xbc] sm:$0xf] %vm1653, %v1572
        %1702 = vst.msk [vmem:[%s257 + $0xc0] sm:$0xf] %vm1653, %v1573
        %1703 = vst.msk [vmem:[%s257 + $0xc4] sm:$0xf] %vm1653, %v1574
        %1704 = vst.msk [vmem:[%s257 + $0xc8] sm:$0xf] %vm1653, %v1575
        %1705 = vst.msk [vmem:[%s257 + $0xcc] sm:$0xf] %vm1653, %v1576
        %1706 = vst.msk [vmem:[%s257 + $0xd0] sm:$0xf] %vm1653, %v1577
        %1707 = vst.msk [vmem:[%s257 + $0xd4] sm:$0xf] %vm1653, %v1578
        %1708 = vst.msk [vmem:[%s257 + $0xd8] sm:$0xf] %vm1653, %v1579
        %1709 = vst.msk [vmem:[%s257 + $0xdc] sm:$0xf] %vm1653, %v1580
        %1710 = vst.msk [vmem:[%s257 + $0xe0] sm:$0xf] %vm1653, %v1581
        %1711 = vst.msk [vmem:[%s257 + $0xe4] sm:$0xf] %vm1653, %v1582
        %1712 = vst.msk [vmem:[%s257 + $0xe8] sm:$0xf] %vm1653, %v1583
        %1713 = vst.msk [vmem:[%s257 + $0xec] sm:$0xf] %vm1653, %v1584
        %1714 = vst.msk [vmem:[%s257 + $0xf0] sm:$0xf] %vm1653, %v1585
        %1715 = vst.msk [vmem:[%s257 + $0xf4] sm:$0xf] %vm1653, %v1586
        %1716 = vst.msk [vmem:[%s257 + $0xf8] sm:$0xf] %vm1653, %v1587
        %1717 = vst.msk [vmem:[%s257 + $0xfc] sm:$0xf] %vm1653, %v1588
      $region40: #{frame_map_forward.4} parent=31 // pred_fallthru
        _
      %s1718 = smul.u32 64, %s19
      %p1719 = scmp.lt.s32.totalorder %s1718, 255
      %s1720 = scalar_select %p1719, %s1718, 255
      %p1721 = scmp.lt.s32.totalorder %s20, 0
      %s1722 = scalar_select %p1721, %s20, 0
      %s1723 = sadd.s32 %s1722, %s1720
      %s1724 = smul.addr %s1723, 4
      %s1725 = scalar_lea.vmem %s3, %s1724
      // Predicated region
      $region41: #{frame_map_forward.4} parent=31 // pred_check
        %p1726 = pneg %p135
      $region42: #{frame_map_forward.4} parent=31 // pred_check_branch
        %1728 = sbr.rel (%p1726) target = $region44
      $region43: #{frame_map_forward.4} parent=31 // pred_region
        %s1729 = smul.u32 64, %s19
      $region44: #{frame_map_forward.4} parent=31 // pred_fallthru
        _
    $region32: #{frame_map_forward.4} parent=5 // pred_fallthru
      _
    %p1730 = scmp.le.s32.totalorder 2, %s9
    // Predicated region
    $region45: #{frame_map_forward.4} parent=5 // pred_check
      %p1731 = pneg %p1730
    $region46: #{frame_map_forward.4} parent=5 // pred_check_branch
      %1733 = sbr.rel (%p1731) target = $region48
    $region47: #{frame_map_forward.4} parent=5 // pred_region
      %s1734 = ssub.s32 %s9, 2
      // Predicated region
      $region49: #{frame_map_forward.4} parent=47 // pred_check
        %p1735 = pneg %p141
      $region50: #{frame_map_forward.4} parent=47 // pred_check_branch
        %1737 = sbr.rel (%p1735) target = $region52
      $region51: #{frame_map_forward.4} parent=47 // pred_region
        %s1738 = smul.u32 64, %s22
        %p1739 = scmp.lt.s32.totalorder %s1738, 255
        %s1740 = scalar_select %p1739, %s1738, 255
        %p1741 = scmp.lt.s32.totalorder %s23, 0
        %s1742 = scalar_select %p1741, %s23, 0
        %s1743 = sadd.s32 %s1742, %s1740
        %s1744 = smul.addr %s1743, 4
        %s1745 = scalar_lea.vmem %s3, %s1744
      $region52: #{frame_map_forward.4} parent=47 // pred_fallthru
        _
    $region48: #{frame_map_forward.4} parent=5 // pred_fallthru
      _
  $region6: #{frame_map_forward.4} parent=0 // loop_footer
    %s13 = sadd.s32 1, %s9
  $region7: #{frame_map_forward.4} parent=0 // loop_footer_branch
    %8 = sbr.rel target = $region3
  $region8: #{frame_map_forward.4} parent=0 // loop_exit
    _

// kernel: frame_map_forward.5
$region0: #{frame_map_forward.5}
  #allocation0 [shape = 'u32[]', space=smem, size = 0x4, offset = 0x4, fixed_abs, tag = 'smem constant byte address 0x4 - core index']
  #allocation1 [shape = 'u32[144,128]{1,0:T(1,128)}', space=vmem, size = 0x12000, scoped, tag = 'internal scratch']
  #allocation2 [shape = 'f32[512,128]{1,0:T(8,128)}', space=vmem, size = 0x40000, scoped, tag = 'scratch operand']
  %s0 = inlined_call_operand.vmem [shape: bf16[512,1024], index: 0, kind: input, shape index: {}]
  %s1 = inlined_call_operand.vmem [shape: bf16[1024,128], index: 1, kind: input, shape index: {}]
  %s2 = inlined_call_operand.vmem [shape: f32[1,128], index: 2, kind: input, shape index: {}]
  %s3 = inlined_call_operand.vmem [shape: bf16[512,128], index: 3, kind: output, shape index: {}]
  %s4 = sld [smem:[#allocation0]]
  $region76: #{frame_map_forward.5} parent=0
    _
  %s6 = ssub.s32 1, %s4
  %s7 = scalar_select 0, %s6, %s4
  $region1: #{frame_map_forward.5} parent=0
    #allocation3 [shape = 'u8[1048576]{0}', space=vmem, size = 0x100000, scoped, tag = 'input window, operand 0']
    loop: start=0, step=1, limit=4
    $region2: #{frame_map_forward.5} parent=1 // loop_pre_header
      _
    $region3: #{frame_map_forward.5} parent=1 // loop_header
      %s9 = sphi 0, %s13
      %p10 = scmp.ge.s32.totalorder %s9, 4
      %s16 = sphi 0, %s35
      %s17 = sphi 0, %s31
      %s18 = sphi 0, %s27
      %s19 = sphi 0, %s16
      %s20 = sphi 0, %s17
      %s21 = sphi 0, %s18
      %s22 = sphi 0, %s19
      %s23 = sphi 0, %s20
      %s24 = sphi 0, %s21
      %s40 = sphi 0, %s42
      %s43 = sphi 0, %s40
      %s44 = sphi 0, %s43
      %s60 = sphi 0, %s44
      %s68 = sphi 0, %s70
      %s71 = sphi 0, %s68
      %s72 = sphi 0, %s71
      %s88 = sphi 0, %s72
      %s94 = sphi 0, %s96
      %s97 = sphi 0, %s94
      %s98 = sphi 0, %s97
      %s114 = sphi 0, %s98
      %s122 = sphi 0, %s124
      %s125 = sphi 0, %s122
      %s126 = sphi 0, %s125
      %s142 = sphi 0, %s126
    $region4: #{frame_map_forward.5} parent=1 // loop_header_branch
      %12 = sbr.rel (%p10) target = $region8
    $region5: #{frame_map_forward.5} parent=1 // loop_body
      %s14 = ssub.s32 %s9, 1
      %s15 = ssub.s32 %s9, 2
      %s25 = sadd.s32 1, %s18
      %p26 = scmp.ge.s32.totalorder %s25, 2
      %s27 = scalar_select %p26, 0, %s25
      %s28 = sadd.s32 1, %s17
      %s29 = scalar_select %p26, %s28, %s17
      %p30 = scmp.ge.s32.totalorder %s29, 1
      %s31 = scalar_select %p30, 0, %s29
      %s32 = sadd.s32 1, %s16
      %s33 = scalar_select %p30, %s32, %s16
      %p34 = scmp.ge.s32.totalorder %s33, 1
      %s35 = scalar_select %p34, 0, %s33
      %s36 = ssub.s32 %s16, %s35
      %s37 = ssub.s32 %s18, %s27
      %s38 = sor.u32 %s36, %s37
      %p39 = scmp.eq.s32.totalorder %s38, 0
      %s41 = sadd.s32 %s40, 1
      %s42 = scalar_select %p39, %s40, %s41
      %p45 = pneg %p39
      %p46 = scmp.eq.s32.totalorder %s9, 1
      %p47 = por %p45, %p46
      %p48 = scmp.ne.s32.totalorder %s40, %s43
      %p49 = scmp.eq.s32.totalorder %s9, 0
      %p50 = por %p48, %p49
      %p51 = scmp.ne.s32.totalorder %s40, %s43
      %p52 = scmp.eq.s32.totalorder %s14, 1
      %p53 = por %p51, %p52
      %p54 = scmp.ne.s32.totalorder %s43, %s44
      %p55 = scmp.eq.s32.totalorder %s14, 0
      %p56 = por %p54, %p55
      %p57 = scmp.ne.s32.totalorder %s43, %s44
      %p58 = scmp.eq.s32.totalorder %s15, 1
      %p59 = por %p57, %p58
      %p61 = scmp.ne.s32.totalorder %s44, %s60
      %p62 = scmp.eq.s32.totalorder %s15, 0
      %p63 = por %p61, %p62
      %s64 = ssub.s32 %s18, %s27
      %s65 = ssub.s32 %s17, %s31
      %s66 = sor.u32 %s64, %s65
      %p67 = scmp.eq.s32.totalorder %s66, 0
      %s69 = sadd.s32 %s68, 1
      %s70 = scalar_select %p67, %s68, %s69
      %p73 = pneg %p67
      %p74 = scmp.eq.s32.totalorder %s9, 1
      %p75 = por %p73, %p74
      %p76 = scmp.ne.s32.totalorder %s68, %s71
      %p77 = scmp.eq.s32.totalorder %s9, 0
      %p78 = por %p76, %p77
      %p79 = scmp.ne.s32.totalorder %s68, %s71
      %p80 = scmp.eq.s32.totalorder %s14, 1
      %p81 = por %p79, %p80
      %p82 = scmp.ne.s32.totalorder %s71, %s72
      %p83 = scmp.eq.s32.totalorder %s14, 0
      %p84 = por %p82, %p83
      %p85 = scmp.ne.s32.totalorder %s71, %s72
      %p86 = scmp.eq.s32.totalorder %s15, 1
      %p87 = por %p85, %p86
      %p89 = scmp.ne.s32.totalorder %s72, %s88
      %p90 = scmp.eq.s32.totalorder %s15, 0
      %p91 = por %p89, %p90
      %s92 = ssub.s32 %s17, %s31
      %p93 = scmp.eq.s32.totalorder %s92, 0
      %s95 = sadd.s32 %s94, 1
      %s96 = scalar_select %p93, %s94, %s95
      %p99 = pneg %p93
      %p100 = scmp.eq.s32.totalorder %s9, 1
      %p101 = por %p99, %p100
      %p102 = scmp.ne.s32.totalorder %s94, %s97
      %p103 = scmp.eq.s32.totalorder %s9, 0
      %p104 = por %p102, %p103
      %p105 = scmp.ne.s32.totalorder %s94, %s97
      %p106 = scmp.eq.s32.totalorder %s14, 1
      %p107 = por %p105, %p106
      %p108 = scmp.ne.s32.totalorder %s97, %s98
      %p109 = scmp.eq.s32.totalorder %s14, 0
      %p110 = por %p108, %p109
      %p111 = scmp.ne.s32.totalorder %s97, %s98
      %p112 = scmp.eq.s32.totalorder %s15, 1
      %p113 = por %p111, %p112
      %p115 = scmp.ne.s32.totalorder %s98, %s114
      %p116 = scmp.eq.s32.totalorder %s15, 0
      %p117 = por %p115, %p116
      %s118 = ssub.s32 %s16, %s35
      %s119 = ssub.s32 %s17, %s31
      %s120 = sor.u32 %s118, %s119
      %p121 = scmp.eq.s32.totalorder %s120, 0
      %s123 = sadd.s32 %s122, 1
      %s124 = scalar_select %p121, %s122, %s123
      %p127 = pneg %p121
      %p128 = scmp.eq.s32.totalorder %s9, 1
      %p129 = por %p127, %p128
      %p130 = scmp.ne.s32.totalorder %s122, %s125
      %p131 = scmp.eq.s32.totalorder %s9, 0
      %p132 = por %p130, %p131
      %p133 = scmp.ne.s32.totalorder %s122, %s125
      %p134 = scmp.eq.s32.totalorder %s14, 1
      %p135 = por %p133, %p134
      %p136 = scmp.ne.s32.totalorder %s125, %s126
      %p137 = scmp.eq.s32.totalorder %s14, 0
      %p138 = por %p136, %p137
      %p139 = scmp.ne.s32.totalorder %s125, %s126
      %p140 = scmp.eq.s32.totalorder %s15, 1
      %p141 = por %p139, %p140
      %p143 = scmp.ne.s32.totalorder %s126, %s142
      %p144 = scmp.eq.s32.totalorder %s15, 0
      %p145 = por %p143, %p144
      %p146 = scmp.le.s32.totalorder 1, %s9
      %p147 = scmp.lt.s32.totalorder %s9, 3
      %p148 = pnand %p146, %p147
      %p149 = pneg %p148
      // Predicated region
      $region9: #{frame_map_forward.5} parent=5 // pred_check
        _
      $region10: #{frame_map_forward.5} parent=5 // pred_check_branch
        %151 = sbr.rel (%p148) target = $region12
      $region11: #{frame_map_forward.5} parent=5 // pred_region
        %s152 = ssub.s32 %s9, 1
        // Predicated region
        $region13: #{frame_map_forward.5} parent=11 // pred_check
          %p153 = pneg %p110
        $region14: #{frame_map_forward.5} parent=11 // pred_check_branch
          %155 = sbr.rel (%p153) target = $region16
        $region15: #{frame_map_forward.5} parent=11 // pred_region
          %p156 = scmp.lt.s32.totalorder %s20, 0
          %s157 = scalar_select %p156, %s20, 0
          %s158 = scalar_lea.vmem %s2, %s157
        $region16: #{frame_map_forward.5} parent=11 // pred_fallthru
          _
      $region12: #{frame_map_forward.5} parent=5 // pred_fallthru
        _
      %p159 = scmp.lt.s32.totalorder %s9, 2
      // Predicated region
      $region17: #{frame_map_forward.5} parent=5 // pred_check
        %p160 = pneg %p159
      $region18: #{frame_map_forward.5} parent=5 // pred_check_branch
        %162 = sbr.rel (%p160) target = $region20
      $region19: #{frame_map_forward.5} parent=5 // pred_region
        // Predicated region
        $region21: #{frame_map_forward.5} parent=19 // pred_check
          %p163 = pneg %p50
        $region22: #{frame_map_forward.5} parent=19 // pred_check_branch
          %165 = sbr.rel (%p163) target = $region24
        $region23: #{frame_map_forward.5} parent=19 // pred_region
          %s166 = sand.u32 %s40, 1
          %s167 = sand.u32 %s40, 1
          %s168 = smul.addr %s167, 1024
          %s169 = scalar_lea.vmem [#allocation3], %s168
          %s170 = smul.u32 64, %s16
          %s171 = smul.u32 4, %s18
          %s172 = smul.addr %s170, 8
          %s173 = sadd.s32 %s171, %s172
          %s174 = smul.addr %s173, 4
          %s175 = scalar_lea.vmem %s0, %s174
          // Predicated region
          $region25: #{frame_map_forward.5} parent=23 // pred_check
            _
          $region26: #{frame_map_forward.5} parent=23 // pred_check_branch
            %177 = sbr.rel (0) target = $region28
          $region27: #{frame_map_forward.5} parent=23 // pred_region
            // Predicated region
            $region29: #{frame_map_forward.5} parent=27 // pred_check
              _
            $region30: #{frame_map_forward.5} parent=27 // pred_check_branch
              %179 = sbr.rel (0) target = $region32
            $region31: #{frame_map_forward.5} parent=27 // pred_region
              loop: start=0, step=1, limit=1
              $region33: #{frame_map_forward.5} parent=31 // loop_pre_header
                _
              $region34: #{frame_map_forward.5} parent=31 // loop_header
                %s181 = sphi 0, %s185
                %p182 = scmp.ge.s32.totalorder %s181, 1
                %s186 = sphi %s175, %s175
                %s187 = sphi %s169, %s169
              $region35: #{frame_map_forward.5} parent=31 // loop_header_branch
                %184 = sbr.rel (%p182) target = $region39
              $region36: #{frame_map_forward.5} parent=31 // loop_body
                %v188 = vld [vmem:[%s186] sm:$0xff]
                %189 = vst [vmem:[%s187] sm:$0xff] %v188
                %v190 = vld [vmem:[%s186 + $0x8] sm:$0xff]
                %191 = vst [vmem:[%s187 + $0x8] sm:$0xff] %v190
                %v192 = vld [vmem:[%s186 + $0x20] sm:$0xff]
                %193 = vst [vmem:[%s187 + $0x10] sm:$0xff] %v192
                %v194 = vld [vmem:[%s186 + $0x28] sm:$0xff]
                %195 = vst [vmem:[%s187 + $0x18] sm:$0xff] %v194
                %v196 = vld [vmem:[%s186 + $0x40] sm:$0xff]
                %197 = vst [vmem:[%s187 + $0x20] sm:$0xff] %v196
                %v198 = vld [vmem:[%s186 + $0x48] sm:$0xff]
                %199 = vst [vmem:[%s187 + $0x28] sm:$0xff] %v198
                %v200 = vld [vmem:[%s186 + $0x60] sm:$0xff]
                %201 = vst [vmem:[%s187 + $0x30] sm:$0xff] %v200
                %v202 = vld [vmem:[%s186 + $0x68] sm:$0xff]
                %203 = vst [vmem:[%s187 + $0x38] sm:$0xff] %v202
                %v204 = vld [vmem:[%s186 + $0x80] sm:$0xff]
                %205 = vst [vmem:[%s187 + $0x40] sm:$0xff] %v204
                %v206 = vld [vmem:[%s186 + $0x88] sm:$0xff]
                %207 = vst [vmem:[%s187 + $0x48] sm:$0xff] %v206
                %v208 = vld [vmem:[%s186 + $0xa0] sm:$0xff]
                %209 = vst [vmem:[%s187 + $0x50] sm:$0xff] %v208
                %v210 = vld [vmem:[%s186 + $0xa8] sm:$0xff]
                %211 = vst [vmem:[%s187 + $0x58] sm:$0xff] %v210
                %v212 = vld [vmem:[%s186 + $0xc0] sm:$0xff]
                %213 = vst [vmem:[%s187 + $0x60] sm:$0xff] %v212
                %v214 = vld [vmem:[%s186 + $0xc8] sm:$0xff]
                %215 = vst [vmem:[%s187 + $0x68] sm:$0xff] %v214
                %v216 = vld [vmem:[%s186 + $0xe0] sm:$0xff]
                %217 = vst [vmem:[%s187 + $0x70] sm:$0xff] %v216
                %v218 = vld [vmem:[%s186 + $0xe8] sm:$0xff]
                %219 = vst [vmem:[%s187 + $0x78] sm:$0xff] %v218
                %v220 = vld [vmem:[%s186 + $0x100] sm:$0xff]
                %221 = vst [vmem:[%s187 + $0x80] sm:$0xff] %v220
                %v222 = vld [vmem:[%s186 + $0x108] sm:$0xff]
                %223 = vst [vmem:[%s187 + $0x88] sm:$0xff] %v222
                %v224 = vld [vmem:[%s186 + $0x120] sm:$0xff]
                %225 = vst [vmem:[%s187 + $0x90] sm:$0xff] %v224
                %v226 = vld [vmem:[%s186 + $0x128] sm:$0xff]
                %227 = vst [vmem:[%s187 + $0x98] sm:$0xff] %v226
                %v228 = vld [vmem:[%s186 + $0x140] sm:$0xff]
                %229 = vst [vmem:[%s187 + $0xa0] sm:$0xff] %v228
                %v230 = vld [vmem:[%s186 + $0x148] sm:$0xff]
                %231 = vst [vmem:[%s187 + $0xa8] sm:$0xff] %v230
                %v232 = vld [vmem:[%s186 + $0x160] sm:$0xff]
                %233 = vst [vmem:[%s187 + $0xb0] sm:$0xff] %v232
                %v234 = vld [vmem:[%s186 + $0x168] sm:$0xff]
                %235 = vst [vmem:[%s187 + $0xb8] sm:$0xff] %v234
                %v236 = vld [vmem:[%s186 + $0x180] sm:$0xff]
                %237 = vst [vmem:[%s187 + $0xc0] sm:$0xff] %v236
                %v238 = vld [vmem:[%s186 + $0x188] sm:$0xff]
                %239 = vst [vmem:[%s187 + $0xc8] sm:$0xff] %v238
                %v240 = vld [vmem:[%s186 + $0x1a0] sm:$0xff]
                %241 = vst [vmem:[%s187 + $0xd0] sm:$0xff] %v240
                %v242 = vld [vmem:[%s186 + $0x1a8] sm:$0xff]
                %243 = vst [vmem:[%s187 + $0xd8] sm:$0xff] %v242
                %v244 = vld [vmem:[%s186 + $0x1c0] sm:$0xff]
                %245 = vst [vmem:[%s187 + $0xe0] sm:$0xff] %v244
                %v246 = vld [vmem:[%s186 + $0x1c8] sm:$0xff]
                %247 = vst [vmem:[%s187 + $0xe8] sm:$0xff] %v246
                %v248 = vld [vmem:[%s186 + $0x1e0] sm:$0xff]
                %249 = vst [vmem:[%s187 + $0xf0] sm:$0xff] %v248
                %v250 = vld [vmem:[%s186 + $0x1e8] sm:$0xff]
                %251 = vst [vmem:[%s187 + $0xf8] sm:$0xff] %v250
                %v252 = vld [vmem:[%s186 + $0x200] sm:$0xff]
                %253 = vst [vmem:[%s187 + $0x100] sm:$0xff] %v252
                %v254 = vld [vmem:[%s186 + $0x208] sm:$0xff]
                %255 = vst [vmem:[%s187 + $0x108] sm:$0xff] %v254
                %v256 = vld [vmem:[%s186 + $0x220] sm:$0xff]
                %257 = vst [vmem:[%s187 + $0x110] sm:$0xff] %v256
                %v258 = vld [vmem:[%s186 + $0x228] sm:$0xff]
                %259 = vst [vmem:[%s187 + $0x118] sm:$0xff] %v258
                %v260 = vld [vmem:[%s186 + $0x240] sm:$0xff]
                %261 = vst [vmem:[%s187 + $0x120] sm:$0xff] %v260
                %v262 = vld [vmem:[%s186 + $0x248] sm:$0xff]
                %263 = vst [vmem:[%s187 + $0x128] sm:$0xff] %v262
                %v264 = vld [vmem:[%s186 + $0x260] sm:$0xff]
                %265 = vst [vmem:[%s187 + $0x130] sm:$0xff] %v264
                %v266 = vld [vmem:[%s186 + $0x268] sm:$0xff]
                %267 = vst [vmem:[%s187 + $0x138] sm:$0xff] %v266
                %v268 = vld [vmem:[%s186 + $0x280] sm:$0xff]
                %269 = vst [vmem:[%s187 + $0x140] sm:$0xff] %v268
                %v270 = vld [vmem:[%s186 + $0x288] sm:$0xff]
                %271 = vst [vmem:[%s187 + $0x148] sm:$0xff] %v270
                %v272 = vld [vmem:[%s186 + $0x2a0] sm:$0xff]
                %273 = vst [vmem:[%s187 + $0x150] sm:$0xff] %v272
                %v274 = vld [vmem:[%s186 + $0x2a8] sm:$0xff]
                %275 = vst [vmem:[%s187 + $0x158] sm:$0xff] %v274
                %v276 = vld [vmem:[%s186 + $0x2c0] sm:$0xff]
                %277 = vst [vmem:[%s187 + $0x160] sm:$0xff] %v276
                %v278 = vld [vmem:[%s186 + $0x2c8] sm:$0xff]
                %279 = vst [vmem:[%s187 + $0x168] sm:$0xff] %v278
                %v280 = vld [vmem:[%s186 + $0x2e0] sm:$0xff]
                %281 = vst [vmem:[%s187 + $0x170] sm:$0xff] %v280
                %v282 = vld [vmem:[%s186 + $0x2e8] sm:$0xff]
                %283 = vst [vmem:[%s187 + $0x178] sm:$0xff] %v282
                %v284 = vld [vmem:[%s186 + $0x300] sm:$0xff]
                %285 = vst [vmem:[%s187 + $0x180] sm:$0xff] %v284
                %v286 = vld [vmem:[%s186 + $0x308] sm:$0xff]
                %287 = vst [vmem:[%s187 + $0x188] sm:$0xff] %v286
                %v288 = vld [vmem:[%s186 + $0x320] sm:$0xff]
                %289 = vst [vmem:[%s187 + $0x190] sm:$0xff] %v288
                %v290 = vld [vmem:[%s186 + $0x328] sm:$0xff]
                %291 = vst [vmem:[%s187 + $0x198] sm:$0xff] %v290
                %v292 = vld [vmem:[%s186 + $0x340] sm:$0xff]
                %293 = vst [vmem:[%s187 + $0x1a0] sm:$0xff] %v292
                %v294 = vld [vmem:[%s186 + $0x348] sm:$0xff]
                %295 = vst [vmem:[%s187 + $0x1a8] sm:$0xff] %v294
                %v296 = vld [vmem:[%s186 + $0x360] sm:$0xff]
                %297 = vst [vmem:[%s187 + $0x1b0] sm:$0xff] %v296
                %v298 = vld [vmem:[%s186 + $0x368] sm:$0xff]
                %299 = vst [vmem:[%s187 + $0x1b8] sm:$0xff] %v298
                %v300 = vld [vmem:[%s186 + $0x380] sm:$0xff]
                %301 = vst [vmem:[%s187 + $0x1c0] sm:$0xff] %v300
                %v302 = vld [vmem:[%s186 + $0x388] sm:$0xff]
                %303 = vst [vmem:[%s187 + $0x1c8] sm:$0xff] %v302
                %v304 = vld [vmem:[%s186 + $0x3a0] sm:$0xff]
                %305 = vst [vmem:[%s187 + $0x1d0] sm:$0xff] %v304
                %v306 = vld [vmem:[%s186 + $0x3a8] sm:$0xff]
                %307 = vst [vmem:[%s187 + $0x1d8] sm:$0xff] %v306
                %v308 = vld [vmem:[%s186 + $0x3c0] sm:$0xff]
                %309 = vst [vmem:[%s187 + $0x1e0] sm:$0xff] %v308
                %v310 = vld [vmem:[%s186 + $0x3c8] sm:$0xff]
                %311 = vst [vmem:[%s187 + $0x1e8] sm:$0xff] %v310
                %v312 = vld [vmem:[%s186 + $0x3e0] sm:$0xff]
                %313 = vst [vmem:[%s187 + $0x1f0] sm:$0xff] %v312
                %v314 = vld [vmem:[%s186 + $0x3e8] sm:$0xff]
                %315 = vst [vmem:[%s187 + $0x1f8] sm:$0xff] %v314
                %v316 = vld [vmem:[%s186 + $0x400] sm:$0xff]
                %317 = vst [vmem:[%s187 + $0x200] sm:$0xff] %v316
                %v318 = vld [vmem:[%s186 + $0x408] sm:$0xff]
                %319 = vst [vmem:[%s187 + $0x208] sm:$0xff] %v318
                %v320 = vld [vmem:[%s186 + $0x420] sm:$0xff]
                %321 = vst [vmem:[%s187 + $0x210] sm:$0xff] %v320
                %v322 = vld [vmem:[%s186 + $0x428] sm:$0xff]
                %323 = vst [vmem:[%s187 + $0x218] sm:$0xff] %v322
                %v324 = vld [vmem:[%s186 + $0x440] sm:$0xff]
                %325 = vst [vmem:[%s187 + $0x220] sm:$0xff] %v324
                %v326 = vld [vmem:[%s186 + $0x448] sm:$0xff]
                %327 = vst [vmem:[%s187 + $0x228] sm:$0xff] %v326
                %v328 = vld [vmem:[%s186 + $0x460] sm:$0xff]
                %329 = vst [vmem:[%s187 + $0x230] sm:$0xff] %v328
                %v330 = vld [vmem:[%s186 + $0x468] sm:$0xff]
                %331 = vst [vmem:[%s187 + $0x238] sm:$0xff] %v330
                %v332 = vld [vmem:[%s186 + $0x480] sm:$0xff]
                %333 = vst [vmem:[%s187 + $0x240] sm:$0xff] %v332
                %v334 = vld [vmem:[%s186 + $0x488] sm:$0xff]
                %335 = vst [vmem:[%s187 + $0x248] sm:$0xff] %v334
                %v336 = vld [vmem:[%s186 + $0x4a0] sm:$0xff]
                %337 = vst [vmem:[%s187 + $0x250] sm:$0xff] %v336
                %v338 = vld [vmem:[%s186 + $0x4a8] sm:$0xff]
                %339 = vst [vmem:[%s187 + $0x258] sm:$0xff] %v338
                %v340 = vld [vmem:[%s186 + $0x4c0] sm:$0xff]
                %341 = vst [vmem:[%s187 + $0x260] sm:$0xff] %v340
                %v342 = vld [vmem:[%s186 + $0x4c8] sm:$0xff]
                %343 = vst [vmem:[%s187 + $0x268] sm:$0xff] %v342
                %v344 = vld [vmem:[%s186 + $0x4e0] sm:$0xff]
                %345 = vst [vmem:[%s187 + $0x270] sm:$0xff] %v344
                %v346 = vld [vmem:[%s186 + $0x4e8] sm:$0xff]
                %347 = vst [vmem:[%s187 + $0x278] sm:$0xff] %v346
                %v348 = vld [vmem:[%s186 + $0x500] sm:$0xff]
                %349 = vst [vmem:[%s187 + $0x280] sm:$0xff] %v348
                %v350 = vld [vmem:[%s186 + $0x508] sm:$0xff]
                %351 = vst [vmem:[%s187 + $0x288] sm:$0xff] %v350
                %v352 = vld [vmem:[%s186 + $0x520] sm:$0xff]
                %353 = vst [vmem:[%s187 + $0x290] sm:$0xff] %v352
                %v354 = vld [vmem:[%s186 + $0x528] sm:$0xff]
                %355 = vst [vmem:[%s187 + $0x298] sm:$0xff] %v354
                %v356 = vld [vmem:[%s186 + $0x540] sm:$0xff]
                %357 = vst [vmem:[%s187 + $0x2a0] sm:$0xff] %v356
                %v358 = vld [vmem:[%s186 + $0x548] sm:$0xff]
                %359 = vst [vmem:[%s187 + $0x2a8] sm:$0xff] %v358
                %v360 = vld [vmem:[%s186 + $0x560] sm:$0xff]
                %361 = vst [vmem:[%s187 + $0x2b0] sm:$0xff] %v360
                %v362 = vld [vmem:[%s186 + $0x568] sm:$0xff]
                %363 = vst [vmem:[%s187 + $0x2b8] sm:$0xff] %v362
                %v364 = vld [vmem:[%s186 + $0x580] sm:$0xff]
                %365 = vst [vmem:[%s187 + $0x2c0] sm:$0xff] %v364
                %v366 = vld [vmem:[%s186 + $0x588] sm:$0xff]
                %367 = vst [vmem:[%s187 + $0x2c8] sm:$0xff] %v366
                %v368 = vld [vmem:[%s186 + $0x5a0] sm:$0xff]
                %369 = vst [vmem:[%s187 + $0x2d0] sm:$0xff] %v368
                %v370 = vld [vmem:[%s186 + $0x5a8] sm:$0xff]
                %371 = vst [vmem:[%s187 + $0x2d8] sm:$0xff] %v370
                %v372 = vld [vmem:[%s186 + $0x5c0] sm:$0xff]
                %373 = vst [vmem:[%s187 + $0x2e0] sm:$0xff] %v372
                %v374 = vld [vmem:[%s186 + $0x5c8] sm:$0xff]
                %375 = vst [vmem:[%s187 + $0x2e8] sm:$0xff] %v374
                %v376 = vld [vmem:[%s186 + $0x5e0] sm:$0xff]
                %377 = vst [vmem:[%s187 + $0x2f0] sm:$0xff] %v376
                %v378 = vld [vmem:[%s186 + $0x5e8] sm:$0xff]
                %379 = vst [vmem:[%s187 + $0x2f8] sm:$0xff] %v378
                %v380 = vld [vmem:[%s186 + $0x600] sm:$0xff]
                %381 = vst [vmem:[%s187 + $0x300] sm:$0xff] %v380
                %v382 = vld [vmem:[%s186 + $0x608] sm:$0xff]
                %383 = vst [vmem:[%s187 + $0x308] sm:$0xff] %v382
                %v384 = vld [vmem:[%s186 + $0x620] sm:$0xff]
                %385 = vst [vmem:[%s187 + $0x310] sm:$0xff] %v384
                %v386 = vld [vmem:[%s186 + $0x628] sm:$0xff]
                %387 = vst [vmem:[%s187 + $0x318] sm:$0xff] %v386
                %v388 = vld [vmem:[%s186 + $0x640] sm:$0xff]
                %389 = vst [vmem:[%s187 + $0x320] sm:$0xff] %v388
                %v390 = vld [vmem:[%s186 + $0x648] sm:$0xff]
                %391 = vst [vmem:[%s187 + $0x328] sm:$0xff] %v390
                %v392 = vld [vmem:[%s186 + $0x660] sm:$0xff]
                %393 = vst [vmem:[%s187 + $0x330] sm:$0xff] %v392
                %v394 = vld [vmem:[%s186 + $0x668] sm:$0xff]
                %395 = vst [vmem:[%s187 + $0x338] sm:$0xff] %v394
                %v396 = vld [vmem:[%s186 + $0x680] sm:$0xff]
                %397 = vst [vmem:[%s187 + $0x340] sm:$0xff] %v396
                %v398 = vld [vmem:[%s186 + $0x688] sm:$0xff]
                %399 = vst [vmem:[%s187 + $0x348] sm:$0xff] %v398
                %v400 = vld [vmem:[%s186 + $0x6a0] sm:$0xff]
                %401 = vst [vmem:[%s187 + $0x350] sm:$0xff] %v400
                %v402 = vld [vmem:[%s186 + $0x6a8] sm:$0xff]
                %403 = vst [vmem:[%s187 + $0x358] sm:$0xff] %v402
                %v404 = vld [vmem:[%s186 + $0x6c0] sm:$0xff]
                %405 = vst [vmem:[%s187 + $0x360] sm:$0xff] %v404
                %v406 = vld [vmem:[%s186 + $0x6c8] sm:$0xff]
                %407 = vst [vmem:[%s187 + $0x368] sm:$0xff] %v406
                %v408 = vld [vmem:[%s186 + $0x6e0] sm:$0xff]
                %409 = vst [vmem:[%s187 + $0x370] sm:$0xff] %v408
                %v410 = vld [vmem:[%s186 + $0x6e8] sm:$0xff]
                %411 = vst [vmem:[%s187 + $0x378] sm:$0xff] %v410
                %v412 = vld [vmem:[%s186 + $0x700] sm:$0xff]
                %413 = vst [vmem:[%s187 + $0x380] sm:$0xff] %v412
                %v414 = vld [vmem:[%s186 + $0x708] sm:$0xff]
                %415 = vst [vmem:[%s187 + $0x388] sm:$0xff] %v414
                %v416 = vld [vmem:[%s186 + $0x720] sm:$0xff]
                %417 = vst [vmem:[%s187 + $0x390] sm:$0xff] %v416
                %v418 = vld [vmem:[%s186 + $0x728] sm:$0xff]
                %419 = vst [vmem:[%s187 + $0x398] sm:$0xff] %v418
                %v420 = vld [vmem:[%s186 + $0x740] sm:$0xff]
                %421 = vst [vmem:[%s187 + $0x3a0] sm:$0xff] %v420
                %v422 = vld [vmem:[%s186 + $0x748] sm:$0xff]
                %423 = vst [vmem:[%s187 + $0x3a8] sm:$0xff] %v422
                %v424 = vld [vmem:[%s186 + $0x760] sm:$0xff]
                %425 = vst [vmem:[%s187 + $0x3b0] sm:$0xff] %v424
                %v426 = vld [vmem:[%s186 + $0x768] sm:$0xff]
                %427 = vst [vmem:[%s187 + $0x3b8] sm:$0xff] %v426
                %v428 = vld [vmem:[%s186 + $0x780] sm:$0xff]
                %429 = vst [vmem:[%s187 + $0x3c0] sm:$0xff] %v428
                %v430 = vld [vmem:[%s186 + $0x788] sm:$0xff]
                %431 = vst [vmem:[%s187 + $0x3c8] sm:$0xff] %v430
                %v432 = vld [vmem:[%s186 + $0x7a0] sm:$0xff]
                %433 = vst [vmem:[%s187 + $0x3d0] sm:$0xff] %v432
                %v434 = vld [vmem:[%s186 + $0x7a8] sm:$0xff]
                %435 = vst [vmem:[%s187 + $0x3d8] sm:$0xff] %v434
                %v436 = vld [vmem:[%s186 + $0x7c0] sm:$0xff]
                %437 = vst [vmem:[%s187 + $0x3e0] sm:$0xff] %v436
                %v438 = vld [vmem:[%s186 + $0x7c8] sm:$0xff]
                %439 = vst [vmem:[%s187 + $0x3e8] sm:$0xff] %v438
                %v440 = vld [vmem:[%s186 + $0x7e0] sm:$0xff]
                %441 = vst [vmem:[%s187 + $0x3f0] sm:$0xff] %v440
                %v442 = vld [vmem:[%s186 + $0x7e8] sm:$0xff]
                %443 = vst [vmem:[%s187 + $0x3f8] sm:$0xff] %v442
              $region37: #{frame_map_forward.5} parent=31 // loop_footer
                %s185 = sadd.s32 1, %s181
              $region38: #{frame_map_forward.5} parent=31 // loop_footer_branch
                %180 = sbr.rel target = $region34
              $region39: #{frame_map_forward.5} parent=31 // loop_exit
                _
            $region32: #{frame_map_forward.5} parent=27 // pred_fallthru
              _
            // Predicated region
            $region40: #{frame_map_forward.5} parent=27 // pred_check
              _
            $region41: #{frame_map_forward.5} parent=27 // pred_check_branch
              %445 = sbr.rel target = $region43
            $region42: #{frame_map_forward.5} parent=27 // pred_region
              _
            $region43: #{frame_map_forward.5} parent=27 // pred_fallthru
              _
          $region28: #{frame_map_forward.5} parent=23 // pred_fallthru
            _
          %446 = vnop
        $region24: #{frame_map_forward.5} parent=19 // pred_fallthru
          _
        // Predicated region
        $region44: #{frame_map_forward.5} parent=19 // pred_check
          %p447 = pneg %p78
        $region45: #{frame_map_forward.5} parent=19 // pred_check_branch
          %449 = sbr.rel (%p447) target = $region47
        $region46: #{frame_map_forward.5} parent=19 // pred_region
          %s450 = smul.u32 64, %s18
          %p451 = scmp.lt.s32.totalorder %s450, 127
          %s452 = scalar_select %p451, %s450, 127
          %p453 = scmp.lt.s32.totalorder %s17, 0
          %s454 = scalar_select %p453, %s17, 0
          %s455 = sadd.s32 %s454, %s452
          %s456 = smul.addr %s455, 4
          %s457 = scalar_lea.vmem %s1, %s456
          %s458 = smul.u32 64, %s18
        $region47: #{frame_map_forward.5} parent=19 // pred_fallthru
          _
      $region20: #{frame_map_forward.5} parent=5 // pred_fallthru
        _
      %p459 = scmp.le.s32.totalorder 1, %s9
      %p460 = scmp.lt.s32.totalorder %s9, 3
      %p461 = pnand %p459, %p460
      %p462 = pneg %p461
      // Predicated region
      $region48: #{frame_map_forward.5} parent=5 // pred_check
        _
      $region49: #{frame_map_forward.5} parent=5 // pred_check_branch
        %464 = sbr.rel (%p461) target = $region51
      $region50: #{frame_map_forward.5} parent=5 // pred_region
        %s465 = ssub.s32 %s9, 1
        %s466 = sand.u32 %s43, 1
        %s467 = sand.u32 %s43, 1
        %s468 = smul.addr %s467, 1024
        %s469 = scalar_lea.vmem [#allocation3], %s468
        // Predicated region
        $region52: #{frame_map_forward.5} parent=50 // pred_check
          %p470 = pneg %p56
        $region53: #{frame_map_forward.5} parent=50 // pred_check_branch
          %472 = sbr.rel (%p470) target = $region55
        $region54: #{frame_map_forward.5} parent=50 // pred_region
          _
        $region55: #{frame_map_forward.5} parent=50 // pred_fallthru
          _
        %s473 = sand.u32 %s43, 1
        %s474 = sand.u32 %s43, 1
        %s475 = smul.addr %s474, 1024
        %s476 = scalar_lea.vmem [#allocation3], %s475
        %p477 = pneg %p56
        %p478 = pneg %p53
        %s479 = smul.u32 64, %s21
        %p480 = scmp.lt.s32.totalorder %s479, 127
        %s481 = scalar_select %p480, %s479, 127
        %p482 = scmp.lt.s32.totalorder %s20, 0
        %s483 = scalar_select %p482, %s20, 0
        %s484 = sadd.s32 %s483, %s481
        %s485 = smul.addr %s484, 4
        %s486 = scalar_lea.vmem %s1, %s485
        %p487 = pneg %p84
        %p488 = pneg %p81
        %p489 = scmp.lt.s32.totalorder %s20, 0
        %s490 = scalar_select %p489, %s20, 0
        %s491 = scalar_lea.vmem %s2, %s490
        %p492 = pneg %p110
        %p493 = pneg %p107
        %p494 = pneg %p138
        %p495 = pneg %p135
        %s496 = smul.u32 64, %s19
        %p497 = scmp.lt.s32.totalorder %s496, 63
        %s498 = scalar_select %p497, %s496, 63
        %p499 = scmp.lt.s32.totalorder %s20, 0
        %s500 = scalar_select %p499, %s20, 0
        %s501 = sadd.s32 %s500, %s498
        %s502 = smul.addr %s501, 4
        %s503 = scalar_lea.vmem %s3, %s502
        %s504 = smul.u32 64, %s19
        %s505 = smul.u32 4, %s21
        %s506 = smul.u32 64, %s21
        %p507 = scmp.lt.s32.totalorder %s506, 127
        %s508 = scalar_select %p507, %s506, 127
        %p509 = scmp.lt.s32.totalorder %s20, 0
        %s510 = scalar_select %p509, %s20, 0
        %s511 = sadd.s32 %s510, %s508
        %s512 = smul.addr %s511, 4
        %s513 = scalar_lea.vmem %s1, %s512
        %s514 = smul.u32 64, %s21
        %p515 = scmp.lt.s32.totalorder %s20, 0
        %s516 = scalar_select %p515, %s20, 0
        %s517 = scalar_lea.vmem %s2, %s516
        %s518 = smul.u32 64, %s19
        %p519 = scmp.lt.s32.totalorder %s518, 63
        %s520 = scalar_select %p519, %s518, 63
        %p521 = scmp.lt.s32.totalorder %s20, 0
        %s522 = scalar_select %p521, %s20, 0
        %s523 = sadd.s32 %s522, %s520
        %s524 = smul.addr %s523, 4
        %s525 = scalar_lea.vmem %s3, %s524
        %s526 = smul.u32 64, %s19
        %p528 = scmp.eq.s32.totalorder %s21, 0
        // Predicated region
        $region56: #{frame_map_forward.5} parent=50 // pred_check
          %p529 = pneg %p528
        $region57: #{frame_map_forward.5} parent=50 // pred_check_branch
          %531 = sbr.rel (%p529) target = $region59
        $region58: #{frame_map_forward.5} parent=50 // pred_region
          %532 = vst [vmem:[#allocation2] sm:$0xff] 0.0
          %533 = vst [vmem:[#allocation2 + $0x8] sm:$0xff] 0.0
          %534 = vst [vmem:[#allocation2 + $0x10] sm:$0xff] 0.0
          %535 = vst [vmem:[#allocation2 + $0x18] sm:$0xff] 0.0
          %536 = vst [vmem:[#allocation2 + $0x20] sm:$0xff] 0.0
          %537 = vst [vmem:[#allocation2 + $0x28] sm:$0xff] 0.0
          %538 = vst [vmem:[#allocation2 + $0x30] sm:$0xff] 0.0
          %539 = vst [vmem:[#allocation2 + $0x38] sm:$0xff] 0.0
          %540 = vst [vmem:[#allocation2 + $0x40] sm:$0xff] 0.0
          %541 = vst [vmem:[#allocation2 + $0x48] sm:$0xff] 0.0
          %542 = vst [vmem:[#allocation2 + $0x50] sm:$0xff] 0.0
          %543 = vst [vmem:[#allocation2 + $0x58] sm:$0xff] 0.0
          %544 = vst [vmem:[#allocation2 + $0x60] sm:$0xff] 0.0
          %545 = vst [vmem:[#allocation2 + $0x68] sm:$0xff] 0.0
          %546 = vst [vmem:[#allocation2 + $0x70] sm:$0xff] 0.0
          %547 = vst [vmem:[#allocation2 + $0x78] sm:$0xff] 0.0
          %548 = vst [vmem:[#allocation2 + $0x80] sm:$0xff] 0.0
          %549 = vst [vmem:[#allocation2 + $0x88] sm:$0xff] 0.0
          %550 = vst [vmem:[#allocation2 + $0x90] sm:$0xff] 0.0
          %551 = vst [vmem:[#allocation2 + $0x98] sm:$0xff] 0.0
          %552 = vst [vmem:[#allocation2 + $0xa0] sm:$0xff] 0.0
          %553 = vst [vmem:[#allocation2 + $0xa8] sm:$0xff] 0.0
          %554 = vst [vmem:[#allocation2 + $0xb0] sm:$0xff] 0.0
          %555 = vst [vmem:[#allocation2 + $0xb8] sm:$0xff] 0.0
          %556 = vst [vmem:[#allocation2 + $0xc0] sm:$0xff] 0.0
          %557 = vst [vmem:[#allocation2 + $0xc8] sm:$0xff] 0.0
          %558 = vst [vmem:[#allocation2 + $0xd0] sm:$0xff] 0.0
          %559 = vst [vmem:[#allocation2 + $0xd8] sm:$0xff] 0.0
          %560 = vst [vmem:[#allocation2 + $0xe0] sm:$0xff] 0.0
          %561 = vst [vmem:[#allocation2 + $0xe8] sm:$0xff] 0.0
          %562 = vst [vmem:[#allocation2 + $0xf0] sm:$0xff] 0.0
          %563 = vst [vmem:[#allocation2 + $0xf8] sm:$0xff] 0.0
          %564 = vst [vmem:[#allocation2 + $0x100] sm:$0xff] 0.0
          %565 = vst [vmem:[#allocation2 + $0x108] sm:$0xff] 0.0
          %566 = vst [vmem:[#allocation2 + $0x110] sm:$0xff] 0.0
          %567 = vst [vmem:[#allocation2 + $0x118] sm:$0xff] 0.0
          %568 = vst [vmem:[#allocation2 + $0x120] sm:$0xff] 0.0
          %569 = vst [vmem:[#allocation2 + $0x128] sm:$0xff] 0.0
          %570 = vst [vmem:[#allocation2 + $0x130] sm:$0xff] 0.0
          %571 = vst [vmem:[#allocation2 + $0x138] sm:$0xff] 0.0
          %572 = vst [vmem:[#allocation2 + $0x140] sm:$0xff] 0.0
          %573 = vst [vmem:[#allocation2 + $0x148] sm:$0xff] 0.0
          %574 = vst [vmem:[#allocation2 + $0x150] sm:$0xff] 0.0
          %575 = vst [vmem:[#allocation2 + $0x158] sm:$0xff] 0.0
          %576 = vst [vmem:[#allocation2 + $0x160] sm:$0xff] 0.0
          %577 = vst [vmem:[#allocation2 + $0x168] sm:$0xff] 0.0
          %578 = vst [vmem:[#allocation2 + $0x170] sm:$0xff] 0.0
          %579 = vst [vmem:[#allocation2 + $0x178] sm:$0xff] 0.0
          %580 = vst [vmem:[#allocation2 + $0x180] sm:$0xff] 0.0
          %581 = vst [vmem:[#allocation2 + $0x188] sm:$0xff] 0.0
          %582 = vst [vmem:[#allocation2 + $0x190] sm:$0xff] 0.0
          %583 = vst [vmem:[#allocation2 + $0x198] sm:$0xff] 0.0
          %584 = vst [vmem:[#allocation2 + $0x1a0] sm:$0xff] 0.0
          %585 = vst [vmem:[#allocation2 + $0x1a8] sm:$0xff] 0.0
          %586 = vst [vmem:[#allocation2 + $0x1b0] sm:$0xff] 0.0
          %587 = vst [vmem:[#allocation2 + $0x1b8] sm:$0xff] 0.0
          %588 = vst [vmem:[#allocation2 + $0x1c0] sm:$0xff] 0.0
          %589 = vst [vmem:[#allocation2 + $0x1c8] sm:$0xff] 0.0
          %590 = vst [vmem:[#allocation2 + $0x1d0] sm:$0xff] 0.0
          %591 = vst [vmem:[#allocation2 + $0x1d8] sm:$0xff] 0.0
          %592 = vst [vmem:[#allocation2 + $0x1e0] sm:$0xff] 0.0
          %593 = vst [vmem:[#allocation2 + $0x1e8] sm:$0xff] 0.0
          %594 = vst [vmem:[#allocation2 + $0x1f0] sm:$0xff] 0.0
          %595 = vst [vmem:[#allocation2 + $0x1f8] sm:$0xff] 0.0
        $region59: #{frame_map_forward.5} parent=50 // pred_fallthru
          _
        %v596 = vld [vmem:[#allocation2] sm:$0xff]
        %v597 = vld [vmem:[#allocation2 + $0x8] sm:$0xff]
        %v598 = vld [vmem:[#allocation2 + $0x10] sm:$0xff]
        %v599 = vld [vmem:[#allocation2 + $0x18] sm:$0xff]
        %v600 = vld [vmem:[#allocation2 + $0x20] sm:$0xff]
        %v601 = vld [vmem:[#allocation2 + $0x28] sm:$0xff]
        %v602 = vld [vmem:[#allocation2 + $0x30] sm:$0xff]
        %v603 = vld [vmem:[#allocation2 + $0x38] sm:$0xff]
        %v604 = vld [vmem:[#allocation2 + $0x40] sm:$0xff]
        %v605 = vld [vmem:[#allocation2 + $0x48] sm:$0xff]
        %v606 = vld [vmem:[#allocation2 + $0x50] sm:$0xff]
        %v607 = vld [vmem:[#allocation2 + $0x58] sm:$0xff]
        %v608 = vld [vmem:[#allocation2 + $0x60] sm:$0xff]
        %v609 = vld [vmem:[#allocation2 + $0x68] sm:$0xff]
        %v610 = vld [vmem:[#allocation2 + $0x70] sm:$0xff]
        %v611 = vld [vmem:[#allocation2 + $0x78] sm:$0xff]
        %v612 = vld [vmem:[#allocation2 + $0x80] sm:$0xff]
        %v613 = vld [vmem:[#allocation2 + $0x88] sm:$0xff]
        %v614 = vld [vmem:[#allocation2 + $0x90] sm:$0xff]
        %v615 = vld [vmem:[#allocation2 + $0x98] sm:$0xff]
        %v616 = vld [vmem:[#allocation2 + $0xa0] sm:$0xff]
        %v617 = vld [vmem:[#allocation2 + $0xa8] sm:$0xff]
        %v618 = vld [vmem:[#allocation2 + $0xb0] sm:$0xff]
        %v619 = vld [vmem:[#allocation2 + $0xb8] sm:$0xff]
        %v620 = vld [vmem:[#allocation2 + $0xc0] sm:$0xff]
        %v621 = vld [vmem:[#allocation2 + $0xc8] sm:$0xff]
        %v622 = vld [vmem:[#allocation2 + $0xd0] sm:$0xff]
        %v623 = vld [vmem:[#allocation2 + $0xd8] sm:$0xff]
        %v624 = vld [vmem:[#allocation2 + $0xe0] sm:$0xff]
        %v625 = vld [vmem:[#allocation2 + $0xe8] sm:$0xff]
        %v626 = vld [vmem:[#allocation2 + $0xf0] sm:$0xff]
        %v627 = vld [vmem:[#allocation2 + $0xf8] sm:$0xff]
        %v628 = vld [vmem:[#allocation2 + $0x100] sm:$0xff]
        %v629 = vld [vmem:[#allocation2 + $0x108] sm:$0xff]
        %v630 = vld [vmem:[#allocation2 + $0x110] sm:$0xff]
        %v631 = vld [vmem:[#allocation2 + $0x118] sm:$0xff]
        %v632 = vld [vmem:[#allocation2 + $0x120] sm:$0xff]
        %v633 = vld [vmem:[#allocation2 + $0x128] sm:$0xff]
        %v634 = vld [vmem:[#allocation2 + $0x130] sm:$0xff]
        %v635 = vld [vmem:[#allocation2 + $0x138] sm:$0xff]
        %v636 = vld [vmem:[#allocation2 + $0x140] sm:$0xff]
        %v637 = vld [vmem:[#allocation2 + $0x148] sm:$0xff]
        %v638 = vld [vmem:[#allocation2 + $0x150] sm:$0xff]
        %v639 = vld [vmem:[#allocation2 + $0x158] sm:$0xff]
        %v640 = vld [vmem:[#allocation2 + $0x160] sm:$0xff]
        %v641 = vld [vmem:[#allocation2 + $0x168] sm:$0xff]
        %v642 = vld [vmem:[#allocation2 + $0x170] sm:$0xff]
        %v643 = vld [vmem:[#allocation2 + $0x178] sm:$0xff]
        %v644 = vld [vmem:[#allocation2 + $0x180] sm:$0xff]
        %v645 = vld [vmem:[#allocation2 + $0x188] sm:$0xff]
        %v646 = vld [vmem:[#allocation2 + $0x190] sm:$0xff]
        %v647 = vld [vmem:[#allocation2 + $0x198] sm:$0xff]
        %v648 = vld [vmem:[#allocation2 + $0x1a0] sm:$0xff]
        %v649 = vld [vmem:[#allocation2 + $0x1a8] sm:$0xff]
        %v650 = vld [vmem:[#allocation2 + $0x1b0] sm:$0xff]
        %v651 = vld [vmem:[#allocation2 + $0x1b8] sm:$0xff]
        %v652 = vld [vmem:[#allocation2 + $0x1c0] sm:$0xff]
        %v653 = vld [vmem:[#allocation2 + $0x1c8] sm:$0xff]
        %v654 = vld [vmem:[#allocation2 + $0x1d0] sm:$0xff]
        %v655 = vld [vmem:[#allocation2 + $0x1d8] sm:$0xff]
        %v656 = vld [vmem:[#allocation2 + $0x1e0] sm:$0xff]
        %v657 = vld [vmem:[#allocation2 + $0x1e8] sm:$0xff]
        %v658 = vld [vmem:[#allocation2 + $0x1f0] sm:$0xff]
        %v659 = vld [vmem:[#allocation2 + $0x1f8] sm:$0xff]
        %v660 = vld [vmem:[%s469] sm:$0xff]
        %v661 = vld [vmem:[%s469 + $0x8] sm:$0xff]
        %v662 = vld [vmem:[%s469 + $0x10] sm:$0xff]
        %v663 = vld [vmem:[%s469 + $0x18] sm:$0xff]
        %v664 = vld [vmem:[%s469 + $0x20] sm:$0xff]
        %v665 = vld [vmem:[%s469 + $0x28] sm:$0xff]
        %v666 = vld [vmem:[%s469 + $0x30] sm:$0xff]
        %v667 = vld [vmem:[%s469 + $0x38] sm:$0xff]
        %v668 = vld [vmem:[%s469 + $0x40] sm:$0xff]
        %v669 = vld [vmem:[%s469 + $0x48] sm:$0xff]
        %v670 = vld [vmem:[%s469 + $0x50] sm:$0xff]
        %v671 = vld [vmem:[%s469 + $0x58] sm:$0xff]
        %v672 = vld [vmem:[%s469 + $0x60] sm:$0xff]
        %v673 = vld [vmem:[%s469 + $0x68] sm:$0xff]
        %v674 = vld [vmem:[%s469 + $0x70] sm:$0xff]
        %v675 = vld [vmem:[%s469 + $0x78] sm:$0xff]
        %v676 = vld [vmem:[%s469 + $0x80] sm:$0xff]
        %v677 = vld [vmem:[%s469 + $0x88] sm:$0xff]
        %v678 = vld [vmem:[%s469 + $0x90] sm:$0xff]
        %v679 = vld [vmem:[%s469 + $0x98] sm:$0xff]
        %v680 = vld [vmem:[%s469 + $0xa0] sm:$0xff]
        %v681 = vld [vmem:[%s469 + $0xa8] sm:$0xff]
        %v682 = vld [vmem:[%s469 + $0xb0] sm:$0xff]
        %v683 = vld [vmem:[%s469 + $0xb8] sm:$0xff]
        %v684 = vld [vmem:[%s469 + $0xc0] sm:$0xff]
        %v685 = vld [vmem:[%s469 + $0xc8] sm:$0xff]
        %v686 = vld [vmem:[%s469 + $0xd0] sm:$0xff]
        %v687 = vld [vmem:[%s469 + $0xd8] sm:$0xff]
        %v688 = vld [vmem:[%s469 + $0xe0] sm:$0xff]
        %v689 = vld [vmem:[%s469 + $0xe8] sm:$0xff]
        %v690 = vld [vmem:[%s469 + $0xf0] sm:$0xff]
        %v691 = vld [vmem:[%s469 + $0xf8] sm:$0xff]
        %v692 = vld [vmem:[%s469 + $0x100] sm:$0xff]
        %v693 = vld [vmem:[%s469 + $0x108] sm:$0xff]
        %v694 = vld [vmem:[%s469 + $0x110] sm:$0xff]
        %v695 = vld [vmem:[%s469 + $0x118] sm:$0xff]
        %v696 = vld [vmem:[%s469 + $0x120] sm:$0xff]
        %v697 = vld [vmem:[%s469 + $0x128] sm:$0xff]
        %v698 = vld [vmem:[%s469 + $0x130] sm:$0xff]
        %v699 = vld [vmem:[%s469 + $0x138] sm:$0xff]
        %v700 = vld [vmem:[%s469 + $0x140] sm:$0xff]
        %v701 = vld [vmem:[%s469 + $0x148] sm:$0xff]
        %v702 = vld [vmem:[%s469 + $0x150] sm:$0xff]
        %v703 = vld [vmem:[%s469 + $0x158] sm:$0xff]
        %v704 = vld [vmem:[%s469 + $0x160] sm:$0xff]
        %v705 = vld [vmem:[%s469 + $0x168] sm:$0xff]
        %v706 = vld [vmem:[%s469 + $0x170] sm:$0xff]
        %v707 = vld [vmem:[%s469 + $0x178] sm:$0xff]
        %v708 = vld [vmem:[%s469 + $0x180] sm:$0xff]
        %v709 = vld [vmem:[%s469 + $0x188] sm:$0xff]
        %v710 = vld [vmem:[%s469 + $0x190] sm:$0xff]
        %v711 = vld [vmem:[%s469 + $0x198] sm:$0xff]
        %v712 = vld [vmem:[%s469 + $0x1a0] sm:$0xff]
        %v713 = vld [vmem:[%s469 + $0x1a8] sm:$0xff]
        %v714 = vld [vmem:[%s469 + $0x1b0] sm:$0xff]
        %v715 = vld [vmem:[%s469 + $0x1b8] sm:$0xff]
        %v716 = vld [vmem:[%s469 + $0x1c0] sm:$0xff]
        %v717 = vld [vmem:[%s469 + $0x1c8] sm:$0xff]
        %v718 = vld [vmem:[%s469 + $0x1d0] sm:$0xff]
        %v719 = vld [vmem:[%s469 + $0x1d8] sm:$0xff]
        %v720 = vld [vmem:[%s469 + $0x1e0] sm:$0xff]
        %v721 = vld [vmem:[%s469 + $0x1e8] sm:$0xff]
        %v722 = vld [vmem:[%s469 + $0x1f0] sm:$0xff]
        %v723 = vld [vmem:[%s469 + $0x1f8] sm:$0xff]
        %v724 = vld [vmem:[%s469 + $0x200] sm:$0xff]
        %v725 = vld [vmem:[%s469 + $0x208] sm:$0xff]
        %v726 = vld [vmem:[%s469 + $0x210] sm:$0xff]
        %v727 = vld [vmem:[%s469 + $0x218] sm:$0xff]
        %v728 = vld [vmem:[%s469 + $0x220] sm:$0xff]
        %v729 = vld [vmem:[%s469 + $0x228] sm:$0xff]
        %v730 = vld [vmem:[%s469 + $0x230] sm:$0xff]
        %v731 = vld [vmem:[%s469 + $0x238] sm:$0xff]
        %v732 = vld [vmem:[%s469 + $0x240] sm:$0xff]
        %v733 = vld [vmem:[%s469 + $0x248] sm:$0xff]
        %v734 = vld [vmem:[%s469 + $0x250] sm:$0xff]
        %v735 = vld [vmem:[%s469 + $0x258] sm:$0xff]
        %v736 = vld [vmem:[%s469 + $0x260] sm:$0xff]
        %v737 = vld [vmem:[%s469 + $0x268] sm:$0xff]
        %v738 = vld [vmem:[%s469 + $0x270] sm:$0xff]
        %v739 = vld [vmem:[%s469 + $0x278] sm:$0xff]
        %v740 = vld [vmem:[%s469 + $0x280] sm:$0xff]
        %v741 = vld [vmem:[%s469 + $0x288] sm:$0xff]
        %v742 = vld [vmem:[%s469 + $0x290] sm:$0xff]
        %v743 = vld [vmem:[%s469 + $0x298] sm:$0xff]
        %v744 = vld [vmem:[%s469 + $0x2a0] sm:$0xff]
        %v745 = vld [vmem:[%s469 + $0x2a8] sm:$0xff]
        %v746 = vld [vmem:[%s469 + $0x2b0] sm:$0xff]
        %v747 = vld [vmem:[%s469 + $0x2b8] sm:$0xff]
        %v748 = vld [vmem:[%s469 + $0x2c0] sm:$0xff]
        %v749 = vld [vmem:[%s469 + $0x2c8] sm:$0xff]
        %v750 = vld [vmem:[%s469 + $0x2d0] sm:$0xff]
        %v751 = vld [vmem:[%s469 + $0x2d8] sm:$0xff]
        %v752 = vld [vmem:[%s469 + $0x2e0] sm:$0xff]
        %v753 = vld [vmem:[%s469 + $0x2e8] sm:$0xff]
        %v754 = vld [vmem:[%s469 + $0x2f0] sm:$0xff]
        %v755 = vld [vmem:[%s469 + $0x2f8] sm:$0xff]
        %v756 = vld [vmem:[%s469 + $0x300] sm:$0xff]
        %v757 = vld [vmem:[%s469 + $0x308] sm:$0xff]
        %v758 = vld [vmem:[%s469 + $0x310] sm:$0xff]
        %v759 = vld [vmem:[%s469 + $0x318] sm:$0xff]
        %v760 = vld [vmem:[%s469 + $0x320] sm:$0xff]
        %v761 = vld [vmem:[%s469 + $0x328] sm:$0xff]
        %v762 = vld [vmem:[%s469 + $0x330] sm:$0xff]
        %v763 = vld [vmem:[%s469 + $0x338] sm:$0xff]
        %v764 = vld [vmem:[%s469 + $0x340] sm:$0xff]
        %v765 = vld [vmem:[%s469 + $0x348] sm:$0xff]
        %v766 = vld [vmem:[%s469 + $0x350] sm:$0xff]
        %v767 = vld [vmem:[%s469 + $0x358] sm:$0xff]
        %v768 = vld [vmem:[%s469 + $0x360] sm:$0xff]
        %v769 = vld [vmem:[%s469 + $0x368] sm:$0xff]
        %v770 = vld [vmem:[%s469 + $0x370] sm:$0xff]
        %v771 = vld [vmem:[%s469 + $0x378] sm:$0xff]
        %v772 = vld [vmem:[%s469 + $0x380] sm:$0xff]
        %v773 = vld [vmem:[%s469 + $0x388] sm:$0xff]
        %v774 = vld [vmem:[%s469 + $0x390] sm:$0xff]
        %v775 = vld [vmem:[%s469 + $0x398] sm:$0xff]
        %v776 = vld [vmem:[%s469 + $0x3a0] sm:$0xff]
        %v777 = vld [vmem:[%s469 + $0x3a8] sm:$0xff]
        %v778 = vld [vmem:[%s469 + $0x3b0] sm:$0xff]
        %v779 = vld [vmem:[%s469 + $0x3b8] sm:$0xff]
        %v780 = vld [vmem:[%s469 + $0x3c0] sm:$0xff]
        %v781 = vld [vmem:[%s469 + $0x3c8] sm:$0xff]
        %v782 = vld [vmem:[%s469 + $0x3d0] sm:$0xff]
        %v783 = vld [vmem:[%s469 + $0x3d8] sm:$0xff]
        %v784 = vld [vmem:[%s469 + $0x3e0] sm:$0xff]
        %v785 = vld [vmem:[%s469 + $0x3e8] sm:$0xff]
        %v786 = vld [vmem:[%s469 + $0x3f0] sm:$0xff]
        %v787 = vld [vmem:[%s469 + $0x3f8] sm:$0xff]
        %v788 = vld [vmem:[%s513] sm:$0xf]
        %v789 = vld [vmem:[%s513 + $0x4] sm:$0xf]
        %v790 = vld [vmem:[%s513 + $0x8] sm:$0xf]
        %v791 = vld [vmem:[%s513 + $0xc] sm:$0xf]
        %v792 = vld [vmem:[%s513 + $0x10] sm:$0xf]
        %v793 = vld [vmem:[%s513 + $0x14] sm:$0xf]
        %v794 = vld [vmem:[%s513 + $0x18] sm:$0xf]
        %v795 = vld [vmem:[%s513 + $0x1c] sm:$0xf]
        %v796 = vld [vmem:[%s513 + $0x20] sm:$0xf]
        %v797 = vld [vmem:[%s513 + $0x24] sm:$0xf]
        %v798 = vld [vmem:[%s513 + $0x28] sm:$0xf]
        %v799 = vld [vmem:[%s513 + $0x2c] sm:$0xf]
        %v800 = vld [vmem:[%s513 + $0x30] sm:$0xf]
        %v801 = vld [vmem:[%s513 + $0x34] sm:$0xf]
        %v802 = vld [vmem:[%s513 + $0x38] sm:$0xf]
        %v803 = vld [vmem:[%s513 + $0x3c] sm:$0xf]
        %v804 = vld [vmem:[%s513 + $0x40] sm:$0xf]
        %v805 = vld [vmem:[%s513 + $0x44] sm:$0xf]
        %v806 = vld [vmem:[%s513 + $0x48] sm:$0xf]
        %v807 = vld [vmem:[%s513 + $0x4c] sm:$0xf]
        %v808 = vld [vmem:[%s513 + $0x50] sm:$0xf]
        %v809 = vld [vmem:[%s513 + $0x54] sm:$0xf]
        %v810 = vld [vmem:[%s513 + $0x58] sm:$0xf]
        %v811 = vld [vmem:[%s513 + $0x5c] sm:$0xf]
        %v812 = vld [vmem:[%s513 + $0x60] sm:$0xf]
        %v813 = vld [vmem:[%s513 + $0x64] sm:$0xf]
        %v814 = vld [vmem:[%s513 + $0x68] sm:$0xf]
        %v815 = vld [vmem:[%s513 + $0x6c] sm:$0xf]
        %v816 = vld [vmem:[%s513 + $0x70] sm:$0xf]
        %v817 = vld [vmem:[%s513 + $0x74] sm:$0xf]
        %v818 = vld [vmem:[%s513 + $0x78] sm:$0xf]
        %v819 = vld [vmem:[%s513 + $0x7c] sm:$0xf]
        %v820 = vld [vmem:[%s513 + $0x80] sm:$0xf]
        %v821 = vld [vmem:[%s513 + $0x84] sm:$0xf]
        %v822 = vld [vmem:[%s513 + $0x88] sm:$0xf]
        %v823 = vld [vmem:[%s513 + $0x8c] sm:$0xf]
        %v824 = vld [vmem:[%s513 + $0x90] sm:$0xf]
        %v825 = vld [vmem:[%s513 + $0x94] sm:$0xf]
        %v826 = vld [vmem:[%s513 + $0x98] sm:$0xf]
        %v827 = vld [vmem:[%s513 + $0x9c] sm:$0xf]
        %v828 = vld [vmem:[%s513 + $0xa0] sm:$0xf]
        %v829 = vld [vmem:[%s513 + $0xa4] sm:$0xf]
        %v830 = vld [vmem:[%s513 + $0xa8] sm:$0xf]
        %v831 = vld [vmem:[%s513 + $0xac] sm:$0xf]
        %v832 = vld [vmem:[%s513 + $0xb0] sm:$0xf]
        %v833 = vld [vmem:[%s513 + $0xb4] sm:$0xf]
        %v834 = vld [vmem:[%s513 + $0xb8] sm:$0xf]
        %v835 = vld [vmem:[%s513 + $0xbc] sm:$0xf]
        %v836 = vld [vmem:[%s513 + $0xc0] sm:$0xf]
        %v837 = vld [vmem:[%s513 + $0xc4] sm:$0xf]
        %v838 = vld [vmem:[%s513 + $0xc8] sm:$0xf]
        %v839 = vld [vmem:[%s513 + $0xcc] sm:$0xf]
        %v840 = vld [vmem:[%s513 + $0xd0] sm:$0xf]
        %v841 = vld [vmem:[%s513 + $0xd4] sm:$0xf]
        %v842 = vld [vmem:[%s513 + $0xd8] sm:$0xf]
        %v843 = vld [vmem:[%s513 + $0xdc] sm:$0xf]
        %v844 = vld [vmem:[%s513 + $0xe0] sm:$0xf]
        %v845 = vld [vmem:[%s513 + $0xe4] sm:$0xf]
        %v846 = vld [vmem:[%s513 + $0xe8] sm:$0xf]
        %v847 = vld [vmem:[%s513 + $0xec] sm:$0xf]
        %v848 = vld [vmem:[%s513 + $0xf0] sm:$0xf]
        %v849 = vld [vmem:[%s513 + $0xf4] sm:$0xf]
        %v850 = vld [vmem:[%s513 + $0xf8] sm:$0xf]
        %v851 = vld [vmem:[%s513 + $0xfc] sm:$0xf]
        %v980 = vunpack.c.l.b16 %v660
        %v981 = vunpack.c.h.b16 %v660
        %v982 = vunpack.c.l.b16 %v661
        %v983 = vunpack.c.h.b16 %v661
        %v984 = vunpack.c.l.b16 %v662
        %v985 = vunpack.c.h.b16 %v662
        %v986 = vunpack.c.l.b16 %v663
        %v987 = vunpack.c.h.b16 %v663
        %v988 = vunpack.c.l.b16 %v664
        %v989 = vunpack.c.h.b16 %v664
        %v990 = vunpack.c.l.b16 %v665
        %v991 = vunpack.c.h.b16 %v665
        %v992 = vunpack.c.l.b16 %v666
        %v993 = vunpack.c.h.b16 %v666
        %v994 = vunpack.c.l.b16 %v667
        %v995 = vunpack.c.h.b16 %v667
        %v996 = vunpack.c.l.b16 %v668
        %v997 = vunpack.c.h.b16 %v668
        %v998 = vunpack.c.l.b16 %v669
        %v999 = vunpack.c.h.b16 %v669
        %v1000 = vunpack.c.l.b16 %v670
        %v1001 = vunpack.c.h.b16 %v670
        %v1002 = vunpack.c.l.b16 %v671
        %v1003 = vunpack.c.h.b16 %v671
        %v1004 = vunpack.c.l.b16 %v672
        %v1005 = vunpack.c.h.b16 %v672
        %v1006 = vunpack.c.l.b16 %v673
        %v1007 = vunpack.c.h.b16 %v673
        %v1008 = vunpack.c.l.b16 %v674
        %v1009 = vunpack.c.h.b16 %v674
        %v1010 = vunpack.c.l.b16 %v675
        %v1011 = vunpack.c.h.b16 %v675
        %v1012 = vunpack.c.l.b16 %v676
        %v1013 = vunpack.c.h.b16 %v676
        %v1014 = vunpack.c.l.b16 %v677
        %v1015 = vunpack.c.h.b16 %v677
        %v1016 = vunpack.c.l.b16 %v678
        %v1017 = vunpack.c.h.b16 %v678
        %v1018 = vunpack.c.l.b16 %v679
        %v1019 = vunpack.c.h.b16 %v679
        %v1020 = vunpack.c.l.b16 %v680
        %v1021 = vunpack.c.h.b16 %v680
        %v1022 = vunpack.c.l.b16 %v681
        %v1023 = vunpack.c.h.b16 %v681
        %v1024 = vunpack.c.l.b16 %v682
        %v1025 = vunpack.c.h.b16 %v682
        %v1026 = vunpack.c.l.b16 %v683
        %v1027 = vunpack.c.h.b16 %v683
        %v1028 = vunpack.c.l.b16 %v684
        %v1029 = vunpack.c.h.b16 %v684
        %v1030 = vunpack.c.l.b16 %v685
        %v1031 = vunpack.c.h.b16 %v685
        %v1032 = vunpack.c.l.b16 %v686
        %v1033 = vunpack.c.h.b16 %v686
        %v1034 = vunpack.c.l.b16 %v687
        %v1035 = vunpack.c.h.b16 %v687
        %v1036 = vunpack.c.l.b16 %v688
        %v1037 = vunpack.c.h.b16 %v688
        %v1038 = vunpack.c.l.b16 %v689
        %v1039 = vunpack.c.h.b16 %v689
        %v1040 = vunpack.c.l.b16 %v690
        %v1041 = vunpack.c.h.b16 %v690
        %v1042 = vunpack.c.l.b16 %v691
        %v1043 = vunpack.c.h.b16 %v691
        %v1044 = vunpack.c.l.b16 %v692
        %v1045 = vunpack.c.h.b16 %v692
        %v1046 = vunpack.c.l.b16 %v693
        %v1047 = vunpack.c.h.b16 %v693
        %v1048 = vunpack.c.l.b16 %v694
        %v1049 = vunpack.c.h.b16 %v694
        %v1050 = vunpack.c.l.b16 %v695
        %v1051 = vunpack.c.h.b16 %v695
        %v1052 = vunpack.c.l.b16 %v696
        %v1053 = vunpack.c.h.b16 %v696
        %v1054 = vunpack.c.l.b16 %v697
        %v1055 = vunpack.c.h.b16 %v697
        %v1056 = vunpack.c.l.b16 %v698
        %v1057 = vunpack.c.h.b16 %v698
        %v1058 = vunpack.c.l.b16 %v699
        %v1059 = vunpack.c.h.b16 %v699
        %v1060 = vunpack.c.l.b16 %v700
        %v1061 = vunpack.c.h.b16 %v700
        %v1062 = vunpack.c.l.b16 %v701
        %v1063 = vunpack.c.h.b16 %v701
        %v1064 = vunpack.c.l.b16 %v702
        %v1065 = vunpack.c.h.b16 %v702
        %v1066 = vunpack.c.l.b16 %v703
        %v1067 = vunpack.c.h.b16 %v703
        %v1068 = vunpack.c.l.b16 %v704
        %v1069 = vunpack.c.h.b16 %v704
        %v1070 = vunpack.c.l.b16 %v705
        %v1071 = vunpack.c.h.b16 %v705
        %v1072 = vunpack.c.l.b16 %v706
        %v1073 = vunpack.c.h.b16 %v706
        %v1074 = vunpack.c.l.b16 %v707
        %v1075 = vunpack.c.h.b16 %v707
        %v1076 = vunpack.c.l.b16 %v708
        %v1077 = vunpack.c.h.b16 %v708
        %v1078 = vunpack.c.l.b16 %v709
        %v1079 = vunpack.c.h.b16 %v709
        %v1080 = vunpack.c.l.b16 %v710
        %v1081 = vunpack.c.h.b16 %v710
        %v1082 = vunpack.c.l.b16 %v711
        %v1083 = vunpack.c.h.b16 %v711
        %v1084 = vunpack.c.l.b16 %v712
        %v1085 = vunpack.c.h.b16 %v712
        %v1086 = vunpack.c.l.b16 %v713
        %v1087 = vunpack.c.h.b16 %v713
        %v1088 = vunpack.c.l.b16 %v714
        %v1089 = vunpack.c.h.b16 %v714
        %v1090 = vunpack.c.l.b16 %v715
        %v1091 = vunpack.c.h.b16 %v715
        %v1092 = vunpack.c.l.b16 %v716
        %v1093 = vunpack.c.h.b16 %v716
        %v1094 = vunpack.c.l.b16 %v717
        %v1095 = vunpack.c.h.b16 %v717
        %v1096 = vunpack.c.l.b16 %v718
        %v1097 = vunpack.c.h.b16 %v718
        %v1098 = vunpack.c.l.b16 %v719
        %v1099 = vunpack.c.h.b16 %v719
        %v1100 = vunpack.c.l.b16 %v720
        %v1101 = vunpack.c.h.b16 %v720
        %v1102 = vunpack.c.l.b16 %v721
        %v1103 = vunpack.c.h.b16 %v721
        %v1104 = vunpack.c.l.b16 %v722
        %v1105 = vunpack.c.h.b16 %v722
        %v1106 = vunpack.c.l.b16 %v723
        %v1107 = vunpack.c.h.b16 %v723
        %v1108 = vunpack.c.l.b16 %v724
        %v1109 = vunpack.c.h.b16 %v724
        %v1110 = vunpack.c.l.b16 %v725
        %v1111 = vunpack.c.h.b16 %v725
        %v1112 = vunpack.c.l.b16 %v726
        %v1113 = vunpack.c.h.b16 %v726
        %v1114 = vunpack.c.l.b16 %v727
        %v1115 = vunpack.c.h.b16 %v727
        %v1116 = vunpack.c.l.b16 %v728
        %v1117 = vunpack.c.h.b16 %v728
        %v1118 = vunpack.c.l.b16 %v729
        %v1119 = vunpack.c.h.b16 %v729
        %v1120 = vunpack.c.l.b16 %v730
        %v1121 = vunpack.c.h.b16 %v730
        %v1122 = vunpack.c.l.b16 %v731
        %v1123 = vunpack.c.h.b16 %v731
        %v1124 = vunpack.c.l.b16 %v732
        %v1125 = vunpack.c.h.b16 %v732
        %v1126 = vunpack.c.l.b16 %v733
        %v1127 = vunpack.c.h.b16 %v733
        %v1128 = vunpack.c.l.b16 %v734
        %v1129 = vunpack.c.h.b16 %v734
        %v1130 = vunpack.c.l.b16 %v735
        %v1131 = vunpack.c.h.b16 %v735
        %v1132 = vunpack.c.l.b16 %v736
        %v1133 = vunpack.c.h.b16 %v736
        %v1134 = vunpack.c.l.b16 %v737
        %v1135 = vunpack.c.h.b16 %v737
        %v1136 = vunpack.c.l.b16 %v738
        %v1137 = vunpack.c.h.b16 %v738
        %v1138 = vunpack.c.l.b16 %v739
        %v1139 = vunpack.c.h.b16 %v739
        %v1140 = vunpack.c.l.b16 %v740
        %v1141 = vunpack.c.h.b16 %v740
        %v1142 = vunpack.c.l.b16 %v741
        %v1143 = vunpack.c.h.b16 %v741
        %v1144 = vunpack.c.l.b16 %v742
        %v1145 = vunpack.c.h.b16 %v742
        %v1146 = vunpack.c.l.b16 %v743
        %v1147 = vunpack.c.h.b16 %v743
        %v1148 = vunpack.c.l.b16 %v744
        %v1149 = vunpack.c.h.b16 %v744
        %v1150 = vunpack.c.l.b16 %v745
        %v1151 = vunpack.c.h.b16 %v745
        %v1152 = vunpack.c.l.b16 %v746
        %v1153 = vunpack.c.h.b16 %v746
        %v1154 = vunpack.c.l.b16 %v747
        %v1155 = vunpack.c.h.b16 %v747
        %v1156 = vunpack.c.l.b16 %v748
        %v1157 = vunpack.c.h.b16 %v748
        %v1158 = vunpack.c.l.b16 %v749
        %v1159 = vunpack.c.h.b16 %v749
        %v1160 = vunpack.c.l.b16 %v750
        %v1161 = vunpack.c.h.b16 %v750
        %v1162 = vunpack.c.l.b16 %v751
        %v1163 = vunpack.c.h.b16 %v751
        %v1164 = vunpack.c.l.b16 %v752
        %v1165 = vunpack.c.h.b16 %v752
        %v1166 = vunpack.c.l.b16 %v753
        %v1167 = vunpack.c.h.b16 %v753
        %v1168 = vunpack.c.l.b16 %v754
        %v1169 = vunpack.c.h.b16 %v754
        %v1170 = vunpack.c.l.b16 %v755
        %v1171 = vunpack.c.h.b16 %v755
        %v1172 = vunpack.c.l.b16 %v756
        %v1173 = vunpack.c.h.b16 %v756
        %v1174 = vunpack.c.l.b16 %v757
        %v1175 = vunpack.c.h.b16 %v757
        %v1176 = vunpack.c.l.b16 %v758
        %v1177 = vunpack.c.h.b16 %v758
        %v1178 = vunpack.c.l.b16 %v759
        %v1179 = vunpack.c.h.b16 %v759
        %v1180 = vunpack.c.l.b16 %v760
        %v1181 = vunpack.c.h.b16 %v760
        %v1182 = vunpack.c.l.b16 %v761
        %v1183 = vunpack.c.h.b16 %v761
        %v1184 = vunpack.c.l.b16 %v762
        %v1185 = vunpack.c.h.b16 %v762
        %v1186 = vunpack.c.l.b16 %v763
        %v1187 = vunpack.c.h.b16 %v763
        %v1188 = vunpack.c.l.b16 %v764
        %v1189 = vunpack.c.h.b16 %v764
        %v1190 = vunpack.c.l.b16 %v765
        %v1191 = vunpack.c.h.b16 %v765
        %v1192 = vunpack.c.l.b16 %v766
        %v1193 = vunpack.c.h.b16 %v766
        %v1194 = vunpack.c.l.b16 %v767
        %v1195 = vunpack.c.h.b16 %v767
        %v1196 = vunpack.c.l.b16 %v768
        %v1197 = vunpack.c.h.b16 %v768
        %v1198 = vunpack.c.l.b16 %v769
        %v1199 = vunpack.c.h.b16 %v769
        %v1200 = vunpack.c.l.b16 %v770
        %v1201 = vunpack.c.h.b16 %v770
        %v1202 = vunpack.c.l.b16 %v771
        %v1203 = vunpack.c.h.b16 %v771
        %v1204 = vunpack.c.l.b16 %v772
        %v1205 = vunpack.c.h.b16 %v772
        %v1206 = vunpack.c.l.b16 %v773
        %v1207 = vunpack.c.h.b16 %v773
        %v1208 = vunpack.c.l.b16 %v774
        %v1209 = vunpack.c.h.b16 %v774
        %v1210 = vunpack.c.l.b16 %v775
        %v1211 = vunpack.c.h.b16 %v775
        %v1212 = vunpack.c.l.b16 %v776
        %v1213 = vunpack.c.h.b16 %v776
        %v1214 = vunpack.c.l.b16 %v777
        %v1215 = vunpack.c.h.b16 %v777
        %v1216 = vunpack.c.l.b16 %v778
        %v1217 = vunpack.c.h.b16 %v778
        %v1218 = vunpack.c.l.b16 %v779
        %v1219 = vunpack.c.h.b16 %v779
        %v1220 = vunpack.c.l.b16 %v780
        %v1221 = vunpack.c.h.b16 %v780
        %v1222 = vunpack.c.l.b16 %v781
        %v1223 = vunpack.c.h.b16 %v781
        %v1224 = vunpack.c.l.b16 %v782
        %v1225 = vunpack.c.h.b16 %v782
        %v1226 = vunpack.c.l.b16 %v783
        %v1227 = vunpack.c.h.b16 %v783
        %v1228 = vunpack.c.l.b16 %v784
        %v1229 = vunpack.c.h.b16 %v784
        %v1230 = vunpack.c.l.b16 %v785
        %v1231 = vunpack.c.h.b16 %v785
        %v1232 = vunpack.c.l.b16 %v786
        %v1233 = vunpack.c.h.b16 %v786
        %v1234 = vunpack.c.l.b16 %v787
        %v1235 = vunpack.c.h.b16 %v787
        %v1236 = vpack.c.b16 %v984, %v980
        %v1237 = vpack.c.b16 %v985, %v981
        %v1238 = vpack.c.b16 %v986, %v982
        %v1239 = vpack.c.b16 %v987, %v983
        %v1240 = vpack.c.b16 %v992, %v988
        %v1241 = vpack.c.b16 %v993, %v989
        %v1242 = vpack.c.b16 %v994, %v990
        %v1243 = vpack.c.b16 %v995, %v991
        %v1244 = vpack.c.b16 %v1000, %v996
        %v1245 = vpack.c.b16 %v1001, %v997
        %v1246 = vpack.c.b16 %v1002, %v998
        %v1247 = vpack.c.b16 %v1003, %v999
        %v1248 = vpack.c.b16 %v1008, %v1004
        %v1249 = vpack.c.b16 %v1009, %v1005
        %v1250 = vpack.c.b16 %v1010, %v1006
        %v1251 = vpack.c.b16 %v1011, %v1007
        %v1252 = vpack.c.b16 %v1016, %v1012
        %v1253 = vpack.c.b16 %v1017, %v1013
        %v1254 = vpack.c.b16 %v1018, %v1014
        %v1255 = vpack.c.b16 %v1019, %v1015
        %v1256 = vpack.c.b16 %v1024, %v1020
        %v1257 = vpack.c.b16 %v1025, %v1021
        %v1258 = vpack.c.b16 %v1026, %v1022
        %v1259 = vpack.c.b16 %v1027, %v1023
        %v1260 = vpack.c.b16 %v1032, %v1028
        %v1261 = vpack.c.b16 %v1033, %v1029
        %v1262 = vpack.c.b16 %v1034, %v1030
        %v1263 = vpack.c.b16 %v1035, %v1031
        %v1264 = vpack.c.b16 %v1040, %v1036
        %v1265 = vpack.c.b16 %v1041, %v1037
        %v1266 = vpack.c.b16 %v1042, %v1038
        %v1267 = vpack.c.b16 %v1043, %v1039
        %v1268 = vpack.c.b16 %v1048, %v1044
        %v1269 = vpack.c.b16 %v1049, %v1045
        %v1270 = vpack.c.b16 %v1050, %v1046
        %v1271 = vpack.c.b16 %v1051, %v1047
        %v1272 = vpack.c.b16 %v1056, %v1052
        %v1273 = vpack.c.b16 %v1057, %v1053
        %v1274 = vpack.c.b16 %v1058, %v1054
        %v1275 = vpack.c.b16 %v1059, %v1055
        %v1276 = vpack.c.b16 %v1064, %v1060
        %v1277 = vpack.c.b16 %v1065, %v1061
        %v1278 = vpack.c.b16 %v1066, %v1062
        %v1279 = vpack.c.b16 %v1067, %v1063
        %v1280 = vpack.c.b16 %v1072, %v1068
        %v1281 = vpack.c.b16 %v1073, %v1069
        %v1282 = vpack.c.b16 %v1074, %v1070
        %v1283 = vpack.c.b16 %v1075, %v1071
        %v1284 = vpack.c.b16 %v1080, %v1076
        %v1285 = vpack.c.b16 %v1081, %v1077
        %v1286 = vpack.c.b16 %v1082, %v1078
        %v1287 = vpack.c.b16 %v1083, %v1079
        %v1288 = vpack.c.b16 %v1088, %v1084
        %v1289 = vpack.c.b16 %v1089, %v1085
        %v1290 = vpack.c.b16 %v1090, %v1086
        %v1291 = vpack.c.b16 %v1091, %v1087
        %v1292 = vpack.c.b16 %v1096, %v1092
        %v1293 = vpack.c.b16 %v1097, %v1093
        %v1294 = vpack.c.b16 %v1098, %v1094
        %v1295 = vpack.c.b16 %v1099, %v1095
        %v1296 = vpack.c.b16 %v1104, %v1100
        %v1297 = vpack.c.b16 %v1105, %v1101
        %v1298 = vpack.c.b16 %v1106, %v1102
        %v1299 = vpack.c.b16 %v1107, %v1103
        %v1300 = vpack.c.b16 %v1112, %v1108
        %v1301 = vpack.c.b16 %v1113, %v1109
        %v1302 = vpack.c.b16 %v1114, %v1110
        %v1303 = vpack.c.b16 %v1115, %v1111
        %v1304 = vpack.c.b16 %v1120, %v1116
        %v1305 = vpack.c.b16 %v1121, %v1117
        %v1306 = vpack.c.b16 %v1122, %v1118
        %v1307 = vpack.c.b16 %v1123, %v1119
        %v1308 = vpack.c.b16 %v1128, %v1124
        %v1309 = vpack.c.b16 %v1129, %v1125
        %v1310 = vpack.c.b16 %v1130, %v1126
        %v1311 = vpack.c.b16 %v1131, %v1127
        %v1312 = vpack.c.b16 %v1136, %v1132
        %v1313 = vpack.c.b16 %v1137, %v1133
        %v1314 = vpack.c.b16 %v1138, %v1134
        %v1315 = vpack.c.b16 %v1139, %v1135
        %v1316 = vpack.c.b16 %v1144, %v1140
        %v1317 = vpack.c.b16 %v1145, %v1141
        %v1318 = vpack.c.b16 %v1146, %v1142
        %v1319 = vpack.c.b16 %v1147, %v1143
        %v1320 = vpack.c.b16 %v1152, %v1148
        %v1321 = vpack.c.b16 %v1153, %v1149
        %v1322 = vpack.c.b16 %v1154, %v1150
        %v1323 = vpack.c.b16 %v1155, %v1151
        %v1324 = vpack.c.b16 %v1160, %v1156
        %v1325 = vpack.c.b16 %v1161, %v1157
        %v1326 = vpack.c.b16 %v1162, %v1158
        %v1327 = vpack.c.b16 %v1163, %v1159
        %v1328 = vpack.c.b16 %v1168, %v1164
        %v1329 = vpack.c.b16 %v1169, %v1165
        %v1330 = vpack.c.b16 %v1170, %v1166
        %v1331 = vpack.c.b16 %v1171, %v1167
        %v1332 = vpack.c.b16 %v1176, %v1172
        %v1333 = vpack.c.b16 %v1177, %v1173
        %v1334 = vpack.c.b16 %v1178, %v1174
        %v1335 = vpack.c.b16 %v1179, %v1175
        %v1336 = vpack.c.b16 %v1184, %v1180
        %v1337 = vpack.c.b16 %v1185, %v1181
        %v1338 = vpack.c.b16 %v1186, %v1182
        %v1339 = vpack.c.b16 %v1187, %v1183
        %v1340 = vpack.c.b16 %v1192, %v1188
        %v1341 = vpack.c.b16 %v1193, %v1189
        %v1342 = vpack.c.b16 %v1194, %v1190
        %v1343 = vpack.c.b16 %v1195, %v1191
        %v1344 = vpack.c.b16 %v1200, %v1196
        %v1345 = vpack.c.b16 %v1201, %v1197
        %v1346 = vpack.c.b16 %v1202, %v1198
        %v1347 = vpack.c.b16 %v1203, %v1199
        %v1348 = vpack.c.b16 %v1208, %v1204
        %v1349 = vpack.c.b16 %v1209, %v1205
        %v1350 = vpack.c.b16 %v1210, %v1206
        %v1351 = vpack.c.b16 %v1211, %v1207
        %v1352 = vpack.c.b16 %v1216, %v1212
        %v1353 = vpack.c.b16 %v1217, %v1213
        %v1354 = vpack.c.b16 %v1218, %v1214
        %v1355 = vpack.c.b16 %v1219, %v1215
        %v1356 = vpack.c.b16 %v1224, %v1220
        %v1357 = vpack.c.b16 %v1225, %v1221
        %v1358 = vpack.c.b16 %v1226, %v1222
        %v1359 = vpack.c.b16 %v1227, %v1223
        %v1360 = vpack.c.b16 %v1232, %v1228
        %v1361 = vpack.c.b16 %v1233, %v1229
        %v1362 = vpack.c.b16 %v1234, %v1230
        %v1363 = vpack.c.b16 %v1235, %v1231
        %v1556 = vunpack.c.l.b16 %v788
        %v1557 = vunpack.c.l.b16 %v789
        %v1558 = vunpack.c.l.b16 %v790
        %v1559 = vunpack.c.l.b16 %v791
        %v1560 = vunpack.c.l.b16 %v792
        %v1561 = vunpack.c.l.b16 %v793
        %v1562 = vunpack.c.l.b16 %v794
        %v1563 = vunpack.c.l.b16 %v795
        %v1564 = vunpack.c.l.b16 %v796
        %v1565 = vunpack.c.l.b16 %v797
        %v1566 = vunpack.c.l.b16 %v798
        %v1567 = vunpack.c.l.b16 %v799
        %v1568 = vunpack.c.l.b16 %v800
        %v1569 = vunpack.c.l.b16 %v801
        %v1570 = vunpack.c.l.b16 %v802
        %v1571 = vunpack.c.l.b16 %v803
        %v1572 = vunpack.c.l.b16 %v804
        %v1573 = vunpack.c.l.b16 %v805
        %v1574 = vunpack.c.l.b16 %v806
        %v1575 = vunpack.c.l.b16 %v807
        %v1576 = vunpack.c.l.b16 %v808
        %v1577 = vunpack.c.l.b16 %v809
        %v1578 = vunpack.c.l.b16 %v810
        %v1579 = vunpack.c.l.b16 %v811
        %v1580 = vunpack.c.l.b16 %v812
        %v1581 = vunpack.c.l.b16 %v813
        %v1582 = vunpack.c.l.b16 %v814
        %v1583 = vunpack.c.l.b16 %v815
        %v1584 = vunpack.c.l.b16 %v816
        %v1585 = vunpack.c.l.b16 %v817
        %v1586 = vunpack.c.l.b16 %v818
        %v1587 = vunpack.c.l.b16 %v819
        %v1588 = vunpack.c.l.b16 %v820
        %v1589 = vunpack.c.l.b16 %v821
        %v1590 = vunpack.c.l.b16 %v822
        %v1591 = vunpack.c.l.b16 %v823
        %v1592 = vunpack.c.l.b16 %v824
        %v1593 = vunpack.c.l.b16 %v825
        %v1594 = vunpack.c.l.b16 %v826
        %v1595 = vunpack.c.l.b16 %v827
        %v1596 = vunpack.c.l.b16 %v828
        %v1597 = vunpack.c.l.b16 %v829
        %v1598 = vunpack.c.l.b16 %v830
        %v1599 = vunpack.c.l.b16 %v831
        %v1600 = vunpack.c.l.b16 %v832
        %v1601 = vunpack.c.l.b16 %v833
        %v1602 = vunpack.c.l.b16 %v834
        %v1603 = vunpack.c.l.b16 %v835
        %v1604 = vunpack.c.l.b16 %v836
        %v1605 = vunpack.c.l.b16 %v837
        %v1606 = vunpack.c.l.b16 %v838
        %v1607 = vunpack.c.l.b16 %v839
        %v1608 = vunpack.c.l.b16 %v840
        %v1609 = vunpack.c.l.b16 %v841
        %v1610 = vunpack.c.l.b16 %v842
        %v1611 = vunpack.c.l.b16 %v843
        %v1612 = vunpack.c.l.b16 %v844
        %v1613 = vunpack.c.l.b16 %v845
        %v1614 = vunpack.c.l.b16 %v846
        %v1615 = vunpack.c.l.b16 %v847
        %v1616 = vunpack.c.l.b16 %v848
        %v1617 = vunpack.c.l.b16 %v849
        %v1618 = vunpack.c.l.b16 %v850
        %v1619 = vunpack.c.l.b16 %v851
        %v1620 = vpack.c.b16 %v1557, %v1556
        %v1621 = vpack.c.b16 %v1559, %v1558
        %v1622 = vpack.c.b16 %v1561, %v1560
        %v1623 = vpack.c.b16 %v1563, %v1562
        %v1624 = vpack.c.b16 %v1565, %v1564
        %v1625 = vpack.c.b16 %v1567, %v1566
        %v1626 = vpack.c.b16 %v1569, %v1568
        %v1627 = vpack.c.b16 %v1571, %v1570
        %v1628 = vpack.c.b16 %v1573, %v1572
        %v1629 = vpack.c.b16 %v1575, %v1574
        %v1630 = vpack.c.b16 %v1577, %v1576
        %v1631 = vpack.c.b16 %v1579, %v1578
        %v1632 = vpack.c.b16 %v1581, %v1580
        %v1633 = vpack.c.b16 %v1583, %v1582
        %v1634 = vpack.c.b16 %v1585, %v1584
        %v1635 = vpack.c.b16 %v1587, %v1586
        %v1636 = vpack.c.b16 %v1589, %v1588
        %v1637 = vpack.c.b16 %v1591, %v1590
        %v1638 = vpack.c.b16 %v1593, %v1592
        %v1639 = vpack.c.b16 %v1595, %v1594
        %v1640 = vpack.c.b16 %v1597, %v1596
        %v1641 = vpack.c.b16 %v1599, %v1598
        %v1642 = vpack.c.b16 %v1601, %v1600
        %v1643 = vpack.c.b16 %v1603, %v1602
        %v1644 = vpack.c.b16 %v1605, %v1604
        %v1645 = vpack.c.b16 %v1607, %v1606
        %v1646 = vpack.c.b16 %v1609, %v1608
        %v1647 = vpack.c.b16 %v1611, %v1610
        %v1648 = vpack.c.b16 %v1613, %v1612
        %v1649 = vpack.c.b16 %v1615, %v1614
        %v1650 = vpack.c.b16 %v1617, %v1616
        %v1651 = vpack.c.b16 %v1619, %v1618
        %1684 = vmatprep.subr.bf16.mxu0 0
        %1685 = vmatpush1.bf16.msra.mxu0 %v1620
        %1686 = vmatprep.subr.bf16.mxu0 0
        %1687 = vmatpush1.bf16.msra.mxu0 %v1621
        %1688 = vmatprep.subr.bf16.mxu0 0
        %1689 = vmatpush1.bf16.msra.mxu0 %v1622
        %1690 = vmatprep.subr.bf16.mxu0 0
        %1691 = vmatpush1.bf16.msra.mxu0 %v1623
        %1692 = vmatprep.subr.bf16.mxu0 0
        %1693 = vmatpush1.bf16.msra.mxu0 %v1624
        %1694 = vmatprep.subr.bf16.mxu0 0
        %1695 = vmatpush1.bf16.msra.mxu0 %v1625
        %1696 = vmatprep.subr.bf16.mxu0 0
        %1697 = vmatpush1.bf16.msra.mxu0 %v1626
        %1698 = vmatprep.subr.bf16.mxu0 0
        %1699 = vmatpush1.bf16.msra.mxu0 %v1627
        %1700 = vmatprep.subr.bf16.mxu0 0
        %1701 = vmatpush1.bf16.msra.mxu0 %v1628
        %1702 = vmatprep.subr.bf16.mxu0 0
        %1703 = vmatpush1.bf16.msra.mxu0 %v1629
        %1704 = vmatprep.subr.bf16.mxu0 0
        %1705 = vmatpush1.bf16.msra.mxu0 %v1630
        %1706 = vmatprep.subr.bf16.mxu0 0
        %1707 = vmatpush1.bf16.msra.mxu0 %v1631
        %1708 = vmatprep.subr.bf16.mxu0 0
        %1709 = vmatpush1.bf16.msra.mxu0 %v1632
        %1710 = vmatprep.subr.bf16.mxu0 0
        %1711 = vmatpush1.bf16.msra.mxu0 %v1633
        %1712 = vmatprep.subr.bf16.mxu0 0
        %1713 = vmatpush1.bf16.msra.mxu0 %v1634
        %1714 = vmatprep.subr.bf16.mxu0 0
        %1715 = vmatpush1.bf16.msra.mxu0 %v1635
        %1716 = vmatprep.mubr.bf16.mxu0 %v1237
        %1717 = vmatmul.mubr.bf16.gmra.mrb[0].mxu0 %v1236
        %v1718 = vpop.f32.mrb[0].mxu0
        %v1719 = vadd.f32 0.0, %v1718
        %v1720 = vpop.f32.mrb[0].mxu0
        %v1721 = vpop.f32.mrb[0].mxu0
        %v1722 = vadd.f32 0.0, %v1721
        %v1723 = vpop.f32.mrb[0].mxu0
        %1724 = vmatprep.mubr.bf16.mxu0 %v1241
        %1725 = vmatmul.mubr.bf16.gmra.mrb[0].mxu0 %v1240
        %v1726 = vpop.f32.mrb[0].mxu0
        %v1727 = vadd.f32 0.0, %v1726
        %v1728 = vpop.f32.mrb[0].mxu0
        %v1729 = vpop.f32.mrb[0].mxu0
        %v1730 = vadd.f32 0.0, %v1729
        %v1731 = vpop.f32.mrb[0].mxu0
        %1732 = vmatprep.mubr.bf16.mxu0 %v1245
        %1733 = vmatmul.mubr.bf16.gmra.mrb[0].mxu0 %v1244
        %v1734 = vpop.f32.mrb[0].mxu0
        %v1735 = vadd.f32 0.0, %v1734
        %v1736 = vpop.f32.mrb[0].mxu0
        %v1737 = vpop.f32.mrb[0].mxu0
        %v1738 = vadd.f32 0.0, %v1737
        %v1739 = vpop.f32.mrb[0].mxu0
        %1740 = vmatprep.mubr.bf16.mxu0 %v1249
        %1741 = vmatmul.mubr.bf16.gmra.mrb[0].mxu0 %v1248
        %v1742 = vpop.f32.mrb[0].mxu0
        %v1743 = vadd.f32 0.0, %v1742
        %v1744 = vpop.f32.mrb[0].mxu0
        %v1745 = vpop.f32.mrb[0].mxu0
        %v1746 = vadd.f32 0.0, %v1745
        %v1747 = vpop.f32.mrb[0].mxu0
        %1748 = vmatprep.mubr.bf16.mxu0 %v1253
        %1749 = vmatmul.mubr.bf16.gmra.mrb[0].mxu0 %v1252
        %v1750 = vpop.f32.mrb[0].mxu0
        %v1751 = vadd.f32 0.0, %v1750
        %v1752 = vpop.f32.mrb[0].mxu0
        %v1753 = vpop.f32.mrb[0].mxu0
        %v1754 = vadd.f32 0.0, %v1753
        %v1755 = vpop.f32.mrb[0].mxu0
        %1756 = vmatprep.mubr.bf16.mxu0 %v1257
        %1757 = vmatmul.mubr.bf16.gmra.mrb[0].mxu0 %v1256
        %v1758 = vpop.f32.mrb[0].mxu0
        %v1759 = vadd.f32 0.0, %v1758
        %v1760 = vpop.f32.mrb[0].mxu0
        %v1761 = vpop.f32.mrb[0].mxu0
        %v1762 = vadd.f32 0.0, %v1761
        %v1763 = vpop.f32.mrb[0].mxu0
        %1764 = vmatprep.mubr.bf16.mxu0 %v1261
        %1765 = vmatmul.mubr.bf16.gmra.mrb[0].mxu0 %v1260
        %v1766 = vpop.f32.mrb[0].mxu0
        %v1767 = vadd.f32 0.0, %v1766
        %v1768 = vpop.f32.mrb[0].mxu0
        %v1769 = vpop.f32.mrb[0].mxu0
        %v1770 = vadd.f32 0.0, %v1769
        %v1771 = vpop.f32.mrb[0].mxu0
        %1772 = vmatprep.mubr.bf16.mxu0 %v1265
        %1773 = vmatmul.mubr.bf16.gmra.mrb[0].mxu0 %v1264
        %v1774 = vpop.f32.mrb[0].mxu0
        %v1775 = vadd.f32 0.0, %v1774
        %v1776 = vpop.f32.mrb[0].mxu0
        %v1777 = vpop.f32.mrb[0].mxu0
        %v1778 = vadd.f32 0.0, %v1777
        %v1779 = vpop.f32.mrb[0].mxu0
        %1780 = vmatprep.mubr.bf16.mxu0 %v1269
        %1781 = vmatmul.mubr.bf16.gmra.mrb[0].mxu0 %v1268
        %v1782 = vpop.f32.mrb[0].mxu0
        %v1783 = vadd.f32 0.0, %v1782
        %v1784 = vpop.f32.mrb[0].mxu0
        %v1785 = vpop.f32.mrb[0].mxu0
        %v1786 = vadd.f32 0.0, %v1785
        %v1787 = vpop.f32.mrb[0].mxu0
        %1788 = vmatprep.mubr.bf16.mxu0 %v1273
        %1789 = vmatmul.mubr.bf16.gmra.mrb[0].mxu0 %v1272
        %v1790 = vpop.f32.mrb[0].mxu0
        %v1791 = vadd.f32 0.0, %v1790
        %v1792 = vpop.f32.mrb[0].mxu0
        %v1793 = vpop.f32.mrb[0].mxu0
        %v1794 = vadd.f32 0.0, %v1793
        %v1795 = vpop.f32.mrb[0].mxu0
        %1796 = vmatprep.mubr.bf16.mxu0 %v1277
        %1797 = vmatmul.mubr.bf16.gmra.mrb[0].mxu0 %v1276
        %v1798 = vpop.f32.mrb[0].mxu0
        %v1799 = vadd.f32 0.0, %v1798
        %v1800 = vpop.f32.mrb[0].mxu0
        %v1801 = vpop.f32.mrb[0].mxu0
        %v1802 = vadd.f32 0.0, %v1801
        %v1803 = vpop.f32.mrb[0].mxu0
        %1804 = vmatprep.mubr.bf16.mxu0 %v1281
        %1805 = vmatmul.mubr.bf16.gmra.mrb[0].mxu0 %v1280
        %v1806 = vpop.f32.mrb[0].mxu0
        %v1807 = vadd.f32 0.0, %v1806
        %v1808 = vpop.f32.mrb[0].mxu0
        %v1809 = vpop.f32.mrb[0].mxu0
        %v1810 = vadd.f32 0.0, %v1809
        %v1811 = vpop.f32.mrb[0].mxu0
        %1812 = vmatprep.mubr.bf16.mxu0 %v1285
        %1813 = vmatmul.mubr.bf16.gmra.mrb[0].mxu0 %v1284
        %v1814 = vpop.f32.mrb[0].mxu0
        %v1815 = vadd.f32 0.0, %v1814
        %v1816 = vpop.f32.mrb[0].mxu0
        %v1817 = vpop.f32.mrb[0].mxu0
        %v1818 = vadd.f32 0.0, %v1817
        %v1819 = vpop.f32.mrb[0].mxu0
        %1820 = vmatprep.mubr.bf16.mxu0 %v1289
        %1821 = vmatmul.mubr.bf16.gmra.mrb[0].mxu0 %v1288
        %v1822 = vpop.f32.mrb[0].mxu0
        %v1823 = vadd.f32 0.0, %v1822
        %v1824 = vpop.f32.mrb[0].mxu0
        %v1825 = vpop.f32.mrb[0].mxu0
        %v1826 = vadd.f32 0.0, %v1825
        %v1827 = vpop.f32.mrb[0].mxu0
        %1828 = vmatprep.mubr.bf16.mxu0 %v1293
        %1829 = vmatmul.mubr.bf16.gmra.mrb[0].mxu0 %v1292
        %v1830 = vpop.f32.mrb[0].mxu0
        %v1831 = vadd.f32 0.0, %v1830
        %v1832 = vpop.f32.mrb[0].mxu0
        %v1833 = vpop.f32.mrb[0].mxu0
        %v1834 = vadd.f32 0.0, %v1833
        %v1835 = vpop.f32.mrb[0].mxu0
        %1836 = vmatprep.mubr.bf16.mxu0 %v1297
        %1837 = vmatmul.mubr.bf16.gmra.mrb[0].mxu0 %v1296
        %v1838 = vpop.f32.mrb[0].mxu0
        %v1839 = vadd.f32 0.0, %v1838
        %v1840 = vpop.f32.mrb[0].mxu0
        %v1841 = vpop.f32.mrb[0].mxu0
        %v1842 = vadd.f32 0.0, %v1841
        %v1843 = vpop.f32.mrb[0].mxu0
        %1844 = vmatprep.mubr.bf16.mxu0 %v1301
        %1845 = vmatmul.mubr.bf16.gmra.mrb[0].mxu0 %v1300
        %v1846 = vpop.f32.mrb[0].mxu0
        %v1847 = vadd.f32 0.0, %v1846
        %v1848 = vpop.f32.mrb[0].mxu0
        %v1849 = vpop.f32.mrb[0].mxu0
        %v1850 = vadd.f32 0.0, %v1849
        %v1851 = vpop.f32.mrb[0].mxu0
        %1852 = vmatprep.mubr.bf16.mxu0 %v1305
        %1853 = vmatmul.mubr.bf16.gmra.mrb[0].mxu0 %v1304
        %v1854 = vpop.f32.mrb[0].mxu0
        %v1855 = vadd.f32 0.0, %v1854
        %v1856 = vpop.f32.mrb[0].mxu0
        %v1857 = vpop.f32.mrb[0].mxu0
        %v1858 = vadd.f32 0.0, %v1857
        %v1859 = vpop.f32.mrb[0].mxu0
        %1860 = vmatprep.mubr.bf16.mxu0 %v1309
        %1861 = vmatmul.mubr.bf16.gmra.mrb[0].mxu0 %v1308
        %v1862 = vpop.f32.mrb[0].mxu0
        %v1863 = vadd.f32 0.0, %v1862
        %v1864 = vpop.f32.mrb[0].mxu0
        %v1865 = vpop.f32.mrb[0].mxu0
        %v1866 = vadd.f32 0.0, %v1865
        %v1867 = vpop.f32.mrb[0].mxu0
        %1868 = vmatprep.mubr.bf16.mxu0 %v1313
        %1869 = vmatmul.mubr.bf16.gmra.mrb[0].mxu0 %v1312
        %v1870 = vpop.f32.mrb[0].mxu0
        %v1871 = vadd.f32 0.0, %v1870
        %v1872 = vpop.f32.mrb[0].mxu0
        %v1873 = vpop.f32.mrb[0].mxu0
        %v1874 = vadd.f32 0.0, %v1873
        %v1875 = vpop.f32.mrb[0].mxu0
        %1876 = vmatprep.mubr.bf16.mxu0 %v1317
        %1877 = vmatmul.mubr.bf16.gmra.mrb[0].mxu0 %v1316
        %v1878 = vpop.f32.mrb[0].mxu0
        %v1879 = vadd.f32 0.0, %v1878
        %v1880 = vpop.f32.mrb[0].mxu0
        %v1881 = vpop.f32.mrb[0].mxu0
        %v1882 = vadd.f32 0.0, %v1881
        %v1883 = vpop.f32.mrb[0].mxu0
        %1884 = vmatprep.mubr.bf16.mxu0 %v1321
        %1885 = vmatmul.mubr.bf16.gmra.mrb[0].mxu0 %v1320
        %v1886 = vpop.f32.mrb[0].mxu0
        %v1887 = vadd.f32 0.0, %v1886
        %v1888 = vpop.f32.mrb[0].mxu0
        %v1889 = vpop.f32.mrb[0].mxu0
        %v1890 = vadd.f32 0.0, %v1889
        %v1891 = vpop.f32.mrb[0].mxu0
        %1892 = vmatprep.mubr.bf16.mxu0 %v1325
        %1893 = vmatmul.mubr.bf16.gmra.mrb[0].mxu0 %v1324
        %v1894 = vpop.f32.mrb[0].mxu0
        %v1895 = vadd.f32 0.0, %v1894
        %v1896 = vpop.f32.mrb[0].mxu0
        %v1897 = vpop.f32.mrb[0].mxu0
        %v1898 = vadd.f32 0.0, %v1897
        %v1899 = vpop.f32.mrb[0].mxu0
        %1900 = vmatprep.mubr.bf16.mxu0 %v1329
        %1901 = vmatmul.mubr.bf16.gmra.mrb[0].mxu0 %v1328
        %v1902 = vpop.f32.mrb[0].mxu0
        %v1903 = vadd.f32 0.0, %v1902
        %v1904 = vpop.f32.mrb[0].mxu0
        %v1905 = vpop.f32.mrb[0].mxu0
        %v1906 = vadd.f32 0.0, %v1905
        %v1907 = vpop.f32.mrb[0].mxu0
        %1908 = vmatprep.mubr.bf16.mxu0 %v1333
        %1909 = vmatmul.mubr.bf16.gmra.mrb[0].mxu0 %v1332
        %v1910 = vpop.f32.mrb[0].mxu0
        %v1911 = vadd.f32 0.0, %v1910
        %v1912 = vpop.f32.mrb[0].mxu0
        %v1913 = vpop.f32.mrb[0].mxu0
        %v1914 = vadd.f32 0.0, %v1913
        %v1915 = vpop.f32.mrb[0].mxu0
        %1916 = vmatprep.mubr.bf16.mxu0 %v1337
        %1917 = vmatmul.mubr.bf16.gmra.mrb[0].mxu0 %v1336
        %v1918 = vpop.f32.mrb[0].mxu0
        %v1919 = vadd.f32 0.0, %v1918
        %v1920 = vpop.f32.mrb[0].mxu0
        %v1921 = vpop.f32.mrb[0].mxu0
        %v1922 = vadd.f32 0.0, %v1921
        %v1923 = vpop.f32.mrb[0].mxu0
        %1924 = vmatprep.mubr.bf16.mxu0 %v1341
        %1925 = vmatmul.mubr.bf16.gmra.mrb[0].mxu0 %v1340
        %v1926 = vpop.f32.mrb[0].mxu0
        %v1927 = vadd.f32 0.0, %v1926
        %v1928 = vpop.f32.mrb[0].mxu0
        %v1929 = vpop.f32.mrb[0].mxu0
        %v1930 = vadd.f32 0.0, %v1929
        %v1931 = vpop.f32.mrb[0].mxu0
        %1932 = vmatprep.mubr.bf16.mxu0 %v1345
        %1933 = vmatmul.mubr.bf16.gmra.mrb[0].mxu0 %v1344
        %v1934 = vpop.f32.mrb[0].mxu0
        %v1935 = vadd.f32 0.0, %v1934
        %v1936 = vpop.f32.mrb[0].mxu0
        %v1937 = vpop.f32.mrb[0].mxu0
        %v1938 = vadd.f32 0.0, %v1937
        %v1939 = vpop.f32.mrb[0].mxu0
        %1940 = vmatprep.mubr.bf16.mxu0 %v1349
        %1941 = vmatmul.mubr.bf16.gmra.mrb[0].mxu0 %v1348
        %v1942 = vpop.f32.mrb[0].mxu0
        %v1943 = vadd.f32 0.0, %v1942
        %v1944 = vpop.f32.mrb[0].mxu0
        %v1945 = vpop.f32.mrb[0].mxu0
        %v1946 = vadd.f32 0.0, %v1945
        %v1947 = vpop.f32.mrb[0].mxu0
        %1948 = vmatprep.mubr.bf16.mxu0 %v1353
        %1949 = vmatmul.mubr.bf16.gmra.mrb[0].mxu0 %v1352
        %v1950 = vpop.f32.mrb[0].mxu0
        %v1951 = vadd.f32 0.0, %v1950
        %v1952 = vpop.f32.mrb[0].mxu0
        %v1953 = vpop.f32.mrb[0].mxu0
        %v1954 = vadd.f32 0.0, %v1953
        %v1955 = vpop.f32.mrb[0].mxu0
        %1956 = vmatprep.mubr.bf16.mxu0 %v1357
        %1957 = vmatmul.mubr.bf16.gmra.mrb[0].mxu0 %v1356
        %v1958 = vpop.f32.mrb[0].mxu0
        %v1959 = vadd.f32 0.0, %v1958
        %v1960 = vpop.f32.mrb[0].mxu0
        %v1961 = vpop.f32.mrb[0].mxu0
        %v1962 = vadd.f32 0.0, %v1961
        %v1963 = vpop.f32.mrb[0].mxu0
        %1964 = vmatprep.mubr.bf16.mxu0 %v1361
        %1965 = vmatmul.mubr.bf16.gmra.mrb[0].mxu0 %v1360
        %v1966 = vpop.f32.mrb[0].mxu0
        %v1967 = vadd.f32 0.0, %v1966
        %v1968 = vpop.f32.mrb[0].mxu0
        %v1969 = vpop.f32.mrb[0].mxu0
        %v1970 = vadd.f32 0.0, %v1969
        %v1971 = vpop.f32.mrb[0].mxu0
        %1972 = vdwg.mxu0
        %1973 = vmatprep.subr.bf16.mxu0 0
        %1974 = vmatpush1.bf16.msra.mxu0 %v1636
        %1975 = vmatprep.subr.bf16.mxu0 0
        %1976 = vmatpush1.bf16.msra.mxu0 %v1637
        %1977 = vmatprep.subr.bf16.mxu0 0
        %1978 = vmatpush1.bf16.msra.mxu0 %v1638
        %1979 = vmatprep.subr.bf16.mxu0 0
        %1980 = vmatpush1.bf16.msra.mxu0 %v1639
        %1981 = vmatprep.subr.bf16.mxu0 0
        %1982 = vmatpush1.bf16.msra.mxu0 %v1640
        %1983 = vmatprep.subr.bf16.mxu0 0
        %1984 = vmatpush1.bf16.msra.mxu0 %v1641
        %1985 = vmatprep.subr.bf16.mxu0 0
        %1986 = vmatpush1.bf16.msra.mxu0 %v1642
        %1987 = vmatprep.subr.bf16.mxu0 0
        %1988 = vmatpush1.bf16.msra.mxu0 %v1643
        %1989 = vmatprep.subr.bf16.mxu0 0
        %1990 = vmatpush1.bf16.msra.mxu0 %v1644
        %1991 = vmatprep.subr.bf16.mxu0 0
        %1992 = vmatpush1.bf16.msra.mxu0 %v1645
        %1993 = vmatprep.subr.bf16.mxu0 0
        %1994 = vmatpush1.bf16.msra.mxu0 %v1646
        %1995 = vmatprep.subr.bf16.mxu0 0
        %1996 = vmatpush1.bf16.msra.mxu0 %v1647
        %1997 = vmatprep.subr.bf16.mxu0 0
        %1998 = vmatpush1.bf16.msra.mxu0 %v1648
        %1999 = vmatprep.subr.bf16.mxu0 0
        %2000 = vmatpush1.bf16.msra.mxu0 %v1649
        %2001 = vmatprep.subr.bf16.mxu0 0
        %2002 = vmatpush1.bf16.msra.mxu0 %v1650
        %2003 = vmatprep.subr.bf16.mxu0 0
        %2004 = vmatpush1.bf16.msra.mxu0 %v1651
        %2005 = vmatprep.mubr.bf16.mxu0 %v1239
        %2006 = vmatmul.mubr.bf16.gmra.mrb[0].mxu0 %v1238
        %v2007 = vpop.f32.mrb[0].mxu0
        %v2008 = vadd.f32 %v1719, %v2007
        %v2009 = vpop.f32.mrb[0].mxu0
        %v2010 = vpop.f32.mrb[0].mxu0
        %v2011 = vadd.f32 %v1722, %v2010
        %v2012 = vpop.f32.mrb[0].mxu0
        %2013 = vmatprep.mubr.bf16.mxu0 %v1243
        %2014 = vmatmul.mubr.bf16.gmra.mrb[0].mxu0 %v1242
        %v2015 = vpop.f32.mrb[0].mxu0
        %v2016 = vadd.f32 %v1727, %v2015
        %v2017 = vpop.f32.mrb[0].mxu0
        %v2018 = vpop.f32.mrb[0].mxu0
        %v2019 = vadd.f32 %v1730, %v2018
        %v2020 = vpop.f32.mrb[0].mxu0
        %2021 = vmatprep.mubr.bf16.mxu0 %v1247
        %2022 = vmatmul.mubr.bf16.gmra.mrb[0].mxu0 %v1246
        %v2023 = vpop.f32.mrb[0].mxu0
        %v2024 = vadd.f32 %v1735, %v2023
        %v2025 = vpop.f32.mrb[0].mxu0
        %v2026 = vpop.f32.mrb[0].mxu0
        %v2027 = vadd.f32 %v1738, %v2026
        %v2028 = vpop.f32.mrb[0].mxu0
        %2029 = vmatprep.mubr.bf16.mxu0 %v1251
        %2030 = vmatmul.mubr.bf16.gmra.mrb[0].mxu0 %v1250
        %v2031 = vpop.f32.mrb[0].mxu0
        %v2032 = vadd.f32 %v1743, %v2031
        %v2033 = vpop.f32.mrb[0].mxu0
        %v2034 = vpop.f32.mrb[0].mxu0
        %v2035 = vadd.f32 %v1746, %v2034
        %v2036 = vpop.f32.mrb[0].mxu0
        %2037 = vmatprep.mubr.bf16.mxu0 %v1255
        %2038 = vmatmul.mubr.bf16.gmra.mrb[0].mxu0 %v1254
        %v2039 = vpop.f32.mrb[0].mxu0
        %v2040 = vadd.f32 %v1751, %v2039
        %v2041 = vpop.f32.mrb[0].mxu0
        %v2042 = vpop.f32.mrb[0].mxu0
        %v2043 = vadd.f32 %v1754, %v2042
        %v2044 = vpop.f32.mrb[0].mxu0
        %2045 = vmatprep.mubr.bf16.mxu0 %v1259
        %2046 = vmatmul.mubr.bf16.gmra.mrb[0].mxu0 %v1258
        %v2047 = vpop.f32.mrb[0].mxu0
        %v2048 = vadd.f32 %v1759, %v2047
        %v2049 = vpop.f32.mrb[0].mxu0
        %v2050 = vpop.f32.mrb[0].mxu0
        %v2051 = vadd.f32 %v1762, %v2050
        %v2052 = vpop.f32.mrb[0].mxu0
        %2053 = vmatprep.mubr.bf16.mxu0 %v1263
        %2054 = vmatmul.mubr.bf16.gmra.mrb[0].mxu0 %v1262
        %v2055 = vpop.f32.mrb[0].mxu0
        %v2056 = vadd.f32 %v1767, %v2055
        %v2057 = vpop.f32.mrb[0].mxu0
        %v2058 = vpop.f32.mrb[0].mxu0
        %v2059 = vadd.f32 %v1770, %v2058
        %v2060 = vpop.f32.mrb[0].mxu0
        %2061 = vmatprep.mubr.bf16.mxu0 %v1267
        %2062 = vmatmul.mubr.bf16.gmra.mrb[0].mxu0 %v1266
        %v2063 = vpop.f32.mrb[0].mxu0
        %v2064 = vadd.f32 %v1775, %v2063
        %v2065 = vpop.f32.mrb[0].mxu0
        %v2066 = vpop.f32.mrb[0].mxu0
        %v2067 = vadd.f32 %v1778, %v2066
        %v2068 = vpop.f32.mrb[0].mxu0
        %2069 = vmatprep.mubr.bf16.mxu0 %v1271
        %2070 = vmatmul.mubr.bf16.gmra.mrb[0].mxu0 %v1270
        %v2071 = vpop.f32.mrb[0].mxu0
        %v2072 = vadd.f32 %v1783, %v2071
        %v2073 = vpop.f32.mrb[0].mxu0
        %v2074 = vpop.f32.mrb[0].mxu0
        %v2075 = vadd.f32 %v1786, %v2074
        %v2076 = vpop.f32.mrb[0].mxu0
        %2077 = vmatprep.mubr.bf16.mxu0 %v1275
        %2078 = vmatmul.mubr.bf16.gmra.mrb[0].mxu0 %v1274
        %v2079 = vpop.f32.mrb[0].mxu0
        %v2080 = vadd.f32 %v1791, %v2079
        %v2081 = vpop.f32.mrb[0].mxu0
        %v2082 = vpop.f32.mrb[0].mxu0
        %v2083 = vadd.f32 %v1794, %v2082
        %v2084 = vpop.f32.mrb[0].mxu0
        %2085 = vmatprep.mubr.bf16.mxu0 %v1279
        %2086 = vmatmul.mubr.bf16.gmra.mrb[0].mxu0 %v1278
        %v2087 = vpop.f32.mrb[0].mxu0
        %v2088 = vadd.f32 %v1799, %v2087
        %v2089 = vpop.f32.mrb[0].mxu0
        %v2090 = vpop.f32.mrb[0].mxu0
        %v2091 = vadd.f32 %v1802, %v2090
        %v2092 = vpop.f32.mrb[0].mxu0
        %2093 = vmatprep.mubr.bf16.mxu0 %v1283
        %2094 = vmatmul.mubr.bf16.gmra.mrb[0].mxu0 %v1282
        %v2095 = vpop.f32.mrb[0].mxu0
        %v2096 = vadd.f32 %v1807, %v2095
        %v2097 = vpop.f32.mrb[0].mxu0
        %v2098 = vpop.f32.mrb[0].mxu0
        %v2099 = vadd.f32 %v1810, %v2098
        %v2100 = vpop.f32.mrb[0].mxu0
        %2101 = vmatprep.mubr.bf16.mxu0 %v1287
        %2102 = vmatmul.mubr.bf16.gmra.mrb[0].mxu0 %v1286
        %v2103 = vpop.f32.mrb[0].mxu0
        %v2104 = vadd.f32 %v1815, %v2103
        %v2105 = vpop.f32.mrb[0].mxu0
        %v2106 = vpop.f32.mrb[0].mxu0
        %v2107 = vadd.f32 %v1818, %v2106
        %v2108 = vpop.f32.mrb[0].mxu0
        %2109 = vmatprep.mubr.bf16.mxu0 %v1291
        %2110 = vmatmul.mubr.bf16.gmra.mrb[0].mxu0 %v1290
        %v2111 = vpop.f32.mrb[0].mxu0
        %v2112 = vadd.f32 %v1823, %v2111
        %v2113 = vpop.f32.mrb[0].mxu0
        %v2114 = vpop.f32.mrb[0].mxu0
        %v2115 = vadd.f32 %v1826, %v2114
        %v2116 = vpop.f32.mrb[0].mxu0
        %2117 = vmatprep.mubr.bf16.mxu0 %v1295
        %2118 = vmatmul.mubr.bf16.gmra.mrb[0].mxu0 %v1294
        %v2119 = vpop.f32.mrb[0].mxu0
        %v2120 = vadd.f32 %v1831, %v2119
        %v2121 = vpop.f32.mrb[0].mxu0
        %v2122 = vpop.f32.mrb[0].mxu0
        %v2123 = vadd.f32 %v1834, %v2122
        %v2124 = vpop.f32.mrb[0].mxu0
        %2125 = vmatprep.mubr.bf16.mxu0 %v1299
        %2126 = vmatmul.mubr.bf16.gmra.mrb[0].mxu0 %v1298
        %v2127 = vpop.f32.mrb[0].mxu0
        %v2128 = vadd.f32 %v1839, %v2127
        %v2129 = vpop.f32.mrb[0].mxu0
        %v2130 = vpop.f32.mrb[0].mxu0
        %v2131 = vadd.f32 %v1842, %v2130
        %v2132 = vpop.f32.mrb[0].mxu0
        %2133 = vmatprep.mubr.bf16.mxu0 %v1303
        %2134 = vmatmul.mubr.bf16.gmra.mrb[0].mxu0 %v1302
        %v2135 = vpop.f32.mrb[0].mxu0
        %v2136 = vadd.f32 %v1847, %v2135
        %v2137 = vpop.f32.mrb[0].mxu0
        %v2138 = vpop.f32.mrb[0].mxu0
        %v2139 = vadd.f32 %v1850, %v2138
        %v2140 = vpop.f32.mrb[0].mxu0
        %2141 = vmatprep.mubr.bf16.mxu0 %v1307
        %2142 = vmatmul.mubr.bf16.gmra.mrb[0].mxu0 %v1306
        %v2143 = vpop.f32.mrb[0].mxu0
        %v2144 = vadd.f32 %v1855, %v2143
        %v2145 = vpop.f32.mrb[0].mxu0
        %v2146 = vpop.f32.mrb[0].mxu0
        %v2147 = vadd.f32 %v1858, %v2146
        %v2148 = vpop.f32.mrb[0].mxu0
        %2149 = vmatprep.mubr.bf16.mxu0 %v1311
        %2150 = vmatmul.mubr.bf16.gmra.mrb[0].mxu0 %v1310
        %v2151 = vpop.f32.mrb[0].mxu0
        %v2152 = vadd.f32 %v1863, %v2151
        %v2153 = vpop.f32.mrb[0].mxu0
        %v2154 = vpop.f32.mrb[0].mxu0
        %v2155 = vadd.f32 %v1866, %v2154
        %v2156 = vpop.f32.mrb[0].mxu0
        %2157 = vmatprep.mubr.bf16.mxu0 %v1315
        %2158 = vmatmul.mubr.bf16.gmra.mrb[0].mxu0 %v1314
        %v2159 = vpop.f32.mrb[0].mxu0
        %v2160 = vadd.f32 %v1871, %v2159
        %v2161 = vpop.f32.mrb[0].mxu0
        %v2162 = vpop.f32.mrb[0].mxu0
        %v2163 = vadd.f32 %v1874, %v2162
        %v2164 = vpop.f32.mrb[0].mxu0
        %2165 = vmatprep.mubr.bf16.mxu0 %v1319
        %2166 = vmatmul.mubr.bf16.gmra.mrb[0].mxu0 %v1318
        %v2167 = vpop.f32.mrb[0].mxu0
        %v2168 = vadd.f32 %v1879, %v2167
        %v2169 = vpop.f32.mrb[0].mxu0
        %v2170 = vpop.f32.mrb[0].mxu0
        %v2171 = vadd.f32 %v1882, %v2170
        %v2172 = vpop.f32.mrb[0].mxu0
        %2173 = vmatprep.mubr.bf16.mxu0 %v1323
        %2174 = vmatmul.mubr.bf16.gmra.mrb[0].mxu0 %v1322
        %v2175 = vpop.f32.mrb[0].mxu0
        %v2176 = vadd.f32 %v1887, %v2175
        %v2177 = vpop.f32.mrb[0].mxu0
        %v2178 = vpop.f32.mrb[0].mxu0
        %v2179 = vadd.f32 %v1890, %v2178
        %v2180 = vpop.f32.mrb[0].mxu0
        %2181 = vmatprep.mubr.bf16.mxu0 %v1327
        %2182 = vmatmul.mubr.bf16.gmra.mrb[0].mxu0 %v1326
        %v2183 = vpop.f32.mrb[0].mxu0
        %v2184 = vadd.f32 %v1895, %v2183
        %v2185 = vpop.f32.mrb[0].mxu0
        %v2186 = vpop.f32.mrb[0].mxu0
        %v2187 = vadd.f32 %v1898, %v2186
        %v2188 = vpop.f32.mrb[0].mxu0
        %2189 = vmatprep.mubr.bf16.mxu0 %v1331
        %2190 = vmatmul.mubr.bf16.gmra.mrb[0].mxu0 %v1330
        %v2191 = vpop.f32.mrb[0].mxu0
        %v2192 = vadd.f32 %v1903, %v2191
        %v2193 = vpop.f32.mrb[0].mxu0
        %v2194 = vpop.f32.mrb[0].mxu0
        %v2195 = vadd.f32 %v1906, %v2194
        %v2196 = vpop.f32.mrb[0].mxu0
        %2197 = vmatprep.mubr.bf16.mxu0 %v1335
        %2198 = vmatmul.mubr.bf16.gmra.mrb[0].mxu0 %v1334
        %v2199 = vpop.f32.mrb[0].mxu0
        %v2200 = vadd.f32 %v1911, %v2199
        %v2201 = vpop.f32.mrb[0].mxu0
        %v2202 = vpop.f32.mrb[0].mxu0
        %v2203 = vadd.f32 %v1914, %v2202
        %v2204 = vpop.f32.mrb[0].mxu0
        %2205 = vmatprep.mubr.bf16.mxu0 %v1339
        %2206 = vmatmul.mubr.bf16.gmra.mrb[0].mxu0 %v1338
        %v2207 = vpop.f32.mrb[0].mxu0
        %v2208 = vadd.f32 %v1919, %v2207
        %v2209 = vpop.f32.mrb[0].mxu0
        %v2210 = vpop.f32.mrb[0].mxu0
        %v2211 = vadd.f32 %v1922, %v2210
        %v2212 = vpop.f32.mrb[0].mxu0
        %2213 = vmatprep.mubr.bf16.mxu0 %v1343
        %2214 = vmatmul.mubr.bf16.gmra.mrb[0].mxu0 %v1342
        %v2215 = vpop.f32.mrb[0].mxu0
        %v2216 = vadd.f32 %v1927, %v2215
        %v2217 = vpop.f32.mrb[0].mxu0
        %v2218 = vpop.f32.mrb[0].mxu0
        %v2219 = vadd.f32 %v1930, %v2218
        %v2220 = vpop.f32.mrb[0].mxu0
        %2221 = vmatprep.mubr.bf16.mxu0 %v1347
        %2222 = vmatmul.mubr.bf16.gmra.mrb[0].mxu0 %v1346
        %v2223 = vpop.f32.mrb[0].mxu0
        %v2224 = vadd.f32 %v1935, %v2223
        %v2225 = vpop.f32.mrb[0].mxu0
        %v2226 = vpop.f32.mrb[0].mxu0
        %v2227 = vadd.f32 %v1938, %v2226
        %v2228 = vpop.f32.mrb[0].mxu0
        %2229 = vmatprep.mubr.bf16.mxu0 %v1351
        %2230 = vmatmul.mubr.bf16.gmra.mrb[0].mxu0 %v1350
        %v2231 = vpop.f32.mrb[0].mxu0
        %v2232 = vadd.f32 %v1943, %v2231
        %v2233 = vpop.f32.mrb[0].mxu0
        %v2234 = vpop.f32.mrb[0].mxu0
        %v2235 = vadd.f32 %v1946, %v2234
        %v2236 = vpop.f32.mrb[0].mxu0
        %2237 = vmatprep.mubr.bf16.mxu0 %v1355
        %2238 = vmatmul.mubr.bf16.gmra.mrb[0].mxu0 %v1354
        %v2239 = vpop.f32.mrb[0].mxu0
        %v2240 = vadd.f32 %v1951, %v2239
        %v2241 = vpop.f32.mrb[0].mxu0
        %v2242 = vpop.f32.mrb[0].mxu0
        %v2243 = vadd.f32 %v1954, %v2242
        %v2244 = vpop.f32.mrb[0].mxu0
        %2245 = vmatprep.mubr.bf16.mxu0 %v1359
        %2246 = vmatmul.mubr.bf16.gmra.mrb[0].mxu0 %v1358
        %v2247 = vpop.f32.mrb[0].mxu0
        %v2248 = vadd.f32 %v1959, %v2247
        %v2249 = vpop.f32.mrb[0].mxu0
        %v2250 = vpop.f32.mrb[0].mxu0
        %v2251 = vadd.f32 %v1962, %v2250
        %v2252 = vpop.f32.mrb[0].mxu0
        %2253 = vmatprep.mubr.bf16.mxu0 %v1363
        %2254 = vmatmul.mubr.bf16.gmra.mrb[0].mxu0 %v1362
        %v2255 = vpop.f32.mrb[0].mxu0
        %v2256 = vadd.f32 %v1967, %v2255
        %v2257 = vpop.f32.mrb[0].mxu0
        %v2258 = vpop.f32.mrb[0].mxu0
        %v2259 = vadd.f32 %v1970, %v2258
        %v2260 = vpop.f32.mrb[0].mxu0
        %2261 = vdwg.mxu0
        %v2262 = vadd.f32 %v596, %v2008
        %v2263 = vadd.f32 %v597, %v2011
        %v2264 = vadd.f32 %v598, %v2016
        %v2265 = vadd.f32 %v599, %v2019
        %v2266 = vadd.f32 %v600, %v2024
        %v2267 = vadd.f32 %v601, %v2027
        %v2268 = vadd.f32 %v602, %v2032
        %v2269 = vadd.f32 %v603, %v2035
        %v2270 = vadd.f32 %v604, %v2040
        %v2271 = vadd.f32 %v605, %v2043
        %v2272 = vadd.f32 %v606, %v2048
        %v2273 = vadd.f32 %v607, %v2051
        %v2274 = vadd.f32 %v608, %v2056
        %v2275 = vadd.f32 %v609, %v2059
        %v2276 = vadd.f32 %v610, %v2064
        %v2277 = vadd.f32 %v611, %v2067
        %v2278 = vadd.f32 %v612, %v2072
        %v2279 = vadd.f32 %v613, %v2075
        %v2280 = vadd.f32 %v614, %v2080
        %v2281 = vadd.f32 %v615, %v2083
        %v2282 = vadd.f32 %v616, %v2088
        %v2283 = vadd.f32 %v617, %v2091
        %v2284 = vadd.f32 %v618, %v2096
        %v2285 = vadd.f32 %v619, %v2099
        %v2286 = vadd.f32 %v620, %v2104
        %v2287 = vadd.f32 %v621, %v2107
        %v2288 = vadd.f32 %v622, %v2112
        %v2289 = vadd.f32 %v623, %v2115
        %v2290 = vadd.f32 %v624, %v2120
        %v2291 = vadd.f32 %v625, %v2123
        %v2292 = vadd.f32 %v626, %v2128
        %v2293 = vadd.f32 %v627, %v2131
        %v2294 = vadd.f32 %v628, %v2136
        %v2295 = vadd.f32 %v629, %v2139
        %v2296 = vadd.f32 %v630, %v2144
        %v2297 = vadd.f32 %v631, %v2147
        %v2298 = vadd.f32 %v632, %v2152
        %v2299 = vadd.f32 %v633, %v2155
        %v2300 = vadd.f32 %v634, %v2160
        %v2301 = vadd.f32 %v635, %v2163
        %v2302 = vadd.f32 %v636, %v2168
        %v2303 = vadd.f32 %v637, %v2171
        %v2304 = vadd.f32 %v638, %v2176
        %v2305 = vadd.f32 %v639, %v2179
        %v2306 = vadd.f32 %v640, %v2184
        %v2307 = vadd.f32 %v641, %v2187
        %v2308 = vadd.f32 %v642, %v2192
        %v2309 = vadd.f32 %v643, %v2195
        %v2310 = vadd.f32 %v644, %v2200
        %v2311 = vadd.f32 %v645, %v2203
        %v2312 = vadd.f32 %v646, %v2208
        %v2313 = vadd.f32 %v647, %v2211
        %v2314 = vadd.f32 %v648, %v2216
        %v2315 = vadd.f32 %v649, %v2219
        %v2316 = vadd.f32 %v650, %v2224
        %v2317 = vadd.f32 %v651, %v2227
        %v2318 = vadd.f32 %v652, %v2232
        %v2319 = vadd.f32 %v653, %v2235
        %v2320 = vadd.f32 %v654, %v2240
        %v2321 = vadd.f32 %v655, %v2243
        %v2322 = vadd.f32 %v656, %v2248
        %v2323 = vadd.f32 %v657, %v2251
        %v2324 = vadd.f32 %v658, %v2256
        %v2325 = vadd.f32 %v659, %v2259
        %2326 = vst [vmem:[#allocation2] sm:$0xff] %v2262
        %2327 = vst [vmem:[#allocation2 + $0x8] sm:$0xff] %v2263
        %2328 = vst [vmem:[#allocation2 + $0x10] sm:$0xff] %v2264
        %2329 = vst [vmem:[#allocation2 + $0x18] sm:$0xff] %v2265
        %2330 = vst [vmem:[#allocation2 + $0x20] sm:$0xff] %v2266
        %2331 = vst [vmem:[#allocation2 + $0x28] sm:$0xff] %v2267
        %2332 = vst [vmem:[#allocation2 + $0x30] sm:$0xff] %v2268
        %2333 = vst [vmem:[#allocation2 + $0x38] sm:$0xff] %v2269
        %2334 = vst [vmem:[#allocation2 + $0x40] sm:$0xff] %v2270
        %2335 = vst [vmem:[#allocation2 + $0x48] sm:$0xff] %v2271
        %2336 = vst [vmem:[#allocation2 + $0x50] sm:$0xff] %v2272
        %2337 = vst [vmem:[#allocation2 + $0x58] sm:$0xff] %v2273
        %2338 = vst [vmem:[#allocation2 + $0x60] sm:$0xff] %v2274
        %2339 = vst [vmem:[#allocation2 + $0x68] sm:$0xff] %v2275
        %2340 = vst [vmem:[#allocation2 + $0x70] sm:$0xff] %v2276
        %2341 = vst [vmem:[#allocation2 + $0x78] sm:$0xff] %v2277
        %2342 = vst [vmem:[#allocation2 + $0x80] sm:$0xff] %v2278
        %2343 = vst [vmem:[#allocation2 + $0x88] sm:$0xff] %v2279
        %2344 = vst [vmem:[#allocation2 + $0x90] sm:$0xff] %v2280
        %2345 = vst [vmem:[#allocation2 + $0x98] sm:$0xff] %v2281
        %2346 = vst [vmem:[#allocation2 + $0xa0] sm:$0xff] %v2282
        %2347 = vst [vmem:[#allocation2 + $0xa8] sm:$0xff] %v2283
        %2348 = vst [vmem:[#allocation2 + $0xb0] sm:$0xff] %v2284
        %2349 = vst [vmem:[#allocation2 + $0xb8] sm:$0xff] %v2285
        %2350 = vst [vmem:[#allocation2 + $0xc0] sm:$0xff] %v2286
        %2351 = vst [vmem:[#allocation2 + $0xc8] sm:$0xff] %v2287
        %2352 = vst [vmem:[#allocation2 + $0xd0] sm:$0xff] %v2288
        %2353 = vst [vmem:[#allocation2 + $0xd8] sm:$0xff] %v2289
        %2354 = vst [vmem:[#allocation2 + $0xe0] sm:$0xff] %v2290
        %2355 = vst [vmem:[#allocation2 + $0xe8] sm:$0xff] %v2291
        %2356 = vst [vmem:[#allocation2 + $0xf0] sm:$0xff] %v2292
        %2357 = vst [vmem:[#allocation2 + $0xf8] sm:$0xff] %v2293
        %2358 = vst [vmem:[#allocation2 + $0x100] sm:$0xff] %v2294
        %2359 = vst [vmem:[#allocation2 + $0x108] sm:$0xff] %v2295
        %2360 = vst [vmem:[#allocation2 + $0x110] sm:$0xff] %v2296
        %2361 = vst [vmem:[#allocation2 + $0x118] sm:$0xff] %v2297
        %2362 = vst [vmem:[#allocation2 + $0x120] sm:$0xff] %v2298
        %2363 = vst [vmem:[#allocation2 + $0x128] sm:$0xff] %v2299
        %2364 = vst [vmem:[#allocation2 + $0x130] sm:$0xff] %v2300
        %2365 = vst [vmem:[#allocation2 + $0x138] sm:$0xff] %v2301
        %2366 = vst [vmem:[#allocation2 + $0x140] sm:$0xff] %v2302
        %2367 = vst [vmem:[#allocation2 + $0x148] sm:$0xff] %v2303
        %2368 = vst [vmem:[#allocation2 + $0x150] sm:$0xff] %v2304
        %2369 = vst [vmem:[#allocation2 + $0x158] sm:$0xff] %v2305
        %2370 = vst [vmem:[#allocation2 + $0x160] sm:$0xff] %v2306
        %2371 = vst [vmem:[#allocation2 + $0x168] sm:$0xff] %v2307
        %2372 = vst [vmem:[#allocation2 + $0x170] sm:$0xff] %v2308
        %2373 = vst [vmem:[#allocation2 + $0x178] sm:$0xff] %v2309
        %2374 = vst [vmem:[#allocation2 + $0x180] sm:$0xff] %v2310
        %2375 = vst [vmem:[#allocation2 + $0x188] sm:$0xff] %v2311
        %2376 = vst [vmem:[#allocation2 + $0x190] sm:$0xff] %v2312
        %2377 = vst [vmem:[#allocation2 + $0x198] sm:$0xff] %v2313
        %2378 = vst [vmem:[#allocation2 + $0x1a0] sm:$0xff] %v2314
        %2379 = vst [vmem:[#allocation2 + $0x1a8] sm:$0xff] %v2315
        %2380 = vst [vmem:[#allocation2 + $0x1b0] sm:$0xff] %v2316
        %2381 = vst [vmem:[#allocation2 + $0x1b8] sm:$0xff] %v2317
        %2382 = vst [vmem:[#allocation2 + $0x1c0] sm:$0xff] %v2318
        %2383 = vst [vmem:[#allocation2 + $0x1c8] sm:$0xff] %v2319
        %2384 = vst [vmem:[#allocation2 + $0x1d0] sm:$0xff] %v2320
        %2385 = vst [vmem:[#allocation2 + $0x1d8] sm:$0xff] %v2321
        %2386 = vst [vmem:[#allocation2 + $0x1e0] sm:$0xff] %v2322
        %2387 = vst [vmem:[#allocation2 + $0x1e8] sm:$0xff] %v2323
        %2388 = vst [vmem:[#allocation2 + $0x1f0] sm:$0xff] %v2324
        %2389 = vst [vmem:[#allocation2 + $0x1f8] sm:$0xff] %v2325
        %p2390 = scmp.eq.s32.totalorder %s21, 1
        // Predicated region
        $region60: #{frame_map_forward.5} parent=50 // pred_check
          %p2391 = pneg %p2390
        $region61: #{frame_map_forward.5} parent=50 // pred_check_branch
          %2393 = sbr.rel (%p2391) target = $region63
        $region62: #{frame_map_forward.5} parent=50 // pred_region
          %v2394 = vld [vmem:[#allocation2] sm:$0xff]
          %v2395 = vld [vmem:[#allocation2 + $0x8] sm:$0xff]
          %v2396 = vld [vmem:[#allocation2 + $0x10] sm:$0xff]
          %v2397 = vld [vmem:[#allocation2 + $0x18] sm:$0xff]
          %v2398 = vld [vmem:[#allocation2 + $0x20] sm:$0xff]
          %v2399 = vld [vmem:[#allocation2 + $0x28] sm:$0xff]
          %v2400 = vld [vmem:[#allocation2 + $0x30] sm:$0xff]
          %v2401 = vld [vmem:[#allocation2 + $0x38] sm:$0xff]
          %v2402 = vld [vmem:[#allocation2 + $0x40] sm:$0xff]
          %v2403 = vld [vmem:[#allocation2 + $0x48] sm:$0xff]
          %v2404 = vld [vmem:[#allocation2 + $0x50] sm:$0xff]
          %v2405 = vld [vmem:[#allocation2 + $0x58] sm:$0xff]
          %v2406 = vld [vmem:[#allocation2 + $0x60] sm:$0xff]
          %v2407 = vld [vmem:[#allocation2 + $0x68] sm:$0xff]
          %v2408 = vld [vmem:[#allocation2 + $0x70] sm:$0xff]
          %v2409 = vld [vmem:[#allocation2 + $0x78] sm:$0xff]
          %v2410 = vld [vmem:[#allocation2 + $0x80] sm:$0xff]
          %v2411 = vld [vmem:[#allocation2 + $0x88] sm:$0xff]
          %v2412 = vld [vmem:[#allocation2 + $0x90] sm:$0xff]
          %v2413 = vld [vmem:[#allocation2 + $0x98] sm:$0xff]
          %v2414 = vld [vmem:[#allocation2 + $0xa0] sm:$0xff]
          %v2415 = vld [vmem:[#allocation2 + $0xa8] sm:$0xff]
          %v2416 = vld [vmem:[#allocation2 + $0xb0] sm:$0xff]
          %v2417 = vld [vmem:[#allocation2 + $0xb8] sm:$0xff]
          %v2418 = vld [vmem:[#allocation2 + $0xc0] sm:$0xff]
          %v2419 = vld [vmem:[#allocation2 + $0xc8] sm:$0xff]
          %v2420 = vld [vmem:[#allocation2 + $0xd0] sm:$0xff]
          %v2421 = vld [vmem:[#allocation2 + $0xd8] sm:$0xff]
          %v2422 = vld [vmem:[#allocation2 + $0xe0] sm:$0xff]
          %v2423 = vld [vmem:[#allocation2 + $0xe8] sm:$0xff]
          %v2424 = vld [vmem:[#allocation2 + $0xf0] sm:$0xff]
          %v2425 = vld [vmem:[#allocation2 + $0xf8] sm:$0xff]
          %v2426 = vld [vmem:[#allocation2 + $0x100] sm:$0xff]
          %v2427 = vld [vmem:[#allocation2 + $0x108] sm:$0xff]
          %v2428 = vld [vmem:[#allocation2 + $0x110] sm:$0xff]
          %v2429 = vld [vmem:[#allocation2 + $0x118] sm:$0xff]
          %v2430 = vld [vmem:[#allocation2 + $0x120] sm:$0xff]
          %v2431 = vld [vmem:[#allocation2 + $0x128] sm:$0xff]
          %v2432 = vld [vmem:[#allocation2 + $0x130] sm:$0xff]
          %v2433 = vld [vmem:[#allocation2 + $0x138] sm:$0xff]
          %v2434 = vld [vmem:[#allocation2 + $0x140] sm:$0xff]
          %v2435 = vld [vmem:[#allocation2 + $0x148] sm:$0xff]
          %v2436 = vld [vmem:[#allocation2 + $0x150] sm:$0xff]
          %v2437 = vld [vmem:[#allocation2 + $0x158] sm:$0xff]
          %v2438 = vld [vmem:[#allocation2 + $0x160] sm:$0xff]
          %v2439 = vld [vmem:[#allocation2 + $0x168] sm:$0xff]
          %v2440 = vld [vmem:[#allocation2 + $0x170] sm:$0xff]
          %v2441 = vld [vmem:[#allocation2 + $0x178] sm:$0xff]
          %v2442 = vld [vmem:[#allocation2 + $0x180] sm:$0xff]
          %v2443 = vld [vmem:[#allocation2 + $0x188] sm:$0xff]
          %v2444 = vld [vmem:[#allocation2 + $0x190] sm:$0xff]
          %v2445 = vld [vmem:[#allocation2 + $0x198] sm:$0xff]
          %v2446 = vld [vmem:[#allocation2 + $0x1a0] sm:$0xff]
          %v2447 = vld [vmem:[#allocation2 + $0x1a8] sm:$0xff]
          %v2448 = vld [vmem:[#allocation2 + $0x1b0] sm:$0xff]
          %v2449 = vld [vmem:[#allocation2 + $0x1b8] sm:$0xff]
          %v2450 = vld [vmem:[#allocation2 + $0x1c0] sm:$0xff]
          %v2451 = vld [vmem:[#allocation2 + $0x1c8] sm:$0xff]
          %v2452 = vld [vmem:[#allocation2 + $0x1d0] sm:$0xff]
          %v2453 = vld [vmem:[#allocation2 + $0x1d8] sm:$0xff]
          %v2454 = vld [vmem:[#allocation2 + $0x1e0] sm:$0xff]
          %v2455 = vld [vmem:[#allocation2 + $0x1e8] sm:$0xff]
          %v2456 = vld [vmem:[#allocation2 + $0x1f0] sm:$0xff]
          %v2457 = vld [vmem:[#allocation2 + $0x1f8] sm:$0xff]
          %v2458 = vld [vmem:[%s517] sm:$0x1]
          %v2460 = vlaneseq
          %v2461 = vshrl.u32 %v2460, 7
          %v2462 = vsub.s32 0, %v2461
          %v2463 = vrot.slane %v2458, %v2462
          %v2465 = vadd.f32 %v2394, %v2463
          %v2466 = vadd.f32 %v2395, %v2463
          %v2467 = vadd.f32 %v2396, %v2463
          %v2468 = vadd.f32 %v2397, %v2463
          %v2469 = vadd.f32 %v2398, %v2463
          %v2470 = vadd.f32 %v2399, %v2463
          %v2471 = vadd.f32 %v2400, %v2463
          %v2472 = vadd.f32 %v2401, %v2463
          %v2473 = vadd.f32 %v2402, %v2463
          %v2474 = vadd.f32 %v2403, %v2463
          %v2475 = vadd.f32 %v2404, %v2463
          %v2476 = vadd.f32 %v2405, %v2463
          %v2477 = vadd.f32 %v2406, %v2463
          %v2478 = vadd.f32 %v2407, %v2463
          %v2479 = vadd.f32 %v2408, %v2463
          %v2480 = vadd.f32 %v2409, %v2463
          %v2481 = vadd.f32 %v2410, %v2463
          %v2482 = vadd.f32 %v2411, %v2463
          %v2483 = vadd.f32 %v2412, %v2463
          %v2484 = vadd.f32 %v2413, %v2463
          %v2485 = vadd.f32 %v2414, %v2463
          %v2486 = vadd.f32 %v2415, %v2463
          %v2487 = vadd.f32 %v2416, %v2463
          %v2488 = vadd.f32 %v2417, %v2463
          %v2489 = vadd.f32 %v2418, %v2463
          %v2490 = vadd.f32 %v2419, %v2463
          %v2491 = vadd.f32 %v2420, %v2463
          %v2492 = vadd.f32 %v2421, %v2463
          %v2493 = vadd.f32 %v2422, %v2463
          %v2494 = vadd.f32 %v2423, %v2463
          %v2495 = vadd.f32 %v2424, %v2463
          %v2496 = vadd.f32 %v2425, %v2463
          %v2497 = vadd.f32 %v2426, %v2463
          %v2498 = vadd.f32 %v2427, %v2463
          %v2499 = vadd.f32 %v2428, %v2463
          %v2500 = vadd.f32 %v2429, %v2463
          %v2501 = vadd.f32 %v2430, %v2463
          %v2502 = vadd.f32 %v2431, %v2463
          %v2503 = vadd.f32 %v2432, %v2463
          %v2504 = vadd.f32 %v2433, %v2463
          %v2505 = vadd.f32 %v2434, %v2463
          %v2506 = vadd.f32 %v2435, %v2463
          %v2507 = vadd.f32 %v2436, %v2463
          %v2508 = vadd.f32 %v2437, %v2463
          %v2509 = vadd.f32 %v2438, %v2463
          %v2510 = vadd.f32 %v2439, %v2463
          %v2511 = vadd.f32 %v2440, %v2463
          %v2512 = vadd.f32 %v2441, %v2463
          %v2513 = vadd.f32 %v2442, %v2463
          %v2514 = vadd.f32 %v2443, %v2463
          %v2515 = vadd.f32 %v2444, %v2463
          %v2516 = vadd.f32 %v2445, %v2463
          %v2517 = vadd.f32 %v2446, %v2463
          %v2518 = vadd.f32 %v2447, %v2463
          %v2519 = vadd.f32 %v2448, %v2463
          %v2520 = vadd.f32 %v2449, %v2463
          %v2521 = vadd.f32 %v2450, %v2463
          %v2522 = vadd.f32 %v2451, %v2463
          %v2523 = vadd.f32 %v2452, %v2463
          %v2524 = vadd.f32 %v2453, %v2463
          %v2525 = vadd.f32 %v2454, %v2463
          %v2526 = vadd.f32 %v2455, %v2463
          %v2527 = vadd.f32 %v2456, %v2463
          %v2528 = vadd.f32 %v2457, %v2463
          %v2529 = vmul.f32 %v2465, 0.2
          %v2530 = vmul.f32 %v2466, 0.2
          %v2531 = vmul.f32 %v2467, 0.2
          %v2532 = vmul.f32 %v2468, 0.2
          %v2533 = vmul.f32 %v2469, 0.2
          %v2534 = vmul.f32 %v2470, 0.2
          %v2535 = vmul.f32 %v2471, 0.2
          %v2536 = vmul.f32 %v2472, 0.2
          %v2537 = vmul.f32 %v2473, 0.2
          %v2538 = vmul.f32 %v2474, 0.2
          %v2539 = vmul.f32 %v2475, 0.2
          %v2540 = vmul.f32 %v2476, 0.2
          %v2541 = vmul.f32 %v2477, 0.2
          %v2542 = vmul.f32 %v2478, 0.2
          %v2543 = vmul.f32 %v2479, 0.2
          %v2544 = vmul.f32 %v2480, 0.2
          %v2545 = vmul.f32 %v2481, 0.2
          %v2546 = vmul.f32 %v2482, 0.2
          %v2547 = vmul.f32 %v2483, 0.2
          %v2548 = vmul.f32 %v2484, 0.2
          %v2549 = vmul.f32 %v2485, 0.2
          %v2550 = vmul.f32 %v2486, 0.2
          %v2551 = vmul.f32 %v2487, 0.2
          %v2552 = vmul.f32 %v2488, 0.2
          %v2553 = vmul.f32 %v2489, 0.2
          %v2554 = vmul.f32 %v2490, 0.2
          %v2555 = vmul.f32 %v2491, 0.2
          %v2556 = vmul.f32 %v2492, 0.2
          %v2557 = vmul.f32 %v2493, 0.2
          %v2558 = vmul.f32 %v2494, 0.2
          %v2559 = vmul.f32 %v2495, 0.2
          %v2560 = vmul.f32 %v2496, 0.2
          %v2561 = vmul.f32 %v2497, 0.2
          %v2562 = vmul.f32 %v2498, 0.2
          %v2563 = vmul.f32 %v2499, 0.2
          %v2564 = vmul.f32 %v2500, 0.2
          %v2565 = vmul.f32 %v2501, 0.2
          %v2566 = vmul.f32 %v2502, 0.2
          %v2567 = vmul.f32 %v2503, 0.2
          %v2568 = vmul.f32 %v2504, 0.2
          %v2569 = vmul.f32 %v2505, 0.2
          %v2570 = vmul.f32 %v2506, 0.2
          %v2571 = vmul.f32 %v2507, 0.2
          %v2572 = vmul.f32 %v2508, 0.2
          %v2573 = vmul.f32 %v2509, 0.2
          %v2574 = vmul.f32 %v2510, 0.2
          %v2575 = vmul.f32 %v2511, 0.2
          %v2576 = vmul.f32 %v2512, 0.2
          %v2577 = vmul.f32 %v2513, 0.2
          %v2578 = vmul.f32 %v2514, 0.2
          %v2579 = vmul.f32 %v2515, 0.2
          %v2580 = vmul.f32 %v2516, 0.2
          %v2581 = vmul.f32 %v2517, 0.2
          %v2582 = vmul.f32 %v2518, 0.2
          %v2583 = vmul.f32 %v2519, 0.2
          %v2584 = vmul.f32 %v2520, 0.2
          %v2585 = vmul.f32 %v2521, 0.2
          %v2586 = vmul.f32 %v2522, 0.2
          %v2587 = vmul.f32 %v2523, 0.2
          %v2588 = vmul.f32 %v2524, 0.2
          %v2589 = vmul.f32 %v2525, 0.2
          %v2590 = vmul.f32 %v2526, 0.2
          %v2591 = vmul.f32 %v2527, 0.2
          %v2592 = vmul.f32 %v2528, 0.2
          %v2593 = vmax.f32 %v2465, %v2529
          %v2594 = vmax.f32 %v2466, %v2530
          %v2595 = vmax.f32 %v2467, %v2531
          %v2596 = vmax.f32 %v2468, %v2532
          %v2597 = vmax.f32 %v2469, %v2533
          %v2598 = vmax.f32 %v2470, %v2534
          %v2599 = vmax.f32 %v2471, %v2535
          %v2600 = vmax.f32 %v2472, %v2536
          %v2601 = vmax.f32 %v2473, %v2537
          %v2602 = vmax.f32 %v2474, %v2538
          %v2603 = vmax.f32 %v2475, %v2539
          %v2604 = vmax.f32 %v2476, %v2540
          %v2605 = vmax.f32 %v2477, %v2541
          %v2606 = vmax.f32 %v2478, %v2542
          %v2607 = vmax.f32 %v2479, %v2543
          %v2608 = vmax.f32 %v2480, %v2544
          %v2609 = vmax.f32 %v2481, %v2545
          %v2610 = vmax.f32 %v2482, %v2546
          %v2611 = vmax.f32 %v2483, %v2547
          %v2612 = vmax.f32 %v2484, %v2548
          %v2613 = vmax.f32 %v2485, %v2549
          %v2614 = vmax.f32 %v2486, %v2550
          %v2615 = vmax.f32 %v2487, %v2551
          %v2616 = vmax.f32 %v2488, %v2552
          %v2617 = vmax.f32 %v2489, %v2553
          %v2618 = vmax.f32 %v2490, %v2554
          %v2619 = vmax.f32 %v2491, %v2555
          %v2620 = vmax.f32 %v2492, %v2556
          %v2621 = vmax.f32 %v2493, %v2557
          %v2622 = vmax.f32 %v2494, %v2558
          %v2623 = vmax.f32 %v2495, %v2559
          %v2624 = vmax.f32 %v2496, %v2560
          %v2625 = vmax.f32 %v2497, %v2561
          %v2626 = vmax.f32 %v2498, %v2562
          %v2627 = vmax.f32 %v2499, %v2563
          %v2628 = vmax.f32 %v2500, %v2564
          %v2629 = vmax.f32 %v2501, %v2565
          %v2630 = vmax.f32 %v2502, %v2566
          %v2631 = vmax.f32 %v2503, %v2567
          %v2632 = vmax.f32 %v2504, %v2568
          %v2633 = vmax.f32 %v2505, %v2569
          %v2634 = vmax.f32 %v2506, %v2570
          %v2635 = vmax.f32 %v2507, %v2571
          %v2636 = vmax.f32 %v2508, %v2572
          %v2637 = vmax.f32 %v2509, %v2573
          %v2638 = vmax.f32 %v2510, %v2574
          %v2639 = vmax.f32 %v2511, %v2575
          %v2640 = vmax.f32 %v2512, %v2576
          %v2641 = vmax.f32 %v2513, %v2577
          %v2642 = vmax.f32 %v2514, %v2578
          %v2643 = vmax.f32 %v2515, %v2579
          %v2644 = vmax.f32 %v2516, %v2580
          %v2645 = vmax.f32 %v2517, %v2581
          %v2646 = vmax.f32 %v2518, %v2582
          %v2647 = vmax.f32 %v2519, %v2583
          %v2648 = vmax.f32 %v2520, %v2584
          %v2649 = vmax.f32 %v2521, %v2585
          %v2650 = vmax.f32 %v2522, %v2586
          %v2651 = vmax.f32 %v2523, %v2587
          %v2652 = vmax.f32 %v2524, %v2588
          %v2653 = vmax.f32 %v2525, %v2589
          %v2654 = vmax.f32 %v2526, %v2590
          %v2655 = vmax.f32 %v2527, %v2591
          %v2656 = vmax.f32 %v2528, %v2592
          %v2657 = vpack.c.bf16 %v2594, %v2593
          %v2658 = vpack.c.bf16 %v2596, %v2595
          %v2659 = vpack.c.bf16 %v2598, %v2597
          %v2660 = vpack.c.bf16 %v2600, %v2599
          %v2661 = vpack.c.bf16 %v2602, %v2601
          %v2662 = vpack.c.bf16 %v2604, %v2603
          %v2663 = vpack.c.bf16 %v2606, %v2605
          %v2664 = vpack.c.bf16 %v2608, %v2607
          %v2665 = vpack.c.bf16 %v2610, %v2609
          %v2666 = vpack.c.bf16 %v2612, %v2611
          %v2667 = vpack.c.bf16 %v2614, %v2613
          %v2668 = vpack.c.bf16 %v2616, %v2615
          %v2669 = vpack.c.bf16 %v2618, %v2617
          %v2670 = vpack.c.bf16 %v2620, %v2619
          %v2671 = vpack.c.bf16 %v2622, %v2621
          %v2672 = vpack.c.bf16 %v2624, %v2623
          %v2673 = vpack.c.bf16 %v2626, %v2625
          %v2674 = vpack.c.bf16 %v2628, %v2627
          %v2675 = vpack.c.bf16 %v2630, %v2629
          %v2676 = vpack.c.bf16 %v2632, %v2631
          %v2677 = vpack.c.bf16 %v2634, %v2633
          %v2678 = vpack.c.bf16 %v2636, %v2635
          %v2679 = vpack.c.bf16 %v2638, %v2637
          %v2680 = vpack.c.bf16 %v2640, %v2639
          %v2681 = vpack.c.bf16 %v2642, %v2641
          %v2682 = vpack.c.bf16 %v2644, %v2643
          %v2683 = vpack.c.bf16 %v2646, %v2645
          %v2684 = vpack.c.bf16 %v2648, %v2647
          %v2685 = vpack.c.bf16 %v2650, %v2649
          %v2686 = vpack.c.bf16 %v2652, %v2651
          %v2687 = vpack.c.bf16 %v2654, %v2653
          %v2688 = vpack.c.bf16 %v2656, %v2655
          %v2721 = vunpack.c.l.b16 %v2657
          %v2722 = vunpack.c.h.b16 %v2657
          %v2723 = vunpack.c.l.b16 %v2658
          %v2724 = vunpack.c.h.b16 %v2658
          %v2725 = vunpack.c.l.b16 %v2659
          %v2726 = vunpack.c.h.b16 %v2659
          %v2727 = vunpack.c.l.b16 %v2660
          %v2728 = vunpack.c.h.b16 %v2660
          %v2729 = vunpack.c.l.b16 %v2661
          %v2730 = vunpack.c.h.b16 %v2661
          %v2731 = vunpack.c.l.b16 %v2662
          %v2732 = vunpack.c.h.b16 %v2662
          %v2733 = vunpack.c.l.b16 %v2663
          %v2734 = vunpack.c.h.b16 %v2663
          %v2735 = vunpack.c.l.b16 %v2664
          %v2736 = vunpack.c.h.b16 %v2664
          %v2737 = vunpack.c.l.b16 %v2665
          %v2738 = vunpack.c.h.b16 %v2665
          %v2739 = vunpack.c.l.b16 %v2666
          %v2740 = vunpack.c.h.b16 %v2666
          %v2741 = vunpack.c.l.b16 %v2667
          %v2742 = vunpack.c.h.b16 %v2667
          %v2743 = vunpack.c.l.b16 %v2668
          %v2744 = vunpack.c.h.b16 %v2668
          %v2745 = vunpack.c.l.b16 %v2669
          %v2746 = vunpack.c.h.b16 %v2669
          %v2747 = vunpack.c.l.b16 %v2670
          %v2748 = vunpack.c.h.b16 %v2670
          %v2749 = vunpack.c.l.b16 %v2671
          %v2750 = vunpack.c.h.b16 %v2671
          %v2751 = vunpack.c.l.b16 %v2672
          %v2752 = vunpack.c.h.b16 %v2672
          %v2753 = vunpack.c.l.b16 %v2673
          %v2754 = vunpack.c.h.b16 %v2673
          %v2755 = vunpack.c.l.b16 %v2674
          %v2756 = vunpack.c.h.b16 %v2674
          %v2757 = vunpack.c.l.b16 %v2675
          %v2758 = vunpack.c.h.b16 %v2675
          %v2759 = vunpack.c.l.b16 %v2676
          %v2760 = vunpack.c.h.b16 %v2676
          %v2761 = vunpack.c.l.b16 %v2677
          %v2762 = vunpack.c.h.b16 %v2677
          %v2763 = vunpack.c.l.b16 %v2678
          %v2764 = vunpack.c.h.b16 %v2678
          %v2765 = vunpack.c.l.b16 %v2679
          %v2766 = vunpack.c.h.b16 %v2679
          %v2767 = vunpack.c.l.b16 %v2680
          %v2768 = vunpack.c.h.b16 %v2680
          %v2769 = vunpack.c.l.b16 %v2681
          %v2770 = vunpack.c.h.b16 %v2681
          %v2771 = vunpack.c.l.b16 %v2682
          %v2772 = vunpack.c.h.b16 %v2682
          %v2773 = vunpack.c.l.b16 %v2683
          %v2774 = vunpack.c.h.b16 %v2683
          %v2775 = vunpack.c.l.b16 %v2684
          %v2776 = vunpack.c.h.b16 %v2684
          %v2777 = vunpack.c.l.b16 %v2685
          %v2778 = vunpack.c.h.b16 %v2685
          %v2779 = vunpack.c.l.b16 %v2686
          %v2780 = vunpack.c.h.b16 %v2686
          %v2781 = vunpack.c.l.b16 %v2687
          %v2782 = vunpack.c.h.b16 %v2687
          %v2783 = vunpack.c.l.b16 %v2688
          %v2784 = vunpack.c.h.b16 %v2688
          %v2785 = vpack.c.b16 %v2721, %v2721
          %v2786 = vpack.c.b16 %v2722, %v2722
          %v2787 = vpack.c.b16 %v2723, %v2723
          %v2788 = vpack.c.b16 %v2724, %v2724
          %v2789 = vpack.c.b16 %v2725, %v2725
          %v2790 = vpack.c.b16 %v2726, %v2726
          %v2791 = vpack.c.b16 %v2727, %v2727
          %v2792 = vpack.c.b16 %v2728, %v2728
          %v2793 = vpack.c.b16 %v2729, %v2729
          %v2794 = vpack.c.b16 %v2730, %v2730
          %v2795 = vpack.c.b16 %v2731, %v2731
          %v2796 = vpack.c.b16 %v2732, %v2732
          %v2797 = vpack.c.b16 %v2733, %v2733
          %v2798 = vpack.c.b16 %v2734, %v2734
          %v2799 = vpack.c.b16 %v2735, %v2735
          %v2800 = vpack.c.b16 %v2736, %v2736
          %v2801 = vpack.c.b16 %v2737, %v2737
          %v2802 = vpack.c.b16 %v2738, %v2738
          %v2803 = vpack.c.b16 %v2739, %v2739
          %v2804 = vpack.c.b16 %v2740, %v2740
          %v2805 = vpack.c.b16 %v2741, %v2741
          %v2806 = vpack.c.b16 %v2742, %v2742
          %v2807 = vpack.c.b16 %v2743, %v2743
          %v2808 = vpack.c.b16 %v2744, %v2744
          %v2809 = vpack.c.b16 %v2745, %v2745
          %v2810 = vpack.c.b16 %v2746, %v2746
          %v2811 = vpack.c.b16 %v2747, %v2747
          %v2812 = vpack.c.b16 %v2748, %v2748
          %v2813 = vpack.c.b16 %v2749, %v2749
          %v2814 = vpack.c.b16 %v2750, %v2750
          %v2815 = vpack.c.b16 %v2751, %v2751
          %v2816 = vpack.c.b16 %v2752, %v2752
          %v2817 = vpack.c.b16 %v2753, %v2753
          %v2818 = vpack.c.b16 %v2754, %v2754
          %v2819 = vpack.c.b16 %v2755, %v2755
          %v2820 = vpack.c.b16 %v2756, %v2756
          %v2821 = vpack.c.b16 %v2757, %v2757
          %v2822 = vpack.c.b16 %v2758, %v2758
          %v2823 = vpack.c.b16 %v2759, %v2759
          %v2824 = vpack.c.b16 %v2760, %v2760
          %v2825 = vpack.c.b16 %v2761, %v2761
          %v2826 = vpack.c.b16 %v2762, %v2762
          %v2827 = vpack.c.b16 %v2763, %v2763
          %v2828 = vpack.c.b16 %v2764, %v2764
          %v2829 = vpack.c.b16 %v2765, %v2765
          %v2830 = vpack.c.b16 %v2766, %v2766
          %v2831 = vpack.c.b16 %v2767, %v2767
          %v2832 = vpack.c.b16 %v2768, %v2768
          %v2833 = vpack.c.b16 %v2769, %v2769
          %v2834 = vpack.c.b16 %v2770, %v2770
          %v2835 = vpack.c.b16 %v2771, %v2771
          %v2836 = vpack.c.b16 %v2772, %v2772
          %v2837 = vpack.c.b16 %v2773, %v2773
          %v2838 = vpack.c.b16 %v2774, %v2774
          %v2839 = vpack.c.b16 %v2775, %v2775
          %v2840 = vpack.c.b16 %v2776, %v2776
          %v2841 = vpack.c.b16 %v2777, %v2777
          %v2842 = vpack.c.b16 %v2778, %v2778
          %v2843 = vpack.c.b16 %v2779, %v2779
          %v2844 = vpack.c.b16 %v2780, %v2780
          %v2845 = vpack.c.b16 %v2781, %v2781
          %v2846 = vpack.c.b16 %v2782, %v2782
          %v2847 = vpack.c.b16 %v2783, %v2783
          %v2848 = vpack.c.b16 %v2784, %v2784
          %2913 = vst [vmem:[%s525] sm:$0xf] %v2785
          %2914 = vst [vmem:[%s525 + $0x4] sm:$0xf] %v2786
          %2915 = vst [vmem:[%s525 + $0x8] sm:$0xf] %v2787
          %2916 = vst [vmem:[%s525 + $0xc] sm:$0xf] %v2788
          %2917 = vst [vmem:[%s525 + $0x10] sm:$0xf] %v2789
          %2918 = vst [vmem:[%s525 + $0x14] sm:$0xf] %v2790
          %2919 = vst [vmem:[%s525 + $0x18] sm:$0xf] %v2791
          %2920 = vst [vmem:[%s525 + $0x1c] sm:$0xf] %v2792
          %2921 = vst [vmem:[%s525 + $0x20] sm:$0xf] %v2793
          %2922 = vst [vmem:[%s525 + $0x24] sm:$0xf] %v2794
          %2923 = vst [vmem:[%s525 + $0x28] sm:$0xf] %v2795
          %2924 = vst [vmem:[%s525 + $0x2c] sm:$0xf] %v2796
          %2925 = vst [vmem:[%s525 + $0x30] sm:$0xf] %v2797
          %2926 = vst [vmem:[%s525 + $0x34] sm:$0xf] %v2798
          %2927 = vst [vmem:[%s525 + $0x38] sm:$0xf] %v2799
          %2928 = vst [vmem:[%s525 + $0x3c] sm:$0xf] %v2800
          %2929 = vst [vmem:[%s525 + $0x40] sm:$0xf] %v2801
          %2930 = vst [vmem:[%s525 + $0x44] sm:$0xf] %v2802
          %2931 = vst [vmem:[%s525 + $0x48] sm:$0xf] %v2803
          %2932 = vst [vmem:[%s525 + $0x4c] sm:$0xf] %v2804
          %2933 = vst [vmem:[%s525 + $0x50] sm:$0xf] %v2805
          %2934 = vst [vmem:[%s525 + $0x54] sm:$0xf] %v2806
          %2935 = vst [vmem:[%s525 + $0x58] sm:$0xf] %v2807
          %2936 = vst [vmem:[%s525 + $0x5c] sm:$0xf] %v2808
          %2937 = vst [vmem:[%s525 + $0x60] sm:$0xf] %v2809
          %2938 = vst [vmem:[%s525 + $0x64] sm:$0xf] %v2810
          %2939 = vst [vmem:[%s525 + $0x68] sm:$0xf] %v2811
          %2940 = vst [vmem:[%s525 + $0x6c] sm:$0xf] %v2812
          %2941 = vst [vmem:[%s525 + $0x70] sm:$0xf] %v2813
          %2942 = vst [vmem:[%s525 + $0x74] sm:$0xf] %v2814
          %2943 = vst [vmem:[%s525 + $0x78] sm:$0xf] %v2815
          %2944 = vst [vmem:[%s525 + $0x7c] sm:$0xf] %v2816
          %2945 = vst [vmem:[%s525 + $0x80] sm:$0xf] %v2817
          %2946 = vst [vmem:[%s525 + $0x84] sm:$0xf] %v2818
          %2947 = vst [vmem:[%s525 + $0x88] sm:$0xf] %v2819
          %2948 = vst [vmem:[%s525 + $0x8c] sm:$0xf] %v2820
          %2949 = vst [vmem:[%s525 + $0x90] sm:$0xf] %v2821
          %2950 = vst [vmem:[%s525 + $0x94] sm:$0xf] %v2822
          %2951 = vst [vmem:[%s525 + $0x98] sm:$0xf] %v2823
          %2952 = vst [vmem:[%s525 + $0x9c] sm:$0xf] %v2824
          %2953 = vst [vmem:[%s525 + $0xa0] sm:$0xf] %v2825
          %2954 = vst [vmem:[%s525 + $0xa4] sm:$0xf] %v2826
          %2955 = vst [vmem:[%s525 + $0xa8] sm:$0xf] %v2827
          %2956 = vst [vmem:[%s525 + $0xac] sm:$0xf] %v2828
          %2957 = vst [vmem:[%s525 + $0xb0] sm:$0xf] %v2829
          %2958 = vst [vmem:[%s525 + $0xb4] sm:$0xf] %v2830
          %2959 = vst [vmem:[%s525 + $0xb8] sm:$0xf] %v2831
          %2960 = vst [vmem:[%s525 + $0xbc] sm:$0xf] %v2832
          %2961 = vst [vmem:[%s525 + $0xc0] sm:$0xf] %v2833
          %2962 = vst [vmem:[%s525 + $0xc4] sm:$0xf] %v2834
          %2963 = vst [vmem:[%s525 + $0xc8] sm:$0xf] %v2835
          %2964 = vst [vmem:[%s525 + $0xcc] sm:$0xf] %v2836
          %2965 = vst [vmem:[%s525 + $0xd0] sm:$0xf] %v2837
          %2966 = vst [vmem:[%s525 + $0xd4] sm:$0xf] %v2838
          %2967 = vst [vmem:[%s525 + $0xd8] sm:$0xf] %v2839
          %2968 = vst [vmem:[%s525 + $0xdc] sm:$0xf] %v2840
          %2969 = vst [vmem:[%s525 + $0xe0] sm:$0xf] %v2841
          %2970 = vst [vmem:[%s525 + $0xe4] sm:$0xf] %v2842
          %2971 = vst [vmem:[%s525 + $0xe8] sm:$0xf] %v2843
          %2972 = vst [vmem:[%s525 + $0xec] sm:$0xf] %v2844
          %2973 = vst [vmem:[%s525 + $0xf0] sm:$0xf] %v2845
          %2974 = vst [vmem:[%s525 + $0xf4] sm:$0xf] %v2846
          %2975 = vst [vmem:[%s525 + $0xf8] sm:$0xf] %v2847
          %2976 = vst [vmem:[%s525 + $0xfc] sm:$0xf] %v2848
        $region63: #{frame_map_forward.5} parent=50 // pred_fallthru
          _
        %s2977 = smul.u32 64, %s19
        %p2978 = scmp.lt.s32.totalorder %s2977, 63
        %s2979 = scalar_select %p2978, %s2977, 63
        %p2980 = scmp.lt.s32.totalorder %s20, 0
        %s2981 = scalar_select %p2980, %s20, 0
        %s2982 = sadd.s32 %s2981, %s2979
        %s2983 = smul.addr %s2982, 4
        %s2984 = scalar_lea.vmem %s3, %s2983
        // Predicated region
        $region64: #{frame_map_forward.5} parent=50 // pred_check
          %p2985 = pneg %p135
        $region65: #{frame_map_forward.5} parent=50 // pred_check_branch
          %2987 = sbr.rel (%p2985) target = $region67
        $region66: #{frame_map_forward.5} parent=50 // pred_region
          %s2988 = smul.u32 64, %s19
        $region67: #{frame_map_forward.5} parent=50 // pred_fallthru
          _
        // Predicated region
        $region68: #{frame_map_forward.5} parent=50 // pred_check
          %p2989 = pneg %p135
        $region69: #{frame_map_forward.5} parent=50 // pred_check_branch
          %2991 = sbr.rel (%p2989) target = $region71
        $region70: #{frame_map_forward.5} parent=50 // pred_region
          %s2992 = smul.u32 64, %s19
          %p2993 = scmp.lt.s32.totalorder %s2992, 63
          %s2994 = scalar_select %p2993, %s2992, 63
          %p2995 = scmp.lt.s32.totalorder %s20, 0
          %s2996 = scalar_select %p2995, %s20, 0
          %s2997 = sadd.s32 %s2996, %s2994
          %s2998 = smul.addr %s2997, 4
          %s2999 = scalar_lea.vmem %s3, %s2998
        $region71: #{frame_map_forward.5} parent=50 // pred_fallthru
          _
      $region51: #{frame_map_forward.5} parent=5 // pred_fallthru
        _
      %p3000 = scmp.le.s32.totalorder 2, %s9
      // Predicated region
      $region72: #{frame_map_forward.5} parent=5 // pred_check
        %p3001 = pneg %p3000
      $region73: #{frame_map_forward.5} parent=5 // pred_check_branch
        %3003 = sbr.rel (%p3001) target = $region75
      $region74: #{frame_map_forward.5} parent=5 // pred_region
        %s3004 = ssub.s32 %s9, 2
      $region75: #{frame_map_forward.5} parent=5 // pred_fallthru
        _
    $region6: #{frame_map_forward.5} parent=1 // loop_footer
      %s13 = sadd.s32 1, %s9
    $region7: #{frame_map_forward.5} parent=1 // loop_footer_branch
      %8 = sbr.rel target = $region3
    $region8: #{frame_map_forward.5} parent=1 // loop_exit
      _

// kernel: frame_map_forward.6
$region0: #{frame_map_forward.6}
  #allocation0 [shape = 'u32[]', space=smem, size = 0x4, offset = 0x4, fixed_abs, tag = 'smem constant byte address 0x4 - core index']
  #allocation1 [shape = 'u32[144,128]{1,0:T(1,128)}', space=vmem, size = 0x12000, scoped, tag = 'internal scratch']
  #allocation2 [shape = 'f32[128,256]{1,0:T(8,128)}', space=vmem, size = 0x20000, scoped, tag = 'scratch operand']
  %s0 = inlined_call_operand.vmem [shape: bf16[128,2048], index: 0, kind: input, shape index: {}]
  %s1 = inlined_call_operand.vmem [shape: bf16[2048,256], index: 1, kind: input, shape index: {}]
  %s2 = inlined_call_operand.vmem [shape: f32[1,256], index: 2, kind: input, shape index: {}]
  %s3 = inlined_call_operand.vmem [shape: bf16[128,256], index: 3, kind: output, shape index: {}]
  %s4 = sld [smem:[#allocation0]]
  $region76: #{frame_map_forward.6} parent=0
    _
  %s6 = ssub.s32 1, %s4
  %s7 = scalar_select 0, %s6, %s4
  $region1: #{frame_map_forward.6} parent=0
    #allocation3 [shape = 'u8[262144]{0}', space=vmem, size = 0x40000, scoped, tag = 'input window, operand 0']
    loop: start=0, step=1, limit=6
    $region2: #{frame_map_forward.6} parent=1 // loop_pre_header
      _
    $region3: #{frame_map_forward.6} parent=1 // loop_header
      %s9 = sphi 0, %s13
      %p10 = scmp.ge.s32.totalorder %s9, 6
      %s16 = sphi 0, %s35
      %s17 = sphi 0, %s31
      %s18 = sphi 0, %s27
      %s19 = sphi 0, %s16
      %s20 = sphi 0, %s17
      %s21 = sphi 0, %s18
      %s22 = sphi 0, %s19
      %s23 = sphi 0, %s20
      %s24 = sphi 0, %s21
      %s40 = sphi 0, %s42
      %s43 = sphi 0, %s40
      %s44 = sphi 0, %s43
      %s60 = sphi 0, %s44
      %s68 = sphi 0, %s70
      %s71 = sphi 0, %s68
      %s72 = sphi 0, %s71
      %s88 = sphi 0, %s72
      %s94 = sphi 0, %s96
      %s97 = sphi 0, %s94
      %s98 = sphi 0, %s97
      %s114 = sphi 0, %s98
      %s122 = sphi 0, %s124
      %s125 = sphi 0, %s122
      %s126 = sphi 0, %s125
      %s142 = sphi 0, %s126
    $region4: #{frame_map_forward.6} parent=1 // loop_header_branch
      %12 = sbr.rel (%p10) target = $region8
    $region5: #{frame_map_forward.6} parent=1 // loop_body
      %s14 = ssub.s32 %s9, 1
      %s15 = ssub.s32 %s9, 2
      %s25 = sadd.s32 1, %s18
      %p26 = scmp.ge.s32.totalorder %s25, 4
      %s27 = scalar_select %p26, 0, %s25
      %s28 = sadd.s32 1, %s17
      %s29 = scalar_select %p26, %s28, %s17
      %p30 = scmp.ge.s32.totalorder %s29, 1
      %s31 = scalar_select %p30, 0, %s29
      %s32 = sadd.s32 1, %s16
      %s33 = scalar_select %p30, %s32, %s16
      %p34 = scmp.ge.s32.totalorder %s33, 1
      %s35 = scalar_select %p34, 0, %s33
      %s36 = ssub.s32 %s16, %s35
      %s37 = ssub.s32 %s18, %s27
      %s38 = sor.u32 %s36, %s37
      %p39 = scmp.eq.s32.totalorder %s38, 0
      %s41 = sadd.s32 %s40, 1
      %s42 = scalar_select %p39, %s40, %s41
      %p45 = pneg %p39
      %p46 = scmp.eq.s32.totalorder %s9, 3
      %p47 = por %p45, %p46
      %p48 = scmp.ne.s32.totalorder %s40, %s43
      %p49 = scmp.eq.s32.totalorder %s9, 0
      %p50 = por %p48, %p49
      %p51 = scmp.ne.s32.totalorder %s40, %s43
      %p52 = scmp.eq.s32.totalorder %s14, 3
      %p53 = por %p51, %p52
      %p54 = scmp.ne.s32.totalorder %s43, %s44
      %p55 = scmp.eq.s32.totalorder %s14, 0
      %p56 = por %p54, %p55
      %p57 = scmp.ne.s32.totalorder %s43, %s44
      %p58 = scmp.eq.s32.totalorder %s15, 3
      %p59 = por %p57, %p58
      %p61 = scmp.ne.s32.totalorder %s44, %s60
      %p62 = scmp.eq.s32.totalorder %s15, 0
      %p63 = por %p61, %p62
      %s64 = ssub.s32 %s18, %s27
      %s65 = ssub.s32 %s17, %s31
      %s66 = sor.u32 %s64, %s65
      %p67 = scmp.eq.s32.totalorder %s66, 0
      %s69 = sadd.s32 %s68, 1
      %s70 = scalar_select %p67, %s68, %s69
      %p73 = pneg %p67
      %p74 = scmp.eq.s32.totalorder %s9, 3
      %p75 = por %p73, %p74
      %p76 = scmp.ne.s32.totalorder %s68, %s71
      %p77 = scmp.eq.s32.totalorder %s9, 0
      %p78 = por %p76, %p77
      %p79 = scmp.ne.s32.totalorder %s68, %s71
      %p80 = scmp.eq.s32.totalorder %s14, 3
      %p81 = por %p79, %p80
      %p82 = scmp.ne.s32.totalorder %s71, %s72
      %p83 = scmp.eq.s32.totalorder %s14, 0
      %p84 = por %p82, %p83
      %p85 = scmp.ne.s32.totalorder %s71, %s72
      %p86 = scmp.eq.s32.totalorder %s15, 3
      %p87 = por %p85, %p86
      %p89 = scmp.ne.s32.totalorder %s72, %s88
      %p90 = scmp.eq.s32.totalorder %s15, 0
      %p91 = por %p89, %p90
      %s92 = ssub.s32 %s17, %s31
      %p93 = scmp.eq.s32.totalorder %s92, 0
      %s95 = sadd.s32 %s94, 1
      %s96 = scalar_select %p93, %s94, %s95
      %p99 = pneg %p93
      %p100 = scmp.eq.s32.totalorder %s9, 3
      %p101 = por %p99, %p100
      %p102 = scmp.ne.s32.totalorder %s94, %s97
      %p103 = scmp.eq.s32.totalorder %s9, 0
      %p104 = por %p102, %p103
      %p105 = scmp.ne.s32.totalorder %s94, %s97
      %p106 = scmp.eq.s32.totalorder %s14, 3
      %p107 = por %p105, %p106
      %p108 = scmp.ne.s32.totalorder %s97, %s98
      %p109 = scmp.eq.s32.totalorder %s14, 0
      %p110 = por %p108, %p109
      %p111 = scmp.ne.s32.totalorder %s97, %s98
      %p112 = scmp.eq.s32.totalorder %s15, 3
      %p113 = por %p111, %p112
      %p115 = scmp.ne.s32.totalorder %s98, %s114
      %p116 = scmp.eq.s32.totalorder %s15, 0
      %p117 = por %p115, %p116
      %s118 = ssub.s32 %s16, %s35
      %s119 = ssub.s32 %s17, %s31
      %s120 = sor.u32 %s118, %s119
      %p121 = scmp.eq.s32.totalorder %s120, 0
      %s123 = sadd.s32 %s122, 1
      %s124 = scalar_select %p121, %s122, %s123
      %p127 = pneg %p121
      %p128 = scmp.eq.s32.totalorder %s9, 3
      %p129 = por %p127, %p128
      %p130 = scmp.ne.s32.totalorder %s122, %s125
      %p131 = scmp.eq.s32.totalorder %s9, 0
      %p132 = por %p130, %p131
      %p133 = scmp.ne.s32.totalorder %s122, %s125
      %p134 = scmp.eq.s32.totalorder %s14, 3
      %p135 = por %p133, %p134
      %p136 = scmp.ne.s32.totalorder %s125, %s126
      %p137 = scmp.eq.s32.totalorder %s14, 0
      %p138 = por %p136, %p137
      %p139 = scmp.ne.s32.totalorder %s125, %s126
      %p140 = scmp.eq.s32.totalorder %s15, 3
      %p141 = por %p139, %p140
      %p143 = scmp.ne.s32.totalorder %s126, %s142
      %p144 = scmp.eq.s32.totalorder %s15, 0
      %p145 = por %p143, %p144
      %p146 = scmp.le.s32.totalorder 1, %s9
      %p147 = scmp.lt.s32.totalorder %s9, 5
      %p148 = pnand %p146, %p147
      %p149 = pneg %p148
      // Predicated region
      $region9: #{frame_map_forward.6} parent=5 // pred_check
        _
      $region10: #{frame_map_forward.6} parent=5 // pred_check_branch
        %151 = sbr.rel (%p148) target = $region12
      $region11: #{frame_map_forward.6} parent=5 // pred_region
        %s152 = ssub.s32 %s9, 1
        // Predicated region
        $region13: #{frame_map_forward.6} parent=11 // pred_check
          %p153 = pneg %p110
        $region14: #{frame_map_forward.6} parent=11 // pred_check_branch
          %155 = sbr.rel (%p153) target = $region16
        $region15: #{frame_map_forward.6} parent=11 // pred_region
          %s156 = smul.u32 2, %s20
          %p157 = scmp.lt.s32.totalorder %s156, 1
          %s158 = scalar_select %p157, %s156, 1
          %s159 = scalar_lea.vmem %s2, %s158
          %s160 = smul.u32 2, %s20
        $region16: #{frame_map_forward.6} parent=11 // pred_fallthru
          _
      $region12: #{frame_map_forward.6} parent=5 // pred_fallthru
        _
      %p161 = scmp.lt.s32.totalorder %s9, 4
      // Predicated region
      $region17: #{frame_map_forward.6} parent=5 // pred_check
        %p162 = pneg %p161
      $region18: #{frame_map_forward.6} parent=5 // pred_check_branch
        %164 = sbr.rel (%p162) target = $region20
      $region19: #{frame_map_forward.6} parent=5 // pred_region
        // Predicated region
        $region21: #{frame_map_forward.6} parent=19 // pred_check
          %p165 = pneg %p50
        $region22: #{frame_map_forward.6} parent=19 // pred_check_branch
          %167 = sbr.rel (%p165) target = $region24
        $region23: #{frame_map_forward.6} parent=19 // pred_region
          %s168 = sand.u32 %s40, 1
          %s169 = sand.u32 %s40, 1
          %s170 = smul.addr %s169, 256
          %s171 = scalar_lea.vmem [#allocation3], %s170
          %s172 = smul.u32 16, %s16
          %s173 = smul.u32 4, %s18
          %s174 = smul.addr %s172, 16
          %s175 = sadd.s32 %s173, %s174
          %s176 = smul.addr %s175, 4
          %s177 = scalar_lea.vmem %s0, %s176
          // Predicated region
          $region25: #{frame_map_forward.6} parent=23 // pred_check
            _
          $region26: #{frame_map_forward.6} parent=23 // pred_check_branch
            %179 = sbr.rel (0) target = $region28
          $region27: #{frame_map_forward.6} parent=23 // pred_region
            // Predicated region
            $region29: #{frame_map_forward.6} parent=27 // pred_check
              _
            $region30: #{frame_map_forward.6} parent=27 // pred_check_branch
              %181 = sbr.rel (0) target = $region32
            $region31: #{frame_map_forward.6} parent=27 // pred_region
              loop: start=0, step=1, limit=1
              $region33: #{frame_map_forward.6} parent=31 // loop_pre_header
                _
              $region34: #{frame_map_forward.6} parent=31 // loop_header
                %s183 = sphi 0, %s187
                %p184 = scmp.ge.s32.totalorder %s183, 1
                %s188 = sphi %s177, %s177
                %s189 = sphi %s171, %s171
              $region35: #{frame_map_forward.6} parent=31 // loop_header_branch
                %186 = sbr.rel (%p184) target = $region39
              $region36: #{frame_map_forward.6} parent=31 // loop_body
                %v190 = vld [vmem:[%s188] sm:$0xff]
                %191 = vst [vmem:[%s189] sm:$0xff] %v190
                %v192 = vld [vmem:[%s188 + $0x8] sm:$0xff]
                %193 = vst [vmem:[%s189 + $0x8] sm:$0xff] %v192
                %v194 = vld [vmem:[%s188 + $0x40] sm:$0xff]
                %195 = vst [vmem:[%s189 + $0x10] sm:$0xff] %v194
                %v196 = vld [vmem:[%s188 + $0x48] sm:$0xff]
                %197 = vst [vmem:[%s189 + $0x18] sm:$0xff] %v196
                %v198 = vld [vmem:[%s188 + $0x80] sm:$0xff]
                %199 = vst [vmem:[%s189 + $0x20] sm:$0xff] %v198
                %v200 = vld [vmem:[%s188 + $0x88] sm:$0xff]
                %201 = vst [vmem:[%s189 + $0x28] sm:$0xff] %v200
                %v202 = vld [vmem:[%s188 + $0xc0] sm:$0xff]
                %203 = vst [vmem:[%s189 + $0x30] sm:$0xff] %v202
                %v204 = vld [vmem:[%s188 + $0xc8] sm:$0xff]
                %205 = vst [vmem:[%s189 + $0x38] sm:$0xff] %v204
                %v206 = vld [vmem:[%s188 + $0x100] sm:$0xff]
                %207 = vst [vmem:[%s189 + $0x40] sm:$0xff] %v206
                %v208 = vld [vmem:[%s188 + $0x108] sm:$0xff]
                %209 = vst [vmem:[%s189 + $0x48] sm:$0xff] %v208
                %v210 = vld [vmem:[%s188 + $0x140] sm:$0xff]
                %211 = vst [vmem:[%s189 + $0x50] sm:$0xff] %v210
                %v212 = vld [vmem:[%s188 + $0x148] sm:$0xff]
                %213 = vst [vmem:[%s189 + $0x58] sm:$0xff] %v212
                %v214 = vld [vmem:[%s188 + $0x180] sm:$0xff]
                %215 = vst [vmem:[%s189 + $0x60] sm:$0xff] %v214
                %v216 = vld [vmem:[%s188 + $0x188] sm:$0xff]
                %217 = vst [vmem:[%s189 + $0x68] sm:$0xff] %v216
                %v218 = vld [vmem:[%s188 + $0x1c0] sm:$0xff]
                %219 = vst [vmem:[%s189 + $0x70] sm:$0xff] %v218
                %v220 = vld [vmem:[%s188 + $0x1c8] sm:$0xff]
                %221 = vst [vmem:[%s189 + $0x78] sm:$0xff] %v220
                %v222 = vld [vmem:[%s188 + $0x200] sm:$0xff]
                %223 = vst [vmem:[%s189 + $0x80] sm:$0xff] %v222
                %v224 = vld [vmem:[%s188 + $0x208] sm:$0xff]
                %225 = vst [vmem:[%s189 + $0x88] sm:$0xff] %v224
                %v226 = vld [vmem:[%s188 + $0x240] sm:$0xff]
                %227 = vst [vmem:[%s189 + $0x90] sm:$0xff] %v226
                %v228 = vld [vmem:[%s188 + $0x248] sm:$0xff]
                %229 = vst [vmem:[%s189 + $0x98] sm:$0xff] %v228
                %v230 = vld [vmem:[%s188 + $0x280] sm:$0xff]
                %231 = vst [vmem:[%s189 + $0xa0] sm:$0xff] %v230
                %v232 = vld [vmem:[%s188 + $0x288] sm:$0xff]
                %233 = vst [vmem:[%s189 + $0xa8] sm:$0xff] %v232
                %v234 = vld [vmem:[%s188 + $0x2c0] sm:$0xff]
                %235 = vst [vmem:[%s189 + $0xb0] sm:$0xff] %v234
                %v236 = vld [vmem:[%s188 + $0x2c8] sm:$0xff]
                %237 = vst [vmem:[%s189 + $0xb8] sm:$0xff] %v236
                %v238 = vld [vmem:[%s188 + $0x300] sm:$0xff]
                %239 = vst [vmem:[%s189 + $0xc0] sm:$0xff] %v238
                %v240 = vld [vmem:[%s188 + $0x308] sm:$0xff]
                %241 = vst [vmem:[%s189 + $0xc8] sm:$0xff] %v240
                %v242 = vld [vmem:[%s188 + $0x340] sm:$0xff]
                %243 = vst [vmem:[%s189 + $0xd0] sm:$0xff] %v242
                %v244 = vld [vmem:[%s188 + $0x348] sm:$0xff]
                %245 = vst [vmem:[%s189 + $0xd8] sm:$0xff] %v244
                %v246 = vld [vmem:[%s188 + $0x380] sm:$0xff]
                %247 = vst [vmem:[%s189 + $0xe0] sm:$0xff] %v246
                %v248 = vld [vmem:[%s188 + $0x388] sm:$0xff]
                %249 = vst [vmem:[%s189 + $0xe8] sm:$0xff] %v248
                %v250 = vld [vmem:[%s188 + $0x3c0] sm:$0xff]
                %251 = vst [vmem:[%s189 + $0xf0] sm:$0xff] %v250
                %v252 = vld [vmem:[%s188 + $0x3c8] sm:$0xff]
                %253 = vst [vmem:[%s189 + $0xf8] sm:$0xff] %v252
              $region37: #{frame_map_forward.6} parent=31 // loop_footer
                %s187 = sadd.s32 1, %s183
              $region38: #{frame_map_forward.6} parent=31 // loop_footer_branch
                %182 = sbr.rel target = $region34
              $region39: #{frame_map_forward.6} parent=31 // loop_exit
                _
            $region32: #{frame_map_forward.6} parent=27 // pred_fallthru
              _
            // Predicated region
            $region40: #{frame_map_forward.6} parent=27 // pred_check
              _
            $region41: #{frame_map_forward.6} parent=27 // pred_check_branch
              %255 = sbr.rel target = $region43
            $region42: #{frame_map_forward.6} parent=27 // pred_region
              _
            $region43: #{frame_map_forward.6} parent=27 // pred_fallthru
              _
          $region28: #{frame_map_forward.6} parent=23 // pred_fallthru
            _
          %256 = vnop
        $region24: #{frame_map_forward.6} parent=19 // pred_fallthru
          _
        // Predicated region
        $region44: #{frame_map_forward.6} parent=19 // pred_check
          %p257 = pneg %p78
        $region45: #{frame_map_forward.6} parent=19 // pred_check_branch
          %259 = sbr.rel (%p257) target = $region47
        $region46: #{frame_map_forward.6} parent=19 // pred_region
          %s260 = smul.u32 64, %s18
          %s261 = smul.u32 2, %s17
          %p262 = scmp.lt.s32.totalorder %s260, 255
          %s263 = scalar_select %p262, %s260, 255
          %p264 = scmp.lt.s32.totalorder %s261, 1
          %s265 = scalar_select %p264, %s261, 1
          %s266 = smul.addr %s263, 2
          %s267 = sadd.s32 %s265, %s266
          %s268 = smul.addr %s267, 4
          %s269 = scalar_lea.vmem %s1, %s268
          %s270 = smul.u32 64, %s18
          %s271 = smul.u32 2, %s17
        $region47: #{frame_map_forward.6} parent=19 // pred_fallthru
          _
      $region20: #{frame_map_forward.6} parent=5 // pred_fallthru
        _
      %p272 = scmp.le.s32.totalorder 1, %s9
      %p273 = scmp.lt.s32.totalorder %s9, 5
      %p274 = pnand %p272, %p273
      %p275 = pneg %p274
      // Predicated region
      $region48: #{frame_map_forward.6} parent=5 // pred_check
        _
      $region49: #{frame_map_forward.6} parent=5 // pred_check_branch
        %277 = sbr.rel (%p274) target = $region51
      $region50: #{frame_map_forward.6} parent=5 // pred_region
        %s278 = ssub.s32 %s9, 1
        %s279 = sand.u32 %s43, 1
        %s280 = sand.u32 %s43, 1
        %s281 = smul.addr %s280, 256
        %s282 = scalar_lea.vmem [#allocation3], %s281
        // Predicated region
        $region52: #{frame_map_forward.6} parent=50 // pred_check
          %p283 = pneg %p56
        $region53: #{frame_map_forward.6} parent=50 // pred_check_branch
          %285 = sbr.rel (%p283) target = $region55
        $region54: #{frame_map_forward.6} parent=50 // pred_region
          _
        $region55: #{frame_map_forward.6} parent=50 // pred_fallthru
          _
        %s286 = sand.u32 %s43, 1
        %s287 = sand.u32 %s43, 1
        %s288 = smul.addr %s287, 256
        %s289 = scalar_lea.vmem [#allocation3], %s288
        %p290 = pneg %p56
        %p291 = pneg %p53
        %s292 = smul.u32 64, %s21
        %s293 = smul.u32 2, %s20
        %p294 = scmp.lt.s32.totalorder %s292, 255
        %s295 = scalar_select %p294, %s292, 255
        %p296 = scmp.lt.s32.totalorder %s293, 1
        %s297 = scalar_select %p296, %s293, 1
        %s298 = smul.addr %s295, 2
        %s299 = sadd.s32 %s297, %s298
        %s300 = smul.addr %s299, 4
        %s301 = scalar_lea.vmem %s1, %s300
        %p302 = pneg %p84
        %p303 = pneg %p81
        %s304 = smul.u32 2, %s20
        %p305 = scmp.lt.s32.totalorder %s304, 1
        %s306 = scalar_select %p305, %s304, 1
        %s307 = scalar_lea.vmem %s2, %s306
        %p308 = pneg %p110
        %p309 = pneg %p107
        %p310 = pneg %p138
        %p311 = pneg %p135
        %s312 = smul.u32 16, %s19
        %s313 = smul.u32 2, %s20
        %p314 = scmp.lt.s32.totalorder %s312, 15
        %s315 = scalar_select %p314, %s312, 15
        %p316 = scmp.lt.s32.totalorder %s313, 1
        %s317 = scalar_select %p316, %s313, 1
        %s318 = smul.addr %s315, 2
        %s319 = sadd.s32 %s317, %s318
        %s320 = smul.addr %s319, 4
        %s321 = scalar_lea.vmem %s3, %s320
        %s322 = smul.u32 16, %s19
        %s323 = smul.u32 4, %s21
        %s324 = smul.u32 64, %s21
        %s325 = smul.u32 2, %s20
        %p326 = scmp.lt.s32.totalorder %s324, 255
        %s327 = scalar_select %p326, %s324, 255
        %p328 = scmp.lt.s32.totalorder %s325, 1
        %s329 = scalar_select %p328, %s325, 1
        %s330 = smul.addr %s327, 2
        %s331 = sadd.s32 %s329, %s330
        %s332 = smul.addr %s331, 4
        %s333 = scalar_lea.vmem %s1, %s332
        %s334 = smul.u32 64, %s21
        %s335 = smul.u32 2, %s20
        %s336 = smul.u32 2, %s20
        %p337 = scmp.lt.s32.totalorder %s336, 1
        %s338 = scalar_select %p337, %s336, 1
        %s339 = scalar_lea.vmem %s2, %s338
        %s340 = smul.u32 2, %s20
        %s341 = smul.u32 16, %s19
        %s342 = smul.u32 2, %s20
        %p343 = scmp.lt.s32.totalorder %s341, 15
        %s344 = scalar_select %p343, %s341, 15
        %p345 = scmp.lt.s32.totalorder %s342, 1
        %s346 = scalar_select %p345, %s342, 1
        %s347 = smul.addr %s344, 2
        %s348 = sadd.s32 %s346, %s347
        %s349 = smul.addr %s348, 4
        %s350 = scalar_lea.vmem %s3, %s349
        %s351 = smul.u32 16, %s19
        %s352 = smul.u32 2, %s20
        %p353 = scmp.eq.s32.totalorder %s21, 0
        // Predicated region
        $region56: #{frame_map_forward.6} parent=50 // pred_check
          %p354 = pneg %p353
        $region57: #{frame_map_forward.6} parent=50 // pred_check_branch
          %356 = sbr.rel (%p354) target = $region59
        $region58: #{frame_map_forward.6} parent=50 // pred_region
          %357 = vst [vmem:[#allocation2] sm:$0xff] 0.0
          %358 = vst [vmem:[#allocation2 + $0x8] sm:$0xff] 0.0
          %359 = vst [vmem:[#allocation2 + $0x10] sm:$0xff] 0.0
          %360 = vst [vmem:[#allocation2 + $0x18] sm:$0xff] 0.0
          %361 = vst [vmem:[#allocation2 + $0x20] sm:$0xff] 0.0
          %362 = vst [vmem:[#allocation2 + $0x28] sm:$0xff] 0.0
          %363 = vst [vmem:[#allocation2 + $0x30] sm:$0xff] 0.0
          %364 = vst [vmem:[#allocation2 + $0x38] sm:$0xff] 0.0
          %365 = vst [vmem:[#allocation2 + $0x40] sm:$0xff] 0.0
          %366 = vst [vmem:[#allocation2 + $0x48] sm:$0xff] 0.0
          %367 = vst [vmem:[#allocation2 + $0x50] sm:$0xff] 0.0
          %368 = vst [vmem:[#allocation2 + $0x58] sm:$0xff] 0.0
          %369 = vst [vmem:[#allocation2 + $0x60] sm:$0xff] 0.0
          %370 = vst [vmem:[#allocation2 + $0x68] sm:$0xff] 0.0
          %371 = vst [vmem:[#allocation2 + $0x70] sm:$0xff] 0.0
          %372 = vst [vmem:[#allocation2 + $0x78] sm:$0xff] 0.0
          %373 = vst [vmem:[#allocation2 + $0x80] sm:$0xff] 0.0
          %374 = vst [vmem:[#allocation2 + $0x88] sm:$0xff] 0.0
          %375 = vst [vmem:[#allocation2 + $0x90] sm:$0xff] 0.0
          %376 = vst [vmem:[#allocation2 + $0x98] sm:$0xff] 0.0
          %377 = vst [vmem:[#allocation2 + $0xa0] sm:$0xff] 0.0
          %378 = vst [vmem:[#allocation2 + $0xa8] sm:$0xff] 0.0
          %379 = vst [vmem:[#allocation2 + $0xb0] sm:$0xff] 0.0
          %380 = vst [vmem:[#allocation2 + $0xb8] sm:$0xff] 0.0
          %381 = vst [vmem:[#allocation2 + $0xc0] sm:$0xff] 0.0
          %382 = vst [vmem:[#allocation2 + $0xc8] sm:$0xff] 0.0
          %383 = vst [vmem:[#allocation2 + $0xd0] sm:$0xff] 0.0
          %384 = vst [vmem:[#allocation2 + $0xd8] sm:$0xff] 0.0
          %385 = vst [vmem:[#allocation2 + $0xe0] sm:$0xff] 0.0
          %386 = vst [vmem:[#allocation2 + $0xe8] sm:$0xff] 0.0
          %387 = vst [vmem:[#allocation2 + $0xf0] sm:$0xff] 0.0
          %388 = vst [vmem:[#allocation2 + $0xf8] sm:$0xff] 0.0
        $region59: #{frame_map_forward.6} parent=50 // pred_fallthru
          _
        %v389 = vld [vmem:[#allocation2] sm:$0xff]
        %v390 = vld [vmem:[#allocation2 + $0x8] sm:$0xff]
        %v391 = vld [vmem:[#allocation2 + $0x10] sm:$0xff]
        %v392 = vld [vmem:[#allocation2 + $0x18] sm:$0xff]
        %v393 = vld [vmem:[#allocation2 + $0x20] sm:$0xff]
        %v394 = vld [vmem:[#allocation2 + $0x28] sm:$0xff]
        %v395 = vld [vmem:[#allocation2 + $0x30] sm:$0xff]
        %v396 = vld [vmem:[#allocation2 + $0x38] sm:$0xff]
        %v397 = vld [vmem:[#allocation2 + $0x40] sm:$0xff]
        %v398 = vld [vmem:[#allocation2 + $0x48] sm:$0xff]
        %v399 = vld [vmem:[#allocation2 + $0x50] sm:$0xff]
        %v400 = vld [vmem:[#allocation2 + $0x58] sm:$0xff]
        %v401 = vld [vmem:[#allocation2 + $0x60] sm:$0xff]
        %v402 = vld [vmem:[#allocation2 + $0x68] sm:$0xff]
        %v403 = vld [vmem:[#allocation2 + $0x70] sm:$0xff]
        %v404 = vld [vmem:[#allocation2 + $0x78] sm:$0xff]
        %v405 = vld [vmem:[#allocation2 + $0x80] sm:$0xff]
        %v406 = vld [vmem:[#allocation2 + $0x88] sm:$0xff]
        %v407 = vld [vmem:[#allocation2 + $0x90] sm:$0xff]
        %v408 = vld [vmem:[#allocation2 + $0x98] sm:$0xff]
        %v409 = vld [vmem:[#allocation2 + $0xa0] sm:$0xff]
        %v410 = vld [vmem:[#allocation2 + $0xa8] sm:$0xff]
        %v411 = vld [vmem:[#allocation2 + $0xb0] sm:$0xff]
        %v412 = vld [vmem:[#allocation2 + $0xb8] sm:$0xff]
        %v413 = vld [vmem:[#allocation2 + $0xc0] sm:$0xff]
        %v414 = vld [vmem:[#allocation2 + $0xc8] sm:$0xff]
        %v415 = vld [vmem:[#allocation2 + $0xd0] sm:$0xff]
        %v416 = vld [vmem:[#allocation2 + $0xd8] sm:$0xff]
        %v417 = vld [vmem:[#allocation2 + $0xe0] sm:$0xff]
        %v418 = vld [vmem:[#allocation2 + $0xe8] sm:$0xff]
        %v419 = vld [vmem:[#allocation2 + $0xf0] sm:$0xff]
        %v420 = vld [vmem:[#allocation2 + $0xf8] sm:$0xff]
        %v421 = vld [vmem:[%s282] sm:$0xff]
        %v422 = vld [vmem:[%s282 + $0x8] sm:$0xff]
        %v423 = vld [vmem:[%s282 + $0x10] sm:$0xff]
        %v424 = vld [vmem:[%s282 + $0x18] sm:$0xff]
        %v425 = vld [vmem:[%s282 + $0x20] sm:$0xff]
        %v426 = vld [vmem:[%s282 + $0x28] sm:$0xff]
        %v427 = vld [vmem:[%s282 + $0x30] sm:$0xff]
        %v428 = vld [vmem:[%s282 + $0x38] sm:$0xff]
        %v429 = vld [vmem:[%s282 + $0x40] sm:$0xff]
        %v430 = vld [vmem:[%s282 + $0x48] sm:$0xff]
        %v431 = vld [vmem:[%s282 + $0x50] sm:$0xff]
        %v432 = vld [vmem:[%s282 + $0x58] sm:$0xff]
        %v433 = vld [vmem:[%s282 + $0x60] sm:$0xff]
        %v434 = vld [vmem:[%s282 + $0x68] sm:$0xff]
        %v435 = vld [vmem:[%s282 + $0x70] sm:$0xff]
        %v436 = vld [vmem:[%s282 + $0x78] sm:$0xff]
        %v437 = vld [vmem:[%s282 + $0x80] sm:$0xff]
        %v438 = vld [vmem:[%s282 + $0x88] sm:$0xff]
        %v439 = vld [vmem:[%s282 + $0x90] sm:$0xff]
        %v440 = vld [vmem:[%s282 + $0x98] sm:$0xff]
        %v441 = vld [vmem:[%s282 + $0xa0] sm:$0xff]
        %v442 = vld [vmem:[%s282 + $0xa8] sm:$0xff]
        %v443 = vld [vmem:[%s282 + $0xb0] sm:$0xff]
        %v444 = vld [vmem:[%s282 + $0xb8] sm:$0xff]
        %v445 = vld [vmem:[%s282 + $0xc0] sm:$0xff]
        %v446 = vld [vmem:[%s282 + $0xc8] sm:$0xff]
        %v447 = vld [vmem:[%s282 + $0xd0] sm:$0xff]
        %v448 = vld [vmem:[%s282 + $0xd8] sm:$0xff]
        %v449 = vld [vmem:[%s282 + $0xe0] sm:$0xff]
        %v450 = vld [vmem:[%s282 + $0xe8] sm:$0xff]
        %v451 = vld [vmem:[%s282 + $0xf0] sm:$0xff]
        %v452 = vld [vmem:[%s282 + $0xf8] sm:$0xff]
        %v453 = vld [vmem:[%s333] sm:$0xff]
        %v454 = vld [vmem:[%s333 + $0x8] sm:$0xff]
        %v455 = vld [vmem:[%s333 + $0x10] sm:$0xff]
        %v456 = vld [vmem:[%s333 + $0x18] sm:$0xff]
        %v457 = vld [vmem:[%s333 + $0x20] sm:$0xff]
        %v458 = vld [vmem:[%s333 + $0x28] sm:$0xff]
        %v459 = vld [vmem:[%s333 + $0x30] sm:$0xff]
        %v460 = vld [vmem:[%s333 + $0x38] sm:$0xff]
        %v461 = vld [vmem:[%s333 + $0x40] sm:$0xff]
        %v462 = vld [vmem:[%s333 + $0x48] sm:$0xff]
        %v463 = vld [vmem:[%s333 + $0x50] sm:$0xff]
        %v464 = vld [vmem:[%s333 + $0x58] sm:$0xff]
        %v465 = vld [vmem:[%s333 + $0x60] sm:$0xff]
        %v466 = vld [vmem:[%s333 + $0x68] sm:$0xff]
        %v467 = vld [vmem:[%s333 + $0x70] sm:$0xff]
        %v468 = vld [vmem:[%s333 + $0x78] sm:$0xff]
        %v469 = vld [vmem:[%s333 + $0x80] sm:$0xff]
        %v470 = vld [vmem:[%s333 + $0x88] sm:$0xff]
        %v471 = vld [vmem:[%s333 + $0x90] sm:$0xff]
        %v472 = vld [vmem:[%s333 + $0x98] sm:$0xff]
        %v473 = vld [vmem:[%s333 + $0xa0] sm:$0xff]
        %v474 = vld [vmem:[%s333 + $0xa8] sm:$0xff]
        %v475 = vld [vmem:[%s333 + $0xb0] sm:$0xff]
        %v476 = vld [vmem:[%s333 + $0xb8] sm:$0xff]
        %v477 = vld [vmem:[%s333 + $0xc0] sm:$0xff]
        %v478 = vld [vmem:[%s333 + $0xc8] sm:$0xff]
        %v479 = vld [vmem:[%s333 + $0xd0] sm:$0xff]
        %v480 = vld [vmem:[%s333 + $0xd8] sm:$0xff]
        %v481 = vld [vmem:[%s333 + $0xe0] sm:$0xff]
        %v482 = vld [vmem:[%s333 + $0xe8] sm:$0xff]
        %v483 = vld [vmem:[%s333 + $0xf0] sm:$0xff]
        %v484 = vld [vmem:[%s333 + $0xf8] sm:$0xff]
        %v485 = vld [vmem:[%s333 + $0x100] sm:$0xff]
        %v486 = vld [vmem:[%s333 + $0x108] sm:$0xff]
        %v487 = vld [vmem:[%s333 + $0x110] sm:$0xff]
        %v488 = vld [vmem:[%s333 + $0x118] sm:$0xff]
        %v489 = vld [vmem:[%s333 + $0x120] sm:$0xff]
        %v490 = vld [vmem:[%s333 + $0x128] sm:$0xff]
        %v491 = vld [vmem:[%s333 + $0x130] sm:$0xff]
        %v492 = vld [vmem:[%s333 + $0x138] sm:$0xff]
        %v493 = vld [vmem:[%s333 + $0x140] sm:$0xff]
        %v494 = vld [vmem:[%s333 + $0x148] sm:$0xff]
        %v495 = vld [vmem:[%s333 + $0x150] sm:$0xff]
        %v496 = vld [vmem:[%s333 + $0x158] sm:$0xff]
        %v497 = vld [vmem:[%s333 + $0x160] sm:$0xff]
        %v498 = vld [vmem:[%s333 + $0x168] sm:$0xff]
        %v499 = vld [vmem:[%s333 + $0x170] sm:$0xff]
        %v500 = vld [vmem:[%s333 + $0x178] sm:$0xff]
        %v501 = vld [vmem:[%s333 + $0x180] sm:$0xff]
        %v502 = vld [vmem:[%s333 + $0x188] sm:$0xff]
        %v503 = vld [vmem:[%s333 + $0x190] sm:$0xff]
        %v504 = vld [vmem:[%s333 + $0x198] sm:$0xff]
        %v505 = vld [vmem:[%s333 + $0x1a0] sm:$0xff]
        %v506 = vld [vmem:[%s333 + $0x1a8] sm:$0xff]
        %v507 = vld [vmem:[%s333 + $0x1b0] sm:$0xff]
        %v508 = vld [vmem:[%s333 + $0x1b8] sm:$0xff]
        %v509 = vld [vmem:[%s333 + $0x1c0] sm:$0xff]
        %v510 = vld [vmem:[%s333 + $0x1c8] sm:$0xff]
        %v511 = vld [vmem:[%s333 + $0x1d0] sm:$0xff]
        %v512 = vld [vmem:[%s333 + $0x1d8] sm:$0xff]
        %v513 = vld [vmem:[%s333 + $0x1e0] sm:$0xff]
        %v514 = vld [vmem:[%s333 + $0x1e8] sm:$0xff]
        %v515 = vld [vmem:[%s333 + $0x1f0] sm:$0xff]
        %v516 = vld [vmem:[%s333 + $0x1f8] sm:$0xff]
        %v549 = vunpack.c.l.b16 %v421
        %v550 = vunpack.c.h.b16 %v421
        %v551 = vunpack.c.l.b16 %v422
        %v552 = vunpack.c.h.b16 %v422
        %v553 = vunpack.c.l.b16 %v423
        %v554 = vunpack.c.h.b16 %v423
        %v555 = vunpack.c.l.b16 %v424
        %v556 = vunpack.c.h.b16 %v424
        %v557 = vunpack.c.l.b16 %v425
        %v558 = vunpack.c.h.b16 %v425
        %v559 = vunpack.c.l.b16 %v426
        %v560 = vunpack.c.h.b16 %v426
        %v561 = vunpack.c.l.b16 %v427
        %v562 = vunpack.c.h.b16 %v427
        %v563 = vunpack.c.l.b16 %v428
        %v564 = vunpack.c.h.b16 %v428
        %v565 = vunpack.c.l.b16 %v429
        %v566 = vunpack.c.h.b16 %v429
        %v567 = vunpack.c.l.b16 %v430
        %v568 = vunpack.c.h.b16 %v430
        %v569 = vunpack.c.l.b16 %v431
        %v570 = vunpack.c.h.b16 %v431
        %v571 = vunpack.c.l.b16 %v432
        %v572 = vunpack.c.h.b16 %v432
        %v573 = vunpack.c.l.b16 %v433
        %v574 = vunpack.c.h.b16 %v433
        %v575 = vunpack.c.l.b16 %v434
        %v576 = vunpack.c.h.b16 %v434
        %v577 = vunpack.c.l.b16 %v435
        %v578 = vunpack.c.h.b16 %v435
        %v579 = vunpack.c.l.b16 %v436
        %v580 = vunpack.c.h.b16 %v436
        %v581 = vunpack.c.l.b16 %v437
        %v582 = vunpack.c.h.b16 %v437
        %v583 = vunpack.c.l.b16 %v438
        %v584 = vunpack.c.h.b16 %v438
        %v585 = vunpack.c.l.b16 %v439
        %v586 = vunpack.c.h.b16 %v439
        %v587 = vunpack.c.l.b16 %v440
        %v588 = vunpack.c.h.b16 %v440
        %v589 = vunpack.c.l.b16 %v441
        %v590 = vunpack.c.h.b16 %v441
        %v591 = vunpack.c.l.b16 %v442
        %v592 = vunpack.c.h.b16 %v442
        %v593 = vunpack.c.l.b16 %v443
        %v594 = vunpack.c.h.b16 %v443
        %v595 = vunpack.c.l.b16 %v444
        %v596 = vunpack.c.h.b16 %v444
        %v597 = vunpack.c.l.b16 %v445
        %v598 = vunpack.c.h.b16 %v445
        %v599 = vunpack.c.l.b16 %v446
        %v600 = vunpack.c.h.b16 %v446
        %v601 = vunpack.c.l.b16 %v447
        %v602 = vunpack.c.h.b16 %v447
        %v603 = vunpack.c.l.b16 %v448
        %v604 = vunpack.c.h.b16 %v448
        %v605 = vunpack.c.l.b16 %v449
        %v606 = vunpack.c.h.b16 %v449
        %v607 = vunpack.c.l.b16 %v450
        %v608 = vunpack.c.h.b16 %v450
        %v609 = vunpack.c.l.b16 %v451
        %v610 = vunpack.c.h.b16 %v451
        %v611 = vunpack.c.l.b16 %v452
        %v612 = vunpack.c.h.b16 %v452
        %v613 = vpack.c.b16 %v553, %v549
        %v614 = vpack.c.b16 %v554, %v550
        %v615 = vpack.c.b16 %v555, %v551
        %v616 = vpack.c.b16 %v556, %v552
        %v617 = vpack.c.b16 %v561, %v557
        %v618 = vpack.c.b16 %v562, %v558
        %v619 = vpack.c.b16 %v563, %v559
        %v620 = vpack.c.b16 %v564, %v560
        %v621 = vpack.c.b16 %v569, %v565
        %v622 = vpack.c.b16 %v570, %v566
        %v623 = vpack.c.b16 %v571, %v567
        %v624 = vpack.c.b16 %v572, %v568
        %v625 = vpack.c.b16 %v577, %v573
        %v626 = vpack.c.b16 %v578, %v574
        %v627 = vpack.c.b16 %v579, %v575
        %v628 = vpack.c.b16 %v580, %v576
        %v629 = vpack.c.b16 %v585, %v581
        %v630 = vpack.c.b16 %v586, %v582
        %v631 = vpack.c.b16 %v587, %v583
        %v632 = vpack.c.b16 %v588, %v584
        %v633 = vpack.c.b16 %v593, %v589
        %v634 = vpack.c.b16 %v594, %v590
        %v635 = vpack.c.b16 %v595, %v591
        %v636 = vpack.c.b16 %v596, %v592
        %v637 = vpack.c.b16 %v601, %v597
        %v638 = vpack.c.b16 %v602, %v598
        %v639 = vpack.c.b16 %v603, %v599
        %v640 = vpack.c.b16 %v604, %v600
        %v641 = vpack.c.b16 %v609, %v605
        %v642 = vpack.c.b16 %v610, %v606
        %v643 = vpack.c.b16 %v611, %v607
        %v644 = vpack.c.b16 %v612, %v608
        %v741 = vunpack.c.l.b16 %v453
        %v742 = vunpack.c.h.b16 %v453
        %v743 = vunpack.c.l.b16 %v454
        %v744 = vunpack.c.h.b16 %v454
        %v745 = vunpack.c.l.b16 %v455
        %v746 = vunpack.c.h.b16 %v455
        %v747 = vunpack.c.l.b16 %v456
        %v748 = vunpack.c.h.b16 %v456
        %v749 = vunpack.c.l.b16 %v457
        %v750 = vunpack.c.h.b16 %v457
        %v751 = vunpack.c.l.b16 %v458
        %v752 = vunpack.c.h.b16 %v458
        %v753 = vunpack.c.l.b16 %v459
        %v754 = vunpack.c.h.b16 %v459
        %v755 = vunpack.c.l.b16 %v460
        %v756 = vunpack.c.h.b16 %v460
        %v757 = vunpack.c.l.b16 %v461
        %v758 = vunpack.c.h.b16 %v461
        %v759 = vunpack.c.l.b16 %v462
        %v760 = vunpack.c.h.b16 %v462
        %v761 = vunpack.c.l.b16 %v463
        %v762 = vunpack.c.h.b16 %v463
        %v763 = vunpack.c.l.b16 %v464
        %v764 = vunpack.c.h.b16 %v464
        %v765 = vunpack.c.l.b16 %v465
        %v766 = vunpack.c.h.b16 %v465
        %v767 = vunpack.c.l.b16 %v466
        %v768 = vunpack.c.h.b16 %v466
        %v769 = vunpack.c.l.b16 %v467
        %v770 = vunpack.c.h.b16 %v467
        %v771 = vunpack.c.l.b16 %v468
        %v772 = vunpack.c.h.b16 %v468
        %v773 = vunpack.c.l.b16 %v469
        %v774 = vunpack.c.h.b16 %v469
        %v775 = vunpack.c.l.b16 %v470
        %v776 = vunpack.c.h.b16 %v470
        %v777 = vunpack.c.l.b16 %v471
        %v778 = vunpack.c.h.b16 %v471
        %v779 = vunpack.c.l.b16 %v472
        %v780 = vunpack.c.h.b16 %v472
        %v781 = vunpack.c.l.b16 %v473
        %v782 = vunpack.c.h.b16 %v473
        %v783 = vunpack.c.l.b16 %v474
        %v784 = vunpack.c.h.b16 %v474
        %v785 = vunpack.c.l.b16 %v475
        %v786 = vunpack.c.h.b16 %v475
        %v787 = vunpack.c.l.b16 %v476
        %v788 = vunpack.c.h.b16 %v476
        %v789 = vunpack.c.l.b16 %v477
        %v790 = vunpack.c.h.b16 %v477
        %v791 = vunpack.c.l.b16 %v478
        %v792 = vunpack.c.h.b16 %v478
        %v793 = vunpack.c.l.b16 %v479
        %v794 = vunpack.c.h.b16 %v479
        %v795 = vunpack.c.l.b16 %v480
        %v796 = vunpack.c.h.b16 %v480
        %v797 = vunpack.c.l.b16 %v481
        %v798 = vunpack.c.h.b16 %v481
        %v799 = vunpack.c.l.b16 %v482
        %v800 = vunpack.c.h.b16 %v482
        %v801 = vunpack.c.l.b16 %v483
        %v802 = vunpack.c.h.b16 %v483
        %v803 = vunpack.c.l.b16 %v484
        %v804 = vunpack.c.h.b16 %v484
        %v805 = vunpack.c.l.b16 %v485
        %v806 = vunpack.c.h.b16 %v485
        %v807 = vunpack.c.l.b16 %v486
        %v808 = vunpack.c.h.b16 %v486
        %v809 = vunpack.c.l.b16 %v487
        %v810 = vunpack.c.h.b16 %v487
        %v811 = vunpack.c.l.b16 %v488
        %v812 = vunpack.c.h.b16 %v488
        %v813 = vunpack.c.l.b16 %v489
        %v814 = vunpack.c.h.b16 %v489
        %v815 = vunpack.c.l.b16 %v490
        %v816 = vunpack.c.h.b16 %v490
        %v817 = vunpack.c.l.b16 %v491
        %v818 = vunpack.c.h.b16 %v491
        %v819 = vunpack.c.l.b16 %v492
        %v820 = vunpack.c.h.b16 %v492
        %v821 = vunpack.c.l.b16 %v493
        %v822 = vunpack.c.h.b16 %v493
        %v823 = vunpack.c.l.b16 %v494
        %v824 = vunpack.c.h.b16 %v494
        %v825 = vunpack.c.l.b16 %v495
        %v826 = vunpack.c.h.b16 %v495
        %v827 = vunpack.c.l.b16 %v496
        %v828 = vunpack.c.h.b16 %v496
        %v829 = vunpack.c.l.b16 %v497
        %v830 = vunpack.c.h.b16 %v497
        %v831 = vunpack.c.l.b16 %v498
        %v832 = vunpack.c.h.b16 %v498
        %v833 = vunpack.c.l.b16 %v499
        %v834 = vunpack.c.h.b16 %v499
        %v835 = vunpack.c.l.b16 %v500
        %v836 = vunpack.c.h.b16 %v500
        %v837 = vunpack.c.l.b16 %v501
        %v838 = vunpack.c.h.b16 %v501
        %v839 = vunpack.c.l.b16 %v502
        %v840 = vunpack.c.h.b16 %v502
        %v841 = vunpack.c.l.b16 %v503
        %v842 = vunpack.c.h.b16 %v503
        %v843 = vunpack.c.l.b16 %v504
        %v844 = vunpack.c.h.b16 %v504
        %v845 = vunpack.c.l.b16 %v505
        %v846 = vunpack.c.h.b16 %v505
        %v847 = vunpack.c.l.b16 %v506
        %v848 = vunpack.c.h.b16 %v506
        %v849 = vunpack.c.l.b16 %v507
        %v850 = vunpack.c.h.b16 %v507
        %v851 = vunpack.c.l.b16 %v508
        %v852 = vunpack.c.h.b16 %v508
        %v853 = vunpack.c.l.b16 %v509
        %v854 = vunpack.c.h.b16 %v509
        %v855 = vunpack.c.l.b16 %v510
        %v856 = vunpack.c.h.b16 %v510
        %v857 = vunpack.c.l.b16 %v511
        %v858 = vunpack.c.h.b16 %v511
        %v859 = vunpack.c.l.b16 %v512
        %v860 = vunpack.c.h.b16 %v512
        %v861 = vunpack.c.l.b16 %v513
        %v862 = vunpack.c.h.b16 %v513
        %v863 = vunpack.c.l.b16 %v514
        %v864 = vunpack.c.h.b16 %v514
        %v865 = vunpack.c.l.b16 %v515
        %v866 = vunpack.c.h.b16 %v515
        %v867 = vunpack.c.l.b16 %v516
        %v868 = vunpack.c.h.b16 %v516
        %v869 = vpack.c.b16 %v743, %v741
        %v870 = vpack.c.b16 %v744, %v742
        %v871 = vpack.c.b16 %v747, %v745
        %v872 = vpack.c.b16 %v748, %v746
        %v873 = vpack.c.b16 %v751, %v749
        %v874 = vpack.c.b16 %v752, %v750
        %v875 = vpack.c.b16 %v755, %v753
        %v876 = vpack.c.b16 %v756, %v754
        %v877 = vpack.c.b16 %v759, %v757
        %v878 = vpack.c.b16 %v760, %v758
        %v879 = vpack.c.b16 %v763, %v761
        %v880 = vpack.c.b16 %v764, %v762
        %v881 = vpack.c.b16 %v767, %v765
        %v882 = vpack.c.b16 %v768, %v766
        %v883 = vpack.c.b16 %v771, %v769
        %v884 = vpack.c.b16 %v772, %v770
        %v885 = vpack.c.b16 %v775, %v773
        %v886 = vpack.c.b16 %v776, %v774
        %v887 = vpack.c.b16 %v779, %v777
        %v888 = vpack.c.b16 %v780, %v778
        %v889 = vpack.c.b16 %v783, %v781
        %v890 = vpack.c.b16 %v784, %v782
        %v891 = vpack.c.b16 %v787, %v785
        %v892 = vpack.c.b16 %v788, %v786
        %v893 = vpack.c.b16 %v791, %v789
        %v894 = vpack.c.b16 %v792, %v790
        %v895 = vpack.c.b16 %v795, %v793
        %v896 = vpack.c.b16 %v796, %v794
        %v897 = vpack.c.b16 %v799, %v797
        %v898 = vpack.c.b16 %v800, %v798
        %v899 = vpack.c.b16 %v803, %v801
        %v900 = vpack.c.b16 %v804, %v802
        %v901 = vpack.c.b16 %v807, %v805
        %v902 = vpack.c.b16 %v808, %v806
        %v903 = vpack.c.b16 %v811, %v809
        %v904 = vpack.c.b16 %v812, %v810
        %v905 = vpack.c.b16 %v815, %v813
        %v906 = vpack.c.b16 %v816, %v814
        %v907 = vpack.c.b16 %v819, %v817
        %v908 = vpack.c.b16 %v820, %v818
        %v909 = vpack.c.b16 %v823, %v821
        %v910 = vpack.c.b16 %v824, %v822
        %v911 = vpack.c.b16 %v827, %v825
        %v912 = vpack.c.b16 %v828, %v826
        %v913 = vpack.c.b16 %v831, %v829
        %v914 = vpack.c.b16 %v832, %v830
        %v915 = vpack.c.b16 %v835, %v833
        %v916 = vpack.c.b16 %v836, %v834
        %v917 = vpack.c.b16 %v839, %v837
        %v918 = vpack.c.b16 %v840, %v838
        %v919 = vpack.c.b16 %v843, %v841
        %v920 = vpack.c.b16 %v844, %v842
        %v921 = vpack.c.b16 %v847, %v845
        %v922 = vpack.c.b16 %v848, %v846
        %v923 = vpack.c.b16 %v851, %v849
        %v924 = vpack.c.b16 %v852, %v850
        %v925 = vpack.c.b16 %v855, %v853
        %v926 = vpack.c.b16 %v856, %v854
        %v927 = vpack.c.b16 %v859, %v857
        %v928 = vpack.c.b16 %v860, %v858
        %v929 = vpack.c.b16 %v863, %v861
        %v930 = vpack.c.b16 %v864, %v862
        %v931 = vpack.c.b16 %v867, %v865
        %v932 = vpack.c.b16 %v868, %v866
        %997 = vmatprep.subr.bf16.mxu0 %v870
        %998 = vmatpush1.bf16.msra.mxu0 %v869
        %999 = vmatprep.subr.bf16.mxu0 %v872
        %1000 = vmatpush1.bf16.msra.mxu0 %v871
        %1001 = vmatprep.subr.bf16.mxu0 %v874
        %1002 = vmatpush1.bf16.msra.mxu0 %v873
        %1003 = vmatprep.subr.bf16.mxu0 %v876
        %1004 = vmatpush1.bf16.msra.mxu0 %v875
        %1005 = vmatprep.subr.bf16.mxu0 %v878
        %1006 = vmatpush1.bf16.msra.mxu0 %v877
        %1007 = vmatprep.subr.bf16.mxu0 %v880
        %1008 = vmatpush1.bf16.msra.mxu0 %v879
        %1009 = vmatprep.subr.bf16.mxu0 %v882
        %1010 = vmatpush1.bf16.msra.mxu0 %v881
        %1011 = vmatprep.subr.bf16.mxu0 %v884
        %1012 = vmatpush1.bf16.msra.mxu0 %v883
        %1013 = vmatprep.subr.bf16.mxu0 %v886
        %1014 = vmatpush1.bf16.msra.mxu0 %v885
        %1015 = vmatprep.subr.bf16.mxu0 %v888
        %1016 = vmatpush1.bf16.msra.mxu0 %v887
        %1017 = vmatprep.subr.bf16.mxu0 %v890
        %1018 = vmatpush1.bf16.msra.mxu0 %v889
        %1019 = vmatprep.subr.bf16.mxu0 %v892
        %1020 = vmatpush1.bf16.msra.mxu0 %v891
        %1021 = vmatprep.subr.bf16.mxu0 %v894
        %1022 = vmatpush1.bf16.msra.mxu0 %v893
        %1023 = vmatprep.subr.bf16.mxu0 %v896
        %1024 = vmatpush1.bf16.msra.mxu0 %v895
        %1025 = vmatprep.subr.bf16.mxu0 %v898
        %1026 = vmatpush1.bf16.msra.mxu0 %v897
        %1027 = vmatprep.subr.bf16.mxu0 %v900
        %1028 = vmatpush1.bf16.msra.mxu0 %v899
        %1029 = vmatprep.mubr.bf16.mxu0 %v614
        %1030 = vmatmul.mubr.bf16.gmra.mrb[0].mxu0 %v613
        %v1031 = vpop.f32.mrb[0].mxu0
        %v1032 = vadd.f32 0.0, %v1031
        %v1033 = vpop.f32.mrb[0].mxu0
        %v1034 = vadd.f32 0.0, %v1033
        %v1035 = vpop.f32.mrb[0].mxu0
        %v1036 = vadd.f32 0.0, %v1035
        %v1037 = vpop.f32.mrb[0].mxu0
        %v1038 = vadd.f32 0.0, %v1037
        %1039 = vmatprep.mubr.bf16.mxu0 %v618
        %1040 = vmatmul.mubr.bf16.gmra.mrb[0].mxu0 %v617
        %v1041 = vpop.f32.mrb[0].mxu0
        %v1042 = vadd.f32 0.0, %v1041
        %v1043 = vpop.f32.mrb[0].mxu0
        %v1044 = vadd.f32 0.0, %v1043
        %v1045 = vpop.f32.mrb[0].mxu0
        %v1046 = vadd.f32 0.0, %v1045
        %v1047 = vpop.f32.mrb[0].mxu0
        %v1048 = vadd.f32 0.0, %v1047
        %1049 = vmatprep.mubr.bf16.mxu0 %v622
        %1050 = vmatmul.mubr.bf16.gmra.mrb[0].mxu0 %v621
        %v1051 = vpop.f32.mrb[0].mxu0
        %v1052 = vadd.f32 0.0, %v1051
        %v1053 = vpop.f32.mrb[0].mxu0
        %v1054 = vadd.f32 0.0, %v1053
        %v1055 = vpop.f32.mrb[0].mxu0
        %v1056 = vadd.f32 0.0, %v1055
        %v1057 = vpop.f32.mrb[0].mxu0
        %v1058 = vadd.f32 0.0, %v1057
        %1059 = vmatprep.mubr.bf16.mxu0 %v626
        %1060 = vmatmul.mubr.bf16.gmra.mrb[0].mxu0 %v625
        %v1061 = vpop.f32.mrb[0].mxu0
        %v1062 = vadd.f32 0.0, %v1061
        %v1063 = vpop.f32.mrb[0].mxu0
        %v1064 = vadd.f32 0.0, %v1063
        %v1065 = vpop.f32.mrb[0].mxu0
        %v1066 = vadd.f32 0.0, %v1065
        %v1067 = vpop.f32.mrb[0].mxu0
        %v1068 = vadd.f32 0.0, %v1067
        %1069 = vmatprep.mubr.bf16.mxu0 %v630
        %1070 = vmatmul.mubr.bf16.gmra.mrb[0].mxu0 %v629
        %v1071 = vpop.f32.mrb[0].mxu0
        %v1072 = vadd.f32 0.0, %v1071
        %v1073 = vpop.f32.mrb[0].mxu0
        %v1074 = vadd.f32 0.0, %v1073
        %v1075 = vpop.f32.mrb[0].mxu0
        %v1076 = vadd.f32 0.0, %v1075
        %v1077 = vpop.f32.mrb[0].mxu0
        %v1078 = vadd.f32 0.0, %v1077
        %1079 = vmatprep.mubr.bf16.mxu0 %v634
        %1080 = vmatmul.mubr.bf16.gmra.mrb[0].mxu0 %v633
        %v1081 = vpop.f32.mrb[0].mxu0
        %v1082 = vadd.f32 0.0, %v1081
        %v1083 = vpop.f32.mrb[0].mxu0
        %v1084 = vadd.f32 0.0, %v1083
        %v1085 = vpop.f32.mrb[0].mxu0
        %v1086 = vadd.f32 0.0, %v1085
        %v1087 = vpop.f32.mrb[0].mxu0
        %v1088 = vadd.f32 0.0, %v1087
        %1089 = vmatprep.mubr.bf16.mxu0 %v638
        %1090 = vmatmul.mubr.bf16.gmra.mrb[0].mxu0 %v637
        %v1091 = vpop.f32.mrb[0].mxu0
        %v1092 = vadd.f32 0.0, %v1091
        %v1093 = vpop.f32.mrb[0].mxu0
        %v1094 = vadd.f32 0.0, %v1093
        %v1095 = vpop.f32.mrb[0].mxu0
        %v1096 = vadd.f32 0.0, %v1095
        %v1097 = vpop.f32.mrb[0].mxu0
        %v1098 = vadd.f32 0.0, %v1097
        %1099 = vmatprep.mubr.bf16.mxu0 %v642
        %1100 = vmatmul.mubr.bf16.gmra.mrb[0].mxu0 %v641
        %v1101 = vpop.f32.mrb[0].mxu0
        %v1102 = vadd.f32 0.0, %v1101
        %v1103 = vpop.f32.mrb[0].mxu0
        %v1104 = vadd.f32 0.0, %v1103
        %v1105 = vpop.f32.mrb[0].mxu0
        %v1106 = vadd.f32 0.0, %v1105
        %v1107 = vpop.f32.mrb[0].mxu0
        %v1108 = vadd.f32 0.0, %v1107
        %1109 = vdwg.mxu0
        %1110 = vmatprep.subr.bf16.mxu0 %v902
        %1111 = vmatpush1.bf16.msra.mxu0 %v901
        %1112 = vmatprep.subr.bf16.mxu0 %v904
        %1113 = vmatpush1.bf16.msra.mxu0 %v903
        %1114 = vmatprep.subr.bf16.mxu0 %v906
        %1115 = vmatpush1.bf16.msra.mxu0 %v905
        %1116 = vmatprep.subr.bf16.mxu0 %v908
        %1117 = vmatpush1.bf16.msra.mxu0 %v907
        %1118 = vmatprep.subr.bf16.mxu0 %v910
        %1119 = vmatpush1.bf16.msra.mxu0 %v909
        %1120 = vmatprep.subr.bf16.mxu0 %v912
        %1121 = vmatpush1.bf16.msra.mxu0 %v911
        %1122 = vmatprep.subr.bf16.mxu0 %v914
        %1123 = vmatpush1.bf16.msra.mxu0 %v913
        %1124 = vmatprep.subr.bf16.mxu0 %v916
        %1125 = vmatpush1.bf16.msra.mxu0 %v915
        %1126 = vmatprep.subr.bf16.mxu0 %v918
        %1127 = vmatpush1.bf16.msra.mxu0 %v917
        %1128 = vmatprep.subr.bf16.mxu0 %v920
        %1129 = vmatpush1.bf16.msra.mxu0 %v919
        %1130 = vmatprep.subr.bf16.mxu0 %v922
        %1131 = vmatpush1.bf16.msra.mxu0 %v921
        %1132 = vmatprep.subr.bf16.mxu0 %v924
        %1133 = vmatpush1.bf16.msra.mxu0 %v923
        %1134 = vmatprep.subr.bf16.mxu0 %v926
        %1135 = vmatpush1.bf16.msra.mxu0 %v925
        %1136 = vmatprep.subr.bf16.mxu0 %v928
        %1137 = vmatpush1.bf16.msra.mxu0 %v927
        %1138 = vmatprep.subr.bf16.mxu0 %v930
        %1139 = vmatpush1.bf16.msra.mxu0 %v929
        %1140 = vmatprep.subr.bf16.mxu0 %v932
        %1141 = vmatpush1.bf16.msra.mxu0 %v931
        %1142 = vmatprep.mubr.bf16.mxu0 %v616
        %1143 = vmatmul.mubr.bf16.gmra.mrb[0].mxu0 %v615
        %v1144 = vpop.f32.mrb[0].mxu0
        %v1145 = vadd.f32 %v1032, %v1144
        %v1146 = vpop.f32.mrb[0].mxu0
        %v1147 = vadd.f32 %v1034, %v1146
        %v1148 = vpop.f32.mrb[0].mxu0
        %v1149 = vadd.f32 %v1036, %v1148
        %v1150 = vpop.f32.mrb[0].mxu0
        %v1151 = vadd.f32 %v1038, %v1150
        %1152 = vmatprep.mubr.bf16.mxu0 %v620
        %1153 = vmatmul.mubr.bf16.gmra.mrb[0].mxu0 %v619
        %v1154 = vpop.f32.mrb[0].mxu0
        %v1155 = vadd.f32 %v1042, %v1154
        %v1156 = vpop.f32.mrb[0].mxu0
        %v1157 = vadd.f32 %v1044, %v1156
        %v1158 = vpop.f32.mrb[0].mxu0
        %v1159 = vadd.f32 %v1046, %v1158
        %v1160 = vpop.f32.mrb[0].mxu0
        %v1161 = vadd.f32 %v1048, %v1160
        %1162 = vmatprep.mubr.bf16.mxu0 %v624
        %1163 = vmatmul.mubr.bf16.gmra.mrb[0].mxu0 %v623
        %v1164 = vpop.f32.mrb[0].mxu0
        %v1165 = vadd.f32 %v1052, %v1164
        %v1166 = vpop.f32.mrb[0].mxu0
        %v1167 = vadd.f32 %v1054, %v1166
        %v1168 = vpop.f32.mrb[0].mxu0
        %v1169 = vadd.f32 %v1056, %v1168
        %v1170 = vpop.f32.mrb[0].mxu0
        %v1171 = vadd.f32 %v1058, %v1170
        %1172 = vmatprep.mubr.bf16.mxu0 %v628
        %1173 = vmatmul.mubr.bf16.gmra.mrb[0].mxu0 %v627
        %v1174 = vpop.f32.mrb[0].mxu0
        %v1175 = vadd.f32 %v1062, %v1174
        %v1176 = vpop.f32.mrb[0].mxu0
        %v1177 = vadd.f32 %v1064, %v1176
        %v1178 = vpop.f32.mrb[0].mxu0
        %v1179 = vadd.f32 %v1066, %v1178
        %v1180 = vpop.f32.mrb[0].mxu0
        %v1181 = vadd.f32 %v1068, %v1180
        %1182 = vmatprep.mubr.bf16.mxu0 %v632
        %1183 = vmatmul.mubr.bf16.gmra.mrb[0].mxu0 %v631
        %v1184 = vpop.f32.mrb[0].mxu0
        %v1185 = vadd.f32 %v1072, %v1184
        %v1186 = vpop.f32.mrb[0].mxu0
        %v1187 = vadd.f32 %v1074, %v1186
        %v1188 = vpop.f32.mrb[0].mxu0
        %v1189 = vadd.f32 %v1076, %v1188
        %v1190 = vpop.f32.mrb[0].mxu0
        %v1191 = vadd.f32 %v1078, %v1190
        %1192 = vmatprep.mubr.bf16.mxu0 %v636
        %1193 = vmatmul.mubr.bf16.gmra.mrb[0].mxu0 %v635
        %v1194 = vpop.f32.mrb[0].mxu0
        %v1195 = vadd.f32 %v1082, %v1194
        %v1196 = vpop.f32.mrb[0].mxu0
        %v1197 = vadd.f32 %v1084, %v1196
        %v1198 = vpop.f32.mrb[0].mxu0
        %v1199 = vadd.f32 %v1086, %v1198
        %v1200 = vpop.f32.mrb[0].mxu0
        %v1201 = vadd.f32 %v1088, %v1200
        %1202 = vmatprep.mubr.bf16.mxu0 %v640
        %1203 = vmatmul.mubr.bf16.gmra.mrb[0].mxu0 %v639
        %v1204 = vpop.f32.mrb[0].mxu0
        %v1205 = vadd.f32 %v1092, %v1204
        %v1206 = vpop.f32.mrb[0].mxu0
        %v1207 = vadd.f32 %v1094, %v1206
        %v1208 = vpop.f32.mrb[0].mxu0
        %v1209 = vadd.f32 %v1096, %v1208
        %v1210 = vpop.f32.mrb[0].mxu0
        %v1211 = vadd.f32 %v1098, %v1210
        %1212 = vmatprep.mubr.bf16.mxu0 %v644
        %1213 = vmatmul.mubr.bf16.gmra.mrb[0].mxu0 %v643
        %v1214 = vpop.f32.mrb[0].mxu0
        %v1215 = vadd.f32 %v1102, %v1214
        %v1216 = vpop.f32.mrb[0].mxu0
        %v1217 = vadd.f32 %v1104, %v1216
        %v1218 = vpop.f32.mrb[0].mxu0
        %v1219 = vadd.f32 %v1106, %v1218
        %v1220 = vpop.f32.mrb[0].mxu0
        %v1221 = vadd.f32 %v1108, %v1220
        %1222 = vdwg.mxu0
        %v1223 = vadd.f32 %v389, %v1145
        %v1224 = vadd.f32 %v390, %v1147
        %v1225 = vadd.f32 %v391, %v1149
        %v1226 = vadd.f32 %v392, %v1151
        %v1227 = vadd.f32 %v393, %v1155
        %v1228 = vadd.f32 %v394, %v1157
        %v1229 = vadd.f32 %v395, %v1159
        %v1230 = vadd.f32 %v396, %v1161
        %v1231 = vadd.f32 %v397, %v1165
        %v1232 = vadd.f32 %v398, %v1167
        %v1233 = vadd.f32 %v399, %v1169
        %v1234 = vadd.f32 %v400, %v1171
        %v1235 = vadd.f32 %v401, %v1175
        %v1236 = vadd.f32 %v402, %v1177
        %v1237 = vadd.f32 %v403, %v1179
        %v1238 = vadd.f32 %v404, %v1181
        %v1239 = vadd.f32 %v405, %v1185
        %v1240 = vadd.f32 %v406, %v1187
        %v1241 = vadd.f32 %v407, %v1189
        %v1242 = vadd.f32 %v408, %v1191
        %v1243 = vadd.f32 %v409, %v1195
        %v1244 = vadd.f32 %v410, %v1197
        %v1245 = vadd.f32 %v411, %v1199
        %v1246 = vadd.f32 %v412, %v1201
        %v1247 = vadd.f32 %v413, %v1205
        %v1248 = vadd.f32 %v414, %v1207
        %v1249 = vadd.f32 %v415, %v1209
        %v1250 = vadd.f32 %v416, %v1211
        %v1251 = vadd.f32 %v417, %v1215
        %v1252 = vadd.f32 %v418, %v1217
        %v1253 = vadd.f32 %v419, %v1219
        %v1254 = vadd.f32 %v420, %v1221
        %1255 = vst [vmem:[#allocation2] sm:$0xff] %v1223
        %1256 = vst [vmem:[#allocation2 + $0x8] sm:$0xff] %v1224
        %1257 = vst [vmem:[#allocation2 + $0x10] sm:$0xff] %v1225
        %1258 = vst [vmem:[#allocation2 + $0x18] sm:$0xff] %v1226
        %1259 = vst [vmem:[#allocation2 + $0x20] sm:$0xff] %v1227
        %1260 = vst [vmem:[#allocation2 + $0x28] sm:$0xff] %v1228
        %1261 = vst [vmem:[#allocation2 + $0x30] sm:$0xff] %v1229
        %1262 = vst [vmem:[#allocation2 + $0x38] sm:$0xff] %v1230
        %1263 = vst [vmem:[#allocation2 + $0x40] sm:$0xff] %v1231
        %1264 = vst [vmem:[#allocation2 + $0x48] sm:$0xff] %v1232
        %1265 = vst [vmem:[#allocation2 + $0x50] sm:$0xff] %v1233
        %1266 = vst [vmem:[#allocation2 + $0x58] sm:$0xff] %v1234
        %1267 = vst [vmem:[#allocation2 + $0x60] sm:$0xff] %v1235
        %1268 = vst [vmem:[#allocation2 + $0x68] sm:$0xff] %v1236
        %1269 = vst [vmem:[#allocation2 + $0x70] sm:$0xff] %v1237
        %1270 = vst [vmem:[#allocation2 + $0x78] sm:$0xff] %v1238
        %1271 = vst [vmem:[#allocation2 + $0x80] sm:$0xff] %v1239
        %1272 = vst [vmem:[#allocation2 + $0x88] sm:$0xff] %v1240
        %1273 = vst [vmem:[#allocation2 + $0x90] sm:$0xff] %v1241
        %1274 = vst [vmem:[#allocation2 + $0x98] sm:$0xff] %v1242
        %1275 = vst [vmem:[#allocation2 + $0xa0] sm:$0xff] %v1243
        %1276 = vst [vmem:[#allocation2 + $0xa8] sm:$0xff] %v1244
        %1277 = vst [vmem:[#allocation2 + $0xb0] sm:$0xff] %v1245
        %1278 = vst [vmem:[#allocation2 + $0xb8] sm:$0xff] %v1246
        %1279 = vst [vmem:[#allocation2 + $0xc0] sm:$0xff] %v1247
        %1280 = vst [vmem:[#allocation2 + $0xc8] sm:$0xff] %v1248
        %1281 = vst [vmem:[#allocation2 + $0xd0] sm:$0xff] %v1249
        %1282 = vst [vmem:[#allocation2 + $0xd8] sm:$0xff] %v1250
        %1283 = vst [vmem:[#allocation2 + $0xe0] sm:$0xff] %v1251
        %1284 = vst [vmem:[#allocation2 + $0xe8] sm:$0xff] %v1252
        %1285 = vst [vmem:[#allocation2 + $0xf0] sm:$0xff] %v1253
        %1286 = vst [vmem:[#allocation2 + $0xf8] sm:$0xff] %v1254
        %p1287 = scmp.eq.s32.totalorder %s21, 3
        // Predicated region
        $region60: #{frame_map_forward.6} parent=50 // pred_check
          %p1288 = pneg %p1287
        $region61: #{frame_map_forward.6} parent=50 // pred_check_branch
          %1290 = sbr.rel (%p1288) target = $region63
        $region62: #{frame_map_forward.6} parent=50 // pred_region
          %v1291 = vld [vmem:[#allocation2] sm:$0xff]
          %v1292 = vld [vmem:[#allocation2 + $0x8] sm:$0xff]
          %v1293 = vld [vmem:[#allocation2 + $0x10] sm:$0xff]
          %v1294 = vld [vmem:[#allocation2 + $0x18] sm:$0xff]
          %v1295 = vld [vmem:[#allocation2 + $0x20] sm:$0xff]
          %v1296 = vld [vmem:[#allocation2 + $0x28] sm:$0xff]
          %v1297 = vld [vmem:[#allocation2 + $0x30] sm:$0xff]
          %v1298 = vld [vmem:[#allocation2 + $0x38] sm:$0xff]
          %v1299 = vld [vmem:[#allocation2 + $0x40] sm:$0xff]
          %v1300 = vld [vmem:[#allocation2 + $0x48] sm:$0xff]
          %v1301 = vld [vmem:[#allocation2 + $0x50] sm:$0xff]
          %v1302 = vld [vmem:[#allocation2 + $0x58] sm:$0xff]
          %v1303 = vld [vmem:[#allocation2 + $0x60] sm:$0xff]
          %v1304 = vld [vmem:[#allocation2 + $0x68] sm:$0xff]
          %v1305 = vld [vmem:[#allocation2 + $0x70] sm:$0xff]
          %v1306 = vld [vmem:[#allocation2 + $0x78] sm:$0xff]
          %v1307 = vld [vmem:[#allocation2 + $0x80] sm:$0xff]
          %v1308 = vld [vmem:[#allocation2 + $0x88] sm:$0xff]
          %v1309 = vld [vmem:[#allocation2 + $0x90] sm:$0xff]
          %v1310 = vld [vmem:[#allocation2 + $0x98] sm:$0xff]
          %v1311 = vld [vmem:[#allocation2 + $0xa0] sm:$0xff]
          %v1312 = vld [vmem:[#allocation2 + $0xa8] sm:$0xff]
          %v1313 = vld [vmem:[#allocation2 + $0xb0] sm:$0xff]
          %v1314 = vld [vmem:[#allocation2 + $0xb8] sm:$0xff]
          %v1315 = vld [vmem:[#allocation2 + $0xc0] sm:$0xff]
          %v1316 = vld [vmem:[#allocation2 + $0xc8] sm:$0xff]
          %v1317 = vld [vmem:[#allocation2 + $0xd0] sm:$0xff]
          %v1318 = vld [vmem:[#allocation2 + $0xd8] sm:$0xff]
          %v1319 = vld [vmem:[#allocation2 + $0xe0] sm:$0xff]
          %v1320 = vld [vmem:[#allocation2 + $0xe8] sm:$0xff]
          %v1321 = vld [vmem:[#allocation2 + $0xf0] sm:$0xff]
          %v1322 = vld [vmem:[#allocation2 + $0xf8] sm:$0xff]
          %v1323 = vld [vmem:[%s339] sm:$0x3]
          %v1325 = vlaneseq
          %v1326 = vshrl.u32 %v1325, 7
          %v1327 = vsub.s32 0, %v1326
          %v1328 = vrot.slane %v1323, %v1327
          %v1329 = vlaneseq
          %v1330 = vshrl.u32 %v1329, 7
          %v1331 = vsub.s32 1, %v1330
          %v1332 = vrot.slane %v1323, %v1331
          %v1335 = vadd.f32 %v1291, %v1328
          %v1336 = vadd.f32 %v1292, %v1332
          %v1337 = vadd.f32 %v1293, %v1328
          %v1338 = vadd.f32 %v1294, %v1332
          %v1339 = vadd.f32 %v1295, %v1328
          %v1340 = vadd.f32 %v1296, %v1332
          %v1341 = vadd.f32 %v1297, %v1328
          %v1342 = vadd.f32 %v1298, %v1332
          %v1343 = vadd.f32 %v1299, %v1328
          %v1344 = vadd.f32 %v1300, %v1332
          %v1345 = vadd.f32 %v1301, %v1328
          %v1346 = vadd.f32 %v1302, %v1332
          %v1347 = vadd.f32 %v1303, %v1328
          %v1348 = vadd.f32 %v1304, %v1332
          %v1349 = vadd.f32 %v1305, %v1328
          %v1350 = vadd.f32 %v1306, %v1332
          %v1351 = vadd.f32 %v1307, %v1328
          %v1352 = vadd.f32 %v1308, %v1332
          %v1353 = vadd.f32 %v1309, %v1328
          %v1354 = vadd.f32 %v1310, %v1332
          %v1355 = vadd.f32 %v1311, %v1328
          %v1356 = vadd.f32 %v1312, %v1332
          %v1357 = vadd.f32 %v1313, %v1328
          %v1358 = vadd.f32 %v1314, %v1332
          %v1359 = vadd.f32 %v1315, %v1328
          %v1360 = vadd.f32 %v1316, %v1332
          %v1361 = vadd.f32 %v1317, %v1328
          %v1362 = vadd.f32 %v1318, %v1332
          %v1363 = vadd.f32 %v1319, %v1328
          %v1364 = vadd.f32 %v1320, %v1332
          %v1365 = vadd.f32 %v1321, %v1328
          %v1366 = vadd.f32 %v1322, %v1332
          %v1367 = vmul.f32 %v1335, 0.2
          %v1368 = vmul.f32 %v1336, 0.2
          %v1369 = vmul.f32 %v1337, 0.2
          %v1370 = vmul.f32 %v1338, 0.2
          %v1371 = vmul.f32 %v1339, 0.2
          %v1372 = vmul.f32 %v1340, 0.2
          %v1373 = vmul.f32 %v1341, 0.2
          %v1374 = vmul.f32 %v1342, 0.2
          %v1375 = vmul.f32 %v1343, 0.2
          %v1376 = vmul.f32 %v1344, 0.2
          %v1377 = vmul.f32 %v1345, 0.2
          %v1378 = vmul.f32 %v1346, 0.2
          %v1379 = vmul.f32 %v1347, 0.2
          %v1380 = vmul.f32 %v1348, 0.2
          %v1381 = vmul.f32 %v1349, 0.2
          %v1382 = vmul.f32 %v1350, 0.2
          %v1383 = vmul.f32 %v1351, 0.2
          %v1384 = vmul.f32 %v1352, 0.2
          %v1385 = vmul.f32 %v1353, 0.2
          %v1386 = vmul.f32 %v1354, 0.2
          %v1387 = vmul.f32 %v1355, 0.2
          %v1388 = vmul.f32 %v1356, 0.2
          %v1389 = vmul.f32 %v1357, 0.2
          %v1390 = vmul.f32 %v1358, 0.2
          %v1391 = vmul.f32 %v1359, 0.2
          %v1392 = vmul.f32 %v1360, 0.2
          %v1393 = vmul.f32 %v1361, 0.2
          %v1394 = vmul.f32 %v1362, 0.2
          %v1395 = vmul.f32 %v1363, 0.2
          %v1396 = vmul.f32 %v1364, 0.2
          %v1397 = vmul.f32 %v1365, 0.2
          %v1398 = vmul.f32 %v1366, 0.2
          %v1399 = vmax.f32 %v1335, %v1367
          %v1400 = vmax.f32 %v1336, %v1368
          %v1401 = vmax.f32 %v1337, %v1369
          %v1402 = vmax.f32 %v1338, %v1370
          %v1403 = vmax.f32 %v1339, %v1371
          %v1404 = vmax.f32 %v1340, %v1372
          %v1405 = vmax.f32 %v1341, %v1373
          %v1406 = vmax.f32 %v1342, %v1374
          %v1407 = vmax.f32 %v1343, %v1375
          %v1408 = vmax.f32 %v1344, %v1376
          %v1409 = vmax.f32 %v1345, %v1377
          %v1410 = vmax.f32 %v1346, %v1378
          %v1411 = vmax.f32 %v1347, %v1379
          %v1412 = vmax.f32 %v1348, %v1380
          %v1413 = vmax.f32 %v1349, %v1381
          %v1414 = vmax.f32 %v1350, %v1382
          %v1415 = vmax.f32 %v1351, %v1383
          %v1416 = vmax.f32 %v1352, %v1384
          %v1417 = vmax.f32 %v1353, %v1385
          %v1418 = vmax.f32 %v1354, %v1386
          %v1419 = vmax.f32 %v1355, %v1387
          %v1420 = vmax.f32 %v1356, %v1388
          %v1421 = vmax.f32 %v1357, %v1389
          %v1422 = vmax.f32 %v1358, %v1390
          %v1423 = vmax.f32 %v1359, %v1391
          %v1424 = vmax.f32 %v1360, %v1392
          %v1425 = vmax.f32 %v1361, %v1393
          %v1426 = vmax.f32 %v1362, %v1394
          %v1427 = vmax.f32 %v1363, %v1395
          %v1428 = vmax.f32 %v1364, %v1396
          %v1429 = vmax.f32 %v1365, %v1397
          %v1430 = vmax.f32 %v1366, %v1398
          %v1431 = vpack.c.bf16 %v1401, %v1399
          %v1432 = vpack.c.bf16 %v1402, %v1400
          %v1433 = vpack.c.bf16 %v1405, %v1403
          %v1434 = vpack.c.bf16 %v1406, %v1404
          %v1435 = vpack.c.bf16 %v1409, %v1407
          %v1436 = vpack.c.bf16 %v1410, %v1408
          %v1437 = vpack.c.bf16 %v1413, %v1411
          %v1438 = vpack.c.bf16 %v1414, %v1412
          %v1439 = vpack.c.bf16 %v1417, %v1415
          %v1440 = vpack.c.bf16 %v1418, %v1416
          %v1441 = vpack.c.bf16 %v1421, %v1419
          %v1442 = vpack.c.bf16 %v1422, %v1420
          %v1443 = vpack.c.bf16 %v1425, %v1423
          %v1444 = vpack.c.bf16 %v1426, %v1424
          %v1445 = vpack.c.bf16 %v1429, %v1427
          %v1446 = vpack.c.bf16 %v1430, %v1428
          %v1463 = vunpack.c.l.b16 %v1431
          %v1464 = vunpack.c.l.b16 %v1432
          %v1465 = vunpack.c.h.b16 %v1431
          %v1466 = vunpack.c.h.b16 %v1432
          %v1467 = vunpack.c.l.b16 %v1433
          %v1468 = vunpack.c.l.b16 %v1434
          %v1469 = vunpack.c.h.b16 %v1433
          %v1470 = vunpack.c.h.b16 %v1434
          %v1471 = vunpack.c.l.b16 %v1435
          %v1472 = vunpack.c.l.b16 %v1436
          %v1473 = vunpack.c.h.b16 %v1435
          %v1474 = vunpack.c.h.b16 %v1436
          %v1475 = vunpack.c.l.b16 %v1437
          %v1476 = vunpack.c.l.b16 %v1438
          %v1477 = vunpack.c.h.b16 %v1437
          %v1478 = vunpack.c.h.b16 %v1438
          %v1479 = vunpack.c.l.b16 %v1439
          %v1480 = vunpack.c.l.b16 %v1440
          %v1481 = vunpack.c.h.b16 %v1439
          %v1482 = vunpack.c.h.b16 %v1440
          %v1483 = vunpack.c.l.b16 %v1441
          %v1484 = vunpack.c.l.b16 %v1442
          %v1485 = vunpack.c.h.b16 %v1441
          %v1486 = vunpack.c.h.b16 %v1442
          %v1487 = vunpack.c.l.b16 %v1443
          %v1488 = vunpack.c.l.b16 %v1444
          %v1489 = vunpack.c.h.b16 %v1443
          %v1490 = vunpack.c.h.b16 %v1444
          %v1491 = vunpack.c.l.b16 %v1445
          %v1492 = vunpack.c.l.b16 %v1446
          %v1493 = vunpack.c.h.b16 %v1445
          %v1494 = vunpack.c.h.b16 %v1446
          %v1495 = vpack.c.b16 %v1464, %v1463
          %v1496 = vpack.c.b16 %v1466, %v1465
          %v1497 = vpack.c.b16 %v1468, %v1467
          %v1498 = vpack.c.b16 %v1470, %v1469
          %v1499 = vpack.c.b16 %v1472, %v1471
          %v1500 = vpack.c.b16 %v1474, %v1473
          %v1501 = vpack.c.b16 %v1476, %v1475
          %v1502 = vpack.c.b16 %v1478, %v1477
          %v1503 = vpack.c.b16 %v1480, %v1479
          %v1504 = vpack.c.b16 %v1482, %v1481
          %v1505 = vpack.c.b16 %v1484, %v1483
          %v1506 = vpack.c.b16 %v1486, %v1485
          %v1507 = vpack.c.b16 %v1488, %v1487
          %v1508 = vpack.c.b16 %v1490, %v1489
          %v1509 = vpack.c.b16 %v1492, %v1491
          %v1510 = vpack.c.b16 %v1494, %v1493
          %1527 = vst [vmem:[%s350] sm:$0xff] %v1495
          %1528 = vst [vmem:[%s350 + $0x8] sm:$0xff] %v1496
          %1529 = vst [vmem:[%s350 + $0x10] sm:$0xff] %v1497
          %1530 = vst [vmem:[%s350 + $0x18] sm:$0xff] %v1498
          %1531 = vst [vmem:[%s350 + $0x20] sm:$0xff] %v1499
          %1532 = vst [vmem:[%s350 + $0x28] sm:$0xff] %v1500
          %1533 = vst [vmem:[%s350 + $0x30] sm:$0xff] %v1501
          %1534 = vst [vmem:[%s350 + $0x38] sm:$0xff] %v1502
          %1535 = vst [vmem:[%s350 + $0x40] sm:$0xff] %v1503
          %1536 = vst [vmem:[%s350 + $0x48] sm:$0xff] %v1504
          %1537 = vst [vmem:[%s350 + $0x50] sm:$0xff] %v1505
          %1538 = vst [vmem:[%s350 + $0x58] sm:$0xff] %v1506
          %1539 = vst [vmem:[%s350 + $0x60] sm:$0xff] %v1507
          %1540 = vst [vmem:[%s350 + $0x68] sm:$0xff] %v1508
          %1541 = vst [vmem:[%s350 + $0x70] sm:$0xff] %v1509
          %1542 = vst [vmem:[%s350 + $0x78] sm:$0xff] %v1510
        $region63: #{frame_map_forward.6} parent=50 // pred_fallthru
          _
        %s1543 = smul.u32 16, %s19
        %s1544 = smul.u32 2, %s20
        %p1545 = scmp.lt.s32.totalorder %s1543, 15
        %s1546 = scalar_select %p1545, %s1543, 15
        %p1547 = scmp.lt.s32.totalorder %s1544, 1
        %s1548 = scalar_select %p1547, %s1544, 1
        %s1549 = smul.addr %s1546, 2
        %s1550 = sadd.s32 %s1548, %s1549
        %s1551 = smul.addr %s1550, 4
        %s1552 = scalar_lea.vmem %s3, %s1551
        // Predicated region
        $region64: #{frame_map_forward.6} parent=50 // pred_check
          %p1553 = pneg %p135
        $region65: #{frame_map_forward.6} parent=50 // pred_check_branch
          %1555 = sbr.rel (%p1553) target = $region67
        $region66: #{frame_map_forward.6} parent=50 // pred_region
          %s1556 = smul.u32 16, %s19
          %s1557 = smul.u32 2, %s20
        $region67: #{frame_map_forward.6} parent=50 // pred_fallthru
          _
        // Predicated region
        $region68: #{frame_map_forward.6} parent=50 // pred_check
          %p1558 = pneg %p135
        $region69: #{frame_map_forward.6} parent=50 // pred_check_branch
          %1560 = sbr.rel (%p1558) target = $region71
        $region70: #{frame_map_forward.6} parent=50 // pred_region
          %s1561 = smul.u32 16, %s19
          %s1562 = smul.u32 2, %s20
          %p1563 = scmp.lt.s32.totalorder %s1561, 15
          %s1564 = scalar_select %p1563, %s1561, 15
          %p1565 = scmp.lt.s32.totalorder %s1562, 1
          %s1566 = scalar_select %p1565, %s1562, 1
          %s1567 = smul.addr %s1564, 2
          %s1568 = sadd.s32 %s1566, %s1567
          %s1569 = smul.addr %s1568, 4
          %s1570 = scalar_lea.vmem %s3, %s1569
        $region71: #{frame_map_forward.6} parent=50 // pred_fallthru
          _
      $region51: #{frame_map_forward.6} parent=5 // pred_fallthru
        _
      %p1571 = scmp.le.s32.totalorder 2, %s9
      // Predicated region
      $region72: #{frame_map_forward.6} parent=5 // pred_check
        %p1572 = pneg %p1571
      $region73: #{frame_map_forward.6} parent=5 // pred_check_branch
        %1574 = sbr.rel (%p1572) target = $region75
      $region74: #{frame_map_forward.6} parent=5 // pred_region
        %s1575 = ssub.s32 %s9, 2
      $region75: #{frame_map_forward.6} parent=5 // pred_fallthru
        _
    $region6: #{frame_map_forward.6} parent=1 // loop_footer
      %s13 = sadd.s32 1, %s9
    $region7: #{frame_map_forward.6} parent=1 // loop_footer_branch
      %8 = sbr.rel target = $region3
    $region8: #{frame_map_forward.6} parent=1 // loop_exit
      _

// kernel: frame_map_forward.7
$region0: #{frame_map_forward.7}
  #allocation0 [shape = 'u32[]', space=smem, size = 0x4, offset = 0x4, fixed_abs, tag = 'smem constant byte address 0x4 - core index']
  #allocation1 [shape = 'u32[144,128]{1,0:T(1,128)}', space=vmem, size = 0x12000, scoped, tag = 'internal scratch']
  #allocation2 [shape = 'f32[32,256]{1,0:T(8,128)}', space=vmem, size = 0x8000, scoped, tag = 'scratch operand']
  %s0 = inlined_call_operand.vmem [shape: bf16[32,4096], index: 0, kind: input, shape index: {}]
  %s1 = inlined_call_operand.vmem [shape: bf16[4096,512], index: 1, kind: input, shape index: {}]
  %s2 = inlined_call_operand.vmem [shape: f32[1,512], index: 2, kind: input, shape index: {}]
  %s3 = inlined_call_operand.vmem [shape: f32[32,512], index: 3, kind: output, shape index: {}]
  %s4 = sld [smem:[#allocation0]]
  $region133: #{frame_map_forward.7} parent=0
    _
  %s6 = ssub.s32 1, %s4
  %s7 = scalar_select 0, %s6, %s4
  $region1: #{frame_map_forward.7} parent=0
    #allocation3 [shape = 'u8[65536]{0}', space=vmem, size = 0x10000, scoped, tag = 'input window, operand 0']
    #allocation4 [shape = 'u8[524288]{0}', space=vmem, size = 0x80000, scoped, tag = 'input window, operand 1']
    #allocation5 [shape = 'u8[65536]{0}', space=vmem, size = 0x10000, scoped, tag = 'output window, operand 0']
    loop: start=0, step=1, limit=18
    $region2: #{frame_map_forward.7} parent=1 // loop_pre_header
      _
    $region3: #{frame_map_forward.7} parent=1 // loop_header
      %s9 = sphi 0, %s13
      %p10 = scmp.ge.s32.totalorder %s9, 18
      %s16 = sphi 0, %s35
      %s17 = sphi 0, %s31
      %s18 = sphi 0, %s27
      %s19 = sphi 0, %s16
      %s20 = sphi 0, %s17
      %s21 = sphi 0, %s18
      %s22 = sphi 0, %s19
      %s23 = sphi 0, %s20
      %s24 = sphi 0, %s21
      %s40 = sphi 0, %s42
      %s43 = sphi 0, %s40
      %s44 = sphi 0, %s43
      %s60 = sphi 0, %s44
      %s68 = sphi 0, %s70
      %s71 = sphi 0, %s68
      %s72 = sphi 0, %s71
      %s88 = sphi 0, %s72
      %s94 = sphi 0, %s96
      %s97 = sphi 0, %s94
      %s98 = sphi 0, %s97
      %s114 = sphi 0, %s98
      %s122 = sphi 0, %s124
      %s125 = sphi 0, %s122
      %s126 = sphi 0, %s125
      %s142 = sphi 0, %s126
    $region4: #{frame_map_forward.7} parent=1 // loop_header_branch
      %12 = sbr.rel (%p10) target = $region8
    $region5: #{frame_map_forward.7} parent=1 // loop_body
      %s14 = ssub.s32 %s9, 1
      %s15 = ssub.s32 %s9, 2
      %s25 = sadd.s32 1, %s18
      %p26 = scmp.ge.s32.totalorder %s25, 8
      %s27 = scalar_select %p26, 0, %s25
      %s28 = sadd.s32 1, %s17
      %s29 = scalar_select %p26, %s28, %s17
      %p30 = scmp.ge.s32.totalorder %s29, 2
      %s31 = scalar_select %p30, 0, %s29
      %s32 = sadd.s32 1, %s16
      %s33 = scalar_select %p30, %s32, %s16
      %p34 = scmp.ge.s32.totalorder %s33, 1
      %s35 = scalar_select %p34, 0, %s33
      %s36 = ssub.s32 %s16, %s35
      %s37 = ssub.s32 %s18, %s27
      %s38 = sor.u32 %s36, %s37
      %p39 = scmp.eq.s32.totalorder %s38, 0
      %s41 = sadd.s32 %s40, 1
      %s42 = scalar_select %p39, %s40, %s41
      %p45 = pneg %p39
      %p46 = scmp.eq.s32.totalorder %s9, 15
      %p47 = por %p45, %p46
      %p48 = scmp.ne.s32.totalorder %s40, %s43
      %p49 = scmp.eq.s32.totalorder %s9, 0
      %p50 = por %p48, %p49
      %p51 = scmp.ne.s32.totalorder %s40, %s43
      %p52 = scmp.eq.s32.totalorder %s14, 15
      %p53 = por %p51, %p52
      %p54 = scmp.ne.s32.totalorder %s43, %s44
      %p55 = scmp.eq.s32.totalorder %s14, 0
      %p56 = por %p54, %p55
      %p57 = scmp.ne.s32.totalorder %s43, %s44
      %p58 = scmp.eq.s32.totalorder %s15, 15
      %p59 = por %p57, %p58
      %p61 = scmp.ne.s32.totalorder %s44, %s60
      %p62 = scmp.eq.s32.totalorder %s15, 0
      %p63 = por %p61, %p62
      %s64 = ssub.s32 %s18, %s27
      %s65 = ssub.s32 %s17, %s31
      %s66 = sor.u32 %s64, %s65
      %p67 = scmp.eq.s32.totalorder %s66, 0
      %s69 = sadd.s32 %s68, 1
      %s70 = scalar_select %p67, %s68, %s69
      %p73 = pneg %p67
      %p74 = scmp.eq.s32.totalorder %s9, 15
      %p75 = por %p73, %p74
      %p76 = scmp.ne.s32.totalorder %s68, %s71
      %p77 = scmp.eq.s32.totalorder %s9, 0
      %p78 = por %p76, %p77
      %p79 = scmp.ne.s32.totalorder %s68, %s71
      %p80 = scmp.eq.s32.totalorder %s14, 15
      %p81 = por %p79, %p80
      %p82 = scmp.ne.s32.totalorder %s71, %s72
      %p83 = scmp.eq.s32.totalorder %s14, 0
      %p84 = por %p82, %p83
      %p85 = scmp.ne.s32.totalorder %s71, %s72
      %p86 = scmp.eq.s32.totalorder %s15, 15
      %p87 = por %p85, %p86
      %p89 = scmp.ne.s32.totalorder %s72, %s88
      %p90 = scmp.eq.s32.totalorder %s15, 0
      %p91 = por %p89, %p90
      %s92 = ssub.s32 %s17, %s31
      %p93 = scmp.eq.s32.totalorder %s92, 0
      %s95 = sadd.s32 %s94, 1
      %s96 = scalar_select %p93, %s94, %s95
      %p99 = pneg %p93
      %p100 = scmp.eq.s32.totalorder %s9, 15
      %p101 = por %p99, %p100
      %p102 = scmp.ne.s32.totalorder %s94, %s97
      %p103 = scmp.eq.s32.totalorder %s9, 0
      %p104 = por %p102, %p103
      %p105 = scmp.ne.s32.totalorder %s94, %s97
      %p106 = scmp.eq.s32.totalorder %s14, 15
      %p107 = por %p105, %p106
      %p108 = scmp.ne.s32.totalorder %s97, %s98
      %p109 = scmp.eq.s32.totalorder %s14, 0
      %p110 = por %p108, %p109
      %p111 = scmp.ne.s32.totalorder %s97, %s98
      %p112 = scmp.eq.s32.totalorder %s15, 15
      %p113 = por %p111, %p112
      %p115 = scmp.ne.s32.totalorder %s98, %s114
      %p116 = scmp.eq.s32.totalorder %s15, 0
      %p117 = por %p115, %p116
      %s118 = ssub.s32 %s16, %s35
      %s119 = ssub.s32 %s17, %s31
      %s120 = sor.u32 %s118, %s119
      %p121 = scmp.eq.s32.totalorder %s120, 0
      %s123 = sadd.s32 %s122, 1
      %s124 = scalar_select %p121, %s122, %s123
      %p127 = pneg %p121
      %p128 = scmp.eq.s32.totalorder %s9, 15
      %p129 = por %p127, %p128
      %p130 = scmp.ne.s32.totalorder %s122, %s125
      %p131 = scmp.eq.s32.totalorder %s9, 0
      %p132 = por %p130, %p131
      %p133 = scmp.ne.s32.totalorder %s122, %s125
      %p134 = scmp.eq.s32.totalorder %s14, 15
      %p135 = por %p133, %p134
      %p136 = scmp.ne.s32.totalorder %s125, %s126
      %p137 = scmp.eq.s32.totalorder %s14, 0
      %p138 = por %p136, %p137
      %p139 = scmp.ne.s32.totalorder %s125, %s126
      %p140 = scmp.eq.s32.totalorder %s15, 15
      %p141 = por %p139, %p140
      %p143 = scmp.ne.s32.totalorder %s126, %s142
      %p144 = scmp.eq.s32.totalorder %s15, 0
      %p145 = por %p143, %p144
      %p146 = scmp.le.s32.totalorder 1, %s9
      %p147 = scmp.lt.s32.totalorder %s9, 17
      %p148 = pnand %p146, %p147
      %p149 = pneg %p148
      // Predicated region
      $region9: #{frame_map_forward.7} parent=5 // pred_check
        _
      $region10: #{frame_map_forward.7} parent=5 // pred_check_branch
        %151 = sbr.rel (%p148) target = $region12
      $region11: #{frame_map_forward.7} parent=5 // pred_region
        %s152 = ssub.s32 %s9, 1
      $region12: #{frame_map_forward.7} parent=5 // pred_fallthru
        _
      %p153 = scmp.lt.s32.totalorder %s9, 16
      // Predicated region
      $region13: #{frame_map_forward.7} parent=5 // pred_check
        %p154 = pneg %p153
      $region14: #{frame_map_forward.7} parent=5 // pred_check_branch
        %156 = sbr.rel (%p154) target = $region16
      $region15: #{frame_map_forward.7} parent=5 // pred_region
        // Predicated region
        $region17: #{frame_map_forward.7} parent=15 // pred_check
          %p157 = pneg %p50
        $region18: #{frame_map_forward.7} parent=15 // pred_check_branch
          %159 = sbr.rel (%p157) target = $region20
        $region19: #{frame_map_forward.7} parent=15 // pred_region
          %s160 = sand.u32 %s40, 1
          %s161 = sand.u32 %s40, 1
          %s162 = smul.addr %s161, 64
          %s163 = scalar_lea.vmem [#allocation3], %s162
          %s164 = smul.u32 4, %s16
          %s165 = smul.u32 4, %s18
          %s166 = smul.addr %s164, 32
          %s167 = sadd.s32 %s165, %s166
          %s168 = smul.addr %s167, 4
          %s169 = scalar_lea.vmem %s0, %s168
          // Predicated region
          $region21: #{frame_map_forward.7} parent=19 // pred_check
            _
          $region22: #{frame_map_forward.7} parent=19 // pred_check_branch
            %171 = sbr.rel (0) target = $region24
          $region23: #{frame_map_forward.7} parent=19 // pred_region
            // Predicated region
            $region25: #{frame_map_forward.7} parent=23 // pred_check
              _
            $region26: #{frame_map_forward.7} parent=23 // pred_check_branch
              %173 = sbr.rel (0) target = $region28
            $region27: #{frame_map_forward.7} parent=23 // pred_region
              loop: start=0, step=1, limit=1
              $region29: #{frame_map_forward.7} parent=27 // loop_pre_header
                _
              $region30: #{frame_map_forward.7} parent=27 // loop_header
                %s175 = sphi 0, %s179
                %p176 = scmp.ge.s32.totalorder %s175, 1
                %s180 = sphi %s169, %s169
                %s181 = sphi %s163, %s163
              $region31: #{frame_map_forward.7} parent=27 // loop_header_branch
                %178 = sbr.rel (%p176) target = $region35
              $region32: #{frame_map_forward.7} parent=27 // loop_body
                %v182 = vld [vmem:[%s180] sm:$0xff]
                %183 = vst [vmem:[%s181] sm:$0xff] %v182
                %v184 = vld [vmem:[%s180 + $0x8] sm:$0xff]
                %185 = vst [vmem:[%s181 + $0x8] sm:$0xff] %v184
                %v186 = vld [vmem:[%s180 + $0x80] sm:$0xff]
                %187 = vst [vmem:[%s181 + $0x10] sm:$0xff] %v186
                %v188 = vld [vmem:[%s180 + $0x88] sm:$0xff]
                %189 = vst [vmem:[%s181 + $0x18] sm:$0xff] %v188
                %v190 = vld [vmem:[%s180 + $0x100] sm:$0xff]
                %191 = vst [vmem:[%s181 + $0x20] sm:$0xff] %v190
                %v192 = vld [vmem:[%s180 + $0x108] sm:$0xff]
                %193 = vst [vmem:[%s181 + $0x28] sm:$0xff] %v192
                %v194 = vld [vmem:[%s180 + $0x180] sm:$0xff]
                %195 = vst [vmem:[%s181 + $0x30] sm:$0xff] %v194
                %v196 = vld [vmem:[%s180 + $0x188] sm:$0xff]
                %197 = vst [vmem:[%s181 + $0x38] sm:$0xff] %v196
              $region33: #{frame_map_forward.7} parent=27 // loop_footer
                %s179 = sadd.s32 1, %s175
              $region34: #{frame_map_forward.7} parent=27 // loop_footer_branch
                %174 = sbr.rel target = $region30
              $region35: #{frame_map_forward.7} parent=27 // loop_exit
                _
            $region28: #{frame_map_forward.7} parent=23 // pred_fallthru
              _
            // Predicated region
            $region36: #{frame_map_forward.7} parent=23 // pred_check
              _
            $region37: #{frame_map_forward.7} parent=23 // pred_check_branch
              %199 = sbr.rel target = $region39
            $region38: #{frame_map_forward.7} parent=23 // pred_region
              _
            $region39: #{frame_map_forward.7} parent=23 // pred_fallthru
              _
          $region24: #{frame_map_forward.7} parent=19 // pred_fallthru
            _
          %200 = vnop
        $region20: #{frame_map_forward.7} parent=15 // pred_fallthru
          _
        // Predicated region
        $region40: #{frame_map_forward.7} parent=15 // pred_check
          %p201 = pneg %p78
        $region41: #{frame_map_forward.7} parent=15 // pred_check_branch
          %203 = sbr.rel (%p201) target = $region43
        $region42: #{frame_map_forward.7} parent=15 // pred_region
          %s204 = sand.u32 %s68, 1
          %s205 = sand.u32 %s68, 1
          %s206 = smul.addr %s205, 512
          %s207 = scalar_lea.vmem [#allocation4], %s206
          %s208 = smul.u32 64, %s18
          %s209 = smul.u32 2, %s17
          %s210 = smul.addr %s208, 4
          %s211 = sadd.s32 %s209, %s210
          %s212 = smul.addr %s211, 4
          %s213 = scalar_lea.vmem %s1, %s212
          // Predicated region
          $region44: #{frame_map_forward.7} parent=42 // pred_check
            _
          $region45: #{frame_map_forward.7} parent=42 // pred_check_branch
            %215 = sbr.rel (0) target = $region47
          $region46: #{frame_map_forward.7} parent=42 // pred_region
            // Predicated region
            $region48: #{frame_map_forward.7} parent=46 // pred_check
              _
            $region49: #{frame_map_forward.7} parent=46 // pred_check_branch
              %217 = sbr.rel (0) target = $region51
            $region50: #{frame_map_forward.7} parent=46 // pred_region
              // Predicated region
              $region63: #{frame_map_forward.7} parent=50 // pred_check
                _
              $region64: #{frame_map_forward.7} parent=50 // pred_check_branch
                %358 = sbr.rel (0) target = $region66
              $region65: #{frame_map_forward.7} parent=50 // pred_region
                loop: start=0, step=1, limit=1
                $region67: #{frame_map_forward.7} parent=65 // loop_pre_header
                  _
                $region68: #{frame_map_forward.7} parent=65 // loop_header
                  %s360 = sphi 0, %s364
                  %p361 = scmp.ge.s32.totalorder %s360, 1
                  %s365 = sphi %s213, %s213
                  %s366 = sphi %s207, %s207
                $region69: #{frame_map_forward.7} parent=65 // loop_header_branch
                  %363 = sbr.rel (%p361) target = $region73
                $region70: #{frame_map_forward.7} parent=65 // loop_body
                  %v367 = vld [vmem:[%s365] sm:$0xff]
                  %368 = vst [vmem:[%s366] sm:$0xff] %v367
                  %v369 = vld [vmem:[%s365 + $0x10] sm:$0xff]
                  %370 = vst [vmem:[%s366 + $0x8] sm:$0xff] %v369
                  %v371 = vld [vmem:[%s365 + $0x20] sm:$0xff]
                  %372 = vst [vmem:[%s366 + $0x10] sm:$0xff] %v371
                  %v373 = vld [vmem:[%s365 + $0x30] sm:$0xff]
                  %374 = vst [vmem:[%s366 + $0x18] sm:$0xff] %v373
                  %v375 = vld [vmem:[%s365 + $0x40] sm:$0xff]
                  %376 = vst [vmem:[%s366 + $0x20] sm:$0xff] %v375
                  %v377 = vld [vmem:[%s365 + $0x50] sm:$0xff]
                  %378 = vst [vmem:[%s366 + $0x28] sm:$0xff] %v377
                  %v379 = vld [vmem:[%s365 + $0x60] sm:$0xff]
                  %380 = vst [vmem:[%s366 + $0x30] sm:$0xff] %v379
                  %v381 = vld [vmem:[%s365 + $0x70] sm:$0xff]
                  %382 = vst [vmem:[%s366 + $0x38] sm:$0xff] %v381
                  %v383 = vld [vmem:[%s365 + $0x80] sm:$0xff]
                  %384 = vst [vmem:[%s366 + $0x40] sm:$0xff] %v383
                  %v385 = vld [vmem:[%s365 + $0x90] sm:$0xff]
                  %386 = vst [vmem:[%s366 + $0x48] sm:$0xff] %v385
                  %v387 = vld [vmem:[%s365 + $0xa0] sm:$0xff]
                  %388 = vst [vmem:[%s366 + $0x50] sm:$0xff] %v387
                  %v389 = vld [vmem:[%s365 + $0xb0] sm:$0xff]
                  %390 = vst [vmem:[%s366 + $0x58] sm:$0xff] %v389
                  %v391 = vld [vmem:[%s365 + $0xc0] sm:$0xff]
                  %392 = vst [vmem:[%s366 + $0x60] sm:$0xff] %v391
                  %v393 = vld [vmem:[%s365 + $0xd0] sm:$0xff]
                  %394 = vst [vmem:[%s366 + $0x68] sm:$0xff] %v393
                  %v395 = vld [vmem:[%s365 + $0xe0] sm:$0xff]
                  %396 = vst [vmem:[%s366 + $0x70] sm:$0xff] %v395
                  %v397 = vld [vmem:[%s365 + $0xf0] sm:$0xff]
                  %398 = vst [vmem:[%s366 + $0x78] sm:$0xff] %v397
                  %v399 = vld [vmem:[%s365 + $0x100] sm:$0xff]
                  %400 = vst [vmem:[%s366 + $0x80] sm:$0xff] %v399
                  %v401 = vld [vmem:[%s365 + $0x110] sm:$0xff]
                  %402 = vst [vmem:[%s366 + $0x88] sm:$0xff] %v401
                  %v403 = vld [vmem:[%s365 + $0x120] sm:$0xff]
                  %404 = vst [vmem:[%s366 + $0x90] sm:$0xff] %v403
                  %v405 = vld [vmem:[%s365 + $0x130] sm:$0xff]
                  %406 = vst [vmem:[%s366 + $0x98] sm:$0xff] %v405
                  %v407 = vld [vmem:[%s365 + $0x140] sm:$0xff]
                  %408 = vst [vmem:[%s366 + $0xa0] sm:$0xff] %v407
                  %v409 = vld [vmem:[%s365 + $0x150] sm:$0xff]
                  %410 = vst [vmem:[%s366 + $0xa8] sm:$0xff] %v409
                  %v411 = vld [vmem:[%s365 + $0x160] sm:$0xff]
                  %412 = vst [vmem:[%s366 + $0xb0] sm:$0xff] %v411
                  %v413 = vld [vmem:[%s365 + $0x170] sm:$0xff]
                  %414 = vst [vmem:[%s366 + $0xb8] sm:$0xff] %v413
                  %v415 = vld [vmem:[%s365 + $0x180] sm:$0xff]
                  %416 = vst [vmem:[%s366 + $0xc0] sm:$0xff] %v415
                  %v417 = vld [vmem:[%s365 + $0x190] sm:$0xff]
                  %418 = vst [vmem:[%s366 + $0xc8] sm:$0xff] %v417
                  %v419 = vld [vmem:[%s365 + $0x1a0] sm:$0xff]
                  %420 = vst [vmem:[%s366 + $0xd0] sm:$0xff] %v419
                  %v421 = vld [vmem:[%s365 + $0x1b0] sm:$0xff]
                  %422 = vst [vmem:[%s366 + $0xd8] sm:$0xff] %v421
                  %v423 = vld [vmem:[%s365 + $0x1c0] sm:$0xff]
                  %424 = vst [vmem:[%s366 + $0xe0] sm:$0xff] %v423
                  %v425 = vld [vmem:[%s365 + $0x1d0] sm:$0xff]
                  %426 = vst [vmem:[%s366 + $0xe8] sm:$0xff] %v425
                  %v427 = vld [vmem:[%s365 + $0x1e0] sm:$0xff]
                  %428 = vst [vmem:[%s366 + $0xf0] sm:$0xff] %v427
                  %v429 = vld [vmem:[%s365 + $0x1f0] sm:$0xff]
                  %430 = vst [vmem:[%s366 + $0xf8] sm:$0xff] %v429
                  %v431 = vld [vmem:[%s365 + $0x200] sm:$0xff]
                  %432 = vst [vmem:[%s366 + $0x100] sm:$0xff] %v431
                  %v433 = vld [vmem:[%s365 + $0x210] sm:$0xff]
                  %434 = vst [vmem:[%s366 + $0x108] sm:$0xff] %v433
                  %v435 = vld [vmem:[%s365 + $0x220] sm:$0xff]
                  %436 = vst [vmem:[%s366 + $0x110] sm:$0xff] %v435
                  %v437 = vld [vmem:[%s365 + $0x230] sm:$0xff]
                  %438 = vst [vmem:[%s366 + $0x118] sm:$0xff] %v437
                  %v439 = vld [vmem:[%s365 + $0x240] sm:$0xff]
                  %440 = vst [vmem:[%s366 + $0x120] sm:$0xff] %v439
                  %v441 = vld [vmem:[%s365 + $0x250] sm:$0xff]
                  %442 = vst [vmem:[%s366 + $0x128] sm:$0xff] %v441
                  %v443 = vld [vmem:[%s365 + $0x260] sm:$0xff]
                  %444 = vst [vmem:[%s366 + $0x130] sm:$0xff] %v443
                  %v445 = vld [vmem:[%s365 + $0x270] sm:$0xff]
                  %446 = vst [vmem:[%s366 + $0x138] sm:$0xff] %v445
                  %v447 = vld [vmem:[%s365 + $0x280] sm:$0xff]
                  %448 = vst [vmem:[%s366 + $0x140] sm:$0xff] %v447
                  %v449 = vld [vmem:[%s365 + $0x290] sm:$0xff]
                  %450 = vst [vmem:[%s366 + $0x148] sm:$0xff] %v449
                  %v451 = vld [vmem:[%s365 + $0x2a0] sm:$0xff]
                  %452 = vst [vmem:[%s366 + $0x150] sm:$0xff] %v451
                  %v453 = vld [vmem:[%s365 + $0x2b0] sm:$0xff]
                  %454 = vst [vmem:[%s366 + $0x158] sm:$0xff] %v453
                  %v455 = vld [vmem:[%s365 + $0x2c0] sm:$0xff]
                  %456 = vst [vmem:[%s366 + $0x160] sm:$0xff] %v455
                  %v457 = vld [vmem:[%s365 + $0x2d0] sm:$0xff]
                  %458 = vst [vmem:[%s366 + $0x168] sm:$0xff] %v457
                  %v459 = vld [vmem:[%s365 + $0x2e0] sm:$0xff]
                  %460 = vst [vmem:[%s366 + $0x170] sm:$0xff] %v459
                  %v461 = vld [vmem:[%s365 + $0x2f0] sm:$0xff]
                  %462 = vst [vmem:[%s366 + $0x178] sm:$0xff] %v461
                  %v463 = vld [vmem:[%s365 + $0x300] sm:$0xff]
                  %464 = vst [vmem:[%s366 + $0x180] sm:$0xff] %v463
                  %v465 = vld [vmem:[%s365 + $0x310] sm:$0xff]
                  %466 = vst [vmem:[%s366 + $0x188] sm:$0xff] %v465
                  %v467 = vld [vmem:[%s365 + $0x320] sm:$0xff]
                  %468 = vst [vmem:[%s366 + $0x190] sm:$0xff] %v467
                  %v469 = vld [vmem:[%s365 + $0x330] sm:$0xff]
                  %470 = vst [vmem:[%s366 + $0x198] sm:$0xff] %v469
                  %v471 = vld [vmem:[%s365 + $0x340] sm:$0xff]
                  %472 = vst [vmem:[%s366 + $0x1a0] sm:$0xff] %v471
                  %v473 = vld [vmem:[%s365 + $0x350] sm:$0xff]
                  %474 = vst [vmem:[%s366 + $0x1a8] sm:$0xff] %v473
                  %v475 = vld [vmem:[%s365 + $0x360] sm:$0xff]
                  %476 = vst [vmem:[%s366 + $0x1b0] sm:$0xff] %v475
                  %v477 = vld [vmem:[%s365 + $0x370] sm:$0xff]
                  %478 = vst [vmem:[%s366 + $0x1b8] sm:$0xff] %v477
                  %v479 = vld [vmem:[%s365 + $0x380] sm:$0xff]
                  %480 = vst [vmem:[%s366 + $0x1c0] sm:$0xff] %v479
                  %v481 = vld [vmem:[%s365 + $0x390] sm:$0xff]
                  %482 = vst [vmem:[%s366 + $0x1c8] sm:$0xff] %v481
                  %v483 = vld [vmem:[%s365 + $0x3a0] sm:$0xff]
                  %484 = vst [vmem:[%s366 + $0x1d0] sm:$0xff] %v483
                  %v485 = vld [vmem:[%s365 + $0x3b0] sm:$0xff]
                  %486 = vst [vmem:[%s366 + $0x1d8] sm:$0xff] %v485
                  %v487 = vld [vmem:[%s365 + $0x3c0] sm:$0xff]
                  %488 = vst [vmem:[%s366 + $0x1e0] sm:$0xff] %v487
                  %v489 = vld [vmem:[%s365 + $0x3d0] sm:$0xff]
                  %490 = vst [vmem:[%s366 + $0x1e8] sm:$0xff] %v489
                  %v491 = vld [vmem:[%s365 + $0x3e0] sm:$0xff]
                  %492 = vst [vmem:[%s366 + $0x1f0] sm:$0xff] %v491
                  %v493 = vld [vmem:[%s365 + $0x3f0] sm:$0xff]
                  %494 = vst [vmem:[%s366 + $0x1f8] sm:$0xff] %v493
                $region71: #{frame_map_forward.7} parent=65 // loop_footer
                  %s364 = sadd.s32 1, %s360
                $region72: #{frame_map_forward.7} parent=65 // loop_footer_branch
                  %359 = sbr.rel target = $region68
                $region73: #{frame_map_forward.7} parent=65 // loop_exit
                  _
              $region66: #{frame_map_forward.7} parent=50 // pred_fallthru
                _
              // Predicated region
              $region74: #{frame_map_forward.7} parent=50 // pred_check
                _
              $region75: #{frame_map_forward.7} parent=50 // pred_check_branch
                %496 = sbr.rel target = $region77
              $region76: #{frame_map_forward.7} parent=50 // pred_region
                _
              $region77: #{frame_map_forward.7} parent=50 // pred_fallthru
                _
            $region51: #{frame_map_forward.7} parent=46 // pred_fallthru
              _
            // Predicated region
            $region52: #{frame_map_forward.7} parent=46 // pred_check
              _
            $region53: #{frame_map_forward.7} parent=46 // pred_check_branch
              %219 = sbr.rel target = $region55
            $region54: #{frame_map_forward.7} parent=46 // pred_region
              loop: start=0, step=1, limit=1
              $region56: #{frame_map_forward.7} parent=54 // loop_pre_header
                _
              $region57: #{frame_map_forward.7} parent=54 // loop_header
                %s222 = sphi 0, %s226
                %p223 = scmp.ge.s32.totalorder %s222, 1
                %s227 = sphi %s213, %s213
                %s228 = sphi %s207, %s207
              $region58: #{frame_map_forward.7} parent=54 // loop_header_branch
                %225 = sbr.rel (%p223) target = $region62
              $region59: #{frame_map_forward.7} parent=54 // loop_body
                %v229 = vld [vmem:[%s227] sm:$0xff]
                %230 = vst [vmem:[%s228] sm:$0xff] %v229
                %v231 = vld [vmem:[%s227 + $0x10] sm:$0xff]
                %232 = vst [vmem:[%s228 + $0x8] sm:$0xff] %v231
                %v233 = vld [vmem:[%s227 + $0x20] sm:$0xff]
                %234 = vst [vmem:[%s228 + $0x10] sm:$0xff] %v233
                %v235 = vld [vmem:[%s227 + $0x30] sm:$0xff]
                %236 = vst [vmem:[%s228 + $0x18] sm:$0xff] %v235
                %v237 = vld [vmem:[%s227 + $0x40] sm:$0xff]
                %238 = vst [vmem:[%s228 + $0x20] sm:$0xff] %v237
                %v239 = vld [vmem:[%s227 + $0x50] sm:$0xff]
                %240 = vst [vmem:[%s228 + $0x28] sm:$0xff] %v239
                %v241 = vld [vmem:[%s227 + $0x60] sm:$0xff]
                %242 = vst [vmem:[%s228 + $0x30] sm:$0xff] %v241
                %v243 = vld [vmem:[%s227 + $0x70] sm:$0xff]
                %244 = vst [vmem:[%s228 + $0x38] sm:$0xff] %v243
                %v245 = vld [vmem:[%s227 + $0x80] sm:$0xff]
                %246 = vst [vmem:[%s228 + $0x40] sm:$0xff] %v245
                %v247 = vld [vmem:[%s227 + $0x90] sm:$0xff]
                %248 = vst [vmem:[%s228 + $0x48] sm:$0xff] %v247
                %v249 = vld [vmem:[%s227 + $0xa0] sm:$0xff]
                %250 = vst [vmem:[%s228 + $0x50] sm:$0xff] %v249
                %v251 = vld [vmem:[%s227 + $0xb0] sm:$0xff]
                %252 = vst [vmem:[%s228 + $0x58] sm:$0xff] %v251
                %v253 = vld [vmem:[%s227 + $0xc0] sm:$0xff]
                %254 = vst [vmem:[%s228 + $0x60] sm:$0xff] %v253
                %v255 = vld [vmem:[%s227 + $0xd0] sm:$0xff]
                %256 = vst [vmem:[%s228 + $0x68] sm:$0xff] %v255
                %v257 = vld [vmem:[%s227 + $0xe0] sm:$0xff]
                %258 = vst [vmem:[%s228 + $0x70] sm:$0xff] %v257
                %v259 = vld [vmem:[%s227 + $0xf0] sm:$0xff]
                %260 = vst [vmem:[%s228 + $0x78] sm:$0xff] %v259
                %v261 = vld [vmem:[%s227 + $0x100] sm:$0xff]
                %262 = vst [vmem:[%s228 + $0x80] sm:$0xff] %v261
                %v263 = vld [vmem:[%s227 + $0x110] sm:$0xff]
                %264 = vst [vmem:[%s228 + $0x88] sm:$0xff] %v263
                %v265 = vld [vmem:[%s227 + $0x120] sm:$0xff]
                %266 = vst [vmem:[%s228 + $0x90] sm:$0xff] %v265
                %v267 = vld [vmem:[%s227 + $0x130] sm:$0xff]
                %268 = vst [vmem:[%s228 + $0x98] sm:$0xff] %v267
                %v269 = vld [vmem:[%s227 + $0x140] sm:$0xff]
                %270 = vst [vmem:[%s228 + $0xa0] sm:$0xff] %v269
                %v271 = vld [vmem:[%s227 + $0x150] sm:$0xff]
                %272 = vst [vmem:[%s228 + $0xa8] sm:$0xff] %v271
                %v273 = vld [vmem:[%s227 + $0x160] sm:$0xff]
                %274 = vst [vmem:[%s228 + $0xb0] sm:$0xff] %v273
                %v275 = vld [vmem:[%s227 + $0x170] sm:$0xff]
                %276 = vst [vmem:[%s228 + $0xb8] sm:$0xff] %v275
                %v277 = vld [vmem:[%s227 + $0x180] sm:$0xff]
                %278 = vst [vmem:[%s228 + $0xc0] sm:$0xff] %v277
                %v279 = vld [vmem:[%s227 + $0x190] sm:$0xff]
                %280 = vst [vmem:[%s228 + $0xc8] sm:$0xff] %v279
                %v281 = vld [vmem:[%s227 + $0x1a0] sm:$0xff]
                %282 = vst [vmem:[%s228 + $0xd0] sm:$0xff] %v281
                %v283 = vld [vmem:[%s227 + $0x1b0] sm:$0xff]
                %284 = vst [vmem:[%s228 + $0xd8] sm:$0xff] %v283
                %v285 = vld [vmem:[%s227 + $0x1c0] sm:$0xff]
                %286 = vst [vmem:[%s228 + $0xe0] sm:$0xff] %v285
                %v287 = vld [vmem:[%s227 + $0x1d0] sm:$0xff]
                %288 = vst [vmem:[%s228 + $0xe8] sm:$0xff] %v287
                %v289 = vld [vmem:[%s227 + $0x1e0] sm:$0xff]
                %290 = vst [vmem:[%s228 + $0xf0] sm:$0xff] %v289
                %v291 = vld [vmem:[%s227 + $0x1f0] sm:$0xff]
                %292 = vst [vmem:[%s228 + $0xf8] sm:$0xff] %v291
                %v293 = vld [vmem:[%s227 + $0x200] sm:$0xff]
                %294 = vst [vmem:[%s228 + $0x100] sm:$0xff] %v293
                %v295 = vld [vmem:[%s227 + $0x210] sm:$0xff]
                %296 = vst [vmem:[%s228 + $0x108] sm:$0xff] %v295
                %v297 = vld [vmem:[%s227 + $0x220] sm:$0xff]
                %298 = vst [vmem:[%s228 + $0x110] sm:$0xff] %v297
                %v299 = vld [vmem:[%s227 + $0x230] sm:$0xff]
                %300 = vst [vmem:[%s228 + $0x118] sm:$0xff] %v299
                %v301 = vld [vmem:[%s227 + $0x240] sm:$0xff]
                %302 = vst [vmem:[%s228 + $0x120] sm:$0xff] %v301
                %v303 = vld [vmem:[%s227 + $0x250] sm:$0xff]
                %304 = vst [vmem:[%s228 + $0x128] sm:$0xff] %v303
                %v305 = vld [vmem:[%s227 + $0x260] sm:$0xff]
                %306 = vst [vmem:[%s228 + $0x130] sm:$0xff] %v305
                %v307 = vld [vmem:[%s227 + $0x270] sm:$0xff]
                %308 = vst [vmem:[%s228 + $0x138] sm:$0xff] %v307
                %v309 = vld [vmem:[%s227 + $0x280] sm:$0xff]
                %310 = vst [vmem:[%s228 + $0x140] sm:$0xff] %v309
                %v311 = vld [vmem:[%s227 + $0x290] sm:$0xff]
                %312 = vst [vmem:[%s228 + $0x148] sm:$0xff] %v311
                %v313 = vld [vmem:[%s227 + $0x2a0] sm:$0xff]
                %314 = vst [vmem:[%s228 + $0x150] sm:$0xff] %v313
                %v315 = vld [vmem:[%s227 + $0x2b0] sm:$0xff]
                %316 = vst [vmem:[%s228 + $0x158] sm:$0xff] %v315
                %v317 = vld [vmem:[%s227 + $0x2c0] sm:$0xff]
                %318 = vst [vmem:[%s228 + $0x160] sm:$0xff] %v317
                %v319 = vld [vmem:[%s227 + $0x2d0] sm:$0xff]
                %320 = vst [vmem:[%s228 + $0x168] sm:$0xff] %v319
                %v321 = vld [vmem:[%s227 + $0x2e0] sm:$0xff]
                %322 = vst [vmem:[%s228 + $0x170] sm:$0xff] %v321
                %v323 = vld [vmem:[%s227 + $0x2f0] sm:$0xff]
                %324 = vst [vmem:[%s228 + $0x178] sm:$0xff] %v323
                %v325 = vld [vmem:[%s227 + $0x300] sm:$0xff]
                %326 = vst [vmem:[%s228 + $0x180] sm:$0xff] %v325
                %v327 = vld [vmem:[%s227 + $0x310] sm:$0xff]
                %328 = vst [vmem:[%s228 + $0x188] sm:$0xff] %v327
                %v329 = vld [vmem:[%s227 + $0x320] sm:$0xff]
                %330 = vst [vmem:[%s228 + $0x190] sm:$0xff] %v329
                %v331 = vld [vmem:[%s227 + $0x330] sm:$0xff]
                %332 = vst [vmem:[%s228 + $0x198] sm:$0xff] %v331
                %v333 = vld [vmem:[%s227 + $0x340] sm:$0xff]
                %334 = vst [vmem:[%s228 + $0x1a0] sm:$0xff] %v333
                %v335 = vld [vmem:[%s227 + $0x350] sm:$0xff]
                %336 = vst [vmem:[%s228 + $0x1a8] sm:$0xff] %v335
                %v337 = vld [vmem:[%s227 + $0x360] sm:$0xff]
                %338 = vst [vmem:[%s228 + $0x1b0] sm:$0xff] %v337
                %v339 = vld [vmem:[%s227 + $0x370] sm:$0xff]
                %340 = vst [vmem:[%s228 + $0x1b8] sm:$0xff] %v339
                %v341 = vld [vmem:[%s227 + $0x380] sm:$0xff]
                %342 = vst [vmem:[%s228 + $0x1c0] sm:$0xff] %v341
                %v343 = vld [vmem:[%s227 + $0x390] sm:$0xff]
                %344 = vst [vmem:[%s228 + $0x1c8] sm:$0xff] %v343
                %v345 = vld [vmem:[%s227 + $0x3a0] sm:$0xff]
                %346 = vst [vmem:[%s228 + $0x1d0] sm:$0xff] %v345
                %v347 = vld [vmem:[%s227 + $0x3b0] sm:$0xff]
                %348 = vst [vmem:[%s228 + $0x1d8] sm:$0xff] %v347
                %v349 = vld [vmem:[%s227 + $0x3c0] sm:$0xff]
                %350 = vst [vmem:[%s228 + $0x1e0] sm:$0xff] %v349
                %v351 = vld [vmem:[%s227 + $0x3d0] sm:$0xff]
                %352 = vst [vmem:[%s228 + $0x1e8] sm:$0xff] %v351
                %v353 = vld [vmem:[%s227 + $0x3e0] sm:$0xff]
                %354 = vst [vmem:[%s228 + $0x1f0] sm:$0xff] %v353
                %v355 = vld [vmem:[%s227 + $0x3f0] sm:$0xff]
                %356 = vst [vmem:[%s228 + $0x1f8] sm:$0xff] %v355
              $region60: #{frame_map_forward.7} parent=54 // loop_footer
                %s226 = sadd.s32 1, %s222
              $region61: #{frame_map_forward.7} parent=54 // loop_footer_branch
                %221 = sbr.rel target = $region57
              $region62: #{frame_map_forward.7} parent=54 // loop_exit
                _
            $region55: #{frame_map_forward.7} parent=46 // pred_fallthru
              _
          $region47: #{frame_map_forward.7} parent=42 // pred_fallthru
            _
          %497 = vnop
        $region43: #{frame_map_forward.7} parent=15 // pred_fallthru
          _
        // Predicated region
        $region78: #{frame_map_forward.7} parent=15 // pred_check
          %p498 = pneg %p104
        $region79: #{frame_map_forward.7} parent=15 // pred_check_branch
          %500 = sbr.rel (%p498) target = $region81
        $region80: #{frame_map_forward.7} parent=15 // pred_region
          %s501 = smul.u32 2, %s17
          %p502 = scmp.lt.s32.totalorder %s501, 3
          %s503 = scalar_select %p502, %s501, 3
          %s504 = scalar_lea.vmem %s2, %s503
          %s505 = smul.u32 2, %s17
        $region81: #{frame_map_forward.7} parent=15 // pred_fallthru
          _
      $region16: #{frame_map_forward.7} parent=5 // pred_fallthru
        _
      %p506 = scmp.le.s32.totalorder 1, %s9
      %p507 = scmp.lt.s32.totalorder %s9, 17
      %p508 = pnand %p506, %p507
      %p509 = pneg %p508
      // Predicated region
      $region82: #{frame_map_forward.7} parent=5 // pred_check
        _
      $region83: #{frame_map_forward.7} parent=5 // pred_check_branch
        %511 = sbr.rel (%p508) target = $region85
      $region84: #{frame_map_forward.7} parent=5 // pred_region
        %s512 = ssub.s32 %s9, 1
        %s513 = sand.u32 %s43, 1
        %s514 = sand.u32 %s43, 1
        %s515 = smul.addr %s514, 64
        %s516 = scalar_lea.vmem [#allocation3], %s515
        // Predicated region
        $region86: #{frame_map_forward.7} parent=84 // pred_check
          %p517 = pneg %p56
        $region87: #{frame_map_forward.7} parent=84 // pred_check_branch
          %519 = sbr.rel (%p517) target = $region89
        $region88: #{frame_map_forward.7} parent=84 // pred_region
          _
        $region89: #{frame_map_forward.7} parent=84 // pred_fallthru
          _
        %s520 = sand.u32 %s71, 1
        %s521 = sand.u32 %s71, 1
        %s522 = smul.addr %s521, 512
        %s523 = scalar_lea.vmem [#allocation4], %s522
        // Predicated region
        $region90: #{frame_map_forward.7} parent=84 // pred_check
          %p524 = pneg %p84
        $region91: #{frame_map_forward.7} parent=84 // pred_check_branch
          %526 = sbr.rel (%p524) target = $region93
        $region92: #{frame_map_forward.7} parent=84 // pred_region
          _
        $region93: #{frame_map_forward.7} parent=84 // pred_fallthru
          _
        %s527 = sand.u32 %s43, 1
        %s528 = sand.u32 %s43, 1
        %s529 = smul.addr %s528, 64
        %s530 = scalar_lea.vmem [#allocation3], %s529
        %p531 = pneg %p56
        %p532 = pneg %p53
        %s533 = sand.u32 %s71, 1
        %s534 = sand.u32 %s71, 1
        %s535 = smul.addr %s534, 512
        %s536 = scalar_lea.vmem [#allocation4], %s535
        %p537 = pneg %p84
        %p538 = pneg %p81
        %s539 = smul.u32 2, %s20
        %p540 = scmp.lt.s32.totalorder %s539, 3
        %s541 = scalar_select %p540, %s539, 3
        %s542 = scalar_lea.vmem %s2, %s541
        %p543 = pneg %p110
        %p544 = pneg %p107
        %p545 = pneg %p138
        %p546 = pneg %p135
        %s547 = sand.u32 %s125, 1
        %s548 = sand.u32 %s125, 1
        %s549 = smul.addr %s548, 64
        %s550 = scalar_lea.vmem [#allocation5], %s549
        %s551 = smul.u32 4, %s19
        %s552 = smul.u32 4, %s21
        %s553 = smul.u32 64, %s21
        %s554 = smul.u32 2, %s20
        %s555 = smul.u32 2, %s20
        %p556 = scmp.lt.s32.totalorder %s555, 3
        %s557 = scalar_select %p556, %s555, 3
        %s558 = scalar_lea.vmem %s2, %s557
        %s559 = smul.u32 2, %s20
        %s560 = smul.u32 4, %s19
        %s561 = smul.u32 2, %s20
        %p562 = scmp.eq.s32.totalorder %s21, 0
        // Predicated region
        $region94: #{frame_map_forward.7} parent=84 // pred_check
          %p563 = pneg %p562
        $region95: #{frame_map_forward.7} parent=84 // pred_check_branch
          %565 = sbr.rel (%p563) target = $region97
        $region96: #{frame_map_forward.7} parent=84 // pred_region
          %566 = vst [vmem:[#allocation2] sm:$0xff] 0.0
          %567 = vst [vmem:[#allocation2 + $0x8] sm:$0xff] 0.0
          %568 = vst [vmem:[#allocation2 + $0x10] sm:$0xff] 0.0
          %569 = vst [vmem:[#allocation2 + $0x18] sm:$0xff] 0.0
          %570 = vst [vmem:[#allocation2 + $0x20] sm:$0xff] 0.0
          %571 = vst [vmem:[#allocation2 + $0x28] sm:$0xff] 0.0
          %572 = vst [vmem:[#allocation2 + $0x30] sm:$0xff] 0.0
          %573 = vst [vmem:[#allocation2 + $0x38] sm:$0xff] 0.0
        $region97: #{frame_map_forward.7} parent=84 // pred_fallthru
          _
        %v574 = vld [vmem:[#allocation2] sm:$0xff]
        %v575 = vld [vmem:[#allocation2 + $0x8] sm:$0xff]
        %v576 = vld [vmem:[#allocation2 + $0x10] sm:$0xff]
        %v577 = vld [vmem:[#allocation2 + $0x18] sm:$0xff]
        %v578 = vld [vmem:[#allocation2 + $0x20] sm:$0xff]
        %v579 = vld [vmem:[#allocation2 + $0x28] sm:$0xff]
        %v580 = vld [vmem:[#allocation2 + $0x30] sm:$0xff]
        %v581 = vld [vmem:[#allocation2 + $0x38] sm:$0xff]
        %v582 = vld [vmem:[%s516] sm:$0xff]
        %v583 = vld [vmem:[%s516 + $0x8] sm:$0xff]
        %v584 = vld [vmem:[%s516 + $0x10] sm:$0xff]
        %v585 = vld [vmem:[%s516 + $0x18] sm:$0xff]
        %v586 = vld [vmem:[%s516 + $0x20] sm:$0xff]
        %v587 = vld [vmem:[%s516 + $0x28] sm:$0xff]
        %v588 = vld [vmem:[%s516 + $0x30] sm:$0xff]
        %v589 = vld [vmem:[%s516 + $0x38] sm:$0xff]
        %v590 = vld [vmem:[%s523] sm:$0xff]
        %v591 = vld [vmem:[%s523 + $0x8] sm:$0xff]
        %v592 = vld [vmem:[%s523 + $0x10] sm:$0xff]
        %v593 = vld [vmem:[%s523 + $0x18] sm:$0xff]
        %v594 = vld [vmem:[%s523 + $0x20] sm:$0xff]
        %v595 = vld [vmem:[%s523 + $0x28] sm:$0xff]
        %v596 = vld [vmem:[%s523 + $0x30] sm:$0xff]
        %v597 = vld [vmem:[%s523 + $0x38] sm:$0xff]
        %v598 = vld [vmem:[%s523 + $0x40] sm:$0xff]
        %v599 = vld [vmem:[%s523 + $0x48] sm:$0xff]
        %v600 = vld [vmem:[%s523 + $0x50] sm:$0xff]
        %v601 = vld [vmem:[%s523 + $0x58] sm:$0xff]
        %v602 = vld [vmem:[%s523 + $0x60] sm:$0xff]
        %v603 = vld [vmem:[%s523 + $0x68] sm:$0xff]
        %v604 = vld [vmem:[%s523 + $0x70] sm:$0xff]
        %v605 = vld [vmem:[%s523 + $0x78] sm:$0xff]
        %v606 = vld [vmem:[%s523 + $0x80] sm:$0xff]
        %v607 = vld [vmem:[%s523 + $0x88] sm:$0xff]
        %v608 = vld [vmem:[%s523 + $0x90] sm:$0xff]
        %v609 = vld [vmem:[%s523 + $0x98] sm:$0xff]
        %v610 = vld [vmem:[%s523 + $0xa0] sm:$0xff]
        %v611 = vld [vmem:[%s523 + $0xa8] sm:$0xff]
        %v612 = vld [vmem:[%s523 + $0xb0] sm:$0xff]
        %v613 = vld [vmem:[%s523 + $0xb8] sm:$0xff]
        %v614 = vld [vmem:[%s523 + $0xc0] sm:$0xff]
        %v615 = vld [vmem:[%s523 + $0xc8] sm:$0xff]
        %v616 = vld [vmem:[%s523 + $0xd0] sm:$0xff]
        %v617 = vld [vmem:[%s523 + $0xd8] sm:$0xff]
        %v618 = vld [vmem:[%s523 + $0xe0] sm:$0xff]
        %v619 = vld [vmem:[%s523 + $0xe8] sm:$0xff]
        %v620 = vld [vmem:[%s523 + $0xf0] sm:$0xff]
        %v621 = vld [vmem:[%s523 + $0xf8] sm:$0xff]
        %v622 = vld [vmem:[%s523 + $0x100] sm:$0xff]
        %v623 = vld [vmem:[%s523 + $0x108] sm:$0xff]
        %v624 = vld [vmem:[%s523 + $0x110] sm:$0xff]
        %v625 = vld [vmem:[%s523 + $0x118] sm:$0xff]
        %v626 = vld [vmem:[%s523 + $0x120] sm:$0xff]
        %v627 = vld [vmem:[%s523 + $0x128] sm:$0xff]
        %v628 = vld [vmem:[%s523 + $0x130] sm:$0xff]
        %v629 = vld [vmem:[%s523 + $0x138] sm:$0xff]
        %v630 = vld [vmem:[%s523 + $0x140] sm:$0xff]
        %v631 = vld [vmem:[%s523 + $0x148] sm:$0xff]
        %v632 = vld [vmem:[%s523 + $0x150] sm:$0xff]
        %v633 = vld [vmem:[%s523 + $0x158] sm:$0xff]
        %v634 = vld [vmem:[%s523 + $0x160] sm:$0xff]
        %v635 = vld [vmem:[%s523 + $0x168] sm:$0xff]
        %v636 = vld [vmem:[%s523 + $0x170] sm:$0xff]
        %v637 = vld [vmem:[%s523 + $0x178] sm:$0xff]
        %v638 = vld [vmem:[%s523 + $0x180] sm:$0xff]
        %v639 = vld [vmem:[%s523 + $0x188] sm:$0xff]
        %v640 = vld [vmem:[%s523 + $0x190] sm:$0xff]
        %v641 = vld [vmem:[%s523 + $0x198] sm:$0xff]
        %v642 = vld [vmem:[%s523 + $0x1a0] sm:$0xff]
        %v643 = vld [vmem:[%s523 + $0x1a8] sm:$0xff]
        %v644 = vld [vmem:[%s523 + $0x1b0] sm:$0xff]
        %v645 = vld [vmem:[%s523 + $0x1b8] sm:$0xff]
        %v646 = vld [vmem:[%s523 + $0x1c0] sm:$0xff]
        %v647 = vld [vmem:[%s523 + $0x1c8] sm:$0xff]
        %v648 = vld [vmem:[%s523 + $0x1d0] sm:$0xff]
        %v649 = vld [vmem:[%s523 + $0x1d8] sm:$0xff]
        %v650 = vld [vmem:[%s523 + $0x1e0] sm:$0xff]
        %v651 = vld [vmem:[%s523 + $0x1e8] sm:$0xff]
        %v652 = vld [vmem:[%s523 + $0x1f0] sm:$0xff]
        %v653 = vld [vmem:[%s523 + $0x1f8] sm:$0xff]
        %v662 = vunpack.c.l.b16 %v582
        %v663 = vunpack.c.h.b16 %v582
        %v664 = vunpack.c.l.b16 %v583
        %v665 = vunpack.c.h.b16 %v583
        %v666 = vunpack.c.l.b16 %v584
        %v667 = vunpack.c.h.b16 %v584
        %v668 = vunpack.c.l.b16 %v585
        %v669 = vunpack.c.h.b16 %v585
        %v670 = vunpack.c.l.b16 %v586
        %v671 = vunpack.c.h.b16 %v586
        %v672 = vunpack.c.l.b16 %v587
        %v673 = vunpack.c.h.b16 %v587
        %v674 = vunpack.c.l.b16 %v588
        %v675 = vunpack.c.h.b16 %v588
        %v676 = vunpack.c.l.b16 %v589
        %v677 = vunpack.c.h.b16 %v589
        %v678 = vpack.c.b16 %v666, %v662
        %v679 = vpack.c.b16 %v667, %v663
        %v680 = vpack.c.b16 %v668, %v664
        %v681 = vpack.c.b16 %v669, %v665
        %v682 = vpack.c.b16 %v674, %v670
        %v683 = vpack.c.b16 %v675, %v671
        %v684 = vpack.c.b16 %v676, %v672
        %v685 = vpack.c.b16 %v677, %v673
        %v758 = vunpack.c.l.b16 %v590
        %v759 = vunpack.c.h.b16 %v590
        %v760 = vunpack.c.l.b16 %v591
        %v761 = vunpack.c.h.b16 %v591
        %v762 = vunpack.c.l.b16 %v592
        %v763 = vunpack.c.h.b16 %v592
        %v764 = vunpack.c.l.b16 %v593
        %v765 = vunpack.c.h.b16 %v593
        %v766 = vunpack.c.l.b16 %v594
        %v767 = vunpack.c.h.b16 %v594
        %v768 = vunpack.c.l.b16 %v595
        %v769 = vunpack.c.h.b16 %v595
        %v770 = vunpack.c.l.b16 %v596
        %v771 = vunpack.c.h.b16 %v596
        %v772 = vunpack.c.l.b16 %v597
        %v773 = vunpack.c.h.b16 %v597
        %v774 = vunpack.c.l.b16 %v598
        %v775 = vunpack.c.h.b16 %v598
        %v776 = vunpack.c.l.b16 %v599
        %v777 = vunpack.c.h.b16 %v599
        %v778 = vunpack.c.l.b16 %v600
        %v779 = vunpack.c.h.b16 %v600
        %v780 = vunpack.c.l.b16 %v601
        %v781 = vunpack.c.h.b16 %v601
        %v782 = vunpack.c.l.b16 %v602
        %v783 = vunpack.c.h.b16 %v602
        %v784 = vunpack.c.l.b16 %v603
        %v785 = vunpack.c.h.b16 %v603
        %v786 = vunpack.c.l.b16 %v604
        %v787 = vunpack.c.h.b16 %v604
        %v788 = vunpack.c.l.b16 %v605
        %v789 = vunpack.c.h.b16 %v605
        %v790 = vunpack.c.l.b16 %v606
        %v791 = vunpack.c.h.b16 %v606
        %v792 = vunpack.c.l.b16 %v607
        %v793 = vunpack.c.h.b16 %v607
        %v794 = vunpack.c.l.b16 %v608
        %v795 = vunpack.c.h.b16 %v608
        %v796 = vunpack.c.l.b16 %v609
        %v797 = vunpack.c.h.b16 %v609
        %v798 = vunpack.c.l.b16 %v610
        %v799 = vunpack.c.h.b16 %v610
        %v800 = vunpack.c.l.b16 %v611
        %v801 = vunpack.c.h.b16 %v611
        %v802 = vunpack.c.l.b16 %v612
        %v803 = vunpack.c.h.b16 %v612
        %v804 = vunpack.c.l.b16 %v613
        %v805 = vunpack.c.h.b16 %v613
        %v806 = vunpack.c.l.b16 %v614
        %v807 = vunpack.c.h.b16 %v614
        %v808 = vunpack.c.l.b16 %v615
        %v809 = vunpack.c.h.b16 %v615
        %v810 = vunpack.c.l.b16 %v616
        %v811 = vunpack.c.h.b16 %v616
        %v812 = vunpack.c.l.b16 %v617
        %v813 = vunpack.c.h.b16 %v617
        %v814 = vunpack.c.l.b16 %v618
        %v815 = vunpack.c.h.b16 %v618
        %v816 = vunpack.c.l.b16 %v619
        %v817 = vunpack.c.h.b16 %v619
        %v818 = vunpack.c.l.b16 %v620
        %v819 = vunpack.c.h.b16 %v620
        %v820 = vunpack.c.l.b16 %v621
        %v821 = vunpack.c.h.b16 %v621
        %v822 = vunpack.c.l.b16 %v622
        %v823 = vunpack.c.h.b16 %v622
        %v824 = vunpack.c.l.b16 %v623
        %v825 = vunpack.c.h.b16 %v623
        %v826 = vunpack.c.l.b16 %v624
        %v827 = vunpack.c.h.b16 %v624
        %v828 = vunpack.c.l.b16 %v625
        %v829 = vunpack.c.h.b16 %v625
        %v830 = vunpack.c.l.b16 %v626
        %v831 = vunpack.c.h.b16 %v626
        %v832 = vunpack.c.l.b16 %v627
        %v833 = vunpack.c.h.b16 %v627
        %v834 = vunpack.c.l.b16 %v628
        %v835 = vunpack.c.h.b16 %v628
        %v836 = vunpack.c.l.b16 %v629
        %v837 = vunpack.c.h.b16 %v629
        %v838 = vunpack.c.l.b16 %v630
        %v839 = vunpack.c.h.b16 %v630
        %v840 = vunpack.c.l.b16 %v631
        %v841 = vunpack.c.h.b16 %v631
        %v842 = vunpack.c.l.b16 %v632
        %v843 = vunpack.c.h.b16 %v632
        %v844 = vunpack.c.l.b16 %v633
        %v845 = vunpack.c.h.b16 %v633
        %v846 = vunpack.c.l.b16 %v634
        %v847 = vunpack.c.h.b16 %v634
        %v848 = vunpack.c.l.b16 %v635
        %v849 = vunpack.c.h.b16 %v635
        %v850 = vunpack.c.l.b16 %v636
        %v851 = vunpack.c.h.b16 %v636
        %v852 = vunpack.c.l.b16 %v637
        %v853 = vunpack.c.h.b16 %v637
        %v854 = vunpack.c.l.b16 %v638
        %v855 = vunpack.c.h.b16 %v638
        %v856 = vunpack.c.l.b16 %v639
        %v857 = vunpack.c.h.b16 %v639
        %v858 = vunpack.c.l.b16 %v640
        %v859 = vunpack.c.h.b16 %v640
        %v860 = vunpack.c.l.b16 %v641
        %v861 = vunpack.c.h.b16 %v641
        %v862 = vunpack.c.l.b16 %v642
        %v863 = vunpack.c.h.b16 %v642
        %v864 = vunpack.c.l.b16 %v643
        %v865 = vunpack.c.h.b16 %v643
        %v866 = vunpack.c.l.b16 %v644
        %v867 = vunpack.c.h.b16 %v644
        %v868 = vunpack.c.l.b16 %v645
        %v869 = vunpack.c.h.b16 %v645
        %v870 = vunpack.c.l.b16 %v646
        %v871 = vunpack.c.h.b16 %v646
        %v872 = vunpack.c.l.b16 %v647
        %v873 = vunpack.c.h.b16 %v647
        %v874 = vunpack.c.l.b16 %v648
        %v875 = vunpack.c.h.b16 %v648
        %v876 = vunpack.c.l.b16 %v649
        %v877 = vunpack.c.h.b16 %v649
        %v878 = vunpack.c.l.b16 %v650
        %v879 = vunpack.c.h.b16 %v650
        %v880 = vunpack.c.l.b16 %v651
        %v881 = vunpack.c.h.b16 %v651
        %v882 = vunpack.c.l.b16 %v652
        %v883 = vunpack.c.h.b16 %v652
        %v884 = vunpack.c.l.b16 %v653
        %v885 = vunpack.c.h.b16 %v653
        %v886 = vpack.c.b16 %v760, %v758
        %v887 = vpack.c.b16 %v761, %v759
        %v888 = vpack.c.b16 %v764, %v762
        %v889 = vpack.c.b16 %v765, %v763
        %v890 = vpack.c.b16 %v768, %v766
        %v891 = vpack.c.b16 %v769, %v767
        %v892 = vpack.c.b16 %v772, %v770
        %v893 = vpack.c.b16 %v773, %v771
        %v894 = vpack.c.b16 %v776, %v774
        %v895 = vpack.c.b16 %v777, %v775
        %v896 = vpack.c.b16 %v780, %v778
        %v897 = vpack.c.b16 %v781, %v779
        %v898 = vpack.c.b16 %v784, %v782
        %v899 = vpack.c.b16 %v785, %v783
        %v900 = vpack.c.b16 %v788, %v786
        %v901 = vpack.c.b16 %v789, %v787
        %v902 = vpack.c.b16 %v792, %v790
        %v903 = vpack.c.b16 %v793, %v791
        %v904 = vpack.c.b16 %v796, %v794
        %v905 = vpack.c.b16 %v797, %v795
        %v906 = vpack.c.b16 %v800, %v798
        %v907 = vpack.c.b16 %v801, %v799
        %v908 = vpack.c.b16 %v804, %v802
        %v909 = vpack.c.b16 %v805, %v803
        %v910 = vpack.c.b16 %v808, %v806
        %v911 = vpack.c.b16 %v809, %v807
        %v912 = vpack.c.b16 %v812, %v810
        %v913 = vpack.c.b16 %v813, %v811
        %v914 = vpack.c.b16 %v816, %v814
        %v915 = vpack.c.b16 %v817, %v815
        %v916 = vpack.c.b16 %v820, %v818
        %v917 = vpack.c.b16 %v821, %v819
        %v918 = vpack.c.b16 %v824, %v822
        %v919 = vpack.c.b16 %v825, %v823
        %v920 = vpack.c.b16 %v828, %v826
        %v921 = vpack.c.b16 %v829, %v827
        %v922 = vpack.c.b16 %v832, %v830
        %v923 = vpack.c.b16 %v833, %v831
        %v924 = vpack.c.b16 %v836, %v834
        %v925 = vpack.c.b16 %v837, %v835
        %v926 = vpack.c.b16 %v840, %v838
        %v927 = vpack.c.b16 %v841, %v839
        %v928 = vpack.c.b16 %v844, %v842
        %v929 = vpack.c.b16 %v845, %v843
        %v930 = vpack.c.b16 %v848, %v846
        %v931 = vpack.c.b16 %v849, %v847
        %v932 = vpack.c.b16 %v852, %v850
        %v933 = vpack.c.b16 %v853, %v851
        %v934 = vpack.c.b16 %v856, %v854
        %v935 = vpack.c.b16 %v857, %v855
        %v936 = vpack.c.b16 %v860, %v858
        %v937 = vpack.c.b16 %v861, %v859
        %v938 = vpack.c.b16 %v864, %v862
        %v939 = vpack.c.b16 %v865, %v863
        %v940 = vpack.c.b16 %v868, %v866
        %v941 = vpack.c.b16 %v869, %v867
        %v942 = vpack.c.b16 %v872, %v870
        %v943 = vpack.c.b16 %v873, %v871
        %v944 = vpack.c.b16 %v876, %v874
        %v945 = vpack.c.b16 %v877, %v875
        %v946 = vpack.c.b16 %v880, %v878
        %v947 = vpack.c.b16 %v881, %v879
        %v948 = vpack.c.b16 %v884, %v882
        %v949 = vpack.c.b16 %v885, %v883
        %1014 = vmatprep.subr.bf16.mxu0 %v887
        %1015 = vmatpush1.bf16.msra.mxu0 %v886
        %1016 = vmatprep.subr.bf16.mxu0 %v889
        %1017 = vmatpush1.bf16.msra.mxu0 %v888
        %1018 = vmatprep.subr.bf16.mxu0 %v891
        %1019 = vmatpush1.bf16.msra.mxu0 %v890
        %1020 = vmatprep.subr.bf16.mxu0 %v893
        %1021 = vmatpush1.bf16.msra.mxu0 %v892
        %1022 = vmatprep.subr.bf16.mxu0 %v895
        %1023 = vmatpush1.bf16.msra.mxu0 %v894
        %1024 = vmatprep.subr.bf16.mxu0 %v897
        %1025 = vmatpush1.bf16.msra.mxu0 %v896
        %1026 = vmatprep.subr.bf16.mxu0 %v899
        %1027 = vmatpush1.bf16.msra.mxu0 %v898
        %1028 = vmatprep.subr.bf16.mxu0 %v901
        %1029 = vmatpush1.bf16.msra.mxu0 %v900
        %1030 = vmatprep.subr.bf16.mxu0 %v903
        %1031 = vmatpush1.bf16.msra.mxu0 %v902
        %1032 = vmatprep.subr.bf16.mxu0 %v905
        %1033 = vmatpush1.bf16.msra.mxu0 %v904
        %1034 = vmatprep.subr.bf16.mxu0 %v907
        %1035 = vmatpush1.bf16.msra.mxu0 %v906
        %1036 = vmatprep.subr.bf16.mxu0 %v909
        %1037 = vmatpush1.bf16.msra.mxu0 %v908
        %1038 = vmatprep.subr.bf16.mxu0 %v911
        %1039 = vmatpush1.bf16.msra.mxu0 %v910
        %1040 = vmatprep.subr.bf16.mxu0 %v913
        %1041 = vmatpush1.bf16.msra.mxu0 %v912
        %1042 = vmatprep.subr.bf16.mxu0 %v915
        %1043 = vmatpush1.bf16.msra.mxu0 %v914
        %1044 = vmatprep.subr.bf16.mxu0 %v917
        %1045 = vmatpush1.bf16.msra.mxu0 %v916
        %1046 = vmatprep.mubr.bf16.mxu0 %v679
        %1047 = vmatmul.mubr.bf16.gmra.mrb[0].mxu0 %v678
        %v1048 = vpop.f32.mrb[0].mxu0
        %v1049 = vadd.f32 0.0, %v1048
        %v1050 = vpop.f32.mrb[0].mxu0
        %v1051 = vadd.f32 0.0, %v1050
        %v1052 = vpop.f32.mrb[0].mxu0
        %v1053 = vadd.f32 0.0, %v1052
        %v1054 = vpop.f32.mrb[0].mxu0
        %v1055 = vadd.f32 0.0, %v1054
        %1056 = vmatprep.mubr.bf16.mxu0 %v683
        %1057 = vmatmul.mubr.bf16.gmra.mrb[0].mxu0 %v682
        %v1058 = vpop.f32.mrb[0].mxu0
        %v1059 = vadd.f32 0.0, %v1058
        %v1060 = vpop.f32.mrb[0].mxu0
        %v1061 = vadd.f32 0.0, %v1060
        %v1062 = vpop.f32.mrb[0].mxu0
        %v1063 = vadd.f32 0.0, %v1062
        %v1064 = vpop.f32.mrb[0].mxu0
        %v1065 = vadd.f32 0.0, %v1064
        %1066 = vdwg.mxu0
        %1067 = vmatprep.subr.bf16.mxu0 %v919
        %1068 = vmatpush1.bf16.msra.mxu0 %v918
        %1069 = vmatprep.subr.bf16.mxu0 %v921
        %1070 = vmatpush1.bf16.msra.mxu0 %v920
        %1071 = vmatprep.subr.bf16.mxu0 %v923
        %1072 = vmatpush1.bf16.msra.mxu0 %v922
        %1073 = vmatprep.subr.bf16.mxu0 %v925
        %1074 = vmatpush1.bf16.msra.mxu0 %v924
        %1075 = vmatprep.subr.bf16.mxu0 %v927
        %1076 = vmatpush1.bf16.msra.mxu0 %v926
        %1077 = vmatprep.subr.bf16.mxu0 %v929
        %1078 = vmatpush1.bf16.msra.mxu0 %v928
        %1079 = vmatprep.subr.bf16.mxu0 %v931
        %1080 = vmatpush1.bf16.msra.mxu0 %v930
        %1081 = vmatprep.subr.bf16.mxu0 %v933
        %1082 = vmatpush1.bf16.msra.mxu0 %v932
        %1083 = vmatprep.subr.bf16.mxu0 %v935
        %1084 = vmatpush1.bf16.msra.mxu0 %v934
        %1085 = vmatprep.subr.bf16.mxu0 %v937
        %1086 = vmatpush1.bf16.msra.mxu0 %v936
        %1087 = vmatprep.subr.bf16.mxu0 %v939
        %1088 = vmatpush1.bf16.msra.mxu0 %v938
        %1089 = vmatprep.subr.bf16.mxu0 %v941
        %1090 = vmatpush1.bf16.msra.mxu0 %v940
        %1091 = vmatprep.subr.bf16.mxu0 %v943
        %1092 = vmatpush1.bf16.msra.mxu0 %v942
        %1093 = vmatprep.subr.bf16.mxu0 %v945
        %1094 = vmatpush1.bf16.msra.mxu0 %v944
        %1095 = vmatprep.subr.bf16.mxu0 %v947
        %1096 = vmatpush1.bf16.msra.mxu0 %v946
        %1097 = vmatprep.subr.bf16.mxu0 %v949
        %1098 = vmatpush1.bf16.msra.mxu0 %v948
        %1099 = vmatprep.mubr.bf16.mxu0 %v681
        %1100 = vmatmul.mubr.bf16.gmra.mrb[0].mxu0 %v680
        %v1101 = vpop.f32.mrb[0].mxu0
        %v1102 = vadd.f32 %v1049, %v1101
        %v1103 = vpop.f32.mrb[0].mxu0
        %v1104 = vadd.f32 %v1051, %v1103
        %v1105 = vpop.f32.mrb[0].mxu0
        %v1106 = vadd.f32 %v1053, %v1105
        %v1107 = vpop.f32.mrb[0].mxu0
        %v1108 = vadd.f32 %v1055, %v1107
        %1109 = vmatprep.mubr.bf16.mxu0 %v685
        %1110 = vmatmul.mubr.bf16.gmra.mrb[0].mxu0 %v684
        %v1111 = vpop.f32.mrb[0].mxu0
        %v1112 = vadd.f32 %v1059, %v1111
        %v1113 = vpop.f32.mrb[0].mxu0
        %v1114 = vadd.f32 %v1061, %v1113
        %v1115 = vpop.f32.mrb[0].mxu0
        %v1116 = vadd.f32 %v1063, %v1115
        %v1117 = vpop.f32.mrb[0].mxu0
        %v1118 = vadd.f32 %v1065, %v1117
        %1119 = vdwg.mxu0
        %v1120 = vadd.f32 %v574, %v1102
        %v1121 = vadd.f32 %v575, %v1104
        %v1122 = vadd.f32 %v576, %v1106
        %v1123 = vadd.f32 %v577, %v1108
        %v1124 = vadd.f32 %v578, %v1112
        %v1125 = vadd.f32 %v579, %v1114
        %v1126 = vadd.f32 %v580, %v1116
        %v1127 = vadd.f32 %v581, %v1118
        %1128 = vst [vmem:[#allocation2] sm:$0xff] %v1120
        %1129 = vst [vmem:[#allocation2 + $0x8] sm:$0xff] %v1121
        %1130 = vst [vmem:[#allocation2 + $0x10] sm:$0xff] %v1122
        %1131 = vst [vmem:[#allocation2 + $0x18] sm:$0xff] %v1123
        %1132 = vst [vmem:[#allocation2 + $0x20] sm:$0xff] %v1124
        %1133 = vst [vmem:[#allocation2 + $0x28] sm:$0xff] %v1125
        %1134 = vst [vmem:[#allocation2 + $0x30] sm:$0xff] %v1126
        %1135 = vst [vmem:[#allocation2 + $0x38] sm:$0xff] %v1127
        %p1136 = scmp.eq.s32.totalorder %s21, 7
        // Predicated region
        $region98: #{frame_map_forward.7} parent=84 // pred_check
          %p1137 = pneg %p1136
        $region99: #{frame_map_forward.7} parent=84 // pred_check_branch
          %1139 = sbr.rel (%p1137) target = $region101
        $region100: #{frame_map_forward.7} parent=84 // pred_region
          %v1140 = vld [vmem:[#allocation2] sm:$0xff]
          %v1141 = vld [vmem:[#allocation2 + $0x8] sm:$0xff]
          %v1142 = vld [vmem:[#allocation2 + $0x10] sm:$0xff]
          %v1143 = vld [vmem:[#allocation2 + $0x18] sm:$0xff]
          %v1144 = vld [vmem:[#allocation2 + $0x20] sm:$0xff]
          %v1145 = vld [vmem:[#allocation2 + $0x28] sm:$0xff]
          %v1146 = vld [vmem:[#allocation2 + $0x30] sm:$0xff]
          %v1147 = vld [vmem:[#allocation2 + $0x38] sm:$0xff]
          %v1148 = vld [vmem:[%s558] sm:$0x3]
          %v1150 = vlaneseq
          %v1151 = vshrl.u32 %v1150, 7
          %v1152 = vsub.s32 0, %v1151
          %v1153 = vrot.slane %v1148, %v1152
          %v1154 = vlaneseq
          %v1155 = vshrl.u32 %v1154, 7
          %v1156 = vsub.s32 1, %v1155
          %v1157 = vrot.slane %v1148, %v1156
          %v1160 = vadd.f32 %v1140, %v1153
          %v1161 = vadd.f32 %v1141, %v1157
          %v1162 = vadd.f32 %v1142, %v1153
          %v1163 = vadd.f32 %v1143, %v1157
          %v1164 = vadd.f32 %v1144, %v1153
          %v1165 = vadd.f32 %v1145, %v1157
          %v1166 = vadd.f32 %v1146, %v1153
          %v1167 = vadd.f32 %v1147, %v1157
          %1168 = vst [vmem:[%s550] sm:$0xff] %v1160
          %1169 = vst [vmem:[%s550 + $0x8] sm:$0xff] %v1161
          %1170 = vst [vmem:[%s550 + $0x10] sm:$0xff] %v1162
          %1171 = vst [vmem:[%s550 + $0x18] sm:$0xff] %v1163
          %1172 = vst [vmem:[%s550 + $0x20] sm:$0xff] %v1164
          %1173 = vst [vmem:[%s550 + $0x28] sm:$0xff] %v1165
          %1174 = vst [vmem:[%s550 + $0x30] sm:$0xff] %v1166
          %1175 = vst [vmem:[%s550 + $0x38] sm:$0xff] %v1167
        $region101: #{frame_map_forward.7} parent=84 // pred_fallthru
          _
        %s1176 = sand.u32 %s125, 1
        %s1177 = sand.u32 %s125, 1
        %s1178 = smul.addr %s1177, 64
        %s1179 = scalar_lea.vmem [#allocation5], %s1178
        // Predicated region
        $region102: #{frame_map_forward.7} parent=84 // pred_check
          %p1180 = pneg %p135
        $region103: #{frame_map_forward.7} parent=84 // pred_check_branch
          %1182 = sbr.rel (%p1180) target = $region105
        $region104: #{frame_map_forward.7} parent=84 // pred_region
          %s1183 = smul.u32 4, %s19
          %s1184 = smul.u32 2, %s20
          %s1185 = smul.addr %s1183, 4
          %s1186 = sadd.s32 %s1184, %s1185
          %s1187 = smul.addr %s1186, 8
          %s1188 = scalar_lea.vmem %s3, %s1187
          // Predicated region
          $region106: #{frame_map_forward.7} parent=104 // pred_check
            _
          $region107: #{frame_map_forward.7} parent=104 // pred_check_branch
            %1190 = sbr.rel (0) target = $region109
          $region108: #{frame_map_forward.7} parent=104 // pred_region
            // Predicated region
            $region110: #{frame_map_forward.7} parent=108 // pred_check
              _
            $region111: #{frame_map_forward.7} parent=108 // pred_check_branch
              %1192 = sbr.rel (0) target = $region113
            $region112: #{frame_map_forward.7} parent=108 // pred_region
              loop: start=0, step=1, limit=1
              $region114: #{frame_map_forward.7} parent=112 // loop_pre_header
                _
              $region115: #{frame_map_forward.7} parent=112 // loop_header
                %s1194 = sphi 0, %s1198
                %p1195 = scmp.ge.s32.totalorder %s1194, 1
                %s1199 = sphi %s1179, %s1179
                %s1200 = sphi %s1188, %s1188
              $region116: #{frame_map_forward.7} parent=112 // loop_header_branch
                %1197 = sbr.rel (%p1195) target = $region120
              $region117: #{frame_map_forward.7} parent=112 // loop_body
                %v1201 = vld [vmem:[%s1199] sm:$0xff]
                %1202 = vst [vmem:[%s1200] sm:$0xff] %v1201
                %v1203 = vld [vmem:[%s1199 + $0x8] sm:$0xff]
                %1204 = vst [vmem:[%s1200 + $0x8] sm:$0xff] %v1203
                %v1205 = vld [vmem:[%s1199 + $0x10] sm:$0xff]
                %1206 = vst [vmem:[%s1200 + $0x20] sm:$0xff] %v1205
                %v1207 = vld [vmem:[%s1199 + $0x18] sm:$0xff]
                %1208 = vst [vmem:[%s1200 + $0x28] sm:$0xff] %v1207
                %v1209 = vld [vmem:[%s1199 + $0x20] sm:$0xff]
                %1210 = vst [vmem:[%s1200 + $0x40] sm:$0xff] %v1209
                %v1211 = vld [vmem:[%s1199 + $0x28] sm:$0xff]
                %1212 = vst [vmem:[%s1200 + $0x48] sm:$0xff] %v1211
                %v1213 = vld [vmem:[%s1199 + $0x30] sm:$0xff]
                %1214 = vst [vmem:[%s1200 + $0x60] sm:$0xff] %v1213
                %v1215 = vld [vmem:[%s1199 + $0x38] sm:$0xff]
                %1216 = vst [vmem:[%s1200 + $0x68] sm:$0xff] %v1215
              $region118: #{frame_map_forward.7} parent=112 // loop_footer
                %s1198 = sadd.s32 1, %s1194
              $region119: #{frame_map_forward.7} parent=112 // loop_footer_branch
                %1193 = sbr.rel target = $region115
              $region120: #{frame_map_forward.7} parent=112 // loop_exit
                _
            $region113: #{frame_map_forward.7} parent=108 // pred_fallthru
              _
            // Predicated region
            $region121: #{frame_map_forward.7} parent=108 // pred_check
              _
            $region122: #{frame_map_forward.7} parent=108 // pred_check_branch
              %1218 = sbr.rel target = $region124
            $region123: #{frame_map_forward.7} parent=108 // pred_region
              _
            $region124: #{frame_map_forward.7} parent=108 // pred_fallthru
              _
          $region109: #{frame_map_forward.7} parent=104 // pred_fallthru
            _
          %1219 = vnop
        $region105: #{frame_map_forward.7} parent=84 // pred_fallthru
          _
      $region85: #{frame_map_forward.7} parent=5 // pred_fallthru
        _
      %p1220 = scmp.le.s32.totalorder 2, %s9
      // Predicated region
      $region125: #{frame_map_forward.7} parent=5 // pred_check
        %p1221 = pneg %p1220
      $region126: #{frame_map_forward.7} parent=5 // pred_check_branch
        %1223 = sbr.rel (%p1221) target = $region128
      $region127: #{frame_map_forward.7} parent=5 // pred_region
        %s1224 = ssub.s32 %s9, 2
        // Predicated region
        $region129: #{frame_map_forward.7} parent=127 // pred_check
          %p1225 = pneg %p141
        $region130: #{frame_map_forward.7} parent=127 // pred_check_branch
          %1227 = sbr.rel (%p1225) target = $region132
        $region131: #{frame_map_forward.7} parent=127 // pred_region
          %s1228 = sand.u32 %s126, 1
          %s1229 = sand.u32 %s126, 1
          %s1230 = smul.addr %s1229, 64
          %s1231 = scalar_lea.vmem [#allocation5], %s1230
        $region132: #{frame_map_forward.7} parent=127 // pred_fallthru
          _
      $region128: #{frame_map_forward.7} parent=5 // pred_fallthru
        _
    $region6: #{frame_map_forward.7} parent=1 // loop_footer
      %s13 = sadd.s32 1, %s9
    $region7: #{frame_map_forward.7} parent=1 // loop_footer_branch
      %8 = sbr.rel target = $region3
    $region8: #{frame_map_forward.7} parent=1 // loop_exit
      _

</llo_original>
